<compile_context>
chip_gen: v5e
topology: v5e:2x2
jax: 0.10.0
libtpu: 0.0.40
codegen_flags: <defaults>
</compile_context>

<pallas_src>
import functools

import jax
import jax.numpy as jnp
from jax import lax
from jax.experimental import pallas as pl
from jax.experimental.pallas import tpu as pltpu

_WEIGHTS = (0.2, 0.3, 0.5)      # spearman() default column weights
_REG_STRENGTH = 1.0             # torchsort regularization_strength
_BIG = 1e30
_TINY = 1e-37
_LANE = 128


def _scan_lanes(x, op, fill, n_lanes, lane_idx, *, reverse):
    """Hillis-Steele inclusive scan along the last (lane) axis.

    reverse=False: y[..., a] = op(x[..., 0], ..., x[..., a])   (prefix scan)
    reverse=True : y[..., a] = op(x[..., a], ..., x[..., n-1]) (suffix scan)

    Each of the ceil(log2(n)) steps is one XLU lane-rotate (pltpu.roll) plus a
    VPU fill-select and the combining op -- no pad/concat copies.  The lanes the
    rotate wraps around are always overwritten by the fill-select, so the result
    only depends on roll's direction (jnp.roll convention assumed), not on how
    it treats padding.  `n_lanes` (the trailing dim) is a multiple of 128.
    """
    n = n_lanes
    d = 1
    while d < n:
        if reverse:
            # shifted[a] = x[a + d] for a < n - d, else fill
            shifted = pltpu.roll(x, shift=n - d, axis=x.ndim - 1)
            shifted = jnp.where(lane_idx >= n - d, fill, shifted)
        else:
            # shifted[a] = x[a - d] for a >= d, else fill
            shifted = pltpu.roll(x, shift=d, axis=x.ndim - 1)
            shifted = jnp.where(lane_idx < d, fill, shifted)
        x = op(x, shifted)
        d *= 2
    return x


def _my_loss_kernel(pred_row_ref, pred_col_ref, target_row_ref, target_col_ref,
                    out_ref, *, n_real):
    f32 = jnp.float32
    c_out, _, n = pred_row_ref.shape          # [3, 1, n], n a multiple of 128

    pred_row = pred_row_ref[...].astype(f32)       # [3, 1, n]  (batch on lanes)
    pred_col = pred_col_ref[...].astype(f32)       # [3, n, 1]  (batch on sublanes)
    target_row = target_row_ref[...].astype(f32)   # [3, 1, n]
    target_col = target_col_ref[...].astype(f32)   # [3, n, 1]

    m_f = float(n_real)
    inv_reg = 1.0 / _REG_STRENGTH

    # ---- iotas / masks shared by all channels (built exactly once) ----------
    i_i = lax.broadcasted_iota(jnp.int32, (n, n), 0)      # sublane idx (b / elem i)
    j_i = lax.broadcasted_iota(jnp.int32, (n, n), 1)      # lane idx (a / t / rank p)
    lane_row = lax.broadcasted_iota(jnp.int32, (1, n), 1)  # [1, n]
    sub_col = lax.broadcasted_iota(jnp.int32, (n, 1), 0)   # [n, 1]
    i_f = i_i.astype(f32)
    j_f = j_i.astype(f32)
    lowtri = j_i <= i_i                                    # a <= b (or t <= b)
    valid = jnp.logical_and(lowtri, i_i < n_real)          # windows in the real range
    lane_valid = lane_row < n_real                         # [1, n]
    row_valid = sub_col < n_real                           # [n, 1]

    # Closed-form window sums of the KL weights w_t = n_real - t (t = 0..n_real-1):
    #   S_w[b, a] = sum_{t=a..b} (n_real - t) = (b - a + 1) * (2*n_real - a - b) / 2
    s_w = (i_f - j_f + 1.0) * (2.0 * m_f - i_f - j_f) * 0.5
    inv_sw = 1.0 / jnp.where(valid, s_w, 1.0)              # [n, n], exact divide, no log

    # ---- soft ranks: all 3 channels batched as [3, n, n] ---------------------
    # Padded positions get theta = -_BIG so they sort last and never influence
    # the real elements' ranks, duals or window sums.
    theta_row = jnp.where(lane_valid, pred_row * inv_reg, -_BIG)   # [3, 1, n]
    theta_col = jnp.where(row_valid, pred_col * inv_reg, -_BIG)    # [3, n, 1]

    # Descending rank of each element (stable tie-break by original index).
    gt = theta_row > theta_col                                      # [3, n, n]
    tie = jnp.logical_and(theta_row == theta_col, j_i < i_i)
    rank_col = jnp.sum(jnp.logical_or(gt, tie).astype(f32),
                       axis=2, keepdims=True)                       # [3, n, 1]
    perm = (rank_col == j_f).astype(f32)                            # one-hot P[c, i, p]

    # Sorted-descending theta and max-stabilized exponentials.
    s_row = jnp.sum(perm * theta_col, axis=1, keepdims=True)        # [3, 1, n]
    m_max = jnp.max(theta_row, axis=2, keepdims=True)               # [3, 1, 1]
    ey = jnp.exp(s_row - m_max)                                     # [3, 1, n], <= 1

    # Window sums S_y[b, a] = sum_{t=a..b} exp(s_t - m) via a suffix-sum scan of
    # (t <= b)-masked ey: exact (all terms non-negative, no cancellation).
    # TODO(synk): the cheaper prefix-sum-difference form (P[b] - P[a-1]) was not
    # adopted: tiny windows deep in the sorted tail cancel catastrophically.
    masked_ey = jnp.where(lowtri, ey, 0.0)                          # [3, n(b), n(t)]
    s_y = _scan_lanes(masked_ey, jnp.add, 0.0, n, j_i, reverse=True)  # [3, n(b), n(a)]

    # Min-max PAV dual in ratio space: R[b, a] = S_y[b, a] / S_w[b, a];
    #   dual_p = m_max + log(max_{b>=p} min_{a<=p} R)   (log is monotone)
    #   soft_rank_i = exp(theta_i - dual_{rank_i}) = exp(theta_i - m_max) / R*.
    r = jnp.where(valid, jnp.maximum(s_y * inv_sw, _TINY), _BIG)    # [3, n(b), n(a)]
    cmin = _scan_lanes(r, jnp.minimum, _BIG, n, j_i, reverse=False)  # [3, n(b), n(p)]
    dual_r_row = jnp.max(jnp.where(valid, cmin, 0.0),
                         axis=1, keepdims=True)                     # [3, 1, n(p)]
    dual_r_col = jnp.maximum(
        jnp.sum(perm * dual_r_row, axis=2, keepdims=True), _TINY)   # [3, n(i), 1]
    soft_rank = jnp.exp(theta_col - m_max) / dual_r_col             # [3, n, 1]; 0 at pads

    # ---- weighted spearman correlation ---------------------------------------
    # TODO(synk): PyTorch adds torch.rand(...)*1e-12 noise before normalizing;
    # that non-deterministic, negligible term is omitted here (the _TINY clamps
    # only keep degenerate/constant inputs from producing NaN).
    inv_m = 1.0 / m_f
    x = soft_rank * inv_m                                           # pred_i / N
    xm = jnp.where(row_valid,
                   x - jnp.sum(x, axis=1, keepdims=True) * inv_m, 0.0)
    tm = jnp.where(row_valid,
                   target_col - jnp.sum(target_col, axis=1, keepdims=True) * inv_m,
                   0.0)
    num = jnp.sum(xm * tm, axis=1, keepdims=True)                   # [3, 1, 1]
    ssx = jnp.sum(xm * xm, axis=1, keepdims=True)
    sst = jnp.sum(tm * tm, axis=1, keepdims=True)
    corr_c = (num
              * lax.rsqrt(jnp.maximum(ssx, _TINY))
              * lax.rsqrt(jnp.maximum(sst, _TINY)))                 # [3, 1, 1]

    corr = _WEIGHTS[0] * corr_c[0]                                  # [1, 1]
    for c in range(1, c_out):
        corr = corr + _WEIGHTS[c] * corr_c[c]
    spearman_loss = 1.0 - corr                                      # [1, 1]

    # ---- SmoothL1Loss (beta=1.0, reduction='mean') ----------------------------
    # Padded lanes carry pred == target == 0, so they contribute exactly 0.
    d = pred_row - target_row
    ad = jnp.abs(d)
    sl1 = jnp.where(ad < 1.0, 0.5 * d * d, ad - 0.5)
    sl1_c = jnp.sum(sl1, axis=2, keepdims=True)                     # [3, 1, 1]
    l1 = sl1_c[0]
    for c in range(1, c_out):
        l1 = l1 + sl1_c[c]
    l1 = l1 * (1.0 / (m_f * float(c_out)))                          # [1, 1]

    out_ref[...] = 1000000.0 * spearman_loss * l1


def _round_up(x, m):
    return ((x + m - 1) // m) * m


def _my_loss(pred, target):
    pred = jnp.asarray(pred, jnp.float32)
    target = jnp.asarray(target, jnp.float32)
    if pred.ndim != 2 or target.shape != pred.shape:
        raise ValueError("pred/target must both be [N, 3]")
    n_real, c = pred.shape
    if c != len(_WEIGHTS):
        raise ValueError(f"expected {len(_WEIGHTS)} output columns, got {c}")

    # Pad the batch axis to a lane multiple (128): every [3, n, n] intermediate
    # is lane/sublane aligned, the scans roll an aligned axis, and no masked
    # partial stores are generated.  Padded entries are made inert in-kernel.
    n = max(_round_up(n_real, _LANE), _LANE)
    pad = n - n_real
    if pad:
        pred_p = jnp.pad(pred, ((0, pad), (0, 0)))
        target_p = jnp.pad(target, ((0, pad), (0, 0)))
    else:
        pred_p, target_p = pred, target

    pred_t = pred_p.T                       # [3, n]
    target_t = target_p.T
    pred_row = pred_t.reshape(c, 1, n)      # lane-dense row views
    target_row = target_t.reshape(c, 1, n)
    pred_col = pred_t.reshape(c, n, 1)      # tiny column views (12*N extra bytes)
    target_col = target_t.reshape(c, n, 1)

    # Scoped-VMEM budget sized to the [3, n, n] live set; the default scoped
    # limits (16 MiB v5e / 32 MiB v6e,v7x) bind long before physical VMEM.
    vmem_bytes = int(min(max(32 * 1024 * 1024, 160 * n * n), 100 * 1024 * 1024))

    kernel = functools.partial(_my_loss_kernel, n_real=n_real)
    out = pl.pallas_call(
        kernel,
        out_shape=jax.ShapeDtypeStruct((1, 1), jnp.float32),
        in_specs=[
            pl.BlockSpec(memory_space=pltpu.MemorySpace.VMEM),
            pl.BlockSpec(memory_space=pltpu.MemorySpace.VMEM),
            pl.BlockSpec(memory_space=pltpu.MemorySpace.VMEM),
            pl.BlockSpec(memory_space=pltpu.MemorySpace.VMEM),
        ],
        out_specs=pl.BlockSpec(memory_space=pltpu.MemorySpace.VMEM),
        compiler_params=pltpu.CompilerParams(vmem_limit_bytes=vmem_bytes),
    )(pred_row, pred_col, target_row, target_col)
    return out[0, 0]


my_loss = jax.jit(_my_loss)


if __name__ == "__main__":
    key = jax.random.PRNGKey(0)
    k1, k2 = jax.random.split(key)
    N = 128   # lane-aligned batch (review: pick N a multiple of 128)
    pred = jax.random.normal(k1, (N, 3), dtype=jnp.float32)
    target = jax.random.normal(k2, (N, 3), dtype=jnp.float32)

    loss = my_loss(pred, target)
    jax.block_until_ready(loss)
    assert bool(jnp.isfinite(loss)), "loss is not finite"
    print("KERNEL_OK")
</pallas_src>

<mosaic_0001>
module attributes {stable_mosaic.version = 11 : i64} {
  func.func @_my_loss_kernel(%arg0: memref<3x1x128xf32, #tpu.memory_space<vmem>>, %arg1: memref<3x128x1xf32, #tpu.memory_space<vmem>>, %arg2: memref<3x1x128xf32, #tpu.memory_space<vmem>>, %arg3: memref<3x128x1xf32, #tpu.memory_space<vmem>>, %arg4: memref<1x1xf32, #tpu.memory_space<vmem>>) attributes {dimension_semantics = [], scalar_prefetch = 0 : i64, scratch_operands = 0 : i64, tpu.core_type = #tpu.core_type<tc>} {
    %c0 = arith.constant 0 : index
    %c0_0 = arith.constant 0 : index
    %c0_1 = arith.constant 0 : index
    %0 = vector.load %arg0[%c0, %c0_0, %c0_1] : memref<3x1x128xf32, #tpu.memory_space<vmem>>, vector<3x1x128xf32>
    %c0_2 = arith.constant 0 : index
    %c0_3 = arith.constant 0 : index
    %c0_4 = arith.constant 0 : index
    %1 = vector.load %arg1[%c0_2, %c0_3, %c0_4] : memref<3x128x1xf32, #tpu.memory_space<vmem>>, vector<3x128x1xf32>
    %c0_5 = arith.constant 0 : index
    %c0_6 = arith.constant 0 : index
    %c0_7 = arith.constant 0 : index
    %2 = vector.load %arg2[%c0_5, %c0_6, %c0_7] : memref<3x1x128xf32, #tpu.memory_space<vmem>>, vector<3x1x128xf32>
    %c0_8 = arith.constant 0 : index
    %c0_9 = arith.constant 0 : index
    %c0_10 = arith.constant 0 : index
    %3 = vector.load %arg3[%c0_8, %c0_9, %c0_10] : memref<3x128x1xf32, #tpu.memory_space<vmem>>, vector<3x128x1xf32>
    %4 = tpu.iota {dimensions = array<i32: 0>} : vector<128x128xi32>
    %5 = tpu.iota {dimensions = array<i32: 1>} : vector<128x128xi32>
    %6 = tpu.iota {dimensions = array<i32: 1>} : vector<1x128xi32>
    %7 = tpu.iota {dimensions = array<i32: 0>} : vector<128x1xi32>
    %8 = arith.sitofp %4 : vector<128x128xi32> to vector<128x128xf32>
    %9 = arith.sitofp %5 : vector<128x128xi32> to vector<128x128xf32>
    %10 = arith.cmpi sle, %5, %4 : vector<128x128xi32>
    %c128_i32 = arith.constant 128 : i32
    %11 = vector.broadcast %c128_i32 : i32 to vector<128x128xi32>
    %12 = arith.cmpi slt, %4, %11 : vector<128x128xi32>
    %13 = arith.andi %10, %12 : vector<128x128xi1>
    %c128_i32_11 = arith.constant 128 : i32
    %14 = vector.broadcast %c128_i32_11 : i32 to vector<1x128xi32>
    %15 = arith.cmpi slt, %6, %14 : vector<1x128xi32>
    %c128_i32_12 = arith.constant 128 : i32
    %16 = vector.broadcast %c128_i32_12 : i32 to vector<128x1xi32>
    %17 = arith.cmpi slt, %7, %16 : vector<128x1xi32>
    %18 = arith.subf %8, %9 : vector<128x128xf32>
    %cst = arith.constant 1.000000e+00 : f32
    %19 = vector.broadcast %cst : f32 to vector<128x128xf32>
    %20 = arith.addf %18, %19 : vector<128x128xf32>
    %cst_13 = arith.constant 2.560000e+02 : f32
    %21 = vector.broadcast %cst_13 : f32 to vector<128x128xf32>
    %22 = arith.subf %21, %8 : vector<128x128xf32>
    %23 = arith.subf %22, %9 : vector<128x128xf32>
    %24 = arith.mulf %20, %23 : vector<128x128xf32>
    %cst_14 = arith.constant 5.000000e-01 : f32
    %25 = vector.broadcast %cst_14 : f32 to vector<128x128xf32>
    %26 = arith.mulf %24, %25 : vector<128x128xf32>
    %cst_15 = arith.constant 1.000000e+00 : f32
    %27 = vector.broadcast %cst_15 : f32 to vector<128x128xf32>
    %28 = arith.select %13, %26, %27 : vector<128x128xi1>, vector<128x128xf32>
    %cst_16 = arith.constant 1.000000e+00 : f32
    %29 = vector.broadcast %cst_16 : f32 to vector<128x128xf32>
    %30 = arith.divf %29, %28 : vector<128x128xf32>
    %cst_17 = arith.constant 1.000000e+00 : f32
    %31 = vector.broadcast %cst_17 : f32 to vector<3x1x128xf32>
    %32 = arith.mulf %0, %31 : vector<3x1x128xf32>
    %cst_18 = arith.constant -1.000000e+30 : f32
    %33 = vector.shape_cast %15 : vector<1x128xi1> to vector<1x1x128xi1>
    %34 = vector.broadcast %33 : vector<1x1x128xi1> to vector<3x1x128xi1>
    %35 = vector.broadcast %cst_18 : f32 to vector<3x1x128xf32>
    %36 = arith.select %34, %32, %35 : vector<3x1x128xi1>, vector<3x1x128xf32>
    %cst_19 = arith.constant 1.000000e+00 : f32
    %37 = vector.broadcast %cst_19 : f32 to vector<3x128x1xf32>
    %38 = arith.mulf %1, %37 : vector<3x128x1xf32>
    %cst_20 = arith.constant -1.000000e+30 : f32
    %39 = vector.shape_cast %17 : vector<128x1xi1> to vector<1x128x1xi1>
    %40 = vector.broadcast %39 : vector<1x128x1xi1> to vector<3x128x1xi1>
    %41 = vector.broadcast %cst_20 : f32 to vector<3x128x1xf32>
    %42 = arith.select %40, %38, %41 : vector<3x128x1xi1>, vector<3x128x1xf32>
    %43 = vector.broadcast %36 : vector<3x1x128xf32> to vector<3x128x128xf32>
    %44 = vector.broadcast %42 : vector<3x128x1xf32> to vector<3x128x128xf32>
    %45 = arith.cmpf ogt, %43, %44 : vector<3x128x128xf32>
    %46 = vector.broadcast %36 : vector<3x1x128xf32> to vector<3x128x128xf32>
    %47 = vector.broadcast %42 : vector<3x128x1xf32> to vector<3x128x128xf32>
    %48 = arith.cmpf oeq, %46, %47 : vector<3x128x128xf32>
    %49 = arith.cmpi slt, %5, %4 : vector<128x128xi32>
    %50 = vector.shape_cast %49 : vector<128x128xi1> to vector<1x128x128xi1>
    %51 = vector.broadcast %50 : vector<1x128x128xi1> to vector<3x128x128xi1>
    %52 = arith.andi %48, %51 : vector<3x128x128xi1>
    %53 = arith.ori %45, %52 : vector<3x128x128xi1>
    %54 = arith.extui %53 : vector<3x128x128xi1> to vector<3x128x128xi32>
    %55 = arith.sitofp %54 : vector<3x128x128xi32> to vector<3x128x128xf32>
    %cst_21 = arith.constant dense<0.000000e+00> : vector<3x128xf32>
    %56 = vector.multi_reduction <add>, %55, %cst_21 [2] : vector<3x128x128xf32> to vector<3x128xf32>
    %57 = vector.shape_cast %56 : vector<3x128xf32> to vector<3x128x1xf32>
    %58 = vector.shape_cast %9 : vector<128x128xf32> to vector<1x128x128xf32>
    %59 = vector.broadcast %57 : vector<3x128x1xf32> to vector<3x128x128xf32>
    %60 = vector.broadcast %58 : vector<1x128x128xf32> to vector<3x128x128xf32>
    %61 = arith.cmpf oeq, %59, %60 : vector<3x128x128xf32>
    %62 = arith.extui %61 : vector<3x128x128xi1> to vector<3x128x128xi32>
    %63 = arith.sitofp %62 : vector<3x128x128xi32> to vector<3x128x128xf32>
    %64 = vector.broadcast %42 : vector<3x128x1xf32> to vector<3x128x128xf32>
    %65 = arith.mulf %63, %64 : vector<3x128x128xf32>
    %cst_22 = arith.constant dense<0.000000e+00> : vector<3x128xf32>
    %66 = vector.multi_reduction <add>, %65, %cst_22 [1] : vector<3x128x128xf32> to vector<3x128xf32>
    %67 = vector.shape_cast %66 : vector<3x128xf32> to vector<3x1x128xf32>
    %cst_23 = arith.constant dense<0xFF800000> : vector<3x1xf32>
    %68 = vector.multi_reduction <maximumf>, %36, %cst_23 [2] : vector<3x1x128xf32> to vector<3x1xf32>
    %69 = vector.shape_cast %68 : vector<3x1xf32> to vector<3x1x1xf32>
    %70 = vector.broadcast %69 : vector<3x1x1xf32> to vector<3x1x128xf32>
    %71 = arith.subf %67, %70 : vector<3x1x128xf32>
    %72 = math.exp %71 : vector<3x1x128xf32>
    %cst_24 = arith.constant 0.000000e+00 : f32
    %73 = vector.shape_cast %10 : vector<128x128xi1> to vector<1x128x128xi1>
    %74 = vector.broadcast %73 : vector<1x128x128xi1> to vector<3x128x128xi1>
    %75 = vector.shape_cast %72 : vector<3x1x128xf32> to vector<3x1x128xf32>
    %76 = vector.broadcast %75 : vector<3x1x128xf32> to vector<3x128x128xf32>
    %77 = vector.broadcast %cst_24 : f32 to vector<3x128x128xf32>
    %78 = arith.select %74, %76, %77 : vector<3x128x128xi1>, vector<3x128x128xf32>
    %c127_i32 = arith.constant 127 : i32
    %79 = tpu.dynamic_rotate %78 by %c127_i32 dim 2 : vector<3x128x128xf32>, i32 -> vector<3x128x128xf32>
    %c127_i32_25 = arith.constant 127 : i32
    %80 = vector.broadcast %c127_i32_25 : i32 to vector<128x128xi32>
    %81 = arith.cmpi sge, %5, %80 : vector<128x128xi32>
    %cst_26 = arith.constant 0.000000e+00 : f32
    %82 = vector.shape_cast %81 : vector<128x128xi1> to vector<1x128x128xi1>
    %83 = vector.broadcast %82 : vector<1x128x128xi1> to vector<3x128x128xi1>
    %84 = vector.broadcast %cst_26 : f32 to vector<3x128x128xf32>
    %85 = arith.select %83, %84, %79 : vector<3x128x128xi1>, vector<3x128x128xf32>
    %86 = arith.addf %78, %85 : vector<3x128x128xf32>
    %c126_i32 = arith.constant 126 : i32
    %87 = tpu.dynamic_rotate %86 by %c126_i32 dim 2 : vector<3x128x128xf32>, i32 -> vector<3x128x128xf32>
    %c126_i32_27 = arith.constant 126 : i32
    %88 = vector.broadcast %c126_i32_27 : i32 to vector<128x128xi32>
    %89 = arith.cmpi sge, %5, %88 : vector<128x128xi32>
    %cst_28 = arith.constant 0.000000e+00 : f32
    %90 = vector.shape_cast %89 : vector<128x128xi1> to vector<1x128x128xi1>
    %91 = vector.broadcast %90 : vector<1x128x128xi1> to vector<3x128x128xi1>
    %92 = vector.broadcast %cst_28 : f32 to vector<3x128x128xf32>
    %93 = arith.select %91, %92, %87 : vector<3x128x128xi1>, vector<3x128x128xf32>
    %94 = arith.addf %86, %93 : vector<3x128x128xf32>
    %c124_i32 = arith.constant 124 : i32
    %95 = tpu.dynamic_rotate %94 by %c124_i32 dim 2 : vector<3x128x128xf32>, i32 -> vector<3x128x128xf32>
    %c124_i32_29 = arith.constant 124 : i32
    %96 = vector.broadcast %c124_i32_29 : i32 to vector<128x128xi32>
    %97 = arith.cmpi sge, %5, %96 : vector<128x128xi32>
    %cst_30 = arith.constant 0.000000e+00 : f32
    %98 = vector.shape_cast %97 : vector<128x128xi1> to vector<1x128x128xi1>
    %99 = vector.broadcast %98 : vector<1x128x128xi1> to vector<3x128x128xi1>
    %100 = vector.broadcast %cst_30 : f32 to vector<3x128x128xf32>
    %101 = arith.select %99, %100, %95 : vector<3x128x128xi1>, vector<3x128x128xf32>
    %102 = arith.addf %94, %101 : vector<3x128x128xf32>
    %c120_i32 = arith.constant 120 : i32
    %103 = tpu.dynamic_rotate %102 by %c120_i32 dim 2 : vector<3x128x128xf32>, i32 -> vector<3x128x128xf32>
    %c120_i32_31 = arith.constant 120 : i32
    %104 = vector.broadcast %c120_i32_31 : i32 to vector<128x128xi32>
    %105 = arith.cmpi sge, %5, %104 : vector<128x128xi32>
    %cst_32 = arith.constant 0.000000e+00 : f32
    %106 = vector.shape_cast %105 : vector<128x128xi1> to vector<1x128x128xi1>
    %107 = vector.broadcast %106 : vector<1x128x128xi1> to vector<3x128x128xi1>
    %108 = vector.broadcast %cst_32 : f32 to vector<3x128x128xf32>
    %109 = arith.select %107, %108, %103 : vector<3x128x128xi1>, vector<3x128x128xf32>
    %110 = arith.addf %102, %109 : vector<3x128x128xf32>
    %c112_i32 = arith.constant 112 : i32
    %111 = tpu.dynamic_rotate %110 by %c112_i32 dim 2 : vector<3x128x128xf32>, i32 -> vector<3x128x128xf32>
    %c112_i32_33 = arith.constant 112 : i32
    %112 = vector.broadcast %c112_i32_33 : i32 to vector<128x128xi32>
    %113 = arith.cmpi sge, %5, %112 : vector<128x128xi32>
    %cst_34 = arith.constant 0.000000e+00 : f32
    %114 = vector.shape_cast %113 : vector<128x128xi1> to vector<1x128x128xi1>
    %115 = vector.broadcast %114 : vector<1x128x128xi1> to vector<3x128x128xi1>
    %116 = vector.broadcast %cst_34 : f32 to vector<3x128x128xf32>
    %117 = arith.select %115, %116, %111 : vector<3x128x128xi1>, vector<3x128x128xf32>
    %118 = arith.addf %110, %117 : vector<3x128x128xf32>
    %c96_i32 = arith.constant 96 : i32
    %119 = tpu.dynamic_rotate %118 by %c96_i32 dim 2 : vector<3x128x128xf32>, i32 -> vector<3x128x128xf32>
    %c96_i32_35 = arith.constant 96 : i32
    %120 = vector.broadcast %c96_i32_35 : i32 to vector<128x128xi32>
    %121 = arith.cmpi sge, %5, %120 : vector<128x128xi32>
    %cst_36 = arith.constant 0.000000e+00 : f32
    %122 = vector.shape_cast %121 : vector<128x128xi1> to vector<1x128x128xi1>
    %123 = vector.broadcast %122 : vector<1x128x128xi1> to vector<3x128x128xi1>
    %124 = vector.broadcast %cst_36 : f32 to vector<3x128x128xf32>
    %125 = arith.select %123, %124, %119 : vector<3x128x128xi1>, vector<3x128x128xf32>
    %126 = arith.addf %118, %125 : vector<3x128x128xf32>
    %c64_i32 = arith.constant 64 : i32
    %127 = tpu.dynamic_rotate %126 by %c64_i32 dim 2 : vector<3x128x128xf32>, i32 -> vector<3x128x128xf32>
    %c64_i32_37 = arith.constant 64 : i32
    %128 = vector.broadcast %c64_i32_37 : i32 to vector<128x128xi32>
    %129 = arith.cmpi sge, %5, %128 : vector<128x128xi32>
    %cst_38 = arith.constant 0.000000e+00 : f32
    %130 = vector.shape_cast %129 : vector<128x128xi1> to vector<1x128x128xi1>
    %131 = vector.broadcast %130 : vector<1x128x128xi1> to vector<3x128x128xi1>
    %132 = vector.broadcast %cst_38 : f32 to vector<3x128x128xf32>
    %133 = arith.select %131, %132, %127 : vector<3x128x128xi1>, vector<3x128x128xf32>
    %134 = arith.addf %126, %133 : vector<3x128x128xf32>
    %135 = vector.shape_cast %30 : vector<128x128xf32> to vector<1x128x128xf32>
    %136 = vector.broadcast %135 : vector<1x128x128xf32> to vector<3x128x128xf32>
    %137 = arith.mulf %134, %136 : vector<3x128x128xf32>
    %cst_39 = arith.constant 9.99999991E-38 : f32
    %138 = vector.broadcast %cst_39 : f32 to vector<3x128x128xf32>
    %139 = arith.maximumf %137, %138 : vector<3x128x128xf32>
    %cst_40 = arith.constant 1.000000e+30 : f32
    %140 = vector.shape_cast %13 : vector<128x128xi1> to vector<1x128x128xi1>
    %141 = vector.broadcast %140 : vector<1x128x128xi1> to vector<3x128x128xi1>
    %142 = vector.broadcast %cst_40 : f32 to vector<3x128x128xf32>
    %143 = arith.select %141, %139, %142 : vector<3x128x128xi1>, vector<3x128x128xf32>
    %c1_i32 = arith.constant 1 : i32
    %144 = tpu.dynamic_rotate %143 by %c1_i32 dim 2 : vector<3x128x128xf32>, i32 -> vector<3x128x128xf32>
    %c1_i32_41 = arith.constant 1 : i32
    %145 = vector.broadcast %c1_i32_41 : i32 to vector<128x128xi32>
    %146 = arith.cmpi slt, %5, %145 : vector<128x128xi32>
    %cst_42 = arith.constant 1.000000e+30 : f32
    %147 = vector.shape_cast %146 : vector<128x128xi1> to vector<1x128x128xi1>
    %148 = vector.broadcast %147 : vector<1x128x128xi1> to vector<3x128x128xi1>
    %149 = vector.broadcast %cst_42 : f32 to vector<3x128x128xf32>
    %150 = arith.select %148, %149, %144 : vector<3x128x128xi1>, vector<3x128x128xf32>
    %151 = arith.minimumf %143, %150 : vector<3x128x128xf32>
    %c2_i32 = arith.constant 2 : i32
    %152 = tpu.dynamic_rotate %151 by %c2_i32 dim 2 : vector<3x128x128xf32>, i32 -> vector<3x128x128xf32>
    %c2_i32_43 = arith.constant 2 : i32
    %153 = vector.broadcast %c2_i32_43 : i32 to vector<128x128xi32>
    %154 = arith.cmpi slt, %5, %153 : vector<128x128xi32>
    %cst_44 = arith.constant 1.000000e+30 : f32
    %155 = vector.shape_cast %154 : vector<128x128xi1> to vector<1x128x128xi1>
    %156 = vector.broadcast %155 : vector<1x128x128xi1> to vector<3x128x128xi1>
    %157 = vector.broadcast %cst_44 : f32 to vector<3x128x128xf32>
    %158 = arith.select %156, %157, %152 : vector<3x128x128xi1>, vector<3x128x128xf32>
    %159 = arith.minimumf %151, %158 : vector<3x128x128xf32>
    %c4_i32 = arith.constant 4 : i32
    %160 = tpu.dynamic_rotate %159 by %c4_i32 dim 2 : vector<3x128x128xf32>, i32 -> vector<3x128x128xf32>
    %c4_i32_45 = arith.constant 4 : i32
    %161 = vector.broadcast %c4_i32_45 : i32 to vector<128x128xi32>
    %162 = arith.cmpi slt, %5, %161 : vector<128x128xi32>
    %cst_46 = arith.constant 1.000000e+30 : f32
    %163 = vector.shape_cast %162 : vector<128x128xi1> to vector<1x128x128xi1>
    %164 = vector.broadcast %163 : vector<1x128x128xi1> to vector<3x128x128xi1>
    %165 = vector.broadcast %cst_46 : f32 to vector<3x128x128xf32>
    %166 = arith.select %164, %165, %160 : vector<3x128x128xi1>, vector<3x128x128xf32>
    %167 = arith.minimumf %159, %166 : vector<3x128x128xf32>
    %c8_i32 = arith.constant 8 : i32
    %168 = tpu.dynamic_rotate %167 by %c8_i32 dim 2 : vector<3x128x128xf32>, i32 -> vector<3x128x128xf32>
    %c8_i32_47 = arith.constant 8 : i32
    %169 = vector.broadcast %c8_i32_47 : i32 to vector<128x128xi32>
    %170 = arith.cmpi slt, %5, %169 : vector<128x128xi32>
    %cst_48 = arith.constant 1.000000e+30 : f32
    %171 = vector.shape_cast %170 : vector<128x128xi1> to vector<1x128x128xi1>
    %172 = vector.broadcast %171 : vector<1x128x128xi1> to vector<3x128x128xi1>
    %173 = vector.broadcast %cst_48 : f32 to vector<3x128x128xf32>
    %174 = arith.select %172, %173, %168 : vector<3x128x128xi1>, vector<3x128x128xf32>
    %175 = arith.minimumf %167, %174 : vector<3x128x128xf32>
    %c16_i32 = arith.constant 16 : i32
    %176 = tpu.dynamic_rotate %175 by %c16_i32 dim 2 : vector<3x128x128xf32>, i32 -> vector<3x128x128xf32>
    %c16_i32_49 = arith.constant 16 : i32
    %177 = vector.broadcast %c16_i32_49 : i32 to vector<128x128xi32>
    %178 = arith.cmpi slt, %5, %177 : vector<128x128xi32>
    %cst_50 = arith.constant 1.000000e+30 : f32
    %179 = vector.shape_cast %178 : vector<128x128xi1> to vector<1x128x128xi1>
    %180 = vector.broadcast %179 : vector<1x128x128xi1> to vector<3x128x128xi1>
    %181 = vector.broadcast %cst_50 : f32 to vector<3x128x128xf32>
    %182 = arith.select %180, %181, %176 : vector<3x128x128xi1>, vector<3x128x128xf32>
    %183 = arith.minimumf %175, %182 : vector<3x128x128xf32>
    %c32_i32 = arith.constant 32 : i32
    %184 = tpu.dynamic_rotate %183 by %c32_i32 dim 2 : vector<3x128x128xf32>, i32 -> vector<3x128x128xf32>
    %c32_i32_51 = arith.constant 32 : i32
    %185 = vector.broadcast %c32_i32_51 : i32 to vector<128x128xi32>
    %186 = arith.cmpi slt, %5, %185 : vector<128x128xi32>
    %cst_52 = arith.constant 1.000000e+30 : f32
    %187 = vector.shape_cast %186 : vector<128x128xi1> to vector<1x128x128xi1>
    %188 = vector.broadcast %187 : vector<1x128x128xi1> to vector<3x128x128xi1>
    %189 = vector.broadcast %cst_52 : f32 to vector<3x128x128xf32>
    %190 = arith.select %188, %189, %184 : vector<3x128x128xi1>, vector<3x128x128xf32>
    %191 = arith.minimumf %183, %190 : vector<3x128x128xf32>
    %c64_i32_53 = arith.constant 64 : i32
    %192 = tpu.dynamic_rotate %191 by %c64_i32_53 dim 2 : vector<3x128x128xf32>, i32 -> vector<3x128x128xf32>
    %c64_i32_54 = arith.constant 64 : i32
    %193 = vector.broadcast %c64_i32_54 : i32 to vector<128x128xi32>
    %194 = arith.cmpi slt, %5, %193 : vector<128x128xi32>
    %cst_55 = arith.constant 1.000000e+30 : f32
    %195 = vector.shape_cast %194 : vector<128x128xi1> to vector<1x128x128xi1>
    %196 = vector.broadcast %195 : vector<1x128x128xi1> to vector<3x128x128xi1>
    %197 = vector.broadcast %cst_55 : f32 to vector<3x128x128xf32>
    %198 = arith.select %196, %197, %192 : vector<3x128x128xi1>, vector<3x128x128xf32>
    %199 = arith.minimumf %191, %198 : vector<3x128x128xf32>
    %cst_56 = arith.constant 0.000000e+00 : f32
    %200 = vector.shape_cast %13 : vector<128x128xi1> to vector<1x128x128xi1>
    %201 = vector.broadcast %200 : vector<1x128x128xi1> to vector<3x128x128xi1>
    %202 = vector.broadcast %cst_56 : f32 to vector<3x128x128xf32>
    %203 = arith.select %201, %199, %202 : vector<3x128x128xi1>, vector<3x128x128xf32>
    %cst_57 = arith.constant dense<0xFF800000> : vector<3x128xf32>
    %204 = vector.multi_reduction <maximumf>, %203, %cst_57 [1] : vector<3x128x128xf32> to vector<3x128xf32>
    %205 = vector.shape_cast %204 : vector<3x128xf32> to vector<3x1x128xf32>
    %206 = vector.broadcast %205 : vector<3x1x128xf32> to vector<3x128x128xf32>
    %207 = arith.mulf %63, %206 : vector<3x128x128xf32>
    %cst_58 = arith.constant dense<0.000000e+00> : vector<3x128xf32>
    %208 = vector.multi_reduction <add>, %207, %cst_58 [2] : vector<3x128x128xf32> to vector<3x128xf32>
    %209 = vector.shape_cast %208 : vector<3x128xf32> to vector<3x128x1xf32>
    %cst_59 = arith.constant 9.99999991E-38 : f32
    %210 = vector.broadcast %cst_59 : f32 to vector<3x128x1xf32>
    %211 = arith.maximumf %209, %210 : vector<3x128x1xf32>
    %212 = vector.broadcast %69 : vector<3x1x1xf32> to vector<3x128x1xf32>
    %213 = arith.subf %42, %212 : vector<3x128x1xf32>
    %214 = math.exp %213 : vector<3x128x1xf32>
    %215 = arith.divf %214, %211 : vector<3x128x1xf32>
    %cst_60 = arith.constant 7.812500e-03 : f32
    %216 = vector.broadcast %cst_60 : f32 to vector<3x128x1xf32>
    %217 = arith.mulf %215, %216 : vector<3x128x1xf32>
    %cst_61 = arith.constant dense<0.000000e+00> : vector<3x1xf32>
    %218 = vector.multi_reduction <add>, %217, %cst_61 [1] : vector<3x128x1xf32> to vector<3x1xf32>
    %219 = vector.shape_cast %218 : vector<3x1xf32> to vector<3x1x1xf32>
    %cst_62 = arith.constant 7.812500e-03 : f32
    %220 = vector.broadcast %cst_62 : f32 to vector<3x1x1xf32>
    %221 = arith.mulf %219, %220 : vector<3x1x1xf32>
    %222 = vector.broadcast %221 : vector<3x1x1xf32> to vector<3x128x1xf32>
    %223 = arith.subf %217, %222 : vector<3x128x1xf32>
    %cst_63 = arith.constant 0.000000e+00 : f32
    %224 = vector.shape_cast %17 : vector<128x1xi1> to vector<1x128x1xi1>
    %225 = vector.broadcast %224 : vector<1x128x1xi1> to vector<3x128x1xi1>
    %226 = vector.broadcast %cst_63 : f32 to vector<3x128x1xf32>
    %227 = arith.select %225, %223, %226 : vector<3x128x1xi1>, vector<3x128x1xf32>
    %cst_64 = arith.constant dense<0.000000e+00> : vector<3x1xf32>
    %228 = vector.multi_reduction <add>, %3, %cst_64 [1] : vector<3x128x1xf32> to vector<3x1xf32>
    %229 = vector.shape_cast %228 : vector<3x1xf32> to vector<3x1x1xf32>
    %cst_65 = arith.constant 7.812500e-03 : f32
    %230 = vector.broadcast %cst_65 : f32 to vector<3x1x1xf32>
    %231 = arith.mulf %229, %230 : vector<3x1x1xf32>
    %232 = vector.broadcast %231 : vector<3x1x1xf32> to vector<3x128x1xf32>
    %233 = arith.subf %3, %232 : vector<3x128x1xf32>
    %cst_66 = arith.constant 0.000000e+00 : f32
    %234 = vector.shape_cast %17 : vector<128x1xi1> to vector<1x128x1xi1>
    %235 = vector.broadcast %234 : vector<1x128x1xi1> to vector<3x128x1xi1>
    %236 = vector.broadcast %cst_66 : f32 to vector<3x128x1xf32>
    %237 = arith.select %235, %233, %236 : vector<3x128x1xi1>, vector<3x128x1xf32>
    %238 = arith.mulf %227, %237 : vector<3x128x1xf32>
    %cst_67 = arith.constant dense<0.000000e+00> : vector<3x1xf32>
    %239 = vector.multi_reduction <add>, %238, %cst_67 [1] : vector<3x128x1xf32> to vector<3x1xf32>
    %240 = vector.shape_cast %239 : vector<3x1xf32> to vector<3x1x1xf32>
    %241 = arith.mulf %227, %227 : vector<3x128x1xf32>
    %cst_68 = arith.constant dense<0.000000e+00> : vector<3x1xf32>
    %242 = vector.multi_reduction <add>, %241, %cst_68 [1] : vector<3x128x1xf32> to vector<3x1xf32>
    %243 = vector.shape_cast %242 : vector<3x1xf32> to vector<3x1x1xf32>
    %244 = arith.mulf %237, %237 : vector<3x128x1xf32>
    %cst_69 = arith.constant dense<0.000000e+00> : vector<3x1xf32>
    %245 = vector.multi_reduction <add>, %244, %cst_69 [1] : vector<3x128x1xf32> to vector<3x1xf32>
    %246 = vector.shape_cast %245 : vector<3x1xf32> to vector<3x1x1xf32>
    %cst_70 = arith.constant 9.99999991E-38 : f32
    %247 = vector.broadcast %cst_70 : f32 to vector<3x1x1xf32>
    %248 = arith.maximumf %243, %247 : vector<3x1x1xf32>
    %249 = math.rsqrt %248 : vector<3x1x1xf32>
    %250 = arith.mulf %240, %249 : vector<3x1x1xf32>
    %cst_71 = arith.constant 9.99999991E-38 : f32
    %251 = vector.broadcast %cst_71 : f32 to vector<3x1x1xf32>
    %252 = arith.maximumf %246, %251 : vector<3x1x1xf32>
    %253 = math.rsqrt %252 : vector<3x1x1xf32>
    %254 = arith.mulf %250, %253 : vector<3x1x1xf32>
    %255 = vector.extract_strided_slice %254 {offsets = [0, 0, 0], sizes = [1, 1, 1], strides = [1, 1, 1]} : vector<3x1x1xf32> to vector<1x1x1xf32>
    %256 = vector.shape_cast %255 : vector<1x1x1xf32> to vector<1x1xf32>
    %cst_72 = arith.constant 2.000000e-01 : f32
    %257 = vector.broadcast %cst_72 : f32 to vector<1x1xf32>
    %258 = arith.mulf %257, %256 : vector<1x1xf32>
    %259 = vector.extract_strided_slice %254 {offsets = [1, 0, 0], sizes = [1, 1, 1], strides = [1, 1, 1]} : vector<3x1x1xf32> to vector<1x1x1xf32>
    %260 = vector.shape_cast %259 : vector<1x1x1xf32> to vector<1x1xf32>
    %cst_73 = arith.constant 3.000000e-01 : f32
    %261 = vector.broadcast %cst_73 : f32 to vector<1x1xf32>
    %262 = arith.mulf %261, %260 : vector<1x1xf32>
    %263 = arith.addf %258, %262 : vector<1x1xf32>
    %264 = vector.extract_strided_slice %254 {offsets = [2, 0, 0], sizes = [1, 1, 1], strides = [1, 1, 1]} : vector<3x1x1xf32> to vector<1x1x1xf32>
    %265 = vector.shape_cast %264 : vector<1x1x1xf32> to vector<1x1xf32>
    %cst_74 = arith.constant 5.000000e-01 : f32
    %266 = vector.broadcast %cst_74 : f32 to vector<1x1xf32>
    %267 = arith.mulf %266, %265 : vector<1x1xf32>
    %268 = arith.addf %263, %267 : vector<1x1xf32>
    %cst_75 = arith.constant 1.000000e+00 : f32
    %269 = vector.broadcast %cst_75 : f32 to vector<1x1xf32>
    %270 = arith.subf %269, %268 : vector<1x1xf32>
    %271 = arith.subf %0, %2 : vector<3x1x128xf32>
    %272 = math.absf %271 : vector<3x1x128xf32>
    %cst_76 = arith.constant 1.000000e+00 : f32
    %273 = vector.broadcast %cst_76 : f32 to vector<3x1x128xf32>
    %274 = arith.cmpf olt, %272, %273 : vector<3x1x128xf32>
    %cst_77 = arith.constant 5.000000e-01 : f32
    %275 = vector.broadcast %cst_77 : f32 to vector<3x1x128xf32>
    %276 = arith.mulf %275, %271 : vector<3x1x128xf32>
    %277 = arith.mulf %276, %271 : vector<3x1x128xf32>
    %cst_78 = arith.constant 5.000000e-01 : f32
    %278 = vector.broadcast %cst_78 : f32 to vector<3x1x128xf32>
    %279 = arith.subf %272, %278 : vector<3x1x128xf32>
    %280 = arith.select %274, %277, %279 : vector<3x1x128xi1>, vector<3x1x128xf32>
    %cst_79 = arith.constant dense<0.000000e+00> : vector<3x1xf32>
    %281 = vector.multi_reduction <add>, %280, %cst_79 [2] : vector<3x1x128xf32> to vector<3x1xf32>
    %282 = vector.shape_cast %281 : vector<3x1xf32> to vector<3x1x1xf32>
    %283 = vector.extract_strided_slice %282 {offsets = [0, 0, 0], sizes = [1, 1, 1], strides = [1, 1, 1]} : vector<3x1x1xf32> to vector<1x1x1xf32>
    %284 = vector.shape_cast %283 : vector<1x1x1xf32> to vector<1x1xf32>
    %285 = vector.extract_strided_slice %282 {offsets = [1, 0, 0], sizes = [1, 1, 1], strides = [1, 1, 1]} : vector<3x1x1xf32> to vector<1x1x1xf32>
    %286 = vector.shape_cast %285 : vector<1x1x1xf32> to vector<1x1xf32>
    %287 = arith.addf %284, %286 : vector<1x1xf32>
    %288 = vector.extract_strided_slice %282 {offsets = [2, 0, 0], sizes = [1, 1, 1], strides = [1, 1, 1]} : vector<3x1x1xf32> to vector<1x1x1xf32>
    %289 = vector.shape_cast %288 : vector<1x1x1xf32> to vector<1x1xf32>
    %290 = arith.addf %287, %289 : vector<1x1xf32>
    %cst_80 = arith.constant 0.00260416674 : f32
    %291 = vector.broadcast %cst_80 : f32 to vector<1x1xf32>
    %292 = arith.mulf %290, %291 : vector<1x1xf32>
    %cst_81 = arith.constant 1.000000e+06 : f32
    %293 = vector.broadcast %cst_81 : f32 to vector<1x1xf32>
    %294 = arith.mulf %293, %270 : vector<1x1xf32>
    %295 = arith.mulf %294, %292 : vector<1x1xf32>
    %c0_82 = arith.constant 0 : index
    %c0_83 = arith.constant 0 : index
    %296 = vector.load %arg4[%c0_82, %c0_83] : memref<1x1xf32, #tpu.memory_space<vmem>>, vector<1x1xf32>
    tpu.vector_store %arg4[%c0_82, %c0_83], %295 {strides = array<i32>} : memref<1x1xf32, #tpu.memory_space<vmem>>, vector<1x1xf32>,
    return
  }
}

</mosaic_0001>

<llo_original>
// kernel: _my_loss.1
$region0: #{_my_loss.1}
  #allocation0 [shape = 'u32[]', space=smem, size = 0x4, offset = 0x4, fixed_abs, tag = 'smem constant byte address 0x4 - core index']
  #allocation1 [shape = 'u32[72,128]{1,0:T(1,128)}', space=vmem, size = 0x9000, scoped, tag = 'internal scratch']
  %s0 = inlined_call_operand.vmem [shape: f32[3,1,128], index: 0, kind: input, shape index: {}]
  %s1 = inlined_call_operand.vmem [shape: f32[3,128,1], index: 1, kind: input, shape index: {}]
  %s2 = inlined_call_operand.vmem [shape: f32[3,1,128], index: 2, kind: input, shape index: {}]
  %s3 = inlined_call_operand.vmem [shape: f32[3,128,1], index: 3, kind: input, shape index: {}]
  %s4 = inlined_call_operand.hbm [shape: f32[1,1], index: 4, kind: output, shape index: {}]
  %s5 = sld [smem:[#allocation0]]
  $region26: #{_my_loss.1} parent=0
    _
  %s7 = ssub.s32 1, %s5
  %s8 = scalar_select 0, %s7, %s5
  $region1: #{_my_loss.1} parent=0
    #allocation2 [shape = 'u8[512]{0}', space=vmem, size = 0x400, scoped, tag = 'output window, operand 0, single buffered']
    #allocation3 [shape = 's32[1]{0}', space=sflag, size = 0x4, scoped, tag = 'scoped memory for _my_loss.1']
    %9 = vsyncpa [#allocation3], 0
    // Predicated region
    $region2: #{_my_loss.1} parent=1 // pred_check
      _
    $region3: #{_my_loss.1} parent=1 // pred_check_branch
      %11 = sbr.rel (0) target = $region5
    $region4: #{_my_loss.1} parent=1 // pred_region
      _
    $region5: #{_my_loss.1} parent=1 // pred_fallthru
      _
    // Predicated region
    $region6: #{_my_loss.1} parent=1 // pred_check
      _
    $region7: #{_my_loss.1} parent=1 // pred_check_branch
      %13 = sbr.rel (0) target = $region9
    $region8: #{_my_loss.1} parent=1 // pred_region
      _
    $region9: #{_my_loss.1} parent=1 // pred_fallthru
      _
    // Predicated region
    $region10: #{_my_loss.1} parent=1 // pred_check
      _
    $region11: #{_my_loss.1} parent=1 // pred_check_branch
      %15 = sbr.rel (0) target = $region13
    $region12: #{_my_loss.1} parent=1 // pred_region
      _
    $region13: #{_my_loss.1} parent=1 // pred_fallthru
      _
    // Predicated region
    $region14: #{_my_loss.1} parent=1 // pred_check
      _
    $region15: #{_my_loss.1} parent=1 // pred_check_branch
      %17 = sbr.rel (0) target = $region17
    $region16: #{_my_loss.1} parent=1 // pred_region
      _
    $region17: #{_my_loss.1} parent=1 // pred_fallthru
      _
    %v18 = vld [vmem:[%s0] sm:$0x1]
    %v19 = vld [vmem:[%s0 + $0x1] sm:$0x1]
    %v20 = vld [vmem:[%s0 + $0x2] sm:$0x1]
    %v21 = vld [vmem:[%s1] sm:$0xff]
    %v22 = vld [vmem:[%s1 + $0x8] sm:$0xff]
    %v23 = vld [vmem:[%s1 + $0x10] sm:$0xff]
    %v24 = vld [vmem:[%s1 + $0x18] sm:$0xff]
    %v25 = vld [vmem:[%s1 + $0x20] sm:$0xff]
    %v26 = vld [vmem:[%s1 + $0x28] sm:$0xff]
    %v27 = vld [vmem:[%s1 + $0x30] sm:$0xff]
    %v28 = vld [vmem:[%s1 + $0x38] sm:$0xff]
    %v29 = vld [vmem:[%s1 + $0x40] sm:$0xff]
    %v30 = vld [vmem:[%s1 + $0x48] sm:$0xff]
    %v31 = vld [vmem:[%s1 + $0x50] sm:$0xff]
    %v32 = vld [vmem:[%s1 + $0x58] sm:$0xff]
    %v33 = vld [vmem:[%s1 + $0x60] sm:$0xff]
    %v34 = vld [vmem:[%s1 + $0x68] sm:$0xff]
    %v35 = vld [vmem:[%s1 + $0x70] sm:$0xff]
    %v36 = vld [vmem:[%s1 + $0x78] sm:$0xff]
    %v37 = vld [vmem:[%s1 + $0x80] sm:$0xff]
    %v38 = vld [vmem:[%s1 + $0x88] sm:$0xff]
    %v39 = vld [vmem:[%s1 + $0x90] sm:$0xff]
    %v40 = vld [vmem:[%s1 + $0x98] sm:$0xff]
    %v41 = vld [vmem:[%s1 + $0xa0] sm:$0xff]
    %v42 = vld [vmem:[%s1 + $0xa8] sm:$0xff]
    %v43 = vld [vmem:[%s1 + $0xb0] sm:$0xff]
    %v44 = vld [vmem:[%s1 + $0xb8] sm:$0xff]
    %v45 = vld [vmem:[%s1 + $0xc0] sm:$0xff]
    %v46 = vld [vmem:[%s1 + $0xc8] sm:$0xff]
    %v47 = vld [vmem:[%s1 + $0xd0] sm:$0xff]
    %v48 = vld [vmem:[%s1 + $0xd8] sm:$0xff]
    %v49 = vld [vmem:[%s1 + $0xe0] sm:$0xff]
    %v50 = vld [vmem:[%s1 + $0xe8] sm:$0xff]
    %v51 = vld [vmem:[%s1 + $0xf0] sm:$0xff]
    %v52 = vld [vmem:[%s1 + $0xf8] sm:$0xff]
    %v53 = vld [vmem:[%s1 + $0x100] sm:$0xff]
    %v54 = vld [vmem:[%s1 + $0x108] sm:$0xff]
    %v55 = vld [vmem:[%s1 + $0x110] sm:$0xff]
    %v56 = vld [vmem:[%s1 + $0x118] sm:$0xff]
    %v57 = vld [vmem:[%s1 + $0x120] sm:$0xff]
    %v58 = vld [vmem:[%s1 + $0x128] sm:$0xff]
    %v59 = vld [vmem:[%s1 + $0x130] sm:$0xff]
    %v60 = vld [vmem:[%s1 + $0x138] sm:$0xff]
    %v61 = vld [vmem:[%s1 + $0x140] sm:$0xff]
    %v62 = vld [vmem:[%s1 + $0x148] sm:$0xff]
    %v63 = vld [vmem:[%s1 + $0x150] sm:$0xff]
    %v64 = vld [vmem:[%s1 + $0x158] sm:$0xff]
    %v65 = vld [vmem:[%s1 + $0x160] sm:$0xff]
    %v66 = vld [vmem:[%s1 + $0x168] sm:$0xff]
    %v67 = vld [vmem:[%s1 + $0x170] sm:$0xff]
    %v68 = vld [vmem:[%s1 + $0x178] sm:$0xff]
    %v69 = vld [vmem:[%s2] sm:$0x1]
    %v70 = vld [vmem:[%s2 + $0x1] sm:$0x1]
    %v71 = vld [vmem:[%s2 + $0x2] sm:$0x1]
    %v72 = vld [vmem:[%s3] sm:$0xff]
    %v73 = vld [vmem:[%s3 + $0x8] sm:$0xff]
    %v74 = vld [vmem:[%s3 + $0x10] sm:$0xff]
    %v75 = vld [vmem:[%s3 + $0x18] sm:$0xff]
    %v76 = vld [vmem:[%s3 + $0x20] sm:$0xff]
    %v77 = vld [vmem:[%s3 + $0x28] sm:$0xff]
    %v78 = vld [vmem:[%s3 + $0x30] sm:$0xff]
    %v79 = vld [vmem:[%s3 + $0x38] sm:$0xff]
    %v80 = vld [vmem:[%s3 + $0x40] sm:$0xff]
    %v81 = vld [vmem:[%s3 + $0x48] sm:$0xff]
    %v82 = vld [vmem:[%s3 + $0x50] sm:$0xff]
    %v83 = vld [vmem:[%s3 + $0x58] sm:$0xff]
    %v84 = vld [vmem:[%s3 + $0x60] sm:$0xff]
    %v85 = vld [vmem:[%s3 + $0x68] sm:$0xff]
    %v86 = vld [vmem:[%s3 + $0x70] sm:$0xff]
    %v87 = vld [vmem:[%s3 + $0x78] sm:$0xff]
    %v88 = vld [vmem:[%s3 + $0x80] sm:$0xff]
    %v89 = vld [vmem:[%s3 + $0x88] sm:$0xff]
    %v90 = vld [vmem:[%s3 + $0x90] sm:$0xff]
    %v91 = vld [vmem:[%s3 + $0x98] sm:$0xff]
    %v92 = vld [vmem:[%s3 + $0xa0] sm:$0xff]
    %v93 = vld [vmem:[%s3 + $0xa8] sm:$0xff]
    %v94 = vld [vmem:[%s3 + $0xb0] sm:$0xff]
    %v95 = vld [vmem:[%s3 + $0xb8] sm:$0xff]
    %v96 = vld [vmem:[%s3 + $0xc0] sm:$0xff]
    %v97 = vld [vmem:[%s3 + $0xc8] sm:$0xff]
    %v98 = vld [vmem:[%s3 + $0xd0] sm:$0xff]
    %v99 = vld [vmem:[%s3 + $0xd8] sm:$0xff]
    %v100 = vld [vmem:[%s3 + $0xe0] sm:$0xff]
    %v101 = vld [vmem:[%s3 + $0xe8] sm:$0xff]
    %v102 = vld [vmem:[%s3 + $0xf0] sm:$0xff]
    %v103 = vld [vmem:[%s3 + $0xf8] sm:$0xff]
    %v104 = vld [vmem:[%s3 + $0x100] sm:$0xff]
    %v105 = vld [vmem:[%s3 + $0x108] sm:$0xff]
    %v106 = vld [vmem:[%s3 + $0x110] sm:$0xff]
    %v107 = vld [vmem:[%s3 + $0x118] sm:$0xff]
    %v108 = vld [vmem:[%s3 + $0x120] sm:$0xff]
    %v109 = vld [vmem:[%s3 + $0x128] sm:$0xff]
    %v110 = vld [vmem:[%s3 + $0x130] sm:$0xff]
    %v111 = vld [vmem:[%s3 + $0x138] sm:$0xff]
    %v112 = vld [vmem:[%s3 + $0x140] sm:$0xff]
    %v113 = vld [vmem:[%s3 + $0x148] sm:$0xff]
    %v114 = vld [vmem:[%s3 + $0x150] sm:$0xff]
    %v115 = vld [vmem:[%s3 + $0x158] sm:$0xff]
    %v116 = vld [vmem:[%s3 + $0x160] sm:$0xff]
    %v117 = vld [vmem:[%s3 + $0x168] sm:$0xff]
    %v118 = vld [vmem:[%s3 + $0x170] sm:$0xff]
    %v119 = vld [vmem:[%s3 + $0x178] sm:$0xff]
    %v120 = vlaneseq
    %v121 = vshrl.u32 %v120, 7
    %v122 = vadd.s32 %v121, 8
    %v123 = vadd.s32 %v121, 16
    %v124 = vadd.s32 %v121, 24
    %v125 = vadd.s32 %v121, 32
    %v126 = vadd.s32 %v121, 40
    %v127 = vadd.s32 %v121, 48
    %v128 = vadd.s32 %v121, 56
    %v129 = vadd.s32 %v121, 64
    %v130 = vadd.s32 %v121, 72
    %v131 = vadd.s32 %v121, 80
    %v132 = vadd.s32 %v121, 88
    %v133 = vadd.s32 %v121, 96
    %v134 = vadd.s32 %v121, 104
    %v135 = vadd.s32 %v121, 112
    %v136 = vadd.s32 %v121, 120
    %v137 = vlaneseq
    %v138 = vand.u32 %v137, 127
    %v139 = vcvt.s32.f32 %v121
    %v140 = vcvt.s32.f32 %v122
    %v141 = vcvt.s32.f32 %v123
    %v142 = vcvt.s32.f32 %v124
    %v143 = vcvt.s32.f32 %v125
    %v144 = vcvt.s32.f32 %v126
    %v145 = vcvt.s32.f32 %v127
    %v146 = vcvt.s32.f32 %v128
    %v147 = vcvt.s32.f32 %v129
    %v148 = vcvt.s32.f32 %v130
    %v149 = vcvt.s32.f32 %v131
    %v150 = vcvt.s32.f32 %v132
    %v151 = vcvt.s32.f32 %v133
    %v152 = vcvt.s32.f32 %v134
    %v153 = vcvt.s32.f32 %v135
    %v154 = vcvt.s32.f32 %v136
    %v155 = vcvt.s32.f32 %v138
    %vm156 = vcmp.le.s32.totalorder %v138, %v121
    %vm157 = vcmp.le.s32.totalorder %v138, %v122
    %vm158 = vcmp.le.s32.totalorder %v138, %v123
    %vm159 = vcmp.le.s32.totalorder %v138, %v124
    %vm160 = vcmp.le.s32.totalorder %v138, %v125
    %vm161 = vcmp.le.s32.totalorder %v138, %v126
    %vm162 = vcmp.le.s32.totalorder %v138, %v127
    %vm163 = vcmp.le.s32.totalorder %v138, %v128
    %vm164 = vcmp.le.s32.totalorder %v138, %v129
    %vm165 = vcmp.le.s32.totalorder %v138, %v130
    %vm166 = vcmp.le.s32.totalorder %v138, %v131
    %vm167 = vcmp.le.s32.totalorder %v138, %v132
    %vm168 = vcmp.le.s32.totalorder %v138, %v133
    %vm169 = vcmp.le.s32.totalorder %v138, %v134
    %vm170 = vcmp.le.s32.totalorder %v138, %v135
    %vm171 = vcmp.le.s32.totalorder %v138, %v136
    %vm172 = vcmp.lt.s32.totalorder %v121, 128
    %vm173 = vcmp.lt.s32.totalorder %v122, 128
    %vm174 = vcmp.lt.s32.totalorder %v123, 128
    %vm175 = vcmp.lt.s32.totalorder %v124, 128
    %vm176 = vcmp.lt.s32.totalorder %v125, 128
    %vm177 = vcmp.lt.s32.totalorder %v126, 128
    %vm178 = vcmp.lt.s32.totalorder %v127, 128
    %vm179 = vcmp.lt.s32.totalorder %v128, 128
    %vm180 = vcmp.lt.s32.totalorder %v129, 128
    %vm181 = vcmp.lt.s32.totalorder %v130, 128
    %vm182 = vcmp.lt.s32.totalorder %v131, 128
    %vm183 = vcmp.lt.s32.totalorder %v132, 128
    %vm184 = vcmp.lt.s32.totalorder %v133, 128
    %vm185 = vcmp.lt.s32.totalorder %v134, 128
    %vm186 = vcmp.lt.s32.totalorder %v135, 128
    %vm187 = vcmp.lt.s32.totalorder %v136, 128
    %vm188 = vmand %vm156, %vm172
    %vm189 = vmand %vm157, %vm173
    %vm190 = vmand %vm158, %vm174
    %vm191 = vmand %vm159, %vm175
    %vm192 = vmand %vm160, %vm176
    %vm193 = vmand %vm161, %vm177
    %vm194 = vmand %vm162, %vm178
    %vm195 = vmand %vm163, %vm179
    %vm196 = vmand %vm164, %vm180
    %vm197 = vmand %vm165, %vm181
    %vm198 = vmand %vm166, %vm182
    %vm199 = vmand %vm167, %vm183
    %vm200 = vmand %vm168, %vm184
    %vm201 = vmand %vm169, %vm185
    %vm202 = vmand %vm170, %vm186
    %vm203 = vmand %vm171, %vm187
    %vm204 = vcmp.lt.s32.totalorder %v138, 128
    %v205 = vsub.f32 %v139, %v155
    %v206 = vsub.f32 %v140, %v155
    %v207 = vsub.f32 %v141, %v155
    %v208 = vsub.f32 %v142, %v155
    %v209 = vsub.f32 %v143, %v155
    %v210 = vsub.f32 %v144, %v155
    %v211 = vsub.f32 %v145, %v155
    %v212 = vsub.f32 %v146, %v155
    %v213 = vsub.f32 %v147, %v155
    %v214 = vsub.f32 %v148, %v155
    %v215 = vsub.f32 %v149, %v155
    %v216 = vsub.f32 %v150, %v155
    %v217 = vsub.f32 %v151, %v155
    %v218 = vsub.f32 %v152, %v155
    %v219 = vsub.f32 %v153, %v155
    %v220 = vsub.f32 %v154, %v155
    %v221 = vadd.f32 %v205, 1.0
    %v222 = vadd.f32 %v206, 1.0
    %v223 = vadd.f32 %v207, 1.0
    %v224 = vadd.f32 %v208, 1.0
    %v225 = vadd.f32 %v209, 1.0
    %v226 = vadd.f32 %v210, 1.0
    %v227 = vadd.f32 %v211, 1.0
    %v228 = vadd.f32 %v212, 1.0
    %v229 = vadd.f32 %v213, 1.0
    %v230 = vadd.f32 %v214, 1.0
    %v231 = vadd.f32 %v215, 1.0
    %v232 = vadd.f32 %v216, 1.0
    %v233 = vadd.f32 %v217, 1.0
    %v234 = vadd.f32 %v218, 1.0
    %v235 = vadd.f32 %v219, 1.0
    %v236 = vadd.f32 %v220, 1.0
    %v237 = vsub.f32 256.0, %v139
    %v238 = vsub.f32 256.0, %v140
    %v239 = vsub.f32 256.0, %v141
    %v240 = vsub.f32 256.0, %v142
    %v241 = vsub.f32 256.0, %v143
    %v242 = vsub.f32 256.0, %v144
    %v243 = vsub.f32 256.0, %v145
    %v244 = vsub.f32 256.0, %v146
    %v245 = vsub.f32 256.0, %v147
    %v246 = vsub.f32 256.0, %v148
    %v247 = vsub.f32 256.0, %v149
    %v248 = vsub.f32 256.0, %v150
    %v249 = vsub.f32 256.0, %v151
    %v250 = vsub.f32 256.0, %v152
    %v251 = vsub.f32 256.0, %v153
    %v252 = vsub.f32 256.0, %v154
    %v253 = vsub.f32 %v237, %v155
    %v254 = vsub.f32 %v238, %v155
    %v255 = vsub.f32 %v239, %v155
    %v256 = vsub.f32 %v240, %v155
    %v257 = vsub.f32 %v241, %v155
    %v258 = vsub.f32 %v242, %v155
    %v259 = vsub.f32 %v243, %v155
    %v260 = vsub.f32 %v244, %v155
    %v261 = vsub.f32 %v245, %v155
    %v262 = vsub.f32 %v246, %v155
    %v263 = vsub.f32 %v247, %v155
    %v264 = vsub.f32 %v248, %v155
    %v265 = vsub.f32 %v249, %v155
    %v266 = vsub.f32 %v250, %v155
    %v267 = vsub.f32 %v251, %v155
    %v268 = vsub.f32 %v252, %v155
    %v269 = vmul.f32 %v221, %v253
    %v270 = vmul.f32 %v222, %v254
    %v271 = vmul.f32 %v223, %v255
    %v272 = vmul.f32 %v224, %v256
    %v273 = vmul.f32 %v225, %v257
    %v274 = vmul.f32 %v226, %v258
    %v275 = vmul.f32 %v227, %v259
    %v276 = vmul.f32 %v228, %v260
    %v277 = vmul.f32 %v229, %v261
    %v278 = vmul.f32 %v230, %v262
    %v279 = vmul.f32 %v231, %v263
    %v280 = vmul.f32 %v232, %v264
    %v281 = vmul.f32 %v233, %v265
    %v282 = vmul.f32 %v234, %v266
    %v283 = vmul.f32 %v235, %v267
    %v284 = vmul.f32 %v236, %v268
    %v285 = vmul.f32 %v269, 0.5
    %v286 = vmul.f32 %v270, 0.5
    %v287 = vmul.f32 %v271, 0.5
    %v288 = vmul.f32 %v272, 0.5
    %v289 = vmul.f32 %v273, 0.5
    %v290 = vmul.f32 %v274, 0.5
    %v291 = vmul.f32 %v275, 0.5
    %v292 = vmul.f32 %v276, 0.5
    %v293 = vmul.f32 %v277, 0.5
    %v294 = vmul.f32 %v278, 0.5
    %v295 = vmul.f32 %v279, 0.5
    %v296 = vmul.f32 %v280, 0.5
    %v297 = vmul.f32 %v281, 0.5
    %v298 = vmul.f32 %v282, 0.5
    %v299 = vmul.f32 %v283, 0.5
    %v300 = vmul.f32 %v284, 0.5
    %v301 = vsel %vm188, %v285, 1.0
    %v302 = vsel %vm189, %v286, 1.0
    %v303 = vsel %vm190, %v287, 1.0
    %v304 = vsel %vm191, %v288, 1.0
    %v305 = vsel %vm192, %v289, 1.0
    %v306 = vsel %vm193, %v290, 1.0
    %v307 = vsel %vm194, %v291, 1.0
    %v308 = vsel %vm195, %v292, 1.0
    %v309 = vsel %vm196, %v293, 1.0
    %v310 = vsel %vm197, %v294, 1.0
    %v311 = vsel %vm198, %v295, 1.0
    %v312 = vsel %vm199, %v296, 1.0
    %v313 = vsel %vm200, %v297, 1.0
    %v314 = vsel %vm201, %v298, 1.0
    %v315 = vsel %vm202, %v299, 1.0
    %v316 = vsel %vm203, %v300, 1.0
    %v317 = vrcp.pop %v301
    %v318 = vmul.f32 %v301, %v317
    %v319 = vsub.f32 1.0, %v318
    %v320 = vmul.f32 %v317, %v319
    %v321 = vadd.f32 %v317, %v320
    %vm322 = vweird.f32 %v301
    %vm323 = vweird.f32 %v317
    %vm324 = vmor %vm322, %vm323
    %v325 = vsel %vm324, %v317, %v321
    %v326 = vand.u32 2147483647, %v301
    %vm327 = vcmp.eq.f32.partialorder %v326, 8.507059e+37
    %v328 = vand.u32 %v301, 2147483648
    %v329 = vor.u32 1.1754944e-38, %v328
    %v330 = vsel %vm327, %v329, %v325
    %v331 = vmul.f32 1.0, %v330
    %v332 = vrcp.pop %v302
    %v333 = vmul.f32 %v302, %v332
    %v334 = vsub.f32 1.0, %v333
    %v335 = vmul.f32 %v332, %v334
    %v336 = vadd.f32 %v332, %v335
    %vm337 = vweird.f32 %v302
    %vm338 = vweird.f32 %v332
    %vm339 = vmor %vm337, %vm338
    %v340 = vsel %vm339, %v332, %v336
    %v341 = vand.u32 2147483647, %v302
    %vm342 = vcmp.eq.f32.partialorder %v341, 8.507059e+37
    %v343 = vand.u32 %v302, 2147483648
    %v344 = vor.u32 1.1754944e-38, %v343
    %v345 = vsel %vm342, %v344, %v340
    %v346 = vmul.f32 1.0, %v345
    %v347 = vrcp.pop %v303
    %v348 = vmul.f32 %v303, %v347
    %v349 = vsub.f32 1.0, %v348
    %v350 = vmul.f32 %v347, %v349
    %v351 = vadd.f32 %v347, %v350
    %vm352 = vweird.f32 %v303
    %vm353 = vweird.f32 %v347
    %vm354 = vmor %vm352, %vm353
    %v355 = vsel %vm354, %v347, %v351
    %v356 = vand.u32 2147483647, %v303
    %vm357 = vcmp.eq.f32.partialorder %v356, 8.507059e+37
    %v358 = vand.u32 %v303, 2147483648
    %v359 = vor.u32 1.1754944e-38, %v358
    %v360 = vsel %vm357, %v359, %v355
    %v361 = vmul.f32 1.0, %v360
    %v362 = vrcp.pop %v304
    %v363 = vmul.f32 %v304, %v362
    %v364 = vsub.f32 1.0, %v363
    %v365 = vmul.f32 %v362, %v364
    %v366 = vadd.f32 %v362, %v365
    %vm367 = vweird.f32 %v304
    %vm368 = vweird.f32 %v362
    %vm369 = vmor %vm367, %vm368
    %v370 = vsel %vm369, %v362, %v366
    %v371 = vand.u32 2147483647, %v304
    %vm372 = vcmp.eq.f32.partialorder %v371, 8.507059e+37
    %v373 = vand.u32 %v304, 2147483648
    %v374 = vor.u32 1.1754944e-38, %v373
    %v375 = vsel %vm372, %v374, %v370
    %v376 = vmul.f32 1.0, %v375
    %v377 = vrcp.pop %v305
    %v378 = vmul.f32 %v305, %v377
    %v379 = vsub.f32 1.0, %v378
    %v380 = vmul.f32 %v377, %v379
    %v381 = vadd.f32 %v377, %v380
    %vm382 = vweird.f32 %v305
    %vm383 = vweird.f32 %v377
    %vm384 = vmor %vm382, %vm383
    %v385 = vsel %vm384, %v377, %v381
    %v386 = vand.u32 2147483647, %v305
    %vm387 = vcmp.eq.f32.partialorder %v386, 8.507059e+37
    %v388 = vand.u32 %v305, 2147483648
    %v389 = vor.u32 1.1754944e-38, %v388
    %v390 = vsel %vm387, %v389, %v385
    %v391 = vmul.f32 1.0, %v390
    %v392 = vrcp.pop %v306
    %v393 = vmul.f32 %v306, %v392
    %v394 = vsub.f32 1.0, %v393
    %v395 = vmul.f32 %v392, %v394
    %v396 = vadd.f32 %v392, %v395
    %vm397 = vweird.f32 %v306
    %vm398 = vweird.f32 %v392
    %vm399 = vmor %vm397, %vm398
    %v400 = vsel %vm399, %v392, %v396
    %v401 = vand.u32 2147483647, %v306
    %vm402 = vcmp.eq.f32.partialorder %v401, 8.507059e+37
    %v403 = vand.u32 %v306, 2147483648
    %v404 = vor.u32 1.1754944e-38, %v403
    %v405 = vsel %vm402, %v404, %v400
    %v406 = vmul.f32 1.0, %v405
    %v407 = vrcp.pop %v307
    %v408 = vmul.f32 %v307, %v407
    %v409 = vsub.f32 1.0, %v408
    %v410 = vmul.f32 %v407, %v409
    %v411 = vadd.f32 %v407, %v410
    %vm412 = vweird.f32 %v307
    %vm413 = vweird.f32 %v407
    %vm414 = vmor %vm412, %vm413
    %v415 = vsel %vm414, %v407, %v411
    %v416 = vand.u32 2147483647, %v307
    %vm417 = vcmp.eq.f32.partialorder %v416, 8.507059e+37
    %v418 = vand.u32 %v307, 2147483648
    %v419 = vor.u32 1.1754944e-38, %v418
    %v420 = vsel %vm417, %v419, %v415
    %v421 = vmul.f32 1.0, %v420
    %v422 = vrcp.pop %v308
    %v423 = vmul.f32 %v308, %v422
    %v424 = vsub.f32 1.0, %v423
    %v425 = vmul.f32 %v422, %v424
    %v426 = vadd.f32 %v422, %v425
    %vm427 = vweird.f32 %v308
    %vm428 = vweird.f32 %v422
    %vm429 = vmor %vm427, %vm428
    %v430 = vsel %vm429, %v422, %v426
    %v431 = vand.u32 2147483647, %v308
    %vm432 = vcmp.eq.f32.partialorder %v431, 8.507059e+37
    %v433 = vand.u32 %v308, 2147483648
    %v434 = vor.u32 1.1754944e-38, %v433
    %v435 = vsel %vm432, %v434, %v430
    %v436 = vmul.f32 1.0, %v435
    %v437 = vrcp.pop %v309
    %v438 = vmul.f32 %v309, %v437
    %v439 = vsub.f32 1.0, %v438
    %v440 = vmul.f32 %v437, %v439
    %v441 = vadd.f32 %v437, %v440
    %vm442 = vweird.f32 %v309
    %vm443 = vweird.f32 %v437
    %vm444 = vmor %vm442, %vm443
    %v445 = vsel %vm444, %v437, %v441
    %v446 = vand.u32 2147483647, %v309
    %vm447 = vcmp.eq.f32.partialorder %v446, 8.507059e+37
    %v448 = vand.u32 %v309, 2147483648
    %v449 = vor.u32 1.1754944e-38, %v448
    %v450 = vsel %vm447, %v449, %v445
    %v451 = vmul.f32 1.0, %v450
    %v452 = vrcp.pop %v310
    %v453 = vmul.f32 %v310, %v452
    %v454 = vsub.f32 1.0, %v453
    %v455 = vmul.f32 %v452, %v454
    %v456 = vadd.f32 %v452, %v455
    %vm457 = vweird.f32 %v310
    %vm458 = vweird.f32 %v452
    %vm459 = vmor %vm457, %vm458
    %v460 = vsel %vm459, %v452, %v456
    %v461 = vand.u32 2147483647, %v310
    %vm462 = vcmp.eq.f32.partialorder %v461, 8.507059e+37
    %v463 = vand.u32 %v310, 2147483648
    %v464 = vor.u32 1.1754944e-38, %v463
    %v465 = vsel %vm462, %v464, %v460
    %v466 = vmul.f32 1.0, %v465
    %v467 = vrcp.pop %v311
    %v468 = vmul.f32 %v311, %v467
    %v469 = vsub.f32 1.0, %v468
    %v470 = vmul.f32 %v467, %v469
    %v471 = vadd.f32 %v467, %v470
    %vm472 = vweird.f32 %v311
    %vm473 = vweird.f32 %v467
    %vm474 = vmor %vm472, %vm473
    %v475 = vsel %vm474, %v467, %v471
    %v476 = vand.u32 2147483647, %v311
    %vm477 = vcmp.eq.f32.partialorder %v476, 8.507059e+37
    %v478 = vand.u32 %v311, 2147483648
    %v479 = vor.u32 1.1754944e-38, %v478
    %v480 = vsel %vm477, %v479, %v475
    %v481 = vmul.f32 1.0, %v480
    %v482 = vrcp.pop %v312
    %v483 = vmul.f32 %v312, %v482
    %v484 = vsub.f32 1.0, %v483
    %v485 = vmul.f32 %v482, %v484
    %v486 = vadd.f32 %v482, %v485
    %vm487 = vweird.f32 %v312
    %vm488 = vweird.f32 %v482
    %vm489 = vmor %vm487, %vm488
    %v490 = vsel %vm489, %v482, %v486
    %v491 = vand.u32 2147483647, %v312
    %vm492 = vcmp.eq.f32.partialorder %v491, 8.507059e+37
    %v493 = vand.u32 %v312, 2147483648
    %v494 = vor.u32 1.1754944e-38, %v493
    %v495 = vsel %vm492, %v494, %v490
    %v496 = vmul.f32 1.0, %v495
    %v497 = vrcp.pop %v313
    %v498 = vmul.f32 %v313, %v497
    %v499 = vsub.f32 1.0, %v498
    %v500 = vmul.f32 %v497, %v499
    %v501 = vadd.f32 %v497, %v500
    %vm502 = vweird.f32 %v313
    %vm503 = vweird.f32 %v497
    %vm504 = vmor %vm502, %vm503
    %v505 = vsel %vm504, %v497, %v501
    %v506 = vand.u32 2147483647, %v313
    %vm507 = vcmp.eq.f32.partialorder %v506, 8.507059e+37
    %v508 = vand.u32 %v313, 2147483648
    %v509 = vor.u32 1.1754944e-38, %v508
    %v510 = vsel %vm507, %v509, %v505
    %v511 = vmul.f32 1.0, %v510
    %v512 = vrcp.pop %v314
    %v513 = vmul.f32 %v314, %v512
    %v514 = vsub.f32 1.0, %v513
    %v515 = vmul.f32 %v512, %v514
    %v516 = vadd.f32 %v512, %v515
    %vm517 = vweird.f32 %v314
    %vm518 = vweird.f32 %v512
    %vm519 = vmor %vm517, %vm518
    %v520 = vsel %vm519, %v512, %v516
    %v521 = vand.u32 2147483647, %v314
    %vm522 = vcmp.eq.f32.partialorder %v521, 8.507059e+37
    %v523 = vand.u32 %v314, 2147483648
    %v524 = vor.u32 1.1754944e-38, %v523
    %v525 = vsel %vm522, %v524, %v520
    %v526 = vmul.f32 1.0, %v525
    %v527 = vrcp.pop %v315
    %v528 = vmul.f32 %v315, %v527
    %v529 = vsub.f32 1.0, %v528
    %v530 = vmul.f32 %v527, %v529
    %v531 = vadd.f32 %v527, %v530
    %vm532 = vweird.f32 %v315
    %vm533 = vweird.f32 %v527
    %vm534 = vmor %vm532, %vm533
    %v535 = vsel %vm534, %v527, %v531
    %v536 = vand.u32 2147483647, %v315
    %vm537 = vcmp.eq.f32.partialorder %v536, 8.507059e+37
    %v538 = vand.u32 %v315, 2147483648
    %v539 = vor.u32 1.1754944e-38, %v538
    %v540 = vsel %vm537, %v539, %v535
    %v541 = vmul.f32 1.0, %v540
    %v542 = vrcp.pop %v316
    %v543 = vmul.f32 %v316, %v542
    %v544 = vsub.f32 1.0, %v543
    %v545 = vmul.f32 %v542, %v544
    %v546 = vadd.f32 %v542, %v545
    %vm547 = vweird.f32 %v316
    %vm548 = vweird.f32 %v542
    %vm549 = vmor %vm547, %vm548
    %v550 = vsel %vm549, %v542, %v546
    %v551 = vand.u32 2147483647, %v316
    %vm552 = vcmp.eq.f32.partialorder %v551, 8.507059e+37
    %v553 = vand.u32 %v316, 2147483648
    %v554 = vor.u32 1.1754944e-38, %v553
    %v555 = vsel %vm552, %v554, %v550
    %v556 = vmul.f32 1.0, %v555
    %v557 = vsel %vm204, 1, 0
    %vm558 = vcmp.eq.s32.totalorder %v557, 1
    %v559 = vsel %vm558, %v18, -1e+30
    %v560 = vsel %vm558, %v19, -1e+30
    %v561 = vsel %vm558, %v20, -1e+30
    %v562 = vsel %vm172, 1, 0
    %v563 = vsel %vm173, 1, 0
    %v564 = vsel %vm174, 1, 0
    %v565 = vsel %vm175, 1, 0
    %v566 = vsel %vm176, 1, 0
    %v567 = vsel %vm177, 1, 0
    %v568 = vsel %vm178, 1, 0
    %v569 = vsel %vm179, 1, 0
    %v570 = vsel %vm180, 1, 0
    %v571 = vsel %vm181, 1, 0
    %v572 = vsel %vm182, 1, 0
    %v573 = vsel %vm183, 1, 0
    %v574 = vsel %vm184, 1, 0
    %v575 = vsel %vm185, 1, 0
    %v576 = vsel %vm186, 1, 0
    %v577 = vsel %vm187, 1, 0
    %vm578 = vcmp.eq.s32.totalorder %v562, 1
    %vm579 = vcmp.eq.s32.totalorder %v563, 1
    %vm580 = vcmp.eq.s32.totalorder %v564, 1
    %vm581 = vcmp.eq.s32.totalorder %v565, 1
    %vm582 = vcmp.eq.s32.totalorder %v566, 1
    %vm583 = vcmp.eq.s32.totalorder %v567, 1
    %vm584 = vcmp.eq.s32.totalorder %v568, 1
    %vm585 = vcmp.eq.s32.totalorder %v569, 1
    %vm586 = vcmp.eq.s32.totalorder %v570, 1
    %vm587 = vcmp.eq.s32.totalorder %v571, 1
    %vm588 = vcmp.eq.s32.totalorder %v572, 1
    %vm589 = vcmp.eq.s32.totalorder %v573, 1
    %vm590 = vcmp.eq.s32.totalorder %v574, 1
    %vm591 = vcmp.eq.s32.totalorder %v575, 1
    %vm592 = vcmp.eq.s32.totalorder %v576, 1
    %vm593 = vcmp.eq.s32.totalorder %v577, 1
    %v594 = vsel %vm578, %v21, -1e+30
    %v595 = vsel %vm579, %v22, -1e+30
    %v596 = vsel %vm580, %v23, -1e+30
    %v597 = vsel %vm581, %v24, -1e+30
    %v598 = vsel %vm582, %v25, -1e+30
    %v599 = vsel %vm583, %v26, -1e+30
    %v600 = vsel %vm584, %v27, -1e+30
    %v601 = vsel %vm585, %v28, -1e+30
    %v602 = vsel %vm586, %v29, -1e+30
    %v603 = vsel %vm587, %v30, -1e+30
    %v604 = vsel %vm588, %v31, -1e+30
    %v605 = vsel %vm589, %v32, -1e+30
    %v606 = vsel %vm590, %v33, -1e+30
    %v607 = vsel %vm591, %v34, -1e+30
    %v608 = vsel %vm592, %v35, -1e+30
    %v609 = vsel %vm593, %v36, -1e+30
    %v610 = vsel %vm578, %v37, -1e+30
    %v611 = vsel %vm579, %v38, -1e+30
    %v612 = vsel %vm580, %v39, -1e+30
    %v613 = vsel %vm581, %v40, -1e+30
    %v614 = vsel %vm582, %v41, -1e+30
    %v615 = vsel %vm583, %v42, -1e+30
    %v616 = vsel %vm584, %v43, -1e+30
    %v617 = vsel %vm585, %v44, -1e+30
    %v618 = vsel %vm586, %v45, -1e+30
    %v619 = vsel %vm587, %v46, -1e+30
    %v620 = vsel %vm588, %v47, -1e+30
    %v621 = vsel %vm589, %v48, -1e+30
    %v622 = vsel %vm590, %v49, -1e+30
    %v623 = vsel %vm591, %v50, -1e+30
    %v624 = vsel %vm592, %v51, -1e+30
    %v625 = vsel %vm593, %v52, -1e+30
    %v626 = vsel %vm578, %v53, -1e+30
    %v627 = vsel %vm579, %v54, -1e+30
    %v628 = vsel %vm580, %v55, -1e+30
    %v629 = vsel %vm581, %v56, -1e+30
    %v630 = vsel %vm582, %v57, -1e+30
    %v631 = vsel %vm583, %v58, -1e+30
    %v632 = vsel %vm584, %v59, -1e+30
    %v633 = vsel %vm585, %v60, -1e+30
    %v634 = vsel %vm586, %v61, -1e+30
    %v635 = vsel %vm587, %v62, -1e+30
    %v636 = vsel %vm588, %v63, -1e+30
    %v637 = vsel %vm589, %v64, -1e+30
    %v638 = vsel %vm590, %v65, -1e+30
    %v639 = vsel %vm591, %v66, -1e+30
    %v640 = vsel %vm592, %v67, -1e+30
    %v641 = vsel %vm593, %v68, -1e+30
    %v642 = vperm.slane %v559, 0
    %v643 = vperm.slane %v560, 0
    %v644 = vperm.slane %v561, 0
    %646 = vset.pattern.permute.xlu0 0
    %647 = vperm.xlu0 %646, %v594
    %v648 = vpop.permute.xlu0 %647
    %651 = vset.pattern.permute.xlu0 0
    %652 = vperm.xlu0 %651, %v595
    %v653 = vpop.permute.xlu0 %652
    %656 = vset.pattern.permute.xlu0 0
    %657 = vperm.xlu0 %656, %v596
    %v658 = vpop.permute.xlu0 %657
    %661 = vset.pattern.permute.xlu0 0
    %662 = vperm.xlu0 %661, %v597
    %v663 = vpop.permute.xlu0 %662
    %666 = vset.pattern.permute.xlu0 0
    %667 = vperm.xlu0 %666, %v598
    %v668 = vpop.permute.xlu0 %667
    %671 = vset.pattern.permute.xlu0 0
    %672 = vperm.xlu0 %671, %v599
    %v673 = vpop.permute.xlu0 %672
    %676 = vset.pattern.permute.xlu0 0
    %677 = vperm.xlu0 %676, %v600
    %v678 = vpop.permute.xlu0 %677
    %681 = vset.pattern.permute.xlu0 0
    %682 = vperm.xlu0 %681, %v601
    %v683 = vpop.permute.xlu0 %682
    %686 = vset.pattern.permute.xlu0 0
    %687 = vperm.xlu0 %686, %v602
    %v688 = vpop.permute.xlu0 %687
    %691 = vset.pattern.permute.xlu0 0
    %692 = vperm.xlu0 %691, %v603
    %v693 = vpop.permute.xlu0 %692
    %696 = vset.pattern.permute.xlu0 0
    %697 = vperm.xlu0 %696, %v604
    %v698 = vpop.permute.xlu0 %697
    %701 = vset.pattern.permute.xlu0 0
    %702 = vperm.xlu0 %701, %v605
    %v703 = vpop.permute.xlu0 %702
    %706 = vset.pattern.permute.xlu0 0
    %707 = vperm.xlu0 %706, %v606
    %v708 = vpop.permute.xlu0 %707
    %711 = vset.pattern.permute.xlu0 0
    %712 = vperm.xlu0 %711, %v607
    %v713 = vpop.permute.xlu0 %712
    %716 = vset.pattern.permute.xlu0 0
    %717 = vperm.xlu0 %716, %v608
    %v718 = vpop.permute.xlu0 %717
    %721 = vset.pattern.permute.xlu0 0
    %722 = vperm.xlu0 %721, %v609
    %v723 = vpop.permute.xlu0 %722
    %726 = vset.pattern.permute.xlu0 0
    %727 = vperm.xlu0 %726, %v610
    %v728 = vpop.permute.xlu0 %727
    %731 = vset.pattern.permute.xlu0 0
    %732 = vperm.xlu0 %731, %v611
    %v733 = vpop.permute.xlu0 %732
    %736 = vset.pattern.permute.xlu0 0
    %737 = vperm.xlu0 %736, %v612
    %v738 = vpop.permute.xlu0 %737
    %741 = vset.pattern.permute.xlu0 0
    %742 = vperm.xlu0 %741, %v613
    %v743 = vpop.permute.xlu0 %742
    %746 = vset.pattern.permute.xlu0 0
    %747 = vperm.xlu0 %746, %v614
    %v748 = vpop.permute.xlu0 %747
    %751 = vset.pattern.permute.xlu0 0
    %752 = vperm.xlu0 %751, %v615
    %v753 = vpop.permute.xlu0 %752
    %756 = vset.pattern.permute.xlu0 0
    %757 = vperm.xlu0 %756, %v616
    %v758 = vpop.permute.xlu0 %757
    %761 = vset.pattern.permute.xlu0 0
    %762 = vperm.xlu0 %761, %v617
    %v763 = vpop.permute.xlu0 %762
    %766 = vset.pattern.permute.xlu0 0
    %767 = vperm.xlu0 %766, %v618
    %v768 = vpop.permute.xlu0 %767
    %771 = vset.pattern.permute.xlu0 0
    %772 = vperm.xlu0 %771, %v619
    %v773 = vpop.permute.xlu0 %772
    %776 = vset.pattern.permute.xlu0 0
    %777 = vperm.xlu0 %776, %v620
    %v778 = vpop.permute.xlu0 %777
    %781 = vset.pattern.permute.xlu0 0
    %782 = vperm.xlu0 %781, %v621
    %v783 = vpop.permute.xlu0 %782
    %786 = vset.pattern.permute.xlu0 0
    %787 = vperm.xlu0 %786, %v622
    %v788 = vpop.permute.xlu0 %787
    %791 = vset.pattern.permute.xlu0 0
    %792 = vperm.xlu0 %791, %v623
    %v793 = vpop.permute.xlu0 %792
    %796 = vset.pattern.permute.xlu0 0
    %797 = vperm.xlu0 %796, %v624
    %v798 = vpop.permute.xlu0 %797
    %801 = vset.pattern.permute.xlu0 0
    %802 = vperm.xlu0 %801, %v625
    %v803 = vpop.permute.xlu0 %802
    %806 = vset.pattern.permute.xlu0 0
    %807 = vperm.xlu0 %806, %v626
    %v808 = vpop.permute.xlu0 %807
    %811 = vset.pattern.permute.xlu0 0
    %812 = vperm.xlu0 %811, %v627
    %v813 = vpop.permute.xlu0 %812
    %816 = vset.pattern.permute.xlu0 0
    %817 = vperm.xlu0 %816, %v628
    %v818 = vpop.permute.xlu0 %817
    %821 = vset.pattern.permute.xlu0 0
    %822 = vperm.xlu0 %821, %v629
    %v823 = vpop.permute.xlu0 %822
    %826 = vset.pattern.permute.xlu0 0
    %827 = vperm.xlu0 %826, %v630
    %v828 = vpop.permute.xlu0 %827
    %831 = vset.pattern.permute.xlu0 0
    %832 = vperm.xlu0 %831, %v631
    %v833 = vpop.permute.xlu0 %832
    %836 = vset.pattern.permute.xlu0 0
    %837 = vperm.xlu0 %836, %v632
    %v838 = vpop.permute.xlu0 %837
    %841 = vset.pattern.permute.xlu0 0
    %842 = vperm.xlu0 %841, %v633
    %v843 = vpop.permute.xlu0 %842
    %846 = vset.pattern.permute.xlu0 0
    %847 = vperm.xlu0 %846, %v634
    %v848 = vpop.permute.xlu0 %847
    %851 = vset.pattern.permute.xlu0 0
    %852 = vperm.xlu0 %851, %v635
    %v853 = vpop.permute.xlu0 %852
    %856 = vset.pattern.permute.xlu0 0
    %857 = vperm.xlu0 %856, %v636
    %v858 = vpop.permute.xlu0 %857
    %861 = vset.pattern.permute.xlu0 0
    %862 = vperm.xlu0 %861, %v637
    %v863 = vpop.permute.xlu0 %862
    %866 = vset.pattern.permute.xlu0 0
    %867 = vperm.xlu0 %866, %v638
    %v868 = vpop.permute.xlu0 %867
    %871 = vset.pattern.permute.xlu0 0
    %872 = vperm.xlu0 %871, %v639
    %v873 = vpop.permute.xlu0 %872
    %876 = vset.pattern.permute.xlu0 0
    %877 = vperm.xlu0 %876, %v640
    %v878 = vpop.permute.xlu0 %877
    %881 = vset.pattern.permute.xlu0 0
    %882 = vperm.xlu0 %881, %v641
    %v883 = vpop.permute.xlu0 %882
    %vm885 = vcmp.gt.f32.partialorder %v642, %v648
    %vm886 = vcmp.gt.f32.partialorder %v642, %v653
    %vm887 = vcmp.gt.f32.partialorder %v642, %v658
    %vm888 = vcmp.gt.f32.partialorder %v642, %v663
    %vm889 = vcmp.gt.f32.partialorder %v642, %v668
    %vm890 = vcmp.gt.f32.partialorder %v642, %v673
    %vm891 = vcmp.gt.f32.partialorder %v642, %v678
    %vm892 = vcmp.gt.f32.partialorder %v642, %v683
    %vm893 = vcmp.gt.f32.partialorder %v642, %v688
    %vm894 = vcmp.gt.f32.partialorder %v642, %v693
    %vm895 = vcmp.gt.f32.partialorder %v642, %v698
    %vm896 = vcmp.gt.f32.partialorder %v642, %v703
    %vm897 = vcmp.gt.f32.partialorder %v642, %v708
    %vm898 = vcmp.gt.f32.partialorder %v642, %v713
    %vm899 = vcmp.gt.f32.partialorder %v642, %v718
    %vm900 = vcmp.gt.f32.partialorder %v642, %v723
    %vm901 = vcmp.gt.f32.partialorder %v643, %v728
    %vm902 = vcmp.gt.f32.partialorder %v643, %v733
    %vm903 = vcmp.gt.f32.partialorder %v643, %v738
    %vm904 = vcmp.gt.f32.partialorder %v643, %v743
    %vm905 = vcmp.gt.f32.partialorder %v643, %v748
    %vm906 = vcmp.gt.f32.partialorder %v643, %v753
    %vm907 = vcmp.gt.f32.partialorder %v643, %v758
    %vm908 = vcmp.gt.f32.partialorder %v643, %v763
    %vm909 = vcmp.gt.f32.partialorder %v643, %v768
    %vm910 = vcmp.gt.f32.partialorder %v643, %v773
    %vm911 = vcmp.gt.f32.partialorder %v643, %v778
    %vm912 = vcmp.gt.f32.partialorder %v643, %v783
    %vm913 = vcmp.gt.f32.partialorder %v643, %v788
    %vm914 = vcmp.gt.f32.partialorder %v643, %v793
    %vm915 = vcmp.gt.f32.partialorder %v643, %v798
    %vm916 = vcmp.gt.f32.partialorder %v643, %v803
    %vm917 = vcmp.gt.f32.partialorder %v644, %v808
    %vm918 = vcmp.gt.f32.partialorder %v644, %v813
    %vm919 = vcmp.gt.f32.partialorder %v644, %v818
    %vm920 = vcmp.gt.f32.partialorder %v644, %v823
    %vm921 = vcmp.gt.f32.partialorder %v644, %v828
    %vm922 = vcmp.gt.f32.partialorder %v644, %v833
    %vm923 = vcmp.gt.f32.partialorder %v644, %v838
    %vm924 = vcmp.gt.f32.partialorder %v644, %v843
    %vm925 = vcmp.gt.f32.partialorder %v644, %v848
    %vm926 = vcmp.gt.f32.partialorder %v644, %v853
    %vm927 = vcmp.gt.f32.partialorder %v644, %v858
    %vm928 = vcmp.gt.f32.partialorder %v644, %v863
    %vm929 = vcmp.gt.f32.partialorder %v644, %v868
    %vm930 = vcmp.gt.f32.partialorder %v644, %v873
    %vm931 = vcmp.gt.f32.partialorder %v644, %v878
    %vm932 = vcmp.gt.f32.partialorder %v644, %v883
    %vm933 = vcmp.eq.f32.partialorder %v642, %v648
    %vm934 = vcmp.eq.f32.partialorder %v642, %v653
    %vm935 = vcmp.eq.f32.partialorder %v642, %v658
    %vm936 = vcmp.eq.f32.partialorder %v642, %v663
    %vm937 = vcmp.eq.f32.partialorder %v642, %v668
    %vm938 = vcmp.eq.f32.partialorder %v642, %v673
    %vm939 = vcmp.eq.f32.partialorder %v642, %v678
    %vm940 = vcmp.eq.f32.partialorder %v642, %v683
    %vm941 = vcmp.eq.f32.partialorder %v642, %v688
    %vm942 = vcmp.eq.f32.partialorder %v642, %v693
    %vm943 = vcmp.eq.f32.partialorder %v642, %v698
    %vm944 = vcmp.eq.f32.partialorder %v642, %v703
    %vm945 = vcmp.eq.f32.partialorder %v642, %v708
    %vm946 = vcmp.eq.f32.partialorder %v642, %v713
    %vm947 = vcmp.eq.f32.partialorder %v642, %v718
    %vm948 = vcmp.eq.f32.partialorder %v642, %v723
    %vm949 = vcmp.eq.f32.partialorder %v643, %v728
    %vm950 = vcmp.eq.f32.partialorder %v643, %v733
    %vm951 = vcmp.eq.f32.partialorder %v643, %v738
    %vm952 = vcmp.eq.f32.partialorder %v643, %v743
    %vm953 = vcmp.eq.f32.partialorder %v643, %v748
    %vm954 = vcmp.eq.f32.partialorder %v643, %v753
    %vm955 = vcmp.eq.f32.partialorder %v643, %v758
    %vm956 = vcmp.eq.f32.partialorder %v643, %v763
    %vm957 = vcmp.eq.f32.partialorder %v643, %v768
    %vm958 = vcmp.eq.f32.partialorder %v643, %v773
    %vm959 = vcmp.eq.f32.partialorder %v643, %v778
    %vm960 = vcmp.eq.f32.partialorder %v643, %v783
    %vm961 = vcmp.eq.f32.partialorder %v643, %v788
    %vm962 = vcmp.eq.f32.partialorder %v643, %v793
    %vm963 = vcmp.eq.f32.partialorder %v643, %v798
    %vm964 = vcmp.eq.f32.partialorder %v643, %v803
    %vm965 = vcmp.eq.f32.partialorder %v644, %v808
    %vm966 = vcmp.eq.f32.partialorder %v644, %v813
    %vm967 = vcmp.eq.f32.partialorder %v644, %v818
    %vm968 = vcmp.eq.f32.partialorder %v644, %v823
    %vm969 = vcmp.eq.f32.partialorder %v644, %v828
    %vm970 = vcmp.eq.f32.partialorder %v644, %v833
    %vm971 = vcmp.eq.f32.partialorder %v644, %v838
    %vm972 = vcmp.eq.f32.partialorder %v644, %v843
    %vm973 = vcmp.eq.f32.partialorder %v644, %v848
    %vm974 = vcmp.eq.f32.partialorder %v644, %v853
    %vm975 = vcmp.eq.f32.partialorder %v644, %v858
    %vm976 = vcmp.eq.f32.partialorder %v644, %v863
    %vm977 = vcmp.eq.f32.partialorder %v644, %v868
    %vm978 = vcmp.eq.f32.partialorder %v644, %v873
    %vm979 = vcmp.eq.f32.partialorder %v644, %v878
    %vm980 = vcmp.eq.f32.partialorder %v644, %v883
    %vm981 = vcmp.lt.s32.totalorder %v138, %v121
    %vm982 = vcmp.lt.s32.totalorder %v138, %v122
    %vm983 = vcmp.lt.s32.totalorder %v138, %v123
    %vm984 = vcmp.lt.s32.totalorder %v138, %v124
    %vm985 = vcmp.lt.s32.totalorder %v138, %v125
    %vm986 = vcmp.lt.s32.totalorder %v138, %v126
    %vm987 = vcmp.lt.s32.totalorder %v138, %v127
    %vm988 = vcmp.lt.s32.totalorder %v138, %v128
    %vm989 = vcmp.lt.s32.totalorder %v138, %v129
    %vm990 = vcmp.lt.s32.totalorder %v138, %v130
    %vm991 = vcmp.lt.s32.totalorder %v138, %v131
    %vm992 = vcmp.lt.s32.totalorder %v138, %v132
    %vm993 = vcmp.lt.s32.totalorder %v138, %v133
    %vm994 = vcmp.lt.s32.totalorder %v138, %v134
    %vm995 = vcmp.lt.s32.totalorder %v138, %v135
    %vm996 = vcmp.lt.s32.totalorder %v138, %v136
    %v997 = vsel %vm981, 1, 0
    %v998 = vsel %vm982, 1, 0
    %v999 = vsel %vm983, 1, 0
    %v1000 = vsel %vm984, 1, 0
    %v1001 = vsel %vm985, 1, 0
    %v1002 = vsel %vm986, 1, 0
    %v1003 = vsel %vm987, 1, 0
    %v1004 = vsel %vm988, 1, 0
    %v1005 = vsel %vm989, 1, 0
    %v1006 = vsel %vm990, 1, 0
    %v1007 = vsel %vm991, 1, 0
    %v1008 = vsel %vm992, 1, 0
    %v1009 = vsel %vm993, 1, 0
    %v1010 = vsel %vm994, 1, 0
    %v1011 = vsel %vm995, 1, 0
    %v1012 = vsel %vm996, 1, 0
    %vm1013 = vcmp.eq.s32.totalorder %v997, 1
    %vm1014 = vcmp.eq.s32.totalorder %v998, 1
    %vm1015 = vcmp.eq.s32.totalorder %v999, 1
    %vm1016 = vcmp.eq.s32.totalorder %v1000, 1
    %vm1017 = vcmp.eq.s32.totalorder %v1001, 1
    %vm1018 = vcmp.eq.s32.totalorder %v1002, 1
    %vm1019 = vcmp.eq.s32.totalorder %v1003, 1
    %vm1020 = vcmp.eq.s32.totalorder %v1004, 1
    %vm1021 = vcmp.eq.s32.totalorder %v1005, 1
    %vm1022 = vcmp.eq.s32.totalorder %v1006, 1
    %vm1023 = vcmp.eq.s32.totalorder %v1007, 1
    %vm1024 = vcmp.eq.s32.totalorder %v1008, 1
    %vm1025 = vcmp.eq.s32.totalorder %v1009, 1
    %vm1026 = vcmp.eq.s32.totalorder %v1010, 1
    %vm1027 = vcmp.eq.s32.totalorder %v1011, 1
    %vm1028 = vcmp.eq.s32.totalorder %v1012, 1
    %vm1029 = vmand %vm933, %vm1013
    %vm1030 = vmand %vm934, %vm1014
    %vm1031 = vmand %vm935, %vm1015
    %vm1032 = vmand %vm936, %vm1016
    %vm1033 = vmand %vm937, %vm1017
    %vm1034 = vmand %vm938, %vm1018
    %vm1035 = vmand %vm939, %vm1019
    %vm1036 = vmand %vm940, %vm1020
    %vm1037 = vmand %vm941, %vm1021
    %vm1038 = vmand %vm942, %vm1022
    %vm1039 = vmand %vm943, %vm1023
    %vm1040 = vmand %vm944, %vm1024
    %vm1041 = vmand %vm945, %vm1025
    %vm1042 = vmand %vm946, %vm1026
    %vm1043 = vmand %vm947, %vm1027
    %vm1044 = vmand %vm948, %vm1028
    %vm1045 = vmand %vm949, %vm1013
    %vm1046 = vmand %vm950, %vm1014
    %vm1047 = vmand %vm951, %vm1015
    %vm1048 = vmand %vm952, %vm1016
    %vm1049 = vmand %vm953, %vm1017
    %vm1050 = vmand %vm954, %vm1018
    %vm1051 = vmand %vm955, %vm1019
    %vm1052 = vmand %vm956, %vm1020
    %vm1053 = vmand %vm957, %vm1021
    %vm1054 = vmand %vm958, %vm1022
    %vm1055 = vmand %vm959, %vm1023
    %vm1056 = vmand %vm960, %vm1024
    %vm1057 = vmand %vm961, %vm1025
    %vm1058 = vmand %vm962, %vm1026
    %vm1059 = vmand %vm963, %vm1027
    %vm1060 = vmand %vm964, %vm1028
    %vm1061 = vmand %vm965, %vm1013
    %vm1062 = vmand %vm966, %vm1014
    %vm1063 = vmand %vm967, %vm1015
    %vm1064 = vmand %vm968, %vm1016
    %vm1065 = vmand %vm969, %vm1017
    %vm1066 = vmand %vm970, %vm1018
    %vm1067 = vmand %vm971, %vm1019
    %vm1068 = vmand %vm972, %vm1020
    %vm1069 = vmand %vm973, %vm1021
    %vm1070 = vmand %vm974, %vm1022
    %vm1071 = vmand %vm975, %vm1023
    %vm1072 = vmand %vm976, %vm1024
    %vm1073 = vmand %vm977, %vm1025
    %vm1074 = vmand %vm978, %vm1026
    %vm1075 = vmand %vm979, %vm1027
    %vm1076 = vmand %vm980, %vm1028
    %vm1077 = vmor %vm885, %vm1029
    %vm1078 = vmor %vm886, %vm1030
    %vm1079 = vmor %vm887, %vm1031
    %vm1080 = vmor %vm888, %vm1032
    %vm1081 = vmor %vm889, %vm1033
    %vm1082 = vmor %vm890, %vm1034
    %vm1083 = vmor %vm891, %vm1035
    %vm1084 = vmor %vm892, %vm1036
    %vm1085 = vmor %vm893, %vm1037
    %vm1086 = vmor %vm894, %vm1038
    %vm1087 = vmor %vm895, %vm1039
    %vm1088 = vmor %vm896, %vm1040
    %vm1089 = vmor %vm897, %vm1041
    %vm1090 = vmor %vm898, %vm1042
    %vm1091 = vmor %vm899, %vm1043
    %vm1092 = vmor %vm900, %vm1044
    %vm1093 = vmor %vm901, %vm1045
    %vm1094 = vmor %vm902, %vm1046
    %vm1095 = vmor %vm903, %vm1047
    %vm1096 = vmor %vm904, %vm1048
    %vm1097 = vmor %vm905, %vm1049
    %vm1098 = vmor %vm906, %vm1050
    %vm1099 = vmor %vm907, %vm1051
    %vm1100 = vmor %vm908, %vm1052
    %vm1101 = vmor %vm909, %vm1053
    %vm1102 = vmor %vm910, %vm1054
    %vm1103 = vmor %vm911, %vm1055
    %vm1104 = vmor %vm912, %vm1056
    %vm1105 = vmor %vm913, %vm1057
    %vm1106 = vmor %vm914, %vm1058
    %vm1107 = vmor %vm915, %vm1059
    %vm1108 = vmor %vm916, %vm1060
    %vm1109 = vmor %vm917, %vm1061
    %vm1110 = vmor %vm918, %vm1062
    %vm1111 = vmor %vm919, %vm1063
    %vm1112 = vmor %vm920, %vm1064
    %vm1113 = vmor %vm921, %vm1065
    %vm1114 = vmor %vm922, %vm1066
    %vm1115 = vmor %vm923, %vm1067
    %vm1116 = vmor %vm924, %vm1068
    %vm1117 = vmor %vm925, %vm1069
    %vm1118 = vmor %vm926, %vm1070
    %vm1119 = vmor %vm927, %vm1071
    %vm1120 = vmor %vm928, %vm1072
    %vm1121 = vmor %vm929, %vm1073
    %vm1122 = vmor %vm930, %vm1074
    %vm1123 = vmor %vm931, %vm1075
    %vm1124 = vmor %vm932, %vm1076
    %v1125 = vsel %vm1077, 1, 0
    %v1126 = vsel %vm1078, 1, 0
    %v1127 = vsel %vm1079, 1, 0
    %v1128 = vsel %vm1080, 1, 0
    %v1129 = vsel %vm1081, 1, 0
    %v1130 = vsel %vm1082, 1, 0
    %v1131 = vsel %vm1083, 1, 0
    %v1132 = vsel %vm1084, 1, 0
    %v1133 = vsel %vm1085, 1, 0
    %v1134 = vsel %vm1086, 1, 0
    %v1135 = vsel %vm1087, 1, 0
    %v1136 = vsel %vm1088, 1, 0
    %v1137 = vsel %vm1089, 1, 0
    %v1138 = vsel %vm1090, 1, 0
    %v1139 = vsel %vm1091, 1, 0
    %v1140 = vsel %vm1092, 1, 0
    %v1141 = vsel %vm1093, 1, 0
    %v1142 = vsel %vm1094, 1, 0
    %v1143 = vsel %vm1095, 1, 0
    %v1144 = vsel %vm1096, 1, 0
    %v1145 = vsel %vm1097, 1, 0
    %v1146 = vsel %vm1098, 1, 0
    %v1147 = vsel %vm1099, 1, 0
    %v1148 = vsel %vm1100, 1, 0
    %v1149 = vsel %vm1101, 1, 0
    %v1150 = vsel %vm1102, 1, 0
    %v1151 = vsel %vm1103, 1, 0
    %v1152 = vsel %vm1104, 1, 0
    %v1153 = vsel %vm1105, 1, 0
    %v1154 = vsel %vm1106, 1, 0
    %v1155 = vsel %vm1107, 1, 0
    %v1156 = vsel %vm1108, 1, 0
    %v1157 = vsel %vm1109, 1, 0
    %v1158 = vsel %vm1110, 1, 0
    %v1159 = vsel %vm1111, 1, 0
    %v1160 = vsel %vm1112, 1, 0
    %v1161 = vsel %vm1113, 1, 0
    %v1162 = vsel %vm1114, 1, 0
    %v1163 = vsel %vm1115, 1, 0
    %v1164 = vsel %vm1116, 1, 0
    %v1165 = vsel %vm1117, 1, 0
    %v1166 = vsel %vm1118, 1, 0
    %v1167 = vsel %vm1119, 1, 0
    %v1168 = vsel %vm1120, 1, 0
    %v1169 = vsel %vm1121, 1, 0
    %v1170 = vsel %vm1122, 1, 0
    %v1171 = vsel %vm1123, 1, 0
    %v1172 = vsel %vm1124, 1, 0
    %v1173 = vcvt.s32.f32 %v1125
    %v1174 = vcvt.s32.f32 %v1126
    %v1175 = vcvt.s32.f32 %v1127
    %v1176 = vcvt.s32.f32 %v1128
    %v1177 = vcvt.s32.f32 %v1129
    %v1178 = vcvt.s32.f32 %v1130
    %v1179 = vcvt.s32.f32 %v1131
    %v1180 = vcvt.s32.f32 %v1132
    %v1181 = vcvt.s32.f32 %v1133
    %v1182 = vcvt.s32.f32 %v1134
    %v1183 = vcvt.s32.f32 %v1135
    %v1184 = vcvt.s32.f32 %v1136
    %v1185 = vcvt.s32.f32 %v1137
    %v1186 = vcvt.s32.f32 %v1138
    %v1187 = vcvt.s32.f32 %v1139
    %v1188 = vcvt.s32.f32 %v1140
    %v1189 = vcvt.s32.f32 %v1141
    %v1190 = vcvt.s32.f32 %v1142
    %v1191 = vcvt.s32.f32 %v1143
    %v1192 = vcvt.s32.f32 %v1144
    %v1193 = vcvt.s32.f32 %v1145
    %v1194 = vcvt.s32.f32 %v1146
    %v1195 = vcvt.s32.f32 %v1147
    %v1196 = vcvt.s32.f32 %v1148
    %v1197 = vcvt.s32.f32 %v1149
    %v1198 = vcvt.s32.f32 %v1150
    %v1199 = vcvt.s32.f32 %v1151
    %v1200 = vcvt.s32.f32 %v1152
    %v1201 = vcvt.s32.f32 %v1153
    %v1202 = vcvt.s32.f32 %v1154
    %v1203 = vcvt.s32.f32 %v1155
    %v1204 = vcvt.s32.f32 %v1156
    %v1205 = vcvt.s32.f32 %v1157
    %v1206 = vcvt.s32.f32 %v1158
    %v1207 = vcvt.s32.f32 %v1159
    %v1208 = vcvt.s32.f32 %v1160
    %v1209 = vcvt.s32.f32 %v1161
    %v1210 = vcvt.s32.f32 %v1162
    %v1211 = vcvt.s32.f32 %v1163
    %v1212 = vcvt.s32.f32 %v1164
    %v1213 = vcvt.s32.f32 %v1165
    %v1214 = vcvt.s32.f32 %v1166
    %v1215 = vcvt.s32.f32 %v1167
    %v1216 = vcvt.s32.f32 %v1168
    %v1217 = vcvt.s32.f32 %v1169
    %v1218 = vcvt.s32.f32 %v1170
    %v1219 = vcvt.s32.f32 %v1171
    %v1220 = vcvt.s32.f32 %v1172
    %1221 = vadd.xlane.f32.xlu0 %v1173
    %v1222 = vpop.xlane.xlu0 %1221
    %1223 = vadd.xlane.f32.xlu0 %v1174
    %v1224 = vpop.xlane.xlu0 %1223
    %1225 = vadd.xlane.f32.xlu0 %v1175
    %v1226 = vpop.xlane.xlu0 %1225
    %1227 = vadd.xlane.f32.xlu0 %v1176
    %v1228 = vpop.xlane.xlu0 %1227
    %1229 = vadd.xlane.f32.xlu0 %v1177
    %v1230 = vpop.xlane.xlu0 %1229
    %1231 = vadd.xlane.f32.xlu0 %v1178
    %v1232 = vpop.xlane.xlu0 %1231
    %1233 = vadd.xlane.f32.xlu0 %v1179
    %v1234 = vpop.xlane.xlu0 %1233
    %1235 = vadd.xlane.f32.xlu0 %v1180
    %v1236 = vpop.xlane.xlu0 %1235
    %1237 = vadd.xlane.f32.xlu0 %v1181
    %v1238 = vpop.xlane.xlu0 %1237
    %1239 = vadd.xlane.f32.xlu0 %v1182
    %v1240 = vpop.xlane.xlu0 %1239
    %1241 = vadd.xlane.f32.xlu0 %v1183
    %v1242 = vpop.xlane.xlu0 %1241
    %1243 = vadd.xlane.f32.xlu0 %v1184
    %v1244 = vpop.xlane.xlu0 %1243
    %1245 = vadd.xlane.f32.xlu0 %v1185
    %v1246 = vpop.xlane.xlu0 %1245
    %1247 = vadd.xlane.f32.xlu0 %v1186
    %v1248 = vpop.xlane.xlu0 %1247
    %1249 = vadd.xlane.f32.xlu0 %v1187
    %v1250 = vpop.xlane.xlu0 %1249
    %1251 = vadd.xlane.f32.xlu0 %v1188
    %v1252 = vpop.xlane.xlu0 %1251
    %1253 = vadd.xlane.f32.xlu0 %v1189
    %v1254 = vpop.xlane.xlu0 %1253
    %1255 = vadd.xlane.f32.xlu0 %v1190
    %v1256 = vpop.xlane.xlu0 %1255
    %1257 = vadd.xlane.f32.xlu0 %v1191
    %v1258 = vpop.xlane.xlu0 %1257
    %1259 = vadd.xlane.f32.xlu0 %v1192
    %v1260 = vpop.xlane.xlu0 %1259
    %1261 = vadd.xlane.f32.xlu0 %v1193
    %v1262 = vpop.xlane.xlu0 %1261
    %1263 = vadd.xlane.f32.xlu0 %v1194
    %v1264 = vpop.xlane.xlu0 %1263
    %1265 = vadd.xlane.f32.xlu0 %v1195
    %v1266 = vpop.xlane.xlu0 %1265
    %1267 = vadd.xlane.f32.xlu0 %v1196
    %v1268 = vpop.xlane.xlu0 %1267
    %1269 = vadd.xlane.f32.xlu0 %v1197
    %v1270 = vpop.xlane.xlu0 %1269
    %1271 = vadd.xlane.f32.xlu0 %v1198
    %v1272 = vpop.xlane.xlu0 %1271
    %1273 = vadd.xlane.f32.xlu0 %v1199
    %v1274 = vpop.xlane.xlu0 %1273
    %1275 = vadd.xlane.f32.xlu0 %v1200
    %v1276 = vpop.xlane.xlu0 %1275
    %1277 = vadd.xlane.f32.xlu0 %v1201
    %v1278 = vpop.xlane.xlu0 %1277
    %1279 = vadd.xlane.f32.xlu0 %v1202
    %v1280 = vpop.xlane.xlu0 %1279
    %1281 = vadd.xlane.f32.xlu0 %v1203
    %v1282 = vpop.xlane.xlu0 %1281
    %1283 = vadd.xlane.f32.xlu0 %v1204
    %v1284 = vpop.xlane.xlu0 %1283
    %1285 = vadd.xlane.f32.xlu0 %v1205
    %v1286 = vpop.xlane.xlu0 %1285
    %1287 = vadd.xlane.f32.xlu0 %v1206
    %v1288 = vpop.xlane.xlu0 %1287
    %1289 = vadd.xlane.f32.xlu0 %v1207
    %v1290 = vpop.xlane.xlu0 %1289
    %1291 = vadd.xlane.f32.xlu0 %v1208
    %v1292 = vpop.xlane.xlu0 %1291
    %1293 = vadd.xlane.f32.xlu0 %v1209
    %v1294 = vpop.xlane.xlu0 %1293
    %1295 = vadd.xlane.f32.xlu0 %v1210
    %v1296 = vpop.xlane.xlu0 %1295
    %1297 = vadd.xlane.f32.xlu0 %v1211
    %v1298 = vpop.xlane.xlu0 %1297
    %1299 = vadd.xlane.f32.xlu0 %v1212
    %v1300 = vpop.xlane.xlu0 %1299
    %1301 = vadd.xlane.f32.xlu0 %v1213
    %v1302 = vpop.xlane.xlu0 %1301
    %1303 = vadd.xlane.f32.xlu0 %v1214
    %v1304 = vpop.xlane.xlu0 %1303
    %1305 = vadd.xlane.f32.xlu0 %v1215
    %v1306 = vpop.xlane.xlu0 %1305
    %1307 = vadd.xlane.f32.xlu0 %v1216
    %v1308 = vpop.xlane.xlu0 %1307
    %1309 = vadd.xlane.f32.xlu0 %v1217
    %v1310 = vpop.xlane.xlu0 %1309
    %1311 = vadd.xlane.f32.xlu0 %v1218
    %v1312 = vpop.xlane.xlu0 %1311
    %1313 = vadd.xlane.f32.xlu0 %v1219
    %v1314 = vpop.xlane.xlu0 %1313
    %1315 = vadd.xlane.f32.xlu0 %v1220
    %v1316 = vpop.xlane.xlu0 %1315
    %vm1317 = vcmp.eq.f32.partialorder %v1222, %v155
    %vm1318 = vcmp.eq.f32.partialorder %v1224, %v155
    %vm1319 = vcmp.eq.f32.partialorder %v1226, %v155
    %vm1320 = vcmp.eq.f32.partialorder %v1228, %v155
    %vm1321 = vcmp.eq.f32.partialorder %v1230, %v155
    %vm1322 = vcmp.eq.f32.partialorder %v1232, %v155
    %vm1323 = vcmp.eq.f32.partialorder %v1234, %v155
    %vm1324 = vcmp.eq.f32.partialorder %v1236, %v155
    %vm1325 = vcmp.eq.f32.partialorder %v1238, %v155
    %vm1326 = vcmp.eq.f32.partialorder %v1240, %v155
    %vm1327 = vcmp.eq.f32.partialorder %v1242, %v155
    %vm1328 = vcmp.eq.f32.partialorder %v1244, %v155
    %vm1329 = vcmp.eq.f32.partialorder %v1246, %v155
    %vm1330 = vcmp.eq.f32.partialorder %v1248, %v155
    %vm1331 = vcmp.eq.f32.partialorder %v1250, %v155
    %vm1332 = vcmp.eq.f32.partialorder %v1252, %v155
    %vm1333 = vcmp.eq.f32.partialorder %v1254, %v155
    %vm1334 = vcmp.eq.f32.partialorder %v1256, %v155
    %vm1335 = vcmp.eq.f32.partialorder %v1258, %v155
    %vm1336 = vcmp.eq.f32.partialorder %v1260, %v155
    %vm1337 = vcmp.eq.f32.partialorder %v1262, %v155
    %vm1338 = vcmp.eq.f32.partialorder %v1264, %v155
    %vm1339 = vcmp.eq.f32.partialorder %v1266, %v155
    %vm1340 = vcmp.eq.f32.partialorder %v1268, %v155
    %vm1341 = vcmp.eq.f32.partialorder %v1270, %v155
    %vm1342 = vcmp.eq.f32.partialorder %v1272, %v155
    %vm1343 = vcmp.eq.f32.partialorder %v1274, %v155
    %vm1344 = vcmp.eq.f32.partialorder %v1276, %v155
    %vm1345 = vcmp.eq.f32.partialorder %v1278, %v155
    %vm1346 = vcmp.eq.f32.partialorder %v1280, %v155
    %vm1347 = vcmp.eq.f32.partialorder %v1282, %v155
    %vm1348 = vcmp.eq.f32.partialorder %v1284, %v155
    %vm1349 = vcmp.eq.f32.partialorder %v1286, %v155
    %vm1350 = vcmp.eq.f32.partialorder %v1288, %v155
    %vm1351 = vcmp.eq.f32.partialorder %v1290, %v155
    %vm1352 = vcmp.eq.f32.partialorder %v1292, %v155
    %vm1353 = vcmp.eq.f32.partialorder %v1294, %v155
    %vm1354 = vcmp.eq.f32.partialorder %v1296, %v155
    %vm1355 = vcmp.eq.f32.partialorder %v1298, %v155
    %vm1356 = vcmp.eq.f32.partialorder %v1300, %v155
    %vm1357 = vcmp.eq.f32.partialorder %v1302, %v155
    %vm1358 = vcmp.eq.f32.partialorder %v1304, %v155
    %vm1359 = vcmp.eq.f32.partialorder %v1306, %v155
    %vm1360 = vcmp.eq.f32.partialorder %v1308, %v155
    %vm1361 = vcmp.eq.f32.partialorder %v1310, %v155
    %vm1362 = vcmp.eq.f32.partialorder %v1312, %v155
    %vm1363 = vcmp.eq.f32.partialorder %v1314, %v155
    %vm1364 = vcmp.eq.f32.partialorder %v1316, %v155
    %v1365 = vsel %vm1317, 1, 0
    %v1366 = vsel %vm1318, 1, 0
    %v1367 = vsel %vm1319, 1, 0
    %v1368 = vsel %vm1320, 1, 0
    %v1369 = vsel %vm1321, 1, 0
    %v1370 = vsel %vm1322, 1, 0
    %v1371 = vsel %vm1323, 1, 0
    %v1372 = vsel %vm1324, 1, 0
    %v1373 = vsel %vm1325, 1, 0
    %v1374 = vsel %vm1326, 1, 0
    %v1375 = vsel %vm1327, 1, 0
    %v1376 = vsel %vm1328, 1, 0
    %v1377 = vsel %vm1329, 1, 0
    %v1378 = vsel %vm1330, 1, 0
    %v1379 = vsel %vm1331, 1, 0
    %v1380 = vsel %vm1332, 1, 0
    %v1381 = vsel %vm1333, 1, 0
    %v1382 = vsel %vm1334, 1, 0
    %v1383 = vsel %vm1335, 1, 0
    %v1384 = vsel %vm1336, 1, 0
    %v1385 = vsel %vm1337, 1, 0
    %v1386 = vsel %vm1338, 1, 0
    %v1387 = vsel %vm1339, 1, 0
    %v1388 = vsel %vm1340, 1, 0
    %v1389 = vsel %vm1341, 1, 0
    %v1390 = vsel %vm1342, 1, 0
    %v1391 = vsel %vm1343, 1, 0
    %v1392 = vsel %vm1344, 1, 0
    %v1393 = vsel %vm1345, 1, 0
    %v1394 = vsel %vm1346, 1, 0
    %v1395 = vsel %vm1347, 1, 0
    %v1396 = vsel %vm1348, 1, 0
    %v1397 = vsel %vm1349, 1, 0
    %v1398 = vsel %vm1350, 1, 0
    %v1399 = vsel %vm1351, 1, 0
    %v1400 = vsel %vm1352, 1, 0
    %v1401 = vsel %vm1353, 1, 0
    %v1402 = vsel %vm1354, 1, 0
    %v1403 = vsel %vm1355, 1, 0
    %v1404 = vsel %vm1356, 1, 0
    %v1405 = vsel %vm1357, 1, 0
    %v1406 = vsel %vm1358, 1, 0
    %v1407 = vsel %vm1359, 1, 0
    %v1408 = vsel %vm1360, 1, 0
    %v1409 = vsel %vm1361, 1, 0
    %v1410 = vsel %vm1362, 1, 0
    %v1411 = vsel %vm1363, 1, 0
    %v1412 = vsel %vm1364, 1, 0
    %v1413 = vcvt.s32.f32 %v1365
    %v1414 = vcvt.s32.f32 %v1366
    %v1415 = vcvt.s32.f32 %v1367
    %v1416 = vcvt.s32.f32 %v1368
    %v1417 = vcvt.s32.f32 %v1369
    %v1418 = vcvt.s32.f32 %v1370
    %v1419 = vcvt.s32.f32 %v1371
    %v1420 = vcvt.s32.f32 %v1372
    %v1421 = vcvt.s32.f32 %v1373
    %v1422 = vcvt.s32.f32 %v1374
    %v1423 = vcvt.s32.f32 %v1375
    %v1424 = vcvt.s32.f32 %v1376
    %v1425 = vcvt.s32.f32 %v1377
    %v1426 = vcvt.s32.f32 %v1378
    %v1427 = vcvt.s32.f32 %v1379
    %v1428 = vcvt.s32.f32 %v1380
    %v1429 = vcvt.s32.f32 %v1381
    %v1430 = vcvt.s32.f32 %v1382
    %v1431 = vcvt.s32.f32 %v1383
    %v1432 = vcvt.s32.f32 %v1384
    %v1433 = vcvt.s32.f32 %v1385
    %v1434 = vcvt.s32.f32 %v1386
    %v1435 = vcvt.s32.f32 %v1387
    %v1436 = vcvt.s32.f32 %v1388
    %v1437 = vcvt.s32.f32 %v1389
    %v1438 = vcvt.s32.f32 %v1390
    %v1439 = vcvt.s32.f32 %v1391
    %v1440 = vcvt.s32.f32 %v1392
    %v1441 = vcvt.s32.f32 %v1393
    %v1442 = vcvt.s32.f32 %v1394
    %v1443 = vcvt.s32.f32 %v1395
    %v1444 = vcvt.s32.f32 %v1396
    %v1445 = vcvt.s32.f32 %v1397
    %v1446 = vcvt.s32.f32 %v1398
    %v1447 = vcvt.s32.f32 %v1399
    %v1448 = vcvt.s32.f32 %v1400
    %v1449 = vcvt.s32.f32 %v1401
    %v1450 = vcvt.s32.f32 %v1402
    %v1451 = vcvt.s32.f32 %v1403
    %v1452 = vcvt.s32.f32 %v1404
    %v1453 = vcvt.s32.f32 %v1405
    %v1454 = vcvt.s32.f32 %v1406
    %v1455 = vcvt.s32.f32 %v1407
    %v1456 = vcvt.s32.f32 %v1408
    %v1457 = vcvt.s32.f32 %v1409
    %v1458 = vcvt.s32.f32 %v1410
    %v1459 = vcvt.s32.f32 %v1411
    %v1460 = vcvt.s32.f32 %v1412
    %v1461 = vmul.f32 %v1413, %v648
    %v1462 = vmul.f32 %v1414, %v653
    %v1463 = vmul.f32 %v1415, %v658
    %v1464 = vmul.f32 %v1416, %v663
    %v1465 = vmul.f32 %v1417, %v668
    %v1466 = vmul.f32 %v1418, %v673
    %v1467 = vmul.f32 %v1419, %v678
    %v1468 = vmul.f32 %v1420, %v683
    %v1469 = vmul.f32 %v1421, %v688
    %v1470 = vmul.f32 %v1422, %v693
    %v1471 = vmul.f32 %v1423, %v698
    %v1472 = vmul.f32 %v1424, %v703
    %v1473 = vmul.f32 %v1425, %v708
    %v1474 = vmul.f32 %v1426, %v713
    %v1475 = vmul.f32 %v1427, %v718
    %v1476 = vmul.f32 %v1428, %v723
    %v1477 = vmul.f32 %v1429, %v728
    %v1478 = vmul.f32 %v1430, %v733
    %v1479 = vmul.f32 %v1431, %v738
    %v1480 = vmul.f32 %v1432, %v743
    %v1481 = vmul.f32 %v1433, %v748
    %v1482 = vmul.f32 %v1434, %v753
    %v1483 = vmul.f32 %v1435, %v758
    %v1484 = vmul.f32 %v1436, %v763
    %v1485 = vmul.f32 %v1437, %v768
    %v1486 = vmul.f32 %v1438, %v773
    %v1487 = vmul.f32 %v1439, %v778
    %v1488 = vmul.f32 %v1440, %v783
    %v1489 = vmul.f32 %v1441, %v788
    %v1490 = vmul.f32 %v1442, %v793
    %v1491 = vmul.f32 %v1443, %v798
    %v1492 = vmul.f32 %v1444, %v803
    %v1493 = vmul.f32 %v1445, %v808
    %v1494 = vmul.f32 %v1446, %v813
    %v1495 = vmul.f32 %v1447, %v818
    %v1496 = vmul.f32 %v1448, %v823
    %v1497 = vmul.f32 %v1449, %v828
    %v1498 = vmul.f32 %v1450, %v833
    %v1499 = vmul.f32 %v1451, %v838
    %v1500 = vmul.f32 %v1452, %v843
    %v1501 = vmul.f32 %v1453, %v848
    %v1502 = vmul.f32 %v1454, %v853
    %v1503 = vmul.f32 %v1455, %v858
    %v1504 = vmul.f32 %v1456, %v863
    %v1505 = vmul.f32 %v1457, %v868
    %v1506 = vmul.f32 %v1458, %v873
    %v1507 = vmul.f32 %v1459, %v878
    %v1508 = vmul.f32 %v1460, %v883
    %v1509 = vadd.f32 %v1461, %v1462
    %v1510 = vadd.f32 %v1509, %v1463
    %v1511 = vadd.f32 %v1510, %v1464
    %v1512 = vadd.f32 %v1511, %v1465
    %v1513 = vadd.f32 %v1512, %v1466
    %v1514 = vadd.f32 %v1513, %v1467
    %v1515 = vadd.f32 %v1514, %v1468
    %v1516 = vadd.f32 %v1515, %v1469
    %v1517 = vadd.f32 %v1516, %v1470
    %v1518 = vadd.f32 %v1517, %v1471
    %v1519 = vadd.f32 %v1518, %v1472
    %v1520 = vadd.f32 %v1519, %v1473
    %v1521 = vadd.f32 %v1520, %v1474
    %v1522 = vadd.f32 %v1521, %v1475
    %v1523 = vadd.f32 %v1522, %v1476
    %v1524 = vrot.slane %v1523, 4
    %v1525 = vadd.f32 %v1523, %v1524
    %v1526 = vrot.slane %v1525, 2
    %v1527 = vadd.f32 %v1525, %v1526
    %v1528 = vrot.slane %v1527, 1
    %v1529 = vadd.f32 %v1527, %v1528
    %v1530 = vadd.f32 %v1477, %v1478
    %v1531 = vadd.f32 %v1530, %v1479
    %v1532 = vadd.f32 %v1531, %v1480
    %v1533 = vadd.f32 %v1532, %v1481
    %v1534 = vadd.f32 %v1533, %v1482
    %v1535 = vadd.f32 %v1534, %v1483
    %v1536 = vadd.f32 %v1535, %v1484
    %v1537 = vadd.f32 %v1536, %v1485
    %v1538 = vadd.f32 %v1537, %v1486
    %v1539 = vadd.f32 %v1538, %v1487
    %v1540 = vadd.f32 %v1539, %v1488
    %v1541 = vadd.f32 %v1540, %v1489
    %v1542 = vadd.f32 %v1541, %v1490
    %v1543 = vadd.f32 %v1542, %v1491
    %v1544 = vadd.f32 %v1543, %v1492
    %v1545 = vrot.slane %v1544, 4
    %v1546 = vadd.f32 %v1544, %v1545
    %v1547 = vrot.slane %v1546, 2
    %v1548 = vadd.f32 %v1546, %v1547
    %v1549 = vrot.slane %v1548, 1
    %v1550 = vadd.f32 %v1548, %v1549
    %v1551 = vadd.f32 %v1493, %v1494
    %v1552 = vadd.f32 %v1551, %v1495
    %v1553 = vadd.f32 %v1552, %v1496
    %v1554 = vadd.f32 %v1553, %v1497
    %v1555 = vadd.f32 %v1554, %v1498
    %v1556 = vadd.f32 %v1555, %v1499
    %v1557 = vadd.f32 %v1556, %v1500
    %v1558 = vadd.f32 %v1557, %v1501
    %v1559 = vadd.f32 %v1558, %v1502
    %v1560 = vadd.f32 %v1559, %v1503
    %v1561 = vadd.f32 %v1560, %v1504
    %v1562 = vadd.f32 %v1561, %v1505
    %v1563 = vadd.f32 %v1562, %v1506
    %v1564 = vadd.f32 %v1563, %v1507
    %v1565 = vadd.f32 %v1564, %v1508
    %v1566 = vrot.slane %v1565, 4
    %v1567 = vadd.f32 %v1565, %v1566
    %v1568 = vrot.slane %v1567, 2
    %v1569 = vadd.f32 %v1567, %v1568
    %v1570 = vrot.slane %v1569, 1
    %v1571 = vadd.f32 %v1569, %v1570
    %vm1572 = vcmask 1040384
    %v1573 = vsel %vm1572, %v559, -inf
    %1574 = vmax.xlane.f32.xlu0 %v1573
    %v1575 = vpop.xlane.xlu0 %1574
    %v1576 = vsel %vm1572, %v560, -inf
    %1577 = vmax.xlane.f32.xlu0 %v1576
    %v1578 = vpop.xlane.xlu0 %1577
    %v1579 = vsel %vm1572, %v561, -inf
    %1580 = vmax.xlane.f32.xlu0 %v1579
    %v1581 = vpop.xlane.xlu0 %1580
    %v1582 = vsub.f32 %v1529, %v1575
    %v1583 = vsub.f32 %v1550, %v1578
    %v1584 = vsub.f32 %v1571, %v1581
    %v1585 = vmul.f32 %v1582, 1.442695
    %v1586 = vpow.pop %v1585
    %v1587 = vmul.f32 %v1583, 1.442695
    %v1588 = vpow.pop %v1587
    %v1589 = vmul.f32 %v1584, 1.442695
    %v1590 = vpow.pop %v1589
    %v1591 = vsel %vm156, 1, 0
    %v1592 = vsel %vm157, 1, 0
    %v1593 = vsel %vm158, 1, 0
    %v1594 = vsel %vm159, 1, 0
    %v1595 = vsel %vm160, 1, 0
    %v1596 = vsel %vm161, 1, 0
    %v1597 = vsel %vm162, 1, 0
    %v1598 = vsel %vm163, 1, 0
    %v1599 = vsel %vm164, 1, 0
    %v1600 = vsel %vm165, 1, 0
    %v1601 = vsel %vm166, 1, 0
    %v1602 = vsel %vm167, 1, 0
    %v1603 = vsel %vm168, 1, 0
    %v1604 = vsel %vm169, 1, 0
    %v1605 = vsel %vm170, 1, 0
    %v1606 = vsel %vm171, 1, 0
    %vm1607 = vcmp.eq.s32.totalorder %v1591, 1
    %vm1608 = vcmp.eq.s32.totalorder %v1592, 1
    %vm1609 = vcmp.eq.s32.totalorder %v1593, 1
    %vm1610 = vcmp.eq.s32.totalorder %v1594, 1
    %vm1611 = vcmp.eq.s32.totalorder %v1595, 1
    %vm1612 = vcmp.eq.s32.totalorder %v1596, 1
    %vm1613 = vcmp.eq.s32.totalorder %v1597, 1
    %vm1614 = vcmp.eq.s32.totalorder %v1598, 1
    %vm1615 = vcmp.eq.s32.totalorder %v1599, 1
    %vm1616 = vcmp.eq.s32.totalorder %v1600, 1
    %vm1617 = vcmp.eq.s32.totalorder %v1601, 1
    %vm1618 = vcmp.eq.s32.totalorder %v1602, 1
    %vm1619 = vcmp.eq.s32.totalorder %v1603, 1
    %vm1620 = vcmp.eq.s32.totalorder %v1604, 1
    %vm1621 = vcmp.eq.s32.totalorder %v1605, 1
    %vm1622 = vcmp.eq.s32.totalorder %v1606, 1
    %v1623 = vperm.slane %v1586, 0
    %v1624 = vperm.slane %v1588, 0
    %v1625 = vperm.slane %v1590, 0
    %v1626 = vsel %vm1607, %v1623, 0.0
    %v1627 = vsel %vm1608, %v1623, 0.0
    %v1628 = vsel %vm1609, %v1623, 0.0
    %v1629 = vsel %vm1610, %v1623, 0.0
    %v1630 = vsel %vm1611, %v1623, 0.0
    %v1631 = vsel %vm1612, %v1623, 0.0
    %v1632 = vsel %vm1613, %v1623, 0.0
    %v1633 = vsel %vm1614, %v1623, 0.0
    %v1634 = vsel %vm1615, %v1623, 0.0
    %v1635 = vsel %vm1616, %v1623, 0.0
    %v1636 = vsel %vm1617, %v1623, 0.0
    %v1637 = vsel %vm1618, %v1623, 0.0
    %v1638 = vsel %vm1619, %v1623, 0.0
    %v1639 = vsel %vm1620, %v1623, 0.0
    %v1640 = vsel %vm1621, %v1623, 0.0
    %v1641 = vsel %vm1622, %v1623, 0.0
    %v1642 = vsel %vm1607, %v1624, 0.0
    %v1643 = vsel %vm1608, %v1624, 0.0
    %v1644 = vsel %vm1609, %v1624, 0.0
    %v1645 = vsel %vm1610, %v1624, 0.0
    %v1646 = vsel %vm1611, %v1624, 0.0
    %v1647 = vsel %vm1612, %v1624, 0.0
    %v1648 = vsel %vm1613, %v1624, 0.0
    %v1649 = vsel %vm1614, %v1624, 0.0
    %v1650 = vsel %vm1615, %v1624, 0.0
    %v1651 = vsel %vm1616, %v1624, 0.0
    %v1652 = vsel %vm1617, %v1624, 0.0
    %v1653 = vsel %vm1618, %v1624, 0.0
    %v1654 = vsel %vm1619, %v1624, 0.0
    %v1655 = vsel %vm1620, %v1624, 0.0
    %v1656 = vsel %vm1621, %v1624, 0.0
    %v1657 = vsel %vm1622, %v1624, 0.0
    %v1658 = vsel %vm1607, %v1625, 0.0
    %v1659 = vsel %vm1608, %v1625, 0.0
    %v1660 = vsel %vm1609, %v1625, 0.0
    %v1661 = vsel %vm1610, %v1625, 0.0
    %v1662 = vsel %vm1611, %v1625, 0.0
    %v1663 = vsel %vm1612, %v1625, 0.0
    %v1664 = vsel %vm1613, %v1625, 0.0
    %v1665 = vsel %vm1614, %v1625, 0.0
    %v1666 = vsel %vm1615, %v1625, 0.0
    %v1667 = vsel %vm1616, %v1625, 0.0
    %v1668 = vsel %vm1617, %v1625, 0.0
    %v1669 = vsel %vm1618, %v1625, 0.0
    %v1670 = vsel %vm1619, %v1625, 0.0
    %v1671 = vsel %vm1620, %v1625, 0.0
    %v1672 = vsel %vm1621, %v1625, 0.0
    %v1673 = vsel %vm1622, %v1625, 0.0
    %1674 = vrot.lane.b32.xlu0 %v1626, 127
    %v1675 = vpop.permute.xlu0 %1674
    %1676 = vrot.lane.b32.xlu0 %v1627, 127
    %v1677 = vpop.permute.xlu0 %1676
    %1678 = vrot.lane.b32.xlu0 %v1628, 127
    %v1679 = vpop.permute.xlu0 %1678
    %1680 = vrot.lane.b32.xlu0 %v1629, 127
    %v1681 = vpop.permute.xlu0 %1680
    %1682 = vrot.lane.b32.xlu0 %v1630, 127
    %v1683 = vpop.permute.xlu0 %1682
    %1684 = vrot.lane.b32.xlu0 %v1631, 127
    %v1685 = vpop.permute.xlu0 %1684
    %1686 = vrot.lane.b32.xlu0 %v1632, 127
    %v1687 = vpop.permute.xlu0 %1686
    %1688 = vrot.lane.b32.xlu0 %v1633, 127
    %v1689 = vpop.permute.xlu0 %1688
    %1690 = vrot.lane.b32.xlu0 %v1634, 127
    %v1691 = vpop.permute.xlu0 %1690
    %1692 = vrot.lane.b32.xlu0 %v1635, 127
    %v1693 = vpop.permute.xlu0 %1692
    %1694 = vrot.lane.b32.xlu0 %v1636, 127
    %v1695 = vpop.permute.xlu0 %1694
    %1696 = vrot.lane.b32.xlu0 %v1637, 127
    %v1697 = vpop.permute.xlu0 %1696
    %1698 = vrot.lane.b32.xlu0 %v1638, 127
    %v1699 = vpop.permute.xlu0 %1698
    %1700 = vrot.lane.b32.xlu0 %v1639, 127
    %v1701 = vpop.permute.xlu0 %1700
    %1702 = vrot.lane.b32.xlu0 %v1640, 127
    %v1703 = vpop.permute.xlu0 %1702
    %1704 = vrot.lane.b32.xlu0 %v1641, 127
    %v1705 = vpop.permute.xlu0 %1704
    %1706 = vrot.lane.b32.xlu0 %v1642, 127
    %v1707 = vpop.permute.xlu0 %1706
    %1708 = vrot.lane.b32.xlu0 %v1643, 127
    %v1709 = vpop.permute.xlu0 %1708
    %1710 = vrot.lane.b32.xlu0 %v1644, 127
    %v1711 = vpop.permute.xlu0 %1710
    %1712 = vrot.lane.b32.xlu0 %v1645, 127
    %v1713 = vpop.permute.xlu0 %1712
    %1714 = vrot.lane.b32.xlu0 %v1646, 127
    %v1715 = vpop.permute.xlu0 %1714
    %1716 = vrot.lane.b32.xlu0 %v1647, 127
    %v1717 = vpop.permute.xlu0 %1716
    %1718 = vrot.lane.b32.xlu0 %v1648, 127
    %v1719 = vpop.permute.xlu0 %1718
    %1720 = vrot.lane.b32.xlu0 %v1649, 127
    %v1721 = vpop.permute.xlu0 %1720
    %1722 = vrot.lane.b32.xlu0 %v1650, 127
    %v1723 = vpop.permute.xlu0 %1722
    %1724 = vrot.lane.b32.xlu0 %v1651, 127
    %v1725 = vpop.permute.xlu0 %1724
    %1726 = vrot.lane.b32.xlu0 %v1652, 127
    %v1727 = vpop.permute.xlu0 %1726
    %1728 = vrot.lane.b32.xlu0 %v1653, 127
    %v1729 = vpop.permute.xlu0 %1728
    %1730 = vrot.lane.b32.xlu0 %v1654, 127
    %v1731 = vpop.permute.xlu0 %1730
    %1732 = vrot.lane.b32.xlu0 %v1655, 127
    %v1733 = vpop.permute.xlu0 %1732
    %1734 = vrot.lane.b32.xlu0 %v1656, 127
    %v1735 = vpop.permute.xlu0 %1734
    %1736 = vrot.lane.b32.xlu0 %v1657, 127
    %v1737 = vpop.permute.xlu0 %1736
    %1738 = vrot.lane.b32.xlu0 %v1658, 127
    %v1739 = vpop.permute.xlu0 %1738
    %1740 = vrot.lane.b32.xlu0 %v1659, 127
    %v1741 = vpop.permute.xlu0 %1740
    %1742 = vrot.lane.b32.xlu0 %v1660, 127
    %v1743 = vpop.permute.xlu0 %1742
    %1744 = vrot.lane.b32.xlu0 %v1661, 127
    %v1745 = vpop.permute.xlu0 %1744
    %1746 = vrot.lane.b32.xlu0 %v1662, 127
    %v1747 = vpop.permute.xlu0 %1746
    %1748 = vrot.lane.b32.xlu0 %v1663, 127
    %v1749 = vpop.permute.xlu0 %1748
    %1750 = vrot.lane.b32.xlu0 %v1664, 127
    %v1751 = vpop.permute.xlu0 %1750
    %1752 = vrot.lane.b32.xlu0 %v1665, 127
    %v1753 = vpop.permute.xlu0 %1752
    %1754 = vrot.lane.b32.xlu0 %v1666, 127
    %v1755 = vpop.permute.xlu0 %1754
    %1756 = vrot.lane.b32.xlu0 %v1667, 127
    %v1757 = vpop.permute.xlu0 %1756
    %1758 = vrot.lane.b32.xlu0 %v1668, 127
    %v1759 = vpop.permute.xlu0 %1758
    %1760 = vrot.lane.b32.xlu0 %v1669, 127
    %v1761 = vpop.permute.xlu0 %1760
    %1762 = vrot.lane.b32.xlu0 %v1670, 127
    %v1763 = vpop.permute.xlu0 %1762
    %1764 = vrot.lane.b32.xlu0 %v1671, 127
    %v1765 = vpop.permute.xlu0 %1764
    %1766 = vrot.lane.b32.xlu0 %v1672, 127
    %v1767 = vpop.permute.xlu0 %1766
    %1768 = vrot.lane.b32.xlu0 %v1673, 127
    %v1769 = vpop.permute.xlu0 %1768
    %vm1770 = vcmp.ge.s32.totalorder %v138, 127
    %v1771 = vsel %vm1770, 1, 0
    %vm1772 = vcmp.eq.s32.totalorder %v1771, 1
    %v1773 = vsel %vm1772, 0.0, %v1675
    %v1774 = vsel %vm1772, 0.0, %v1677
    %v1775 = vsel %vm1772, 0.0, %v1679
    %v1776 = vsel %vm1772, 0.0, %v1681
    %v1777 = vsel %vm1772, 0.0, %v1683
    %v1778 = vsel %vm1772, 0.0, %v1685
    %v1779 = vsel %vm1772, 0.0, %v1687
    %v1780 = vsel %vm1772, 0.0, %v1689
    %v1781 = vsel %vm1772, 0.0, %v1691
    %v1782 = vsel %vm1772, 0.0, %v1693
    %v1783 = vsel %vm1772, 0.0, %v1695
    %v1784 = vsel %vm1772, 0.0, %v1697
    %v1785 = vsel %vm1772, 0.0, %v1699
    %v1786 = vsel %vm1772, 0.0, %v1701
    %v1787 = vsel %vm1772, 0.0, %v1703
    %v1788 = vsel %vm1772, 0.0, %v1705
    %v1789 = vsel %vm1772, 0.0, %v1707
    %v1790 = vsel %vm1772, 0.0, %v1709
    %v1791 = vsel %vm1772, 0.0, %v1711
    %v1792 = vsel %vm1772, 0.0, %v1713
    %v1793 = vsel %vm1772, 0.0, %v1715
    %v1794 = vsel %vm1772, 0.0, %v1717
    %v1795 = vsel %vm1772, 0.0, %v1719
    %v1796 = vsel %vm1772, 0.0, %v1721
    %v1797 = vsel %vm1772, 0.0, %v1723
    %v1798 = vsel %vm1772, 0.0, %v1725
    %v1799 = vsel %vm1772, 0.0, %v1727
    %v1800 = vsel %vm1772, 0.0, %v1729
    %v1801 = vsel %vm1772, 0.0, %v1731
    %v1802 = vsel %vm1772, 0.0, %v1733
    %v1803 = vsel %vm1772, 0.0, %v1735
    %v1804 = vsel %vm1772, 0.0, %v1737
    %v1805 = vsel %vm1772, 0.0, %v1739
    %v1806 = vsel %vm1772, 0.0, %v1741
    %v1807 = vsel %vm1772, 0.0, %v1743
    %v1808 = vsel %vm1772, 0.0, %v1745
    %v1809 = vsel %vm1772, 0.0, %v1747
    %v1810 = vsel %vm1772, 0.0, %v1749
    %v1811 = vsel %vm1772, 0.0, %v1751
    %v1812 = vsel %vm1772, 0.0, %v1753
    %v1813 = vsel %vm1772, 0.0, %v1755
    %v1814 = vsel %vm1772, 0.0, %v1757
    %v1815 = vsel %vm1772, 0.0, %v1759
    %v1816 = vsel %vm1772, 0.0, %v1761
    %v1817 = vsel %vm1772, 0.0, %v1763
    %v1818 = vsel %vm1772, 0.0, %v1765
    %v1819 = vsel %vm1772, 0.0, %v1767
    %v1820 = vsel %vm1772, 0.0, %v1769
    %v1821 = vadd.f32 %v1626, %v1773
    %v1822 = vadd.f32 %v1627, %v1774
    %v1823 = vadd.f32 %v1628, %v1775
    %v1824 = vadd.f32 %v1629, %v1776
    %v1825 = vadd.f32 %v1630, %v1777
    %v1826 = vadd.f32 %v1631, %v1778
    %v1827 = vadd.f32 %v1632, %v1779
    %v1828 = vadd.f32 %v1633, %v1780
    %v1829 = vadd.f32 %v1634, %v1781
    %v1830 = vadd.f32 %v1635, %v1782
    %v1831 = vadd.f32 %v1636, %v1783
    %v1832 = vadd.f32 %v1637, %v1784
    %v1833 = vadd.f32 %v1638, %v1785
    %v1834 = vadd.f32 %v1639, %v1786
    %v1835 = vadd.f32 %v1640, %v1787
    %v1836 = vadd.f32 %v1641, %v1788
    %v1837 = vadd.f32 %v1642, %v1789
    %v1838 = vadd.f32 %v1643, %v1790
    %v1839 = vadd.f32 %v1644, %v1791
    %v1840 = vadd.f32 %v1645, %v1792
    %v1841 = vadd.f32 %v1646, %v1793
    %v1842 = vadd.f32 %v1647, %v1794
    %v1843 = vadd.f32 %v1648, %v1795
    %v1844 = vadd.f32 %v1649, %v1796
    %v1845 = vadd.f32 %v1650, %v1797
    %v1846 = vadd.f32 %v1651, %v1798
    %v1847 = vadd.f32 %v1652, %v1799
    %v1848 = vadd.f32 %v1653, %v1800
    %v1849 = vadd.f32 %v1654, %v1801
    %v1850 = vadd.f32 %v1655, %v1802
    %v1851 = vadd.f32 %v1656, %v1803
    %v1852 = vadd.f32 %v1657, %v1804
    %v1853 = vadd.f32 %v1658, %v1805
    %v1854 = vadd.f32 %v1659, %v1806
    %v1855 = vadd.f32 %v1660, %v1807
    %v1856 = vadd.f32 %v1661, %v1808
    %v1857 = vadd.f32 %v1662, %v1809
    %v1858 = vadd.f32 %v1663, %v1810
    %v1859 = vadd.f32 %v1664, %v1811
    %v1860 = vadd.f32 %v1665, %v1812
    %v1861 = vadd.f32 %v1666, %v1813
    %v1862 = vadd.f32 %v1667, %v1814
    %v1863 = vadd.f32 %v1668, %v1815
    %v1864 = vadd.f32 %v1669, %v1816
    %v1865 = vadd.f32 %v1670, %v1817
    %v1866 = vadd.f32 %v1671, %v1818
    %v1867 = vadd.f32 %v1672, %v1819
    %v1868 = vadd.f32 %v1673, %v1820
    %1869 = vrot.lane.b32.xlu0 %v1821, 126
    %v1870 = vpop.permute.xlu0 %1869
    %1871 = vrot.lane.b32.xlu0 %v1822, 126
    %v1872 = vpop.permute.xlu0 %1871
    %1873 = vrot.lane.b32.xlu0 %v1823, 126
    %v1874 = vpop.permute.xlu0 %1873
    %1875 = vrot.lane.b32.xlu0 %v1824, 126
    %v1876 = vpop.permute.xlu0 %1875
    %1877 = vrot.lane.b32.xlu0 %v1825, 126
    %v1878 = vpop.permute.xlu0 %1877
    %1879 = vrot.lane.b32.xlu0 %v1826, 126
    %v1880 = vpop.permute.xlu0 %1879
    %1881 = vrot.lane.b32.xlu0 %v1827, 126
    %v1882 = vpop.permute.xlu0 %1881
    %1883 = vrot.lane.b32.xlu0 %v1828, 126
    %v1884 = vpop.permute.xlu0 %1883
    %1885 = vrot.lane.b32.xlu0 %v1829, 126
    %v1886 = vpop.permute.xlu0 %1885
    %1887 = vrot.lane.b32.xlu0 %v1830, 126
    %v1888 = vpop.permute.xlu0 %1887
    %1889 = vrot.lane.b32.xlu0 %v1831, 126
    %v1890 = vpop.permute.xlu0 %1889
    %1891 = vrot.lane.b32.xlu0 %v1832, 126
    %v1892 = vpop.permute.xlu0 %1891
    %1893 = vrot.lane.b32.xlu0 %v1833, 126
    %v1894 = vpop.permute.xlu0 %1893
    %1895 = vrot.lane.b32.xlu0 %v1834, 126
    %v1896 = vpop.permute.xlu0 %1895
    %1897 = vrot.lane.b32.xlu0 %v1835, 126
    %v1898 = vpop.permute.xlu0 %1897
    %1899 = vrot.lane.b32.xlu0 %v1836, 126
    %v1900 = vpop.permute.xlu0 %1899
    %1901 = vrot.lane.b32.xlu0 %v1837, 126
    %v1902 = vpop.permute.xlu0 %1901
    %1903 = vrot.lane.b32.xlu0 %v1838, 126
    %v1904 = vpop.permute.xlu0 %1903
    %1905 = vrot.lane.b32.xlu0 %v1839, 126
    %v1906 = vpop.permute.xlu0 %1905
    %1907 = vrot.lane.b32.xlu0 %v1840, 126
    %v1908 = vpop.permute.xlu0 %1907
    %1909 = vrot.lane.b32.xlu0 %v1841, 126
    %v1910 = vpop.permute.xlu0 %1909
    %1911 = vrot.lane.b32.xlu0 %v1842, 126
    %v1912 = vpop.permute.xlu0 %1911
    %1913 = vrot.lane.b32.xlu0 %v1843, 126
    %v1914 = vpop.permute.xlu0 %1913
    %1915 = vrot.lane.b32.xlu0 %v1844, 126
    %v1916 = vpop.permute.xlu0 %1915
    %1917 = vrot.lane.b32.xlu0 %v1845, 126
    %v1918 = vpop.permute.xlu0 %1917
    %1919 = vrot.lane.b32.xlu0 %v1846, 126
    %v1920 = vpop.permute.xlu0 %1919
    %1921 = vrot.lane.b32.xlu0 %v1847, 126
    %v1922 = vpop.permute.xlu0 %1921
    %1923 = vrot.lane.b32.xlu0 %v1848, 126
    %v1924 = vpop.permute.xlu0 %1923
    %1925 = vrot.lane.b32.xlu0 %v1849, 126
    %v1926 = vpop.permute.xlu0 %1925
    %1927 = vrot.lane.b32.xlu0 %v1850, 126
    %v1928 = vpop.permute.xlu0 %1927
    %1929 = vrot.lane.b32.xlu0 %v1851, 126
    %v1930 = vpop.permute.xlu0 %1929
    %1931 = vrot.lane.b32.xlu0 %v1852, 126
    %v1932 = vpop.permute.xlu0 %1931
    %1933 = vrot.lane.b32.xlu0 %v1853, 126
    %v1934 = vpop.permute.xlu0 %1933
    %1935 = vrot.lane.b32.xlu0 %v1854, 126
    %v1936 = vpop.permute.xlu0 %1935
    %1937 = vrot.lane.b32.xlu0 %v1855, 126
    %v1938 = vpop.permute.xlu0 %1937
    %1939 = vrot.lane.b32.xlu0 %v1856, 126
    %v1940 = vpop.permute.xlu0 %1939
    %1941 = vrot.lane.b32.xlu0 %v1857, 126
    %v1942 = vpop.permute.xlu0 %1941
    %1943 = vrot.lane.b32.xlu0 %v1858, 126
    %v1944 = vpop.permute.xlu0 %1943
    %1945 = vrot.lane.b32.xlu0 %v1859, 126
    %v1946 = vpop.permute.xlu0 %1945
    %1947 = vrot.lane.b32.xlu0 %v1860, 126
    %v1948 = vpop.permute.xlu0 %1947
    %1949 = vrot.lane.b32.xlu0 %v1861, 126
    %v1950 = vpop.permute.xlu0 %1949
    %1951 = vrot.lane.b32.xlu0 %v1862, 126
    %v1952 = vpop.permute.xlu0 %1951
    %1953 = vrot.lane.b32.xlu0 %v1863, 126
    %v1954 = vpop.permute.xlu0 %1953
    %1955 = vrot.lane.b32.xlu0 %v1864, 126
    %v1956 = vpop.permute.xlu0 %1955
    %1957 = vrot.lane.b32.xlu0 %v1865, 126
    %v1958 = vpop.permute.xlu0 %1957
    %1959 = vrot.lane.b32.xlu0 %v1866, 126
    %v1960 = vpop.permute.xlu0 %1959
    %1961 = vrot.lane.b32.xlu0 %v1867, 126
    %v1962 = vpop.permute.xlu0 %1961
    %1963 = vrot.lane.b32.xlu0 %v1868, 126
    %v1964 = vpop.permute.xlu0 %1963
    %vm1965 = vcmp.ge.s32.totalorder %v138, 126
    %v1966 = vsel %vm1965, 1, 0
    %vm1967 = vcmp.eq.s32.totalorder %v1966, 1
    %v1968 = vsel %vm1967, 0.0, %v1870
    %v1969 = vsel %vm1967, 0.0, %v1872
    %v1970 = vsel %vm1967, 0.0, %v1874
    %v1971 = vsel %vm1967, 0.0, %v1876
    %v1972 = vsel %vm1967, 0.0, %v1878
    %v1973 = vsel %vm1967, 0.0, %v1880
    %v1974 = vsel %vm1967, 0.0, %v1882
    %v1975 = vsel %vm1967, 0.0, %v1884
    %v1976 = vsel %vm1967, 0.0, %v1886
    %v1977 = vsel %vm1967, 0.0, %v1888
    %v1978 = vsel %vm1967, 0.0, %v1890
    %v1979 = vsel %vm1967, 0.0, %v1892
    %v1980 = vsel %vm1967, 0.0, %v1894
    %v1981 = vsel %vm1967, 0.0, %v1896
    %v1982 = vsel %vm1967, 0.0, %v1898
    %v1983 = vsel %vm1967, 0.0, %v1900
    %v1984 = vsel %vm1967, 0.0, %v1902
    %v1985 = vsel %vm1967, 0.0, %v1904
    %v1986 = vsel %vm1967, 0.0, %v1906
    %v1987 = vsel %vm1967, 0.0, %v1908
    %v1988 = vsel %vm1967, 0.0, %v1910
    %v1989 = vsel %vm1967, 0.0, %v1912
    %v1990 = vsel %vm1967, 0.0, %v1914
    %v1991 = vsel %vm1967, 0.0, %v1916
    %v1992 = vsel %vm1967, 0.0, %v1918
    %v1993 = vsel %vm1967, 0.0, %v1920
    %v1994 = vsel %vm1967, 0.0, %v1922
    %v1995 = vsel %vm1967, 0.0, %v1924
    %v1996 = vsel %vm1967, 0.0, %v1926
    %v1997 = vsel %vm1967, 0.0, %v1928
    %v1998 = vsel %vm1967, 0.0, %v1930
    %v1999 = vsel %vm1967, 0.0, %v1932
    %v2000 = vsel %vm1967, 0.0, %v1934
    %v2001 = vsel %vm1967, 0.0, %v1936
    %v2002 = vsel %vm1967, 0.0, %v1938
    %v2003 = vsel %vm1967, 0.0, %v1940
    %v2004 = vsel %vm1967, 0.0, %v1942
    %v2005 = vsel %vm1967, 0.0, %v1944
    %v2006 = vsel %vm1967, 0.0, %v1946
    %v2007 = vsel %vm1967, 0.0, %v1948
    %v2008 = vsel %vm1967, 0.0, %v1950
    %v2009 = vsel %vm1967, 0.0, %v1952
    %v2010 = vsel %vm1967, 0.0, %v1954
    %v2011 = vsel %vm1967, 0.0, %v1956
    %v2012 = vsel %vm1967, 0.0, %v1958
    %v2013 = vsel %vm1967, 0.0, %v1960
    %v2014 = vsel %vm1967, 0.0, %v1962
    %v2015 = vsel %vm1967, 0.0, %v1964
    %v2016 = vadd.f32 %v1821, %v1968
    %v2017 = vadd.f32 %v1822, %v1969
    %v2018 = vadd.f32 %v1823, %v1970
    %v2019 = vadd.f32 %v1824, %v1971
    %v2020 = vadd.f32 %v1825, %v1972
    %v2021 = vadd.f32 %v1826, %v1973
    %v2022 = vadd.f32 %v1827, %v1974
    %v2023 = vadd.f32 %v1828, %v1975
    %v2024 = vadd.f32 %v1829, %v1976
    %v2025 = vadd.f32 %v1830, %v1977
    %v2026 = vadd.f32 %v1831, %v1978
    %v2027 = vadd.f32 %v1832, %v1979
    %v2028 = vadd.f32 %v1833, %v1980
    %v2029 = vadd.f32 %v1834, %v1981
    %v2030 = vadd.f32 %v1835, %v1982
    %v2031 = vadd.f32 %v1836, %v1983
    %v2032 = vadd.f32 %v1837, %v1984
    %v2033 = vadd.f32 %v1838, %v1985
    %v2034 = vadd.f32 %v1839, %v1986
    %v2035 = vadd.f32 %v1840, %v1987
    %v2036 = vadd.f32 %v1841, %v1988
    %v2037 = vadd.f32 %v1842, %v1989
    %v2038 = vadd.f32 %v1843, %v1990
    %v2039 = vadd.f32 %v1844, %v1991
    %v2040 = vadd.f32 %v1845, %v1992
    %v2041 = vadd.f32 %v1846, %v1993
    %v2042 = vadd.f32 %v1847, %v1994
    %v2043 = vadd.f32 %v1848, %v1995
    %v2044 = vadd.f32 %v1849, %v1996
    %v2045 = vadd.f32 %v1850, %v1997
    %v2046 = vadd.f32 %v1851, %v1998
    %v2047 = vadd.f32 %v1852, %v1999
    %v2048 = vadd.f32 %v1853, %v2000
    %v2049 = vadd.f32 %v1854, %v2001
    %v2050 = vadd.f32 %v1855, %v2002
    %v2051 = vadd.f32 %v1856, %v2003
    %v2052 = vadd.f32 %v1857, %v2004
    %v2053 = vadd.f32 %v1858, %v2005
    %v2054 = vadd.f32 %v1859, %v2006
    %v2055 = vadd.f32 %v1860, %v2007
    %v2056 = vadd.f32 %v1861, %v2008
    %v2057 = vadd.f32 %v1862, %v2009
    %v2058 = vadd.f32 %v1863, %v2010
    %v2059 = vadd.f32 %v1864, %v2011
    %v2060 = vadd.f32 %v1865, %v2012
    %v2061 = vadd.f32 %v1866, %v2013
    %v2062 = vadd.f32 %v1867, %v2014
    %v2063 = vadd.f32 %v1868, %v2015
    %2064 = vrot.lane.b32.xlu0 %v2016, 124
    %v2065 = vpop.permute.xlu0 %2064
    %2066 = vrot.lane.b32.xlu0 %v2017, 124
    %v2067 = vpop.permute.xlu0 %2066
    %2068 = vrot.lane.b32.xlu0 %v2018, 124
    %v2069 = vpop.permute.xlu0 %2068
    %2070 = vrot.lane.b32.xlu0 %v2019, 124
    %v2071 = vpop.permute.xlu0 %2070
    %2072 = vrot.lane.b32.xlu0 %v2020, 124
    %v2073 = vpop.permute.xlu0 %2072
    %2074 = vrot.lane.b32.xlu0 %v2021, 124
    %v2075 = vpop.permute.xlu0 %2074
    %2076 = vrot.lane.b32.xlu0 %v2022, 124
    %v2077 = vpop.permute.xlu0 %2076
    %2078 = vrot.lane.b32.xlu0 %v2023, 124
    %v2079 = vpop.permute.xlu0 %2078
    %2080 = vrot.lane.b32.xlu0 %v2024, 124
    %v2081 = vpop.permute.xlu0 %2080
    %2082 = vrot.lane.b32.xlu0 %v2025, 124
    %v2083 = vpop.permute.xlu0 %2082
    %2084 = vrot.lane.b32.xlu0 %v2026, 124
    %v2085 = vpop.permute.xlu0 %2084
    %2086 = vrot.lane.b32.xlu0 %v2027, 124
    %v2087 = vpop.permute.xlu0 %2086
    %2088 = vrot.lane.b32.xlu0 %v2028, 124
    %v2089 = vpop.permute.xlu0 %2088
    %2090 = vrot.lane.b32.xlu0 %v2029, 124
    %v2091 = vpop.permute.xlu0 %2090
    %2092 = vrot.lane.b32.xlu0 %v2030, 124
    %v2093 = vpop.permute.xlu0 %2092
    %2094 = vrot.lane.b32.xlu0 %v2031, 124
    %v2095 = vpop.permute.xlu0 %2094
    %2096 = vrot.lane.b32.xlu0 %v2032, 124
    %v2097 = vpop.permute.xlu0 %2096
    %2098 = vrot.lane.b32.xlu0 %v2033, 124
    %v2099 = vpop.permute.xlu0 %2098
    %2100 = vrot.lane.b32.xlu0 %v2034, 124
    %v2101 = vpop.permute.xlu0 %2100
    %2102 = vrot.lane.b32.xlu0 %v2035, 124
    %v2103 = vpop.permute.xlu0 %2102
    %2104 = vrot.lane.b32.xlu0 %v2036, 124
    %v2105 = vpop.permute.xlu0 %2104
    %2106 = vrot.lane.b32.xlu0 %v2037, 124
    %v2107 = vpop.permute.xlu0 %2106
    %2108 = vrot.lane.b32.xlu0 %v2038, 124
    %v2109 = vpop.permute.xlu0 %2108
    %2110 = vrot.lane.b32.xlu0 %v2039, 124
    %v2111 = vpop.permute.xlu0 %2110
    %2112 = vrot.lane.b32.xlu0 %v2040, 124
    %v2113 = vpop.permute.xlu0 %2112
    %2114 = vrot.lane.b32.xlu0 %v2041, 124
    %v2115 = vpop.permute.xlu0 %2114
    %2116 = vrot.lane.b32.xlu0 %v2042, 124
    %v2117 = vpop.permute.xlu0 %2116
    %2118 = vrot.lane.b32.xlu0 %v2043, 124
    %v2119 = vpop.permute.xlu0 %2118
    %2120 = vrot.lane.b32.xlu0 %v2044, 124
    %v2121 = vpop.permute.xlu0 %2120
    %2122 = vrot.lane.b32.xlu0 %v2045, 124
    %v2123 = vpop.permute.xlu0 %2122
    %2124 = vrot.lane.b32.xlu0 %v2046, 124
    %v2125 = vpop.permute.xlu0 %2124
    %2126 = vrot.lane.b32.xlu0 %v2047, 124
    %v2127 = vpop.permute.xlu0 %2126
    %2128 = vrot.lane.b32.xlu0 %v2048, 124
    %v2129 = vpop.permute.xlu0 %2128
    %2130 = vrot.lane.b32.xlu0 %v2049, 124
    %v2131 = vpop.permute.xlu0 %2130
    %2132 = vrot.lane.b32.xlu0 %v2050, 124
    %v2133 = vpop.permute.xlu0 %2132
    %2134 = vrot.lane.b32.xlu0 %v2051, 124
    %v2135 = vpop.permute.xlu0 %2134
    %2136 = vrot.lane.b32.xlu0 %v2052, 124
    %v2137 = vpop.permute.xlu0 %2136
    %2138 = vrot.lane.b32.xlu0 %v2053, 124
    %v2139 = vpop.permute.xlu0 %2138
    %2140 = vrot.lane.b32.xlu0 %v2054, 124
    %v2141 = vpop.permute.xlu0 %2140
    %2142 = vrot.lane.b32.xlu0 %v2055, 124
    %v2143 = vpop.permute.xlu0 %2142
    %2144 = vrot.lane.b32.xlu0 %v2056, 124
    %v2145 = vpop.permute.xlu0 %2144
    %2146 = vrot.lane.b32.xlu0 %v2057, 124
    %v2147 = vpop.permute.xlu0 %2146
    %2148 = vrot.lane.b32.xlu0 %v2058, 124
    %v2149 = vpop.permute.xlu0 %2148
    %2150 = vrot.lane.b32.xlu0 %v2059, 124
    %v2151 = vpop.permute.xlu0 %2150
    %2152 = vrot.lane.b32.xlu0 %v2060, 124
    %v2153 = vpop.permute.xlu0 %2152
    %2154 = vrot.lane.b32.xlu0 %v2061, 124
    %v2155 = vpop.permute.xlu0 %2154
    %2156 = vrot.lane.b32.xlu0 %v2062, 124
    %v2157 = vpop.permute.xlu0 %2156
    %2158 = vrot.lane.b32.xlu0 %v2063, 124
    %v2159 = vpop.permute.xlu0 %2158
    %vm2160 = vcmp.ge.s32.totalorder %v138, 124
    %v2161 = vsel %vm2160, 1, 0
    %vm2162 = vcmp.eq.s32.totalorder %v2161, 1
    %v2163 = vsel %vm2162, 0.0, %v2065
    %v2164 = vsel %vm2162, 0.0, %v2067
    %v2165 = vsel %vm2162, 0.0, %v2069
    %v2166 = vsel %vm2162, 0.0, %v2071
    %v2167 = vsel %vm2162, 0.0, %v2073
    %v2168 = vsel %vm2162, 0.0, %v2075
    %v2169 = vsel %vm2162, 0.0, %v2077
    %v2170 = vsel %vm2162, 0.0, %v2079
    %v2171 = vsel %vm2162, 0.0, %v2081
    %v2172 = vsel %vm2162, 0.0, %v2083
    %v2173 = vsel %vm2162, 0.0, %v2085
    %v2174 = vsel %vm2162, 0.0, %v2087
    %v2175 = vsel %vm2162, 0.0, %v2089
    %v2176 = vsel %vm2162, 0.0, %v2091
    %v2177 = vsel %vm2162, 0.0, %v2093
    %v2178 = vsel %vm2162, 0.0, %v2095
    %v2179 = vsel %vm2162, 0.0, %v2097
    %v2180 = vsel %vm2162, 0.0, %v2099
    %v2181 = vsel %vm2162, 0.0, %v2101
    %v2182 = vsel %vm2162, 0.0, %v2103
    %v2183 = vsel %vm2162, 0.0, %v2105
    %v2184 = vsel %vm2162, 0.0, %v2107
    %v2185 = vsel %vm2162, 0.0, %v2109
    %v2186 = vsel %vm2162, 0.0, %v2111
    %v2187 = vsel %vm2162, 0.0, %v2113
    %v2188 = vsel %vm2162, 0.0, %v2115
    %v2189 = vsel %vm2162, 0.0, %v2117
    %v2190 = vsel %vm2162, 0.0, %v2119
    %v2191 = vsel %vm2162, 0.0, %v2121
    %v2192 = vsel %vm2162, 0.0, %v2123
    %v2193 = vsel %vm2162, 0.0, %v2125
    %v2194 = vsel %vm2162, 0.0, %v2127
    %v2195 = vsel %vm2162, 0.0, %v2129
    %v2196 = vsel %vm2162, 0.0, %v2131
    %v2197 = vsel %vm2162, 0.0, %v2133
    %v2198 = vsel %vm2162, 0.0, %v2135
    %v2199 = vsel %vm2162, 0.0, %v2137
    %v2200 = vsel %vm2162, 0.0, %v2139
    %v2201 = vsel %vm2162, 0.0, %v2141
    %v2202 = vsel %vm2162, 0.0, %v2143
    %v2203 = vsel %vm2162, 0.0, %v2145
    %v2204 = vsel %vm2162, 0.0, %v2147
    %v2205 = vsel %vm2162, 0.0, %v2149
    %v2206 = vsel %vm2162, 0.0, %v2151
    %v2207 = vsel %vm2162, 0.0, %v2153
    %v2208 = vsel %vm2162, 0.0, %v2155
    %v2209 = vsel %vm2162, 0.0, %v2157
    %v2210 = vsel %vm2162, 0.0, %v2159
    %v2211 = vadd.f32 %v2016, %v2163
    %v2212 = vadd.f32 %v2017, %v2164
    %v2213 = vadd.f32 %v2018, %v2165
    %v2214 = vadd.f32 %v2019, %v2166
    %v2215 = vadd.f32 %v2020, %v2167
    %v2216 = vadd.f32 %v2021, %v2168
    %v2217 = vadd.f32 %v2022, %v2169
    %v2218 = vadd.f32 %v2023, %v2170
    %v2219 = vadd.f32 %v2024, %v2171
    %v2220 = vadd.f32 %v2025, %v2172
    %v2221 = vadd.f32 %v2026, %v2173
    %v2222 = vadd.f32 %v2027, %v2174
    %v2223 = vadd.f32 %v2028, %v2175
    %v2224 = vadd.f32 %v2029, %v2176
    %v2225 = vadd.f32 %v2030, %v2177
    %v2226 = vadd.f32 %v2031, %v2178
    %v2227 = vadd.f32 %v2032, %v2179
    %v2228 = vadd.f32 %v2033, %v2180
    %v2229 = vadd.f32 %v2034, %v2181
    %v2230 = vadd.f32 %v2035, %v2182
    %v2231 = vadd.f32 %v2036, %v2183
    %v2232 = vadd.f32 %v2037, %v2184
    %v2233 = vadd.f32 %v2038, %v2185
    %v2234 = vadd.f32 %v2039, %v2186
    %v2235 = vadd.f32 %v2040, %v2187
    %v2236 = vadd.f32 %v2041, %v2188
    %v2237 = vadd.f32 %v2042, %v2189
    %v2238 = vadd.f32 %v2043, %v2190
    %v2239 = vadd.f32 %v2044, %v2191
    %v2240 = vadd.f32 %v2045, %v2192
    %v2241 = vadd.f32 %v2046, %v2193
    %v2242 = vadd.f32 %v2047, %v2194
    %v2243 = vadd.f32 %v2048, %v2195
    %v2244 = vadd.f32 %v2049, %v2196
    %v2245 = vadd.f32 %v2050, %v2197
    %v2246 = vadd.f32 %v2051, %v2198
    %v2247 = vadd.f32 %v2052, %v2199
    %v2248 = vadd.f32 %v2053, %v2200
    %v2249 = vadd.f32 %v2054, %v2201
    %v2250 = vadd.f32 %v2055, %v2202
    %v2251 = vadd.f32 %v2056, %v2203
    %v2252 = vadd.f32 %v2057, %v2204
    %v2253 = vadd.f32 %v2058, %v2205
    %v2254 = vadd.f32 %v2059, %v2206
    %v2255 = vadd.f32 %v2060, %v2207
    %v2256 = vadd.f32 %v2061, %v2208
    %v2257 = vadd.f32 %v2062, %v2209
    %v2258 = vadd.f32 %v2063, %v2210
    %2259 = vrot.lane.b32.xlu0 %v2211, 120
    %v2260 = vpop.permute.xlu0 %2259
    %2261 = vrot.lane.b32.xlu0 %v2212, 120
    %v2262 = vpop.permute.xlu0 %2261
    %2263 = vrot.lane.b32.xlu0 %v2213, 120
    %v2264 = vpop.permute.xlu0 %2263
    %2265 = vrot.lane.b32.xlu0 %v2214, 120
    %v2266 = vpop.permute.xlu0 %2265
    %2267 = vrot.lane.b32.xlu0 %v2215, 120
    %v2268 = vpop.permute.xlu0 %2267
    %2269 = vrot.lane.b32.xlu0 %v2216, 120
    %v2270 = vpop.permute.xlu0 %2269
    %2271 = vrot.lane.b32.xlu0 %v2217, 120
    %v2272 = vpop.permute.xlu0 %2271
    %2273 = vrot.lane.b32.xlu0 %v2218, 120
    %v2274 = vpop.permute.xlu0 %2273
    %2275 = vrot.lane.b32.xlu0 %v2219, 120
    %v2276 = vpop.permute.xlu0 %2275
    %2277 = vrot.lane.b32.xlu0 %v2220, 120
    %v2278 = vpop.permute.xlu0 %2277
    %2279 = vrot.lane.b32.xlu0 %v2221, 120
    %v2280 = vpop.permute.xlu0 %2279
    %2281 = vrot.lane.b32.xlu0 %v2222, 120
    %v2282 = vpop.permute.xlu0 %2281
    %2283 = vrot.lane.b32.xlu0 %v2223, 120
    %v2284 = vpop.permute.xlu0 %2283
    %2285 = vrot.lane.b32.xlu0 %v2224, 120
    %v2286 = vpop.permute.xlu0 %2285
    %2287 = vrot.lane.b32.xlu0 %v2225, 120
    %v2288 = vpop.permute.xlu0 %2287
    %2289 = vrot.lane.b32.xlu0 %v2226, 120
    %v2290 = vpop.permute.xlu0 %2289
    %2291 = vrot.lane.b32.xlu0 %v2227, 120
    %v2292 = vpop.permute.xlu0 %2291
    %2293 = vrot.lane.b32.xlu0 %v2228, 120
    %v2294 = vpop.permute.xlu0 %2293
    %2295 = vrot.lane.b32.xlu0 %v2229, 120
    %v2296 = vpop.permute.xlu0 %2295
    %2297 = vrot.lane.b32.xlu0 %v2230, 120
    %v2298 = vpop.permute.xlu0 %2297
    %2299 = vrot.lane.b32.xlu0 %v2231, 120
    %v2300 = vpop.permute.xlu0 %2299
    %2301 = vrot.lane.b32.xlu0 %v2232, 120
    %v2302 = vpop.permute.xlu0 %2301
    %2303 = vrot.lane.b32.xlu0 %v2233, 120
    %v2304 = vpop.permute.xlu0 %2303
    %2305 = vrot.lane.b32.xlu0 %v2234, 120
    %v2306 = vpop.permute.xlu0 %2305
    %2307 = vrot.lane.b32.xlu0 %v2235, 120
    %v2308 = vpop.permute.xlu0 %2307
    %2309 = vrot.lane.b32.xlu0 %v2236, 120
    %v2310 = vpop.permute.xlu0 %2309
    %2311 = vrot.lane.b32.xlu0 %v2237, 120
    %v2312 = vpop.permute.xlu0 %2311
    %2313 = vrot.lane.b32.xlu0 %v2238, 120
    %v2314 = vpop.permute.xlu0 %2313
    %2315 = vrot.lane.b32.xlu0 %v2239, 120
    %v2316 = vpop.permute.xlu0 %2315
    %2317 = vrot.lane.b32.xlu0 %v2240, 120
    %v2318 = vpop.permute.xlu0 %2317
    %2319 = vrot.lane.b32.xlu0 %v2241, 120
    %v2320 = vpop.permute.xlu0 %2319
    %2321 = vrot.lane.b32.xlu0 %v2242, 120
    %v2322 = vpop.permute.xlu0 %2321
    %2323 = vrot.lane.b32.xlu0 %v2243, 120
    %v2324 = vpop.permute.xlu0 %2323
    %2325 = vrot.lane.b32.xlu0 %v2244, 120
    %v2326 = vpop.permute.xlu0 %2325
    %2327 = vrot.lane.b32.xlu0 %v2245, 120
    %v2328 = vpop.permute.xlu0 %2327
    %2329 = vrot.lane.b32.xlu0 %v2246, 120
    %v2330 = vpop.permute.xlu0 %2329
    %2331 = vrot.lane.b32.xlu0 %v2247, 120
    %v2332 = vpop.permute.xlu0 %2331
    %2333 = vrot.lane.b32.xlu0 %v2248, 120
    %v2334 = vpop.permute.xlu0 %2333
    %2335 = vrot.lane.b32.xlu0 %v2249, 120
    %v2336 = vpop.permute.xlu0 %2335
    %2337 = vrot.lane.b32.xlu0 %v2250, 120
    %v2338 = vpop.permute.xlu0 %2337
    %2339 = vrot.lane.b32.xlu0 %v2251, 120
    %v2340 = vpop.permute.xlu0 %2339
    %2341 = vrot.lane.b32.xlu0 %v2252, 120
    %v2342 = vpop.permute.xlu0 %2341
    %2343 = vrot.lane.b32.xlu0 %v2253, 120
    %v2344 = vpop.permute.xlu0 %2343
    %2345 = vrot.lane.b32.xlu0 %v2254, 120
    %v2346 = vpop.permute.xlu0 %2345
    %2347 = vrot.lane.b32.xlu0 %v2255, 120
    %v2348 = vpop.permute.xlu0 %2347
    %2349 = vrot.lane.b32.xlu0 %v2256, 120
    %v2350 = vpop.permute.xlu0 %2349
    %2351 = vrot.lane.b32.xlu0 %v2257, 120
    %v2352 = vpop.permute.xlu0 %2351
    %2353 = vrot.lane.b32.xlu0 %v2258, 120
    %v2354 = vpop.permute.xlu0 %2353
    %vm2355 = vcmp.ge.s32.totalorder %v138, 120
    %v2356 = vsel %vm2355, 1, 0
    %vm2357 = vcmp.eq.s32.totalorder %v2356, 1
    %v2358 = vsel %vm2357, 0.0, %v2260
    %v2359 = vsel %vm2357, 0.0, %v2262
    %v2360 = vsel %vm2357, 0.0, %v2264
    %v2361 = vsel %vm2357, 0.0, %v2266
    %v2362 = vsel %vm2357, 0.0, %v2268
    %v2363 = vsel %vm2357, 0.0, %v2270
    %v2364 = vsel %vm2357, 0.0, %v2272
    %v2365 = vsel %vm2357, 0.0, %v2274
    %v2366 = vsel %vm2357, 0.0, %v2276
    %v2367 = vsel %vm2357, 0.0, %v2278
    %v2368 = vsel %vm2357, 0.0, %v2280
    %v2369 = vsel %vm2357, 0.0, %v2282
    %v2370 = vsel %vm2357, 0.0, %v2284
    %v2371 = vsel %vm2357, 0.0, %v2286
    %v2372 = vsel %vm2357, 0.0, %v2288
    %v2373 = vsel %vm2357, 0.0, %v2290
    %v2374 = vsel %vm2357, 0.0, %v2292
    %v2375 = vsel %vm2357, 0.0, %v2294
    %v2376 = vsel %vm2357, 0.0, %v2296
    %v2377 = vsel %vm2357, 0.0, %v2298
    %v2378 = vsel %vm2357, 0.0, %v2300
    %v2379 = vsel %vm2357, 0.0, %v2302
    %v2380 = vsel %vm2357, 0.0, %v2304
    %v2381 = vsel %vm2357, 0.0, %v2306
    %v2382 = vsel %vm2357, 0.0, %v2308
    %v2383 = vsel %vm2357, 0.0, %v2310
    %v2384 = vsel %vm2357, 0.0, %v2312
    %v2385 = vsel %vm2357, 0.0, %v2314
    %v2386 = vsel %vm2357, 0.0, %v2316
    %v2387 = vsel %vm2357, 0.0, %v2318
    %v2388 = vsel %vm2357, 0.0, %v2320
    %v2389 = vsel %vm2357, 0.0, %v2322
    %v2390 = vsel %vm2357, 0.0, %v2324
    %v2391 = vsel %vm2357, 0.0, %v2326
    %v2392 = vsel %vm2357, 0.0, %v2328
    %v2393 = vsel %vm2357, 0.0, %v2330
    %v2394 = vsel %vm2357, 0.0, %v2332
    %v2395 = vsel %vm2357, 0.0, %v2334
    %v2396 = vsel %vm2357, 0.0, %v2336
    %v2397 = vsel %vm2357, 0.0, %v2338
    %v2398 = vsel %vm2357, 0.0, %v2340
    %v2399 = vsel %vm2357, 0.0, %v2342
    %v2400 = vsel %vm2357, 0.0, %v2344
    %v2401 = vsel %vm2357, 0.0, %v2346
    %v2402 = vsel %vm2357, 0.0, %v2348
    %v2403 = vsel %vm2357, 0.0, %v2350
    %v2404 = vsel %vm2357, 0.0, %v2352
    %v2405 = vsel %vm2357, 0.0, %v2354
    %v2406 = vadd.f32 %v2211, %v2358
    %v2407 = vadd.f32 %v2212, %v2359
    %v2408 = vadd.f32 %v2213, %v2360
    %v2409 = vadd.f32 %v2214, %v2361
    %v2410 = vadd.f32 %v2215, %v2362
    %v2411 = vadd.f32 %v2216, %v2363
    %v2412 = vadd.f32 %v2217, %v2364
    %v2413 = vadd.f32 %v2218, %v2365
    %v2414 = vadd.f32 %v2219, %v2366
    %v2415 = vadd.f32 %v2220, %v2367
    %v2416 = vadd.f32 %v2221, %v2368
    %v2417 = vadd.f32 %v2222, %v2369
    %v2418 = vadd.f32 %v2223, %v2370
    %v2419 = vadd.f32 %v2224, %v2371
    %v2420 = vadd.f32 %v2225, %v2372
    %v2421 = vadd.f32 %v2226, %v2373
    %v2422 = vadd.f32 %v2227, %v2374
    %v2423 = vadd.f32 %v2228, %v2375
    %v2424 = vadd.f32 %v2229, %v2376
    %v2425 = vadd.f32 %v2230, %v2377
    %v2426 = vadd.f32 %v2231, %v2378
    %v2427 = vadd.f32 %v2232, %v2379
    %v2428 = vadd.f32 %v2233, %v2380
    %v2429 = vadd.f32 %v2234, %v2381
    %v2430 = vadd.f32 %v2235, %v2382
    %v2431 = vadd.f32 %v2236, %v2383
    %v2432 = vadd.f32 %v2237, %v2384
    %v2433 = vadd.f32 %v2238, %v2385
    %v2434 = vadd.f32 %v2239, %v2386
    %v2435 = vadd.f32 %v2240, %v2387
    %v2436 = vadd.f32 %v2241, %v2388
    %v2437 = vadd.f32 %v2242, %v2389
    %v2438 = vadd.f32 %v2243, %v2390
    %v2439 = vadd.f32 %v2244, %v2391
    %v2440 = vadd.f32 %v2245, %v2392
    %v2441 = vadd.f32 %v2246, %v2393
    %v2442 = vadd.f32 %v2247, %v2394
    %v2443 = vadd.f32 %v2248, %v2395
    %v2444 = vadd.f32 %v2249, %v2396
    %v2445 = vadd.f32 %v2250, %v2397
    %v2446 = vadd.f32 %v2251, %v2398
    %v2447 = vadd.f32 %v2252, %v2399
    %v2448 = vadd.f32 %v2253, %v2400
    %v2449 = vadd.f32 %v2254, %v2401
    %v2450 = vadd.f32 %v2255, %v2402
    %v2451 = vadd.f32 %v2256, %v2403
    %v2452 = vadd.f32 %v2257, %v2404
    %v2453 = vadd.f32 %v2258, %v2405
    %2454 = vrot.lane.b32.xlu0 %v2406, 112
    %v2455 = vpop.permute.xlu0 %2454
    %2456 = vrot.lane.b32.xlu0 %v2407, 112
    %v2457 = vpop.permute.xlu0 %2456
    %2458 = vrot.lane.b32.xlu0 %v2408, 112
    %v2459 = vpop.permute.xlu0 %2458
    %2460 = vrot.lane.b32.xlu0 %v2409, 112
    %v2461 = vpop.permute.xlu0 %2460
    %2462 = vrot.lane.b32.xlu0 %v2410, 112
    %v2463 = vpop.permute.xlu0 %2462
    %2464 = vrot.lane.b32.xlu0 %v2411, 112
    %v2465 = vpop.permute.xlu0 %2464
    %2466 = vrot.lane.b32.xlu0 %v2412, 112
    %v2467 = vpop.permute.xlu0 %2466
    %2468 = vrot.lane.b32.xlu0 %v2413, 112
    %v2469 = vpop.permute.xlu0 %2468
    %2470 = vrot.lane.b32.xlu0 %v2414, 112
    %v2471 = vpop.permute.xlu0 %2470
    %2472 = vrot.lane.b32.xlu0 %v2415, 112
    %v2473 = vpop.permute.xlu0 %2472
    %2474 = vrot.lane.b32.xlu0 %v2416, 112
    %v2475 = vpop.permute.xlu0 %2474
    %2476 = vrot.lane.b32.xlu0 %v2417, 112
    %v2477 = vpop.permute.xlu0 %2476
    %2478 = vrot.lane.b32.xlu0 %v2418, 112
    %v2479 = vpop.permute.xlu0 %2478
    %2480 = vrot.lane.b32.xlu0 %v2419, 112
    %v2481 = vpop.permute.xlu0 %2480
    %2482 = vrot.lane.b32.xlu0 %v2420, 112
    %v2483 = vpop.permute.xlu0 %2482
    %2484 = vrot.lane.b32.xlu0 %v2421, 112
    %v2485 = vpop.permute.xlu0 %2484
    %2486 = vrot.lane.b32.xlu0 %v2422, 112
    %v2487 = vpop.permute.xlu0 %2486
    %2488 = vrot.lane.b32.xlu0 %v2423, 112
    %v2489 = vpop.permute.xlu0 %2488
    %2490 = vrot.lane.b32.xlu0 %v2424, 112
    %v2491 = vpop.permute.xlu0 %2490
    %2492 = vrot.lane.b32.xlu0 %v2425, 112
    %v2493 = vpop.permute.xlu0 %2492
    %2494 = vrot.lane.b32.xlu0 %v2426, 112
    %v2495 = vpop.permute.xlu0 %2494
    %2496 = vrot.lane.b32.xlu0 %v2427, 112
    %v2497 = vpop.permute.xlu0 %2496
    %2498 = vrot.lane.b32.xlu0 %v2428, 112
    %v2499 = vpop.permute.xlu0 %2498
    %2500 = vrot.lane.b32.xlu0 %v2429, 112
    %v2501 = vpop.permute.xlu0 %2500
    %2502 = vrot.lane.b32.xlu0 %v2430, 112
    %v2503 = vpop.permute.xlu0 %2502
    %2504 = vrot.lane.b32.xlu0 %v2431, 112
    %v2505 = vpop.permute.xlu0 %2504
    %2506 = vrot.lane.b32.xlu0 %v2432, 112
    %v2507 = vpop.permute.xlu0 %2506
    %2508 = vrot.lane.b32.xlu0 %v2433, 112
    %v2509 = vpop.permute.xlu0 %2508
    %2510 = vrot.lane.b32.xlu0 %v2434, 112
    %v2511 = vpop.permute.xlu0 %2510
    %2512 = vrot.lane.b32.xlu0 %v2435, 112
    %v2513 = vpop.permute.xlu0 %2512
    %2514 = vrot.lane.b32.xlu0 %v2436, 112
    %v2515 = vpop.permute.xlu0 %2514
    %2516 = vrot.lane.b32.xlu0 %v2437, 112
    %v2517 = vpop.permute.xlu0 %2516
    %2518 = vrot.lane.b32.xlu0 %v2438, 112
    %v2519 = vpop.permute.xlu0 %2518
    %2520 = vrot.lane.b32.xlu0 %v2439, 112
    %v2521 = vpop.permute.xlu0 %2520
    %2522 = vrot.lane.b32.xlu0 %v2440, 112
    %v2523 = vpop.permute.xlu0 %2522
    %2524 = vrot.lane.b32.xlu0 %v2441, 112
    %v2525 = vpop.permute.xlu0 %2524
    %2526 = vrot.lane.b32.xlu0 %v2442, 112
    %v2527 = vpop.permute.xlu0 %2526
    %2528 = vrot.lane.b32.xlu0 %v2443, 112
    %v2529 = vpop.permute.xlu0 %2528
    %2530 = vrot.lane.b32.xlu0 %v2444, 112
    %v2531 = vpop.permute.xlu0 %2530
    %2532 = vrot.lane.b32.xlu0 %v2445, 112
    %v2533 = vpop.permute.xlu0 %2532
    %2534 = vrot.lane.b32.xlu0 %v2446, 112
    %v2535 = vpop.permute.xlu0 %2534
    %2536 = vrot.lane.b32.xlu0 %v2447, 112
    %v2537 = vpop.permute.xlu0 %2536
    %2538 = vrot.lane.b32.xlu0 %v2448, 112
    %v2539 = vpop.permute.xlu0 %2538
    %2540 = vrot.lane.b32.xlu0 %v2449, 112
    %v2541 = vpop.permute.xlu0 %2540
    %2542 = vrot.lane.b32.xlu0 %v2450, 112
    %v2543 = vpop.permute.xlu0 %2542
    %2544 = vrot.lane.b32.xlu0 %v2451, 112
    %v2545 = vpop.permute.xlu0 %2544
    %2546 = vrot.lane.b32.xlu0 %v2452, 112
    %v2547 = vpop.permute.xlu0 %2546
    %2548 = vrot.lane.b32.xlu0 %v2453, 112
    %v2549 = vpop.permute.xlu0 %2548
    %vm2550 = vcmp.ge.s32.totalorder %v138, 112
    %v2551 = vsel %vm2550, 1, 0
    %vm2552 = vcmp.eq.s32.totalorder %v2551, 1
    %v2553 = vsel %vm2552, 0.0, %v2455
    %v2554 = vsel %vm2552, 0.0, %v2457
    %v2555 = vsel %vm2552, 0.0, %v2459
    %v2556 = vsel %vm2552, 0.0, %v2461
    %v2557 = vsel %vm2552, 0.0, %v2463
    %v2558 = vsel %vm2552, 0.0, %v2465
    %v2559 = vsel %vm2552, 0.0, %v2467
    %v2560 = vsel %vm2552, 0.0, %v2469
    %v2561 = vsel %vm2552, 0.0, %v2471
    %v2562 = vsel %vm2552, 0.0, %v2473
    %v2563 = vsel %vm2552, 0.0, %v2475
    %v2564 = vsel %vm2552, 0.0, %v2477
    %v2565 = vsel %vm2552, 0.0, %v2479
    %v2566 = vsel %vm2552, 0.0, %v2481
    %v2567 = vsel %vm2552, 0.0, %v2483
    %v2568 = vsel %vm2552, 0.0, %v2485
    %v2569 = vsel %vm2552, 0.0, %v2487
    %v2570 = vsel %vm2552, 0.0, %v2489
    %v2571 = vsel %vm2552, 0.0, %v2491
    %v2572 = vsel %vm2552, 0.0, %v2493
    %v2573 = vsel %vm2552, 0.0, %v2495
    %v2574 = vsel %vm2552, 0.0, %v2497
    %v2575 = vsel %vm2552, 0.0, %v2499
    %v2576 = vsel %vm2552, 0.0, %v2501
    %v2577 = vsel %vm2552, 0.0, %v2503
    %v2578 = vsel %vm2552, 0.0, %v2505
    %v2579 = vsel %vm2552, 0.0, %v2507
    %v2580 = vsel %vm2552, 0.0, %v2509
    %v2581 = vsel %vm2552, 0.0, %v2511
    %v2582 = vsel %vm2552, 0.0, %v2513
    %v2583 = vsel %vm2552, 0.0, %v2515
    %v2584 = vsel %vm2552, 0.0, %v2517
    %v2585 = vsel %vm2552, 0.0, %v2519
    %v2586 = vsel %vm2552, 0.0, %v2521
    %v2587 = vsel %vm2552, 0.0, %v2523
    %v2588 = vsel %vm2552, 0.0, %v2525
    %v2589 = vsel %vm2552, 0.0, %v2527
    %v2590 = vsel %vm2552, 0.0, %v2529
    %v2591 = vsel %vm2552, 0.0, %v2531
    %v2592 = vsel %vm2552, 0.0, %v2533
    %v2593 = vsel %vm2552, 0.0, %v2535
    %v2594 = vsel %vm2552, 0.0, %v2537
    %v2595 = vsel %vm2552, 0.0, %v2539
    %v2596 = vsel %vm2552, 0.0, %v2541
    %v2597 = vsel %vm2552, 0.0, %v2543
    %v2598 = vsel %vm2552, 0.0, %v2545
    %v2599 = vsel %vm2552, 0.0, %v2547
    %v2600 = vsel %vm2552, 0.0, %v2549
    %v2601 = vadd.f32 %v2406, %v2553
    %v2602 = vadd.f32 %v2407, %v2554
    %v2603 = vadd.f32 %v2408, %v2555
    %v2604 = vadd.f32 %v2409, %v2556
    %v2605 = vadd.f32 %v2410, %v2557
    %v2606 = vadd.f32 %v2411, %v2558
    %v2607 = vadd.f32 %v2412, %v2559
    %v2608 = vadd.f32 %v2413, %v2560
    %v2609 = vadd.f32 %v2414, %v2561
    %v2610 = vadd.f32 %v2415, %v2562
    %v2611 = vadd.f32 %v2416, %v2563
    %v2612 = vadd.f32 %v2417, %v2564
    %v2613 = vadd.f32 %v2418, %v2565
    %v2614 = vadd.f32 %v2419, %v2566
    %v2615 = vadd.f32 %v2420, %v2567
    %v2616 = vadd.f32 %v2421, %v2568
    %v2617 = vadd.f32 %v2422, %v2569
    %v2618 = vadd.f32 %v2423, %v2570
    %v2619 = vadd.f32 %v2424, %v2571
    %v2620 = vadd.f32 %v2425, %v2572
    %v2621 = vadd.f32 %v2426, %v2573
    %v2622 = vadd.f32 %v2427, %v2574
    %v2623 = vadd.f32 %v2428, %v2575
    %v2624 = vadd.f32 %v2429, %v2576
    %v2625 = vadd.f32 %v2430, %v2577
    %v2626 = vadd.f32 %v2431, %v2578
    %v2627 = vadd.f32 %v2432, %v2579
    %v2628 = vadd.f32 %v2433, %v2580
    %v2629 = vadd.f32 %v2434, %v2581
    %v2630 = vadd.f32 %v2435, %v2582
    %v2631 = vadd.f32 %v2436, %v2583
    %v2632 = vadd.f32 %v2437, %v2584
    %v2633 = vadd.f32 %v2438, %v2585
    %v2634 = vadd.f32 %v2439, %v2586
    %v2635 = vadd.f32 %v2440, %v2587
    %v2636 = vadd.f32 %v2441, %v2588
    %v2637 = vadd.f32 %v2442, %v2589
    %v2638 = vadd.f32 %v2443, %v2590
    %v2639 = vadd.f32 %v2444, %v2591
    %v2640 = vadd.f32 %v2445, %v2592
    %v2641 = vadd.f32 %v2446, %v2593
    %v2642 = vadd.f32 %v2447, %v2594
    %v2643 = vadd.f32 %v2448, %v2595
    %v2644 = vadd.f32 %v2449, %v2596
    %v2645 = vadd.f32 %v2450, %v2597
    %v2646 = vadd.f32 %v2451, %v2598
    %v2647 = vadd.f32 %v2452, %v2599
    %v2648 = vadd.f32 %v2453, %v2600
    %2649 = vrot.lane.b32.xlu0 %v2601, 96
    %v2650 = vpop.permute.xlu0 %2649
    %2651 = vrot.lane.b32.xlu0 %v2602, 96
    %v2652 = vpop.permute.xlu0 %2651
    %2653 = vrot.lane.b32.xlu0 %v2603, 96
    %v2654 = vpop.permute.xlu0 %2653
    %2655 = vrot.lane.b32.xlu0 %v2604, 96
    %v2656 = vpop.permute.xlu0 %2655
    %2657 = vrot.lane.b32.xlu0 %v2605, 96
    %v2658 = vpop.permute.xlu0 %2657
    %2659 = vrot.lane.b32.xlu0 %v2606, 96
    %v2660 = vpop.permute.xlu0 %2659
    %2661 = vrot.lane.b32.xlu0 %v2607, 96
    %v2662 = vpop.permute.xlu0 %2661
    %2663 = vrot.lane.b32.xlu0 %v2608, 96
    %v2664 = vpop.permute.xlu0 %2663
    %2665 = vrot.lane.b32.xlu0 %v2609, 96
    %v2666 = vpop.permute.xlu0 %2665
    %2667 = vrot.lane.b32.xlu0 %v2610, 96
    %v2668 = vpop.permute.xlu0 %2667
    %2669 = vrot.lane.b32.xlu0 %v2611, 96
    %v2670 = vpop.permute.xlu0 %2669
    %2671 = vrot.lane.b32.xlu0 %v2612, 96
    %v2672 = vpop.permute.xlu0 %2671
    %2673 = vrot.lane.b32.xlu0 %v2613, 96
    %v2674 = vpop.permute.xlu0 %2673
    %2675 = vrot.lane.b32.xlu0 %v2614, 96
    %v2676 = vpop.permute.xlu0 %2675
    %2677 = vrot.lane.b32.xlu0 %v2615, 96
    %v2678 = vpop.permute.xlu0 %2677
    %2679 = vrot.lane.b32.xlu0 %v2616, 96
    %v2680 = vpop.permute.xlu0 %2679
    %2681 = vrot.lane.b32.xlu0 %v2617, 96
    %v2682 = vpop.permute.xlu0 %2681
    %2683 = vrot.lane.b32.xlu0 %v2618, 96
    %v2684 = vpop.permute.xlu0 %2683
    %2685 = vrot.lane.b32.xlu0 %v2619, 96
    %v2686 = vpop.permute.xlu0 %2685
    %2687 = vrot.lane.b32.xlu0 %v2620, 96
    %v2688 = vpop.permute.xlu0 %2687
    %2689 = vrot.lane.b32.xlu0 %v2621, 96
    %v2690 = vpop.permute.xlu0 %2689
    %2691 = vrot.lane.b32.xlu0 %v2622, 96
    %v2692 = vpop.permute.xlu0 %2691
    %2693 = vrot.lane.b32.xlu0 %v2623, 96
    %v2694 = vpop.permute.xlu0 %2693
    %2695 = vrot.lane.b32.xlu0 %v2624, 96
    %v2696 = vpop.permute.xlu0 %2695
    %2697 = vrot.lane.b32.xlu0 %v2625, 96
    %v2698 = vpop.permute.xlu0 %2697
    %2699 = vrot.lane.b32.xlu0 %v2626, 96
    %v2700 = vpop.permute.xlu0 %2699
    %2701 = vrot.lane.b32.xlu0 %v2627, 96
    %v2702 = vpop.permute.xlu0 %2701
    %2703 = vrot.lane.b32.xlu0 %v2628, 96
    %v2704 = vpop.permute.xlu0 %2703
    %2705 = vrot.lane.b32.xlu0 %v2629, 96
    %v2706 = vpop.permute.xlu0 %2705
    %2707 = vrot.lane.b32.xlu0 %v2630, 96
    %v2708 = vpop.permute.xlu0 %2707
    %2709 = vrot.lane.b32.xlu0 %v2631, 96
    %v2710 = vpop.permute.xlu0 %2709
    %2711 = vrot.lane.b32.xlu0 %v2632, 96
    %v2712 = vpop.permute.xlu0 %2711
    %2713 = vrot.lane.b32.xlu0 %v2633, 96
    %v2714 = vpop.permute.xlu0 %2713
    %2715 = vrot.lane.b32.xlu0 %v2634, 96
    %v2716 = vpop.permute.xlu0 %2715
    %2717 = vrot.lane.b32.xlu0 %v2635, 96
    %v2718 = vpop.permute.xlu0 %2717
    %2719 = vrot.lane.b32.xlu0 %v2636, 96
    %v2720 = vpop.permute.xlu0 %2719
    %2721 = vrot.lane.b32.xlu0 %v2637, 96
    %v2722 = vpop.permute.xlu0 %2721
    %2723 = vrot.lane.b32.xlu0 %v2638, 96
    %v2724 = vpop.permute.xlu0 %2723
    %2725 = vrot.lane.b32.xlu0 %v2639, 96
    %v2726 = vpop.permute.xlu0 %2725
    %2727 = vrot.lane.b32.xlu0 %v2640, 96
    %v2728 = vpop.permute.xlu0 %2727
    %2729 = vrot.lane.b32.xlu0 %v2641, 96
    %v2730 = vpop.permute.xlu0 %2729
    %2731 = vrot.lane.b32.xlu0 %v2642, 96
    %v2732 = vpop.permute.xlu0 %2731
    %2733 = vrot.lane.b32.xlu0 %v2643, 96
    %v2734 = vpop.permute.xlu0 %2733
    %2735 = vrot.lane.b32.xlu0 %v2644, 96
    %v2736 = vpop.permute.xlu0 %2735
    %2737 = vrot.lane.b32.xlu0 %v2645, 96
    %v2738 = vpop.permute.xlu0 %2737
    %2739 = vrot.lane.b32.xlu0 %v2646, 96
    %v2740 = vpop.permute.xlu0 %2739
    %2741 = vrot.lane.b32.xlu0 %v2647, 96
    %v2742 = vpop.permute.xlu0 %2741
    %2743 = vrot.lane.b32.xlu0 %v2648, 96
    %v2744 = vpop.permute.xlu0 %2743
    %vm2745 = vcmp.ge.s32.totalorder %v138, 96
    %v2746 = vsel %vm2745, 1, 0
    %vm2747 = vcmp.eq.s32.totalorder %v2746, 1
    %v2748 = vsel %vm2747, 0.0, %v2650
    %v2749 = vsel %vm2747, 0.0, %v2652
    %v2750 = vsel %vm2747, 0.0, %v2654
    %v2751 = vsel %vm2747, 0.0, %v2656
    %v2752 = vsel %vm2747, 0.0, %v2658
    %v2753 = vsel %vm2747, 0.0, %v2660
    %v2754 = vsel %vm2747, 0.0, %v2662
    %v2755 = vsel %vm2747, 0.0, %v2664
    %v2756 = vsel %vm2747, 0.0, %v2666
    %v2757 = vsel %vm2747, 0.0, %v2668
    %v2758 = vsel %vm2747, 0.0, %v2670
    %v2759 = vsel %vm2747, 0.0, %v2672
    %v2760 = vsel %vm2747, 0.0, %v2674
    %v2761 = vsel %vm2747, 0.0, %v2676
    %v2762 = vsel %vm2747, 0.0, %v2678
    %v2763 = vsel %vm2747, 0.0, %v2680
    %v2764 = vsel %vm2747, 0.0, %v2682
    %v2765 = vsel %vm2747, 0.0, %v2684
    %v2766 = vsel %vm2747, 0.0, %v2686
    %v2767 = vsel %vm2747, 0.0, %v2688
    %v2768 = vsel %vm2747, 0.0, %v2690
    %v2769 = vsel %vm2747, 0.0, %v2692
    %v2770 = vsel %vm2747, 0.0, %v2694
    %v2771 = vsel %vm2747, 0.0, %v2696
    %v2772 = vsel %vm2747, 0.0, %v2698
    %v2773 = vsel %vm2747, 0.0, %v2700
    %v2774 = vsel %vm2747, 0.0, %v2702
    %v2775 = vsel %vm2747, 0.0, %v2704
    %v2776 = vsel %vm2747, 0.0, %v2706
    %v2777 = vsel %vm2747, 0.0, %v2708
    %v2778 = vsel %vm2747, 0.0, %v2710
    %v2779 = vsel %vm2747, 0.0, %v2712
    %v2780 = vsel %vm2747, 0.0, %v2714
    %v2781 = vsel %vm2747, 0.0, %v2716
    %v2782 = vsel %vm2747, 0.0, %v2718
    %v2783 = vsel %vm2747, 0.0, %v2720
    %v2784 = vsel %vm2747, 0.0, %v2722
    %v2785 = vsel %vm2747, 0.0, %v2724
    %v2786 = vsel %vm2747, 0.0, %v2726
    %v2787 = vsel %vm2747, 0.0, %v2728
    %v2788 = vsel %vm2747, 0.0, %v2730
    %v2789 = vsel %vm2747, 0.0, %v2732
    %v2790 = vsel %vm2747, 0.0, %v2734
    %v2791 = vsel %vm2747, 0.0, %v2736
    %v2792 = vsel %vm2747, 0.0, %v2738
    %v2793 = vsel %vm2747, 0.0, %v2740
    %v2794 = vsel %vm2747, 0.0, %v2742
    %v2795 = vsel %vm2747, 0.0, %v2744
    %v2796 = vadd.f32 %v2601, %v2748
    %v2797 = vadd.f32 %v2602, %v2749
    %v2798 = vadd.f32 %v2603, %v2750
    %v2799 = vadd.f32 %v2604, %v2751
    %v2800 = vadd.f32 %v2605, %v2752
    %v2801 = vadd.f32 %v2606, %v2753
    %v2802 = vadd.f32 %v2607, %v2754
    %v2803 = vadd.f32 %v2608, %v2755
    %v2804 = vadd.f32 %v2609, %v2756
    %v2805 = vadd.f32 %v2610, %v2757
    %v2806 = vadd.f32 %v2611, %v2758
    %v2807 = vadd.f32 %v2612, %v2759
    %v2808 = vadd.f32 %v2613, %v2760
    %v2809 = vadd.f32 %v2614, %v2761
    %v2810 = vadd.f32 %v2615, %v2762
    %v2811 = vadd.f32 %v2616, %v2763
    %v2812 = vadd.f32 %v2617, %v2764
    %v2813 = vadd.f32 %v2618, %v2765
    %v2814 = vadd.f32 %v2619, %v2766
    %v2815 = vadd.f32 %v2620, %v2767
    %v2816 = vadd.f32 %v2621, %v2768
    %v2817 = vadd.f32 %v2622, %v2769
    %v2818 = vadd.f32 %v2623, %v2770
    %v2819 = vadd.f32 %v2624, %v2771
    %v2820 = vadd.f32 %v2625, %v2772
    %v2821 = vadd.f32 %v2626, %v2773
    %v2822 = vadd.f32 %v2627, %v2774
    %v2823 = vadd.f32 %v2628, %v2775
    %v2824 = vadd.f32 %v2629, %v2776
    %v2825 = vadd.f32 %v2630, %v2777
    %v2826 = vadd.f32 %v2631, %v2778
    %v2827 = vadd.f32 %v2632, %v2779
    %v2828 = vadd.f32 %v2633, %v2780
    %v2829 = vadd.f32 %v2634, %v2781
    %v2830 = vadd.f32 %v2635, %v2782
    %v2831 = vadd.f32 %v2636, %v2783
    %v2832 = vadd.f32 %v2637, %v2784
    %v2833 = vadd.f32 %v2638, %v2785
    %v2834 = vadd.f32 %v2639, %v2786
    %v2835 = vadd.f32 %v2640, %v2787
    %v2836 = vadd.f32 %v2641, %v2788
    %v2837 = vadd.f32 %v2642, %v2789
    %v2838 = vadd.f32 %v2643, %v2790
    %v2839 = vadd.f32 %v2644, %v2791
    %v2840 = vadd.f32 %v2645, %v2792
    %v2841 = vadd.f32 %v2646, %v2793
    %v2842 = vadd.f32 %v2647, %v2794
    %v2843 = vadd.f32 %v2648, %v2795
    %2844 = vrot.lane.b32.xlu0 %v2796, 64
    %v2845 = vpop.permute.xlu0 %2844
    %2846 = vrot.lane.b32.xlu0 %v2797, 64
    %v2847 = vpop.permute.xlu0 %2846
    %2848 = vrot.lane.b32.xlu0 %v2798, 64
    %v2849 = vpop.permute.xlu0 %2848
    %2850 = vrot.lane.b32.xlu0 %v2799, 64
    %v2851 = vpop.permute.xlu0 %2850
    %2852 = vrot.lane.b32.xlu0 %v2800, 64
    %v2853 = vpop.permute.xlu0 %2852
    %2854 = vrot.lane.b32.xlu0 %v2801, 64
    %v2855 = vpop.permute.xlu0 %2854
    %2856 = vrot.lane.b32.xlu0 %v2802, 64
    %v2857 = vpop.permute.xlu0 %2856
    %2858 = vrot.lane.b32.xlu0 %v2803, 64
    %v2859 = vpop.permute.xlu0 %2858
    %2860 = vrot.lane.b32.xlu0 %v2804, 64
    %v2861 = vpop.permute.xlu0 %2860
    %2862 = vrot.lane.b32.xlu0 %v2805, 64
    %v2863 = vpop.permute.xlu0 %2862
    %2864 = vrot.lane.b32.xlu0 %v2806, 64
    %v2865 = vpop.permute.xlu0 %2864
    %2866 = vrot.lane.b32.xlu0 %v2807, 64
    %v2867 = vpop.permute.xlu0 %2866
    %2868 = vrot.lane.b32.xlu0 %v2808, 64
    %v2869 = vpop.permute.xlu0 %2868
    %2870 = vrot.lane.b32.xlu0 %v2809, 64
    %v2871 = vpop.permute.xlu0 %2870
    %2872 = vrot.lane.b32.xlu0 %v2810, 64
    %v2873 = vpop.permute.xlu0 %2872
    %2874 = vrot.lane.b32.xlu0 %v2811, 64
    %v2875 = vpop.permute.xlu0 %2874
    %2876 = vrot.lane.b32.xlu0 %v2812, 64
    %v2877 = vpop.permute.xlu0 %2876
    %2878 = vrot.lane.b32.xlu0 %v2813, 64
    %v2879 = vpop.permute.xlu0 %2878
    %2880 = vrot.lane.b32.xlu0 %v2814, 64
    %v2881 = vpop.permute.xlu0 %2880
    %2882 = vrot.lane.b32.xlu0 %v2815, 64
    %v2883 = vpop.permute.xlu0 %2882
    %2884 = vrot.lane.b32.xlu0 %v2816, 64
    %v2885 = vpop.permute.xlu0 %2884
    %2886 = vrot.lane.b32.xlu0 %v2817, 64
    %v2887 = vpop.permute.xlu0 %2886
    %2888 = vrot.lane.b32.xlu0 %v2818, 64
    %v2889 = vpop.permute.xlu0 %2888
    %2890 = vrot.lane.b32.xlu0 %v2819, 64
    %v2891 = vpop.permute.xlu0 %2890
    %2892 = vrot.lane.b32.xlu0 %v2820, 64
    %v2893 = vpop.permute.xlu0 %2892
    %2894 = vrot.lane.b32.xlu0 %v2821, 64
    %v2895 = vpop.permute.xlu0 %2894
    %2896 = vrot.lane.b32.xlu0 %v2822, 64
    %v2897 = vpop.permute.xlu0 %2896
    %2898 = vrot.lane.b32.xlu0 %v2823, 64
    %v2899 = vpop.permute.xlu0 %2898
    %2900 = vrot.lane.b32.xlu0 %v2824, 64
    %v2901 = vpop.permute.xlu0 %2900
    %2902 = vrot.lane.b32.xlu0 %v2825, 64
    %v2903 = vpop.permute.xlu0 %2902
    %2904 = vrot.lane.b32.xlu0 %v2826, 64
    %v2905 = vpop.permute.xlu0 %2904
    %2906 = vrot.lane.b32.xlu0 %v2827, 64
    %v2907 = vpop.permute.xlu0 %2906
    %2908 = vrot.lane.b32.xlu0 %v2828, 64
    %v2909 = vpop.permute.xlu0 %2908
    %2910 = vrot.lane.b32.xlu0 %v2829, 64
    %v2911 = vpop.permute.xlu0 %2910
    %2912 = vrot.lane.b32.xlu0 %v2830, 64
    %v2913 = vpop.permute.xlu0 %2912
    %2914 = vrot.lane.b32.xlu0 %v2831, 64
    %v2915 = vpop.permute.xlu0 %2914
    %2916 = vrot.lane.b32.xlu0 %v2832, 64
    %v2917 = vpop.permute.xlu0 %2916
    %2918 = vrot.lane.b32.xlu0 %v2833, 64
    %v2919 = vpop.permute.xlu0 %2918
    %2920 = vrot.lane.b32.xlu0 %v2834, 64
    %v2921 = vpop.permute.xlu0 %2920
    %2922 = vrot.lane.b32.xlu0 %v2835, 64
    %v2923 = vpop.permute.xlu0 %2922
    %2924 = vrot.lane.b32.xlu0 %v2836, 64
    %v2925 = vpop.permute.xlu0 %2924
    %2926 = vrot.lane.b32.xlu0 %v2837, 64
    %v2927 = vpop.permute.xlu0 %2926
    %2928 = vrot.lane.b32.xlu0 %v2838, 64
    %v2929 = vpop.permute.xlu0 %2928
    %2930 = vrot.lane.b32.xlu0 %v2839, 64
    %v2931 = vpop.permute.xlu0 %2930
    %2932 = vrot.lane.b32.xlu0 %v2840, 64
    %v2933 = vpop.permute.xlu0 %2932
    %2934 = vrot.lane.b32.xlu0 %v2841, 64
    %v2935 = vpop.permute.xlu0 %2934
    %2936 = vrot.lane.b32.xlu0 %v2842, 64
    %v2937 = vpop.permute.xlu0 %2936
    %2938 = vrot.lane.b32.xlu0 %v2843, 64
    %v2939 = vpop.permute.xlu0 %2938
    %vm2940 = vcmp.ge.s32.totalorder %v138, 64
    %v2941 = vsel %vm2940, 1, 0
    %vm2942 = vcmp.eq.s32.totalorder %v2941, 1
    %v2943 = vsel %vm2942, 0.0, %v2845
    %v2944 = vsel %vm2942, 0.0, %v2847
    %v2945 = vsel %vm2942, 0.0, %v2849
    %v2946 = vsel %vm2942, 0.0, %v2851
    %v2947 = vsel %vm2942, 0.0, %v2853
    %v2948 = vsel %vm2942, 0.0, %v2855
    %v2949 = vsel %vm2942, 0.0, %v2857
    %v2950 = vsel %vm2942, 0.0, %v2859
    %v2951 = vsel %vm2942, 0.0, %v2861
    %v2952 = vsel %vm2942, 0.0, %v2863
    %v2953 = vsel %vm2942, 0.0, %v2865
    %v2954 = vsel %vm2942, 0.0, %v2867
    %v2955 = vsel %vm2942, 0.0, %v2869
    %v2956 = vsel %vm2942, 0.0, %v2871
    %v2957 = vsel %vm2942, 0.0, %v2873
    %v2958 = vsel %vm2942, 0.0, %v2875
    %v2959 = vsel %vm2942, 0.0, %v2877
    %v2960 = vsel %vm2942, 0.0, %v2879
    %v2961 = vsel %vm2942, 0.0, %v2881
    %v2962 = vsel %vm2942, 0.0, %v2883
    %v2963 = vsel %vm2942, 0.0, %v2885
    %v2964 = vsel %vm2942, 0.0, %v2887
    %v2965 = vsel %vm2942, 0.0, %v2889
    %v2966 = vsel %vm2942, 0.0, %v2891
    %v2967 = vsel %vm2942, 0.0, %v2893
    %v2968 = vsel %vm2942, 0.0, %v2895
    %v2969 = vsel %vm2942, 0.0, %v2897
    %v2970 = vsel %vm2942, 0.0, %v2899
    %v2971 = vsel %vm2942, 0.0, %v2901
    %v2972 = vsel %vm2942, 0.0, %v2903
    %v2973 = vsel %vm2942, 0.0, %v2905
    %v2974 = vsel %vm2942, 0.0, %v2907
    %v2975 = vsel %vm2942, 0.0, %v2909
    %v2976 = vsel %vm2942, 0.0, %v2911
    %v2977 = vsel %vm2942, 0.0, %v2913
    %v2978 = vsel %vm2942, 0.0, %v2915
    %v2979 = vsel %vm2942, 0.0, %v2917
    %v2980 = vsel %vm2942, 0.0, %v2919
    %v2981 = vsel %vm2942, 0.0, %v2921
    %v2982 = vsel %vm2942, 0.0, %v2923
    %v2983 = vsel %vm2942, 0.0, %v2925
    %v2984 = vsel %vm2942, 0.0, %v2927
    %v2985 = vsel %vm2942, 0.0, %v2929
    %v2986 = vsel %vm2942, 0.0, %v2931
    %v2987 = vsel %vm2942, 0.0, %v2933
    %v2988 = vsel %vm2942, 0.0, %v2935
    %v2989 = vsel %vm2942, 0.0, %v2937
    %v2990 = vsel %vm2942, 0.0, %v2939
    %v2991 = vadd.f32 %v2796, %v2943
    %v2992 = vadd.f32 %v2797, %v2944
    %v2993 = vadd.f32 %v2798, %v2945
    %v2994 = vadd.f32 %v2799, %v2946
    %v2995 = vadd.f32 %v2800, %v2947
    %v2996 = vadd.f32 %v2801, %v2948
    %v2997 = vadd.f32 %v2802, %v2949
    %v2998 = vadd.f32 %v2803, %v2950
    %v2999 = vadd.f32 %v2804, %v2951
    %v3000 = vadd.f32 %v2805, %v2952
    %v3001 = vadd.f32 %v2806, %v2953
    %v3002 = vadd.f32 %v2807, %v2954
    %v3003 = vadd.f32 %v2808, %v2955
    %v3004 = vadd.f32 %v2809, %v2956
    %v3005 = vadd.f32 %v2810, %v2957
    %v3006 = vadd.f32 %v2811, %v2958
    %v3007 = vadd.f32 %v2812, %v2959
    %v3008 = vadd.f32 %v2813, %v2960
    %v3009 = vadd.f32 %v2814, %v2961
    %v3010 = vadd.f32 %v2815, %v2962
    %v3011 = vadd.f32 %v2816, %v2963
    %v3012 = vadd.f32 %v2817, %v2964
    %v3013 = vadd.f32 %v2818, %v2965
    %v3014 = vadd.f32 %v2819, %v2966
    %v3015 = vadd.f32 %v2820, %v2967
    %v3016 = vadd.f32 %v2821, %v2968
    %v3017 = vadd.f32 %v2822, %v2969
    %v3018 = vadd.f32 %v2823, %v2970
    %v3019 = vadd.f32 %v2824, %v2971
    %v3020 = vadd.f32 %v2825, %v2972
    %v3021 = vadd.f32 %v2826, %v2973
    %v3022 = vadd.f32 %v2827, %v2974
    %v3023 = vadd.f32 %v2828, %v2975
    %v3024 = vadd.f32 %v2829, %v2976
    %v3025 = vadd.f32 %v2830, %v2977
    %v3026 = vadd.f32 %v2831, %v2978
    %v3027 = vadd.f32 %v2832, %v2979
    %v3028 = vadd.f32 %v2833, %v2980
    %v3029 = vadd.f32 %v2834, %v2981
    %v3030 = vadd.f32 %v2835, %v2982
    %v3031 = vadd.f32 %v2836, %v2983
    %v3032 = vadd.f32 %v2837, %v2984
    %v3033 = vadd.f32 %v2838, %v2985
    %v3034 = vadd.f32 %v2839, %v2986
    %v3035 = vadd.f32 %v2840, %v2987
    %v3036 = vadd.f32 %v2841, %v2988
    %v3037 = vadd.f32 %v2842, %v2989
    %v3038 = vadd.f32 %v2843, %v2990
    %v3039 = vmul.f32 %v2991, %v331
    %v3040 = vmul.f32 %v2992, %v346
    %v3041 = vmul.f32 %v2993, %v361
    %v3042 = vmul.f32 %v2994, %v376
    %v3043 = vmul.f32 %v2995, %v391
    %v3044 = vmul.f32 %v2996, %v406
    %v3045 = vmul.f32 %v2997, %v421
    %v3046 = vmul.f32 %v2998, %v436
    %v3047 = vmul.f32 %v2999, %v451
    %v3048 = vmul.f32 %v3000, %v466
    %v3049 = vmul.f32 %v3001, %v481
    %v3050 = vmul.f32 %v3002, %v496
    %v3051 = vmul.f32 %v3003, %v511
    %v3052 = vmul.f32 %v3004, %v526
    %v3053 = vmul.f32 %v3005, %v541
    %v3054 = vmul.f32 %v3006, %v556
    %v3055 = vmul.f32 %v3007, %v331
    %v3056 = vmul.f32 %v3008, %v346
    %v3057 = vmul.f32 %v3009, %v361
    %v3058 = vmul.f32 %v3010, %v376
    %v3059 = vmul.f32 %v3011, %v391
    %v3060 = vmul.f32 %v3012, %v406
    %v3061 = vmul.f32 %v3013, %v421
    %v3062 = vmul.f32 %v3014, %v436
    %v3063 = vmul.f32 %v3015, %v451
    %v3064 = vmul.f32 %v3016, %v466
    %v3065 = vmul.f32 %v3017, %v481
    %v3066 = vmul.f32 %v3018, %v496
    %v3067 = vmul.f32 %v3019, %v511
    %v3068 = vmul.f32 %v3020, %v526
    %v3069 = vmul.f32 %v3021, %v541
    %v3070 = vmul.f32 %v3022, %v556
    %v3071 = vmul.f32 %v3023, %v331
    %v3072 = vmul.f32 %v3024, %v346
    %v3073 = vmul.f32 %v3025, %v361
    %v3074 = vmul.f32 %v3026, %v376
    %v3075 = vmul.f32 %v3027, %v391
    %v3076 = vmul.f32 %v3028, %v406
    %v3077 = vmul.f32 %v3029, %v421
    %v3078 = vmul.f32 %v3030, %v436
    %v3079 = vmul.f32 %v3031, %v451
    %v3080 = vmul.f32 %v3032, %v466
    %v3081 = vmul.f32 %v3033, %v481
    %v3082 = vmul.f32 %v3034, %v496
    %v3083 = vmul.f32 %v3035, %v511
    %v3084 = vmul.f32 %v3036, %v526
    %v3085 = vmul.f32 %v3037, %v541
    %v3086 = vmul.f32 %v3038, %v556
    %v3087 = vmax.f32 %v3039, 1e-37
    %v3088 = vmax.f32 %v3040, 1e-37
    %v3089 = vmax.f32 %v3041, 1e-37
    %v3090 = vmax.f32 %v3042, 1e-37
    %v3091 = vmax.f32 %v3043, 1e-37
    %v3092 = vmax.f32 %v3044, 1e-37
    %v3093 = vmax.f32 %v3045, 1e-37
    %v3094 = vmax.f32 %v3046, 1e-37
    %v3095 = vmax.f32 %v3047, 1e-37
    %v3096 = vmax.f32 %v3048, 1e-37
    %v3097 = vmax.f32 %v3049, 1e-37
    %v3098 = vmax.f32 %v3050, 1e-37
    %v3099 = vmax.f32 %v3051, 1e-37
    %v3100 = vmax.f32 %v3052, 1e-37
    %v3101 = vmax.f32 %v3053, 1e-37
    %v3102 = vmax.f32 %v3054, 1e-37
    %v3103 = vmax.f32 %v3055, 1e-37
    %v3104 = vmax.f32 %v3056, 1e-37
    %v3105 = vmax.f32 %v3057, 1e-37
    %v3106 = vmax.f32 %v3058, 1e-37
    %v3107 = vmax.f32 %v3059, 1e-37
    %v3108 = vmax.f32 %v3060, 1e-37
    %v3109 = vmax.f32 %v3061, 1e-37
    %v3110 = vmax.f32 %v3062, 1e-37
    %v3111 = vmax.f32 %v3063, 1e-37
    %v3112 = vmax.f32 %v3064, 1e-37
    %v3113 = vmax.f32 %v3065, 1e-37
    %v3114 = vmax.f32 %v3066, 1e-37
    %v3115 = vmax.f32 %v3067, 1e-37
    %v3116 = vmax.f32 %v3068, 1e-37
    %v3117 = vmax.f32 %v3069, 1e-37
    %v3118 = vmax.f32 %v3070, 1e-37
    %v3119 = vmax.f32 %v3071, 1e-37
    %v3120 = vmax.f32 %v3072, 1e-37
    %v3121 = vmax.f32 %v3073, 1e-37
    %v3122 = vmax.f32 %v3074, 1e-37
    %v3123 = vmax.f32 %v3075, 1e-37
    %v3124 = vmax.f32 %v3076, 1e-37
    %v3125 = vmax.f32 %v3077, 1e-37
    %v3126 = vmax.f32 %v3078, 1e-37
    %v3127 = vmax.f32 %v3079, 1e-37
    %v3128 = vmax.f32 %v3080, 1e-37
    %v3129 = vmax.f32 %v3081, 1e-37
    %v3130 = vmax.f32 %v3082, 1e-37
    %v3131 = vmax.f32 %v3083, 1e-37
    %v3132 = vmax.f32 %v3084, 1e-37
    %v3133 = vmax.f32 %v3085, 1e-37
    %v3134 = vmax.f32 %v3086, 1e-37
    %v3135 = vsel %vm188, 1, 0
    %v3136 = vsel %vm189, 1, 0
    %v3137 = vsel %vm190, 1, 0
    %v3138 = vsel %vm191, 1, 0
    %v3139 = vsel %vm192, 1, 0
    %v3140 = vsel %vm193, 1, 0
    %v3141 = vsel %vm194, 1, 0
    %v3142 = vsel %vm195, 1, 0
    %v3143 = vsel %vm196, 1, 0
    %v3144 = vsel %vm197, 1, 0
    %v3145 = vsel %vm198, 1, 0
    %v3146 = vsel %vm199, 1, 0
    %v3147 = vsel %vm200, 1, 0
    %v3148 = vsel %vm201, 1, 0
    %v3149 = vsel %vm202, 1, 0
    %v3150 = vsel %vm203, 1, 0
    %vm3151 = vcmp.eq.s32.totalorder %v3135, 1
    %vm3152 = vcmp.eq.s32.totalorder %v3136, 1
    %vm3153 = vcmp.eq.s32.totalorder %v3137, 1
    %vm3154 = vcmp.eq.s32.totalorder %v3138, 1
    %vm3155 = vcmp.eq.s32.totalorder %v3139, 1
    %vm3156 = vcmp.eq.s32.totalorder %v3140, 1
    %vm3157 = vcmp.eq.s32.totalorder %v3141, 1
    %vm3158 = vcmp.eq.s32.totalorder %v3142, 1
    %vm3159 = vcmp.eq.s32.totalorder %v3143, 1
    %vm3160 = vcmp.eq.s32.totalorder %v3144, 1
    %vm3161 = vcmp.eq.s32.totalorder %v3145, 1
    %vm3162 = vcmp.eq.s32.totalorder %v3146, 1
    %vm3163 = vcmp.eq.s32.totalorder %v3147, 1
    %vm3164 = vcmp.eq.s32.totalorder %v3148, 1
    %vm3165 = vcmp.eq.s32.totalorder %v3149, 1
    %vm3166 = vcmp.eq.s32.totalorder %v3150, 1
    %v3167 = vsel %vm3151, %v3087, 1e+30
    %v3168 = vsel %vm3152, %v3088, 1e+30
    %v3169 = vsel %vm3153, %v3089, 1e+30
    %v3170 = vsel %vm3154, %v3090, 1e+30
    %v3171 = vsel %vm3155, %v3091, 1e+30
    %v3172 = vsel %vm3156, %v3092, 1e+30
    %v3173 = vsel %vm3157, %v3093, 1e+30
    %v3174 = vsel %vm3158, %v3094, 1e+30
    %v3175 = vsel %vm3159, %v3095, 1e+30
    %v3176 = vsel %vm3160, %v3096, 1e+30
    %v3177 = vsel %vm3161, %v3097, 1e+30
    %v3178 = vsel %vm3162, %v3098, 1e+30
    %v3179 = vsel %vm3163, %v3099, 1e+30
    %v3180 = vsel %vm3164, %v3100, 1e+30
    %v3181 = vsel %vm3165, %v3101, 1e+30
    %v3182 = vsel %vm3166, %v3102, 1e+30
    %v3183 = vsel %vm3151, %v3103, 1e+30
    %v3184 = vsel %vm3152, %v3104, 1e+30
    %v3185 = vsel %vm3153, %v3105, 1e+30
    %v3186 = vsel %vm3154, %v3106, 1e+30
    %v3187 = vsel %vm3155, %v3107, 1e+30
    %v3188 = vsel %vm3156, %v3108, 1e+30
    %v3189 = vsel %vm3157, %v3109, 1e+30
    %v3190 = vsel %vm3158, %v3110, 1e+30
    %v3191 = vsel %vm3159, %v3111, 1e+30
    %v3192 = vsel %vm3160, %v3112, 1e+30
    %v3193 = vsel %vm3161, %v3113, 1e+30
    %v3194 = vsel %vm3162, %v3114, 1e+30
    %v3195 = vsel %vm3163, %v3115, 1e+30
    %v3196 = vsel %vm3164, %v3116, 1e+30
    %v3197 = vsel %vm3165, %v3117, 1e+30
    %v3198 = vsel %vm3166, %v3118, 1e+30
    %v3199 = vsel %vm3151, %v3119, 1e+30
    %v3200 = vsel %vm3152, %v3120, 1e+30
    %v3201 = vsel %vm3153, %v3121, 1e+30
    %v3202 = vsel %vm3154, %v3122, 1e+30
    %v3203 = vsel %vm3155, %v3123, 1e+30
    %v3204 = vsel %vm3156, %v3124, 1e+30
    %v3205 = vsel %vm3157, %v3125, 1e+30
    %v3206 = vsel %vm3158, %v3126, 1e+30
    %v3207 = vsel %vm3159, %v3127, 1e+30
    %v3208 = vsel %vm3160, %v3128, 1e+30
    %v3209 = vsel %vm3161, %v3129, 1e+30
    %v3210 = vsel %vm3162, %v3130, 1e+30
    %v3211 = vsel %vm3163, %v3131, 1e+30
    %v3212 = vsel %vm3164, %v3132, 1e+30
    %v3213 = vsel %vm3165, %v3133, 1e+30
    %v3214 = vsel %vm3166, %v3134, 1e+30
    %3215 = vrot.lane.b32.xlu0 %v3167, 1
    %v3216 = vpop.permute.xlu0 %3215
    %3217 = vrot.lane.b32.xlu0 %v3168, 1
    %v3218 = vpop.permute.xlu0 %3217
    %3219 = vrot.lane.b32.xlu0 %v3169, 1
    %v3220 = vpop.permute.xlu0 %3219
    %3221 = vrot.lane.b32.xlu0 %v3170, 1
    %v3222 = vpop.permute.xlu0 %3221
    %3223 = vrot.lane.b32.xlu0 %v3171, 1
    %v3224 = vpop.permute.xlu0 %3223
    %3225 = vrot.lane.b32.xlu0 %v3172, 1
    %v3226 = vpop.permute.xlu0 %3225
    %3227 = vrot.lane.b32.xlu0 %v3173, 1
    %v3228 = vpop.permute.xlu0 %3227
    %3229 = vrot.lane.b32.xlu0 %v3174, 1
    %v3230 = vpop.permute.xlu0 %3229
    %3231 = vrot.lane.b32.xlu0 %v3175, 1
    %v3232 = vpop.permute.xlu0 %3231
    %3233 = vrot.lane.b32.xlu0 %v3176, 1
    %v3234 = vpop.permute.xlu0 %3233
    %3235 = vrot.lane.b32.xlu0 %v3177, 1
    %v3236 = vpop.permute.xlu0 %3235
    %3237 = vrot.lane.b32.xlu0 %v3178, 1
    %v3238 = vpop.permute.xlu0 %3237
    %3239 = vrot.lane.b32.xlu0 %v3179, 1
    %v3240 = vpop.permute.xlu0 %3239
    %3241 = vrot.lane.b32.xlu0 %v3180, 1
    %v3242 = vpop.permute.xlu0 %3241
    %3243 = vrot.lane.b32.xlu0 %v3181, 1
    %v3244 = vpop.permute.xlu0 %3243
    %3245 = vrot.lane.b32.xlu0 %v3182, 1
    %v3246 = vpop.permute.xlu0 %3245
    %3247 = vrot.lane.b32.xlu0 %v3183, 1
    %v3248 = vpop.permute.xlu0 %3247
    %3249 = vrot.lane.b32.xlu0 %v3184, 1
    %v3250 = vpop.permute.xlu0 %3249
    %3251 = vrot.lane.b32.xlu0 %v3185, 1
    %v3252 = vpop.permute.xlu0 %3251
    %3253 = vrot.lane.b32.xlu0 %v3186, 1
    %v3254 = vpop.permute.xlu0 %3253
    %3255 = vrot.lane.b32.xlu0 %v3187, 1
    %v3256 = vpop.permute.xlu0 %3255
    %3257 = vrot.lane.b32.xlu0 %v3188, 1
    %v3258 = vpop.permute.xlu0 %3257
    %3259 = vrot.lane.b32.xlu0 %v3189, 1
    %v3260 = vpop.permute.xlu0 %3259
    %3261 = vrot.lane.b32.xlu0 %v3190, 1
    %v3262 = vpop.permute.xlu0 %3261
    %3263 = vrot.lane.b32.xlu0 %v3191, 1
    %v3264 = vpop.permute.xlu0 %3263
    %3265 = vrot.lane.b32.xlu0 %v3192, 1
    %v3266 = vpop.permute.xlu0 %3265
    %3267 = vrot.lane.b32.xlu0 %v3193, 1
    %v3268 = vpop.permute.xlu0 %3267
    %3269 = vrot.lane.b32.xlu0 %v3194, 1
    %v3270 = vpop.permute.xlu0 %3269
    %3271 = vrot.lane.b32.xlu0 %v3195, 1
    %v3272 = vpop.permute.xlu0 %3271
    %3273 = vrot.lane.b32.xlu0 %v3196, 1
    %v3274 = vpop.permute.xlu0 %3273
    %3275 = vrot.lane.b32.xlu0 %v3197, 1
    %v3276 = vpop.permute.xlu0 %3275
    %3277 = vrot.lane.b32.xlu0 %v3198, 1
    %v3278 = vpop.permute.xlu0 %3277
    %3279 = vrot.lane.b32.xlu0 %v3199, 1
    %v3280 = vpop.permute.xlu0 %3279
    %3281 = vrot.lane.b32.xlu0 %v3200, 1
    %v3282 = vpop.permute.xlu0 %3281
    %3283 = vrot.lane.b32.xlu0 %v3201, 1
    %v3284 = vpop.permute.xlu0 %3283
    %3285 = vrot.lane.b32.xlu0 %v3202, 1
    %v3286 = vpop.permute.xlu0 %3285
    %3287 = vrot.lane.b32.xlu0 %v3203, 1
    %v3288 = vpop.permute.xlu0 %3287
    %3289 = vrot.lane.b32.xlu0 %v3204, 1
    %v3290 = vpop.permute.xlu0 %3289
    %3291 = vrot.lane.b32.xlu0 %v3205, 1
    %v3292 = vpop.permute.xlu0 %3291
    %3293 = vrot.lane.b32.xlu0 %v3206, 1
    %v3294 = vpop.permute.xlu0 %3293
    %3295 = vrot.lane.b32.xlu0 %v3207, 1
    %v3296 = vpop.permute.xlu0 %3295
    %3297 = vrot.lane.b32.xlu0 %v3208, 1
    %v3298 = vpop.permute.xlu0 %3297
    %3299 = vrot.lane.b32.xlu0 %v3209, 1
    %v3300 = vpop.permute.xlu0 %3299
    %3301 = vrot.lane.b32.xlu0 %v3210, 1
    %v3302 = vpop.permute.xlu0 %3301
    %3303 = vrot.lane.b32.xlu0 %v3211, 1
    %v3304 = vpop.permute.xlu0 %3303
    %3305 = vrot.lane.b32.xlu0 %v3212, 1
    %v3306 = vpop.permute.xlu0 %3305
    %3307 = vrot.lane.b32.xlu0 %v3213, 1
    %v3308 = vpop.permute.xlu0 %3307
    %3309 = vrot.lane.b32.xlu0 %v3214, 1
    %v3310 = vpop.permute.xlu0 %3309
    %vm3311 = vcmp.lt.s32.totalorder %v138, 1
    %v3312 = vsel %vm3311, 1, 0
    %vm3313 = vcmp.eq.s32.totalorder %v3312, 1
    %v3314 = vsel %vm3313, 1e+30, %v3216
    %v3315 = vsel %vm3313, 1e+30, %v3218
    %v3316 = vsel %vm3313, 1e+30, %v3220
    %v3317 = vsel %vm3313, 1e+30, %v3222
    %v3318 = vsel %vm3313, 1e+30, %v3224
    %v3319 = vsel %vm3313, 1e+30, %v3226
    %v3320 = vsel %vm3313, 1e+30, %v3228
    %v3321 = vsel %vm3313, 1e+30, %v3230
    %v3322 = vsel %vm3313, 1e+30, %v3232
    %v3323 = vsel %vm3313, 1e+30, %v3234
    %v3324 = vsel %vm3313, 1e+30, %v3236
    %v3325 = vsel %vm3313, 1e+30, %v3238
    %v3326 = vsel %vm3313, 1e+30, %v3240
    %v3327 = vsel %vm3313, 1e+30, %v3242
    %v3328 = vsel %vm3313, 1e+30, %v3244
    %v3329 = vsel %vm3313, 1e+30, %v3246
    %v3330 = vsel %vm3313, 1e+30, %v3248
    %v3331 = vsel %vm3313, 1e+30, %v3250
    %v3332 = vsel %vm3313, 1e+30, %v3252
    %v3333 = vsel %vm3313, 1e+30, %v3254
    %v3334 = vsel %vm3313, 1e+30, %v3256
    %v3335 = vsel %vm3313, 1e+30, %v3258
    %v3336 = vsel %vm3313, 1e+30, %v3260
    %v3337 = vsel %vm3313, 1e+30, %v3262
    %v3338 = vsel %vm3313, 1e+30, %v3264
    %v3339 = vsel %vm3313, 1e+30, %v3266
    %v3340 = vsel %vm3313, 1e+30, %v3268
    %v3341 = vsel %vm3313, 1e+30, %v3270
    %v3342 = vsel %vm3313, 1e+30, %v3272
    %v3343 = vsel %vm3313, 1e+30, %v3274
    %v3344 = vsel %vm3313, 1e+30, %v3276
    %v3345 = vsel %vm3313, 1e+30, %v3278
    %v3346 = vsel %vm3313, 1e+30, %v3280
    %v3347 = vsel %vm3313, 1e+30, %v3282
    %v3348 = vsel %vm3313, 1e+30, %v3284
    %v3349 = vsel %vm3313, 1e+30, %v3286
    %v3350 = vsel %vm3313, 1e+30, %v3288
    %v3351 = vsel %vm3313, 1e+30, %v3290
    %v3352 = vsel %vm3313, 1e+30, %v3292
    %v3353 = vsel %vm3313, 1e+30, %v3294
    %v3354 = vsel %vm3313, 1e+30, %v3296
    %v3355 = vsel %vm3313, 1e+30, %v3298
    %v3356 = vsel %vm3313, 1e+30, %v3300
    %v3357 = vsel %vm3313, 1e+30, %v3302
    %v3358 = vsel %vm3313, 1e+30, %v3304
    %v3359 = vsel %vm3313, 1e+30, %v3306
    %v3360 = vsel %vm3313, 1e+30, %v3308
    %v3361 = vsel %vm3313, 1e+30, %v3310
    %v3362 = vmin.f32 %v3167, %v3314
    %v3363 = vmin.f32 %v3168, %v3315
    %v3364 = vmin.f32 %v3169, %v3316
    %v3365 = vmin.f32 %v3170, %v3317
    %v3366 = vmin.f32 %v3171, %v3318
    %v3367 = vmin.f32 %v3172, %v3319
    %v3368 = vmin.f32 %v3173, %v3320
    %v3369 = vmin.f32 %v3174, %v3321
    %v3370 = vmin.f32 %v3175, %v3322
    %v3371 = vmin.f32 %v3176, %v3323
    %v3372 = vmin.f32 %v3177, %v3324
    %v3373 = vmin.f32 %v3178, %v3325
    %v3374 = vmin.f32 %v3179, %v3326
    %v3375 = vmin.f32 %v3180, %v3327
    %v3376 = vmin.f32 %v3181, %v3328
    %v3377 = vmin.f32 %v3182, %v3329
    %v3378 = vmin.f32 %v3183, %v3330
    %v3379 = vmin.f32 %v3184, %v3331
    %v3380 = vmin.f32 %v3185, %v3332
    %v3381 = vmin.f32 %v3186, %v3333
    %v3382 = vmin.f32 %v3187, %v3334
    %v3383 = vmin.f32 %v3188, %v3335
    %v3384 = vmin.f32 %v3189, %v3336
    %v3385 = vmin.f32 %v3190, %v3337
    %v3386 = vmin.f32 %v3191, %v3338
    %v3387 = vmin.f32 %v3192, %v3339
    %v3388 = vmin.f32 %v3193, %v3340
    %v3389 = vmin.f32 %v3194, %v3341
    %v3390 = vmin.f32 %v3195, %v3342
    %v3391 = vmin.f32 %v3196, %v3343
    %v3392 = vmin.f32 %v3197, %v3344
    %v3393 = vmin.f32 %v3198, %v3345
    %v3394 = vmin.f32 %v3199, %v3346
    %v3395 = vmin.f32 %v3200, %v3347
    %v3396 = vmin.f32 %v3201, %v3348
    %v3397 = vmin.f32 %v3202, %v3349
    %v3398 = vmin.f32 %v3203, %v3350
    %v3399 = vmin.f32 %v3204, %v3351
    %v3400 = vmin.f32 %v3205, %v3352
    %v3401 = vmin.f32 %v3206, %v3353
    %v3402 = vmin.f32 %v3207, %v3354
    %v3403 = vmin.f32 %v3208, %v3355
    %v3404 = vmin.f32 %v3209, %v3356
    %v3405 = vmin.f32 %v3210, %v3357
    %v3406 = vmin.f32 %v3211, %v3358
    %v3407 = vmin.f32 %v3212, %v3359
    %v3408 = vmin.f32 %v3213, %v3360
    %v3409 = vmin.f32 %v3214, %v3361
    %3410 = vrot.lane.b32.xlu0 %v3362, 2
    %v3411 = vpop.permute.xlu0 %3410
    %3412 = vrot.lane.b32.xlu0 %v3363, 2
    %v3413 = vpop.permute.xlu0 %3412
    %3414 = vrot.lane.b32.xlu0 %v3364, 2
    %v3415 = vpop.permute.xlu0 %3414
    %3416 = vrot.lane.b32.xlu0 %v3365, 2
    %v3417 = vpop.permute.xlu0 %3416
    %3418 = vrot.lane.b32.xlu0 %v3366, 2
    %v3419 = vpop.permute.xlu0 %3418
    %3420 = vrot.lane.b32.xlu0 %v3367, 2
    %v3421 = vpop.permute.xlu0 %3420
    %3422 = vrot.lane.b32.xlu0 %v3368, 2
    %v3423 = vpop.permute.xlu0 %3422
    %3424 = vrot.lane.b32.xlu0 %v3369, 2
    %v3425 = vpop.permute.xlu0 %3424
    %3426 = vrot.lane.b32.xlu0 %v3370, 2
    %v3427 = vpop.permute.xlu0 %3426
    %3428 = vrot.lane.b32.xlu0 %v3371, 2
    %v3429 = vpop.permute.xlu0 %3428
    %3430 = vrot.lane.b32.xlu0 %v3372, 2
    %v3431 = vpop.permute.xlu0 %3430
    %3432 = vrot.lane.b32.xlu0 %v3373, 2
    %v3433 = vpop.permute.xlu0 %3432
    %3434 = vrot.lane.b32.xlu0 %v3374, 2
    %v3435 = vpop.permute.xlu0 %3434
    %3436 = vrot.lane.b32.xlu0 %v3375, 2
    %v3437 = vpop.permute.xlu0 %3436
    %3438 = vrot.lane.b32.xlu0 %v3376, 2
    %v3439 = vpop.permute.xlu0 %3438
    %3440 = vrot.lane.b32.xlu0 %v3377, 2
    %v3441 = vpop.permute.xlu0 %3440
    %3442 = vrot.lane.b32.xlu0 %v3378, 2
    %v3443 = vpop.permute.xlu0 %3442
    %3444 = vrot.lane.b32.xlu0 %v3379, 2
    %v3445 = vpop.permute.xlu0 %3444
    %3446 = vrot.lane.b32.xlu0 %v3380, 2
    %v3447 = vpop.permute.xlu0 %3446
    %3448 = vrot.lane.b32.xlu0 %v3381, 2
    %v3449 = vpop.permute.xlu0 %3448
    %3450 = vrot.lane.b32.xlu0 %v3382, 2
    %v3451 = vpop.permute.xlu0 %3450
    %3452 = vrot.lane.b32.xlu0 %v3383, 2
    %v3453 = vpop.permute.xlu0 %3452
    %3454 = vrot.lane.b32.xlu0 %v3384, 2
    %v3455 = vpop.permute.xlu0 %3454
    %3456 = vrot.lane.b32.xlu0 %v3385, 2
    %v3457 = vpop.permute.xlu0 %3456
    %3458 = vrot.lane.b32.xlu0 %v3386, 2
    %v3459 = vpop.permute.xlu0 %3458
    %3460 = vrot.lane.b32.xlu0 %v3387, 2
    %v3461 = vpop.permute.xlu0 %3460
    %3462 = vrot.lane.b32.xlu0 %v3388, 2
    %v3463 = vpop.permute.xlu0 %3462
    %3464 = vrot.lane.b32.xlu0 %v3389, 2
    %v3465 = vpop.permute.xlu0 %3464
    %3466 = vrot.lane.b32.xlu0 %v3390, 2
    %v3467 = vpop.permute.xlu0 %3466
    %3468 = vrot.lane.b32.xlu0 %v3391, 2
    %v3469 = vpop.permute.xlu0 %3468
    %3470 = vrot.lane.b32.xlu0 %v3392, 2
    %v3471 = vpop.permute.xlu0 %3470
    %3472 = vrot.lane.b32.xlu0 %v3393, 2
    %v3473 = vpop.permute.xlu0 %3472
    %3474 = vrot.lane.b32.xlu0 %v3394, 2
    %v3475 = vpop.permute.xlu0 %3474
    %3476 = vrot.lane.b32.xlu0 %v3395, 2
    %v3477 = vpop.permute.xlu0 %3476
    %3478 = vrot.lane.b32.xlu0 %v3396, 2
    %v3479 = vpop.permute.xlu0 %3478
    %3480 = vrot.lane.b32.xlu0 %v3397, 2
    %v3481 = vpop.permute.xlu0 %3480
    %3482 = vrot.lane.b32.xlu0 %v3398, 2
    %v3483 = vpop.permute.xlu0 %3482
    %3484 = vrot.lane.b32.xlu0 %v3399, 2
    %v3485 = vpop.permute.xlu0 %3484
    %3486 = vrot.lane.b32.xlu0 %v3400, 2
    %v3487 = vpop.permute.xlu0 %3486
    %3488 = vrot.lane.b32.xlu0 %v3401, 2
    %v3489 = vpop.permute.xlu0 %3488
    %3490 = vrot.lane.b32.xlu0 %v3402, 2
    %v3491 = vpop.permute.xlu0 %3490
    %3492 = vrot.lane.b32.xlu0 %v3403, 2
    %v3493 = vpop.permute.xlu0 %3492
    %3494 = vrot.lane.b32.xlu0 %v3404, 2
    %v3495 = vpop.permute.xlu0 %3494
    %3496 = vrot.lane.b32.xlu0 %v3405, 2
    %v3497 = vpop.permute.xlu0 %3496
    %3498 = vrot.lane.b32.xlu0 %v3406, 2
    %v3499 = vpop.permute.xlu0 %3498
    %3500 = vrot.lane.b32.xlu0 %v3407, 2
    %v3501 = vpop.permute.xlu0 %3500
    %3502 = vrot.lane.b32.xlu0 %v3408, 2
    %v3503 = vpop.permute.xlu0 %3502
    %3504 = vrot.lane.b32.xlu0 %v3409, 2
    %v3505 = vpop.permute.xlu0 %3504
    %vm3506 = vcmp.lt.s32.totalorder %v138, 2
    %v3507 = vsel %vm3506, 1, 0
    %vm3508 = vcmp.eq.s32.totalorder %v3507, 1
    %v3509 = vsel %vm3508, 1e+30, %v3411
    %v3510 = vsel %vm3508, 1e+30, %v3413
    %v3511 = vsel %vm3508, 1e+30, %v3415
    %v3512 = vsel %vm3508, 1e+30, %v3417
    %v3513 = vsel %vm3508, 1e+30, %v3419
    %v3514 = vsel %vm3508, 1e+30, %v3421
    %v3515 = vsel %vm3508, 1e+30, %v3423
    %v3516 = vsel %vm3508, 1e+30, %v3425
    %v3517 = vsel %vm3508, 1e+30, %v3427
    %v3518 = vsel %vm3508, 1e+30, %v3429
    %v3519 = vsel %vm3508, 1e+30, %v3431
    %v3520 = vsel %vm3508, 1e+30, %v3433
    %v3521 = vsel %vm3508, 1e+30, %v3435
    %v3522 = vsel %vm3508, 1e+30, %v3437
    %v3523 = vsel %vm3508, 1e+30, %v3439
    %v3524 = vsel %vm3508, 1e+30, %v3441
    %v3525 = vsel %vm3508, 1e+30, %v3443
    %v3526 = vsel %vm3508, 1e+30, %v3445
    %v3527 = vsel %vm3508, 1e+30, %v3447
    %v3528 = vsel %vm3508, 1e+30, %v3449
    %v3529 = vsel %vm3508, 1e+30, %v3451
    %v3530 = vsel %vm3508, 1e+30, %v3453
    %v3531 = vsel %vm3508, 1e+30, %v3455
    %v3532 = vsel %vm3508, 1e+30, %v3457
    %v3533 = vsel %vm3508, 1e+30, %v3459
    %v3534 = vsel %vm3508, 1e+30, %v3461
    %v3535 = vsel %vm3508, 1e+30, %v3463
    %v3536 = vsel %vm3508, 1e+30, %v3465
    %v3537 = vsel %vm3508, 1e+30, %v3467
    %v3538 = vsel %vm3508, 1e+30, %v3469
    %v3539 = vsel %vm3508, 1e+30, %v3471
    %v3540 = vsel %vm3508, 1e+30, %v3473
    %v3541 = vsel %vm3508, 1e+30, %v3475
    %v3542 = vsel %vm3508, 1e+30, %v3477
    %v3543 = vsel %vm3508, 1e+30, %v3479
    %v3544 = vsel %vm3508, 1e+30, %v3481
    %v3545 = vsel %vm3508, 1e+30, %v3483
    %v3546 = vsel %vm3508, 1e+30, %v3485
    %v3547 = vsel %vm3508, 1e+30, %v3487
    %v3548 = vsel %vm3508, 1e+30, %v3489
    %v3549 = vsel %vm3508, 1e+30, %v3491
    %v3550 = vsel %vm3508, 1e+30, %v3493
    %v3551 = vsel %vm3508, 1e+30, %v3495
    %v3552 = vsel %vm3508, 1e+30, %v3497
    %v3553 = vsel %vm3508, 1e+30, %v3499
    %v3554 = vsel %vm3508, 1e+30, %v3501
    %v3555 = vsel %vm3508, 1e+30, %v3503
    %v3556 = vsel %vm3508, 1e+30, %v3505
    %v3557 = vmin.f32 %v3362, %v3509
    %v3558 = vmin.f32 %v3363, %v3510
    %v3559 = vmin.f32 %v3364, %v3511
    %v3560 = vmin.f32 %v3365, %v3512
    %v3561 = vmin.f32 %v3366, %v3513
    %v3562 = vmin.f32 %v3367, %v3514
    %v3563 = vmin.f32 %v3368, %v3515
    %v3564 = vmin.f32 %v3369, %v3516
    %v3565 = vmin.f32 %v3370, %v3517
    %v3566 = vmin.f32 %v3371, %v3518
    %v3567 = vmin.f32 %v3372, %v3519
    %v3568 = vmin.f32 %v3373, %v3520
    %v3569 = vmin.f32 %v3374, %v3521
    %v3570 = vmin.f32 %v3375, %v3522
    %v3571 = vmin.f32 %v3376, %v3523
    %v3572 = vmin.f32 %v3377, %v3524
    %v3573 = vmin.f32 %v3378, %v3525
    %v3574 = vmin.f32 %v3379, %v3526
    %v3575 = vmin.f32 %v3380, %v3527
    %v3576 = vmin.f32 %v3381, %v3528
    %v3577 = vmin.f32 %v3382, %v3529
    %v3578 = vmin.f32 %v3383, %v3530
    %v3579 = vmin.f32 %v3384, %v3531
    %v3580 = vmin.f32 %v3385, %v3532
    %v3581 = vmin.f32 %v3386, %v3533
    %v3582 = vmin.f32 %v3387, %v3534
    %v3583 = vmin.f32 %v3388, %v3535
    %v3584 = vmin.f32 %v3389, %v3536
    %v3585 = vmin.f32 %v3390, %v3537
    %v3586 = vmin.f32 %v3391, %v3538
    %v3587 = vmin.f32 %v3392, %v3539
    %v3588 = vmin.f32 %v3393, %v3540
    %v3589 = vmin.f32 %v3394, %v3541
    %v3590 = vmin.f32 %v3395, %v3542
    %v3591 = vmin.f32 %v3396, %v3543
    %v3592 = vmin.f32 %v3397, %v3544
    %v3593 = vmin.f32 %v3398, %v3545
    %v3594 = vmin.f32 %v3399, %v3546
    %v3595 = vmin.f32 %v3400, %v3547
    %v3596 = vmin.f32 %v3401, %v3548
    %v3597 = vmin.f32 %v3402, %v3549
    %v3598 = vmin.f32 %v3403, %v3550
    %v3599 = vmin.f32 %v3404, %v3551
    %v3600 = vmin.f32 %v3405, %v3552
    %v3601 = vmin.f32 %v3406, %v3553
    %v3602 = vmin.f32 %v3407, %v3554
    %v3603 = vmin.f32 %v3408, %v3555
    %v3604 = vmin.f32 %v3409, %v3556
    %3605 = vrot.lane.b32.xlu0 %v3557, 4
    %v3606 = vpop.permute.xlu0 %3605
    %3607 = vrot.lane.b32.xlu0 %v3558, 4
    %v3608 = vpop.permute.xlu0 %3607
    %3609 = vrot.lane.b32.xlu0 %v3559, 4
    %v3610 = vpop.permute.xlu0 %3609
    %3611 = vrot.lane.b32.xlu0 %v3560, 4
    %v3612 = vpop.permute.xlu0 %3611
    %3613 = vrot.lane.b32.xlu0 %v3561, 4
    %v3614 = vpop.permute.xlu0 %3613
    %3615 = vrot.lane.b32.xlu0 %v3562, 4
    %v3616 = vpop.permute.xlu0 %3615
    %3617 = vrot.lane.b32.xlu0 %v3563, 4
    %v3618 = vpop.permute.xlu0 %3617
    %3619 = vrot.lane.b32.xlu0 %v3564, 4
    %v3620 = vpop.permute.xlu0 %3619
    %3621 = vrot.lane.b32.xlu0 %v3565, 4
    %v3622 = vpop.permute.xlu0 %3621
    %3623 = vrot.lane.b32.xlu0 %v3566, 4
    %v3624 = vpop.permute.xlu0 %3623
    %3625 = vrot.lane.b32.xlu0 %v3567, 4
    %v3626 = vpop.permute.xlu0 %3625
    %3627 = vrot.lane.b32.xlu0 %v3568, 4
    %v3628 = vpop.permute.xlu0 %3627
    %3629 = vrot.lane.b32.xlu0 %v3569, 4
    %v3630 = vpop.permute.xlu0 %3629
    %3631 = vrot.lane.b32.xlu0 %v3570, 4
    %v3632 = vpop.permute.xlu0 %3631
    %3633 = vrot.lane.b32.xlu0 %v3571, 4
    %v3634 = vpop.permute.xlu0 %3633
    %3635 = vrot.lane.b32.xlu0 %v3572, 4
    %v3636 = vpop.permute.xlu0 %3635
    %3637 = vrot.lane.b32.xlu0 %v3573, 4
    %v3638 = vpop.permute.xlu0 %3637
    %3639 = vrot.lane.b32.xlu0 %v3574, 4
    %v3640 = vpop.permute.xlu0 %3639
    %3641 = vrot.lane.b32.xlu0 %v3575, 4
    %v3642 = vpop.permute.xlu0 %3641
    %3643 = vrot.lane.b32.xlu0 %v3576, 4
    %v3644 = vpop.permute.xlu0 %3643
    %3645 = vrot.lane.b32.xlu0 %v3577, 4
    %v3646 = vpop.permute.xlu0 %3645
    %3647 = vrot.lane.b32.xlu0 %v3578, 4
    %v3648 = vpop.permute.xlu0 %3647
    %3649 = vrot.lane.b32.xlu0 %v3579, 4
    %v3650 = vpop.permute.xlu0 %3649
    %3651 = vrot.lane.b32.xlu0 %v3580, 4
    %v3652 = vpop.permute.xlu0 %3651
    %3653 = vrot.lane.b32.xlu0 %v3581, 4
    %v3654 = vpop.permute.xlu0 %3653
    %3655 = vrot.lane.b32.xlu0 %v3582, 4
    %v3656 = vpop.permute.xlu0 %3655
    %3657 = vrot.lane.b32.xlu0 %v3583, 4
    %v3658 = vpop.permute.xlu0 %3657
    %3659 = vrot.lane.b32.xlu0 %v3584, 4
    %v3660 = vpop.permute.xlu0 %3659
    %3661 = vrot.lane.b32.xlu0 %v3585, 4
    %v3662 = vpop.permute.xlu0 %3661
    %3663 = vrot.lane.b32.xlu0 %v3586, 4
    %v3664 = vpop.permute.xlu0 %3663
    %3665 = vrot.lane.b32.xlu0 %v3587, 4
    %v3666 = vpop.permute.xlu0 %3665
    %3667 = vrot.lane.b32.xlu0 %v3588, 4
    %v3668 = vpop.permute.xlu0 %3667
    %3669 = vrot.lane.b32.xlu0 %v3589, 4
    %v3670 = vpop.permute.xlu0 %3669
    %3671 = vrot.lane.b32.xlu0 %v3590, 4
    %v3672 = vpop.permute.xlu0 %3671
    %3673 = vrot.lane.b32.xlu0 %v3591, 4
    %v3674 = vpop.permute.xlu0 %3673
    %3675 = vrot.lane.b32.xlu0 %v3592, 4
    %v3676 = vpop.permute.xlu0 %3675
    %3677 = vrot.lane.b32.xlu0 %v3593, 4
    %v3678 = vpop.permute.xlu0 %3677
    %3679 = vrot.lane.b32.xlu0 %v3594, 4
    %v3680 = vpop.permute.xlu0 %3679
    %3681 = vrot.lane.b32.xlu0 %v3595, 4
    %v3682 = vpop.permute.xlu0 %3681
    %3683 = vrot.lane.b32.xlu0 %v3596, 4
    %v3684 = vpop.permute.xlu0 %3683
    %3685 = vrot.lane.b32.xlu0 %v3597, 4
    %v3686 = vpop.permute.xlu0 %3685
    %3687 = vrot.lane.b32.xlu0 %v3598, 4
    %v3688 = vpop.permute.xlu0 %3687
    %3689 = vrot.lane.b32.xlu0 %v3599, 4
    %v3690 = vpop.permute.xlu0 %3689
    %3691 = vrot.lane.b32.xlu0 %v3600, 4
    %v3692 = vpop.permute.xlu0 %3691
    %3693 = vrot.lane.b32.xlu0 %v3601, 4
    %v3694 = vpop.permute.xlu0 %3693
    %3695 = vrot.lane.b32.xlu0 %v3602, 4
    %v3696 = vpop.permute.xlu0 %3695
    %3697 = vrot.lane.b32.xlu0 %v3603, 4
    %v3698 = vpop.permute.xlu0 %3697
    %3699 = vrot.lane.b32.xlu0 %v3604, 4
    %v3700 = vpop.permute.xlu0 %3699
    %vm3701 = vcmp.lt.s32.totalorder %v138, 4
    %v3702 = vsel %vm3701, 1, 0
    %vm3703 = vcmp.eq.s32.totalorder %v3702, 1
    %v3704 = vsel %vm3703, 1e+30, %v3606
    %v3705 = vsel %vm3703, 1e+30, %v3608
    %v3706 = vsel %vm3703, 1e+30, %v3610
    %v3707 = vsel %vm3703, 1e+30, %v3612
    %v3708 = vsel %vm3703, 1e+30, %v3614
    %v3709 = vsel %vm3703, 1e+30, %v3616
    %v3710 = vsel %vm3703, 1e+30, %v3618
    %v3711 = vsel %vm3703, 1e+30, %v3620
    %v3712 = vsel %vm3703, 1e+30, %v3622
    %v3713 = vsel %vm3703, 1e+30, %v3624
    %v3714 = vsel %vm3703, 1e+30, %v3626
    %v3715 = vsel %vm3703, 1e+30, %v3628
    %v3716 = vsel %vm3703, 1e+30, %v3630
    %v3717 = vsel %vm3703, 1e+30, %v3632
    %v3718 = vsel %vm3703, 1e+30, %v3634
    %v3719 = vsel %vm3703, 1e+30, %v3636
    %v3720 = vsel %vm3703, 1e+30, %v3638
    %v3721 = vsel %vm3703, 1e+30, %v3640
    %v3722 = vsel %vm3703, 1e+30, %v3642
    %v3723 = vsel %vm3703, 1e+30, %v3644
    %v3724 = vsel %vm3703, 1e+30, %v3646
    %v3725 = vsel %vm3703, 1e+30, %v3648
    %v3726 = vsel %vm3703, 1e+30, %v3650
    %v3727 = vsel %vm3703, 1e+30, %v3652
    %v3728 = vsel %vm3703, 1e+30, %v3654
    %v3729 = vsel %vm3703, 1e+30, %v3656
    %v3730 = vsel %vm3703, 1e+30, %v3658
    %v3731 = vsel %vm3703, 1e+30, %v3660
    %v3732 = vsel %vm3703, 1e+30, %v3662
    %v3733 = vsel %vm3703, 1e+30, %v3664
    %v3734 = vsel %vm3703, 1e+30, %v3666
    %v3735 = vsel %vm3703, 1e+30, %v3668
    %v3736 = vsel %vm3703, 1e+30, %v3670
    %v3737 = vsel %vm3703, 1e+30, %v3672
    %v3738 = vsel %vm3703, 1e+30, %v3674
    %v3739 = vsel %vm3703, 1e+30, %v3676
    %v3740 = vsel %vm3703, 1e+30, %v3678
    %v3741 = vsel %vm3703, 1e+30, %v3680
    %v3742 = vsel %vm3703, 1e+30, %v3682
    %v3743 = vsel %vm3703, 1e+30, %v3684
    %v3744 = vsel %vm3703, 1e+30, %v3686
    %v3745 = vsel %vm3703, 1e+30, %v3688
    %v3746 = vsel %vm3703, 1e+30, %v3690
    %v3747 = vsel %vm3703, 1e+30, %v3692
    %v3748 = vsel %vm3703, 1e+30, %v3694
    %v3749 = vsel %vm3703, 1e+30, %v3696
    %v3750 = vsel %vm3703, 1e+30, %v3698
    %v3751 = vsel %vm3703, 1e+30, %v3700
    %v3752 = vmin.f32 %v3557, %v3704
    %v3753 = vmin.f32 %v3558, %v3705
    %v3754 = vmin.f32 %v3559, %v3706
    %v3755 = vmin.f32 %v3560, %v3707
    %v3756 = vmin.f32 %v3561, %v3708
    %v3757 = vmin.f32 %v3562, %v3709
    %v3758 = vmin.f32 %v3563, %v3710
    %v3759 = vmin.f32 %v3564, %v3711
    %v3760 = vmin.f32 %v3565, %v3712
    %v3761 = vmin.f32 %v3566, %v3713
    %v3762 = vmin.f32 %v3567, %v3714
    %v3763 = vmin.f32 %v3568, %v3715
    %v3764 = vmin.f32 %v3569, %v3716
    %v3765 = vmin.f32 %v3570, %v3717
    %v3766 = vmin.f32 %v3571, %v3718
    %v3767 = vmin.f32 %v3572, %v3719
    %v3768 = vmin.f32 %v3573, %v3720
    %v3769 = vmin.f32 %v3574, %v3721
    %v3770 = vmin.f32 %v3575, %v3722
    %v3771 = vmin.f32 %v3576, %v3723
    %v3772 = vmin.f32 %v3577, %v3724
    %v3773 = vmin.f32 %v3578, %v3725
    %v3774 = vmin.f32 %v3579, %v3726
    %v3775 = vmin.f32 %v3580, %v3727
    %v3776 = vmin.f32 %v3581, %v3728
    %v3777 = vmin.f32 %v3582, %v3729
    %v3778 = vmin.f32 %v3583, %v3730
    %v3779 = vmin.f32 %v3584, %v3731
    %v3780 = vmin.f32 %v3585, %v3732
    %v3781 = vmin.f32 %v3586, %v3733
    %v3782 = vmin.f32 %v3587, %v3734
    %v3783 = vmin.f32 %v3588, %v3735
    %v3784 = vmin.f32 %v3589, %v3736
    %v3785 = vmin.f32 %v3590, %v3737
    %v3786 = vmin.f32 %v3591, %v3738
    %v3787 = vmin.f32 %v3592, %v3739
    %v3788 = vmin.f32 %v3593, %v3740
    %v3789 = vmin.f32 %v3594, %v3741
    %v3790 = vmin.f32 %v3595, %v3742
    %v3791 = vmin.f32 %v3596, %v3743
    %v3792 = vmin.f32 %v3597, %v3744
    %v3793 = vmin.f32 %v3598, %v3745
    %v3794 = vmin.f32 %v3599, %v3746
    %v3795 = vmin.f32 %v3600, %v3747
    %v3796 = vmin.f32 %v3601, %v3748
    %v3797 = vmin.f32 %v3602, %v3749
    %v3798 = vmin.f32 %v3603, %v3750
    %v3799 = vmin.f32 %v3604, %v3751
    %3800 = vrot.lane.b32.xlu0 %v3752, 8
    %v3801 = vpop.permute.xlu0 %3800
    %3802 = vrot.lane.b32.xlu0 %v3753, 8
    %v3803 = vpop.permute.xlu0 %3802
    %3804 = vrot.lane.b32.xlu0 %v3754, 8
    %v3805 = vpop.permute.xlu0 %3804
    %3806 = vrot.lane.b32.xlu0 %v3755, 8
    %v3807 = vpop.permute.xlu0 %3806
    %3808 = vrot.lane.b32.xlu0 %v3756, 8
    %v3809 = vpop.permute.xlu0 %3808
    %3810 = vrot.lane.b32.xlu0 %v3757, 8
    %v3811 = vpop.permute.xlu0 %3810
    %3812 = vrot.lane.b32.xlu0 %v3758, 8
    %v3813 = vpop.permute.xlu0 %3812
    %3814 = vrot.lane.b32.xlu0 %v3759, 8
    %v3815 = vpop.permute.xlu0 %3814
    %3816 = vrot.lane.b32.xlu0 %v3760, 8
    %v3817 = vpop.permute.xlu0 %3816
    %3818 = vrot.lane.b32.xlu0 %v3761, 8
    %v3819 = vpop.permute.xlu0 %3818
    %3820 = vrot.lane.b32.xlu0 %v3762, 8
    %v3821 = vpop.permute.xlu0 %3820
    %3822 = vrot.lane.b32.xlu0 %v3763, 8
    %v3823 = vpop.permute.xlu0 %3822
    %3824 = vrot.lane.b32.xlu0 %v3764, 8
    %v3825 = vpop.permute.xlu0 %3824
    %3826 = vrot.lane.b32.xlu0 %v3765, 8
    %v3827 = vpop.permute.xlu0 %3826
    %3828 = vrot.lane.b32.xlu0 %v3766, 8
    %v3829 = vpop.permute.xlu0 %3828
    %3830 = vrot.lane.b32.xlu0 %v3767, 8
    %v3831 = vpop.permute.xlu0 %3830
    %3832 = vrot.lane.b32.xlu0 %v3768, 8
    %v3833 = vpop.permute.xlu0 %3832
    %3834 = vrot.lane.b32.xlu0 %v3769, 8
    %v3835 = vpop.permute.xlu0 %3834
    %3836 = vrot.lane.b32.xlu0 %v3770, 8
    %v3837 = vpop.permute.xlu0 %3836
    %3838 = vrot.lane.b32.xlu0 %v3771, 8
    %v3839 = vpop.permute.xlu0 %3838
    %3840 = vrot.lane.b32.xlu0 %v3772, 8
    %v3841 = vpop.permute.xlu0 %3840
    %3842 = vrot.lane.b32.xlu0 %v3773, 8
    %v3843 = vpop.permute.xlu0 %3842
    %3844 = vrot.lane.b32.xlu0 %v3774, 8
    %v3845 = vpop.permute.xlu0 %3844
    %3846 = vrot.lane.b32.xlu0 %v3775, 8
    %v3847 = vpop.permute.xlu0 %3846
    %3848 = vrot.lane.b32.xlu0 %v3776, 8
    %v3849 = vpop.permute.xlu0 %3848
    %3850 = vrot.lane.b32.xlu0 %v3777, 8
    %v3851 = vpop.permute.xlu0 %3850
    %3852 = vrot.lane.b32.xlu0 %v3778, 8
    %v3853 = vpop.permute.xlu0 %3852
    %3854 = vrot.lane.b32.xlu0 %v3779, 8
    %v3855 = vpop.permute.xlu0 %3854
    %3856 = vrot.lane.b32.xlu0 %v3780, 8
    %v3857 = vpop.permute.xlu0 %3856
    %3858 = vrot.lane.b32.xlu0 %v3781, 8
    %v3859 = vpop.permute.xlu0 %3858
    %3860 = vrot.lane.b32.xlu0 %v3782, 8
    %v3861 = vpop.permute.xlu0 %3860
    %3862 = vrot.lane.b32.xlu0 %v3783, 8
    %v3863 = vpop.permute.xlu0 %3862
    %3864 = vrot.lane.b32.xlu0 %v3784, 8
    %v3865 = vpop.permute.xlu0 %3864
    %3866 = vrot.lane.b32.xlu0 %v3785, 8
    %v3867 = vpop.permute.xlu0 %3866
    %3868 = vrot.lane.b32.xlu0 %v3786, 8
    %v3869 = vpop.permute.xlu0 %3868
    %3870 = vrot.lane.b32.xlu0 %v3787, 8
    %v3871 = vpop.permute.xlu0 %3870
    %3872 = vrot.lane.b32.xlu0 %v3788, 8
    %v3873 = vpop.permute.xlu0 %3872
    %3874 = vrot.lane.b32.xlu0 %v3789, 8
    %v3875 = vpop.permute.xlu0 %3874
    %3876 = vrot.lane.b32.xlu0 %v3790, 8
    %v3877 = vpop.permute.xlu0 %3876
    %3878 = vrot.lane.b32.xlu0 %v3791, 8
    %v3879 = vpop.permute.xlu0 %3878
    %3880 = vrot.lane.b32.xlu0 %v3792, 8
    %v3881 = vpop.permute.xlu0 %3880
    %3882 = vrot.lane.b32.xlu0 %v3793, 8
    %v3883 = vpop.permute.xlu0 %3882
    %3884 = vrot.lane.b32.xlu0 %v3794, 8
    %v3885 = vpop.permute.xlu0 %3884
    %3886 = vrot.lane.b32.xlu0 %v3795, 8
    %v3887 = vpop.permute.xlu0 %3886
    %3888 = vrot.lane.b32.xlu0 %v3796, 8
    %v3889 = vpop.permute.xlu0 %3888
    %3890 = vrot.lane.b32.xlu0 %v3797, 8
    %v3891 = vpop.permute.xlu0 %3890
    %3892 = vrot.lane.b32.xlu0 %v3798, 8
    %v3893 = vpop.permute.xlu0 %3892
    %3894 = vrot.lane.b32.xlu0 %v3799, 8
    %v3895 = vpop.permute.xlu0 %3894
    %vm3896 = vcmp.lt.s32.totalorder %v138, 8
    %v3897 = vsel %vm3896, 1, 0
    %vm3898 = vcmp.eq.s32.totalorder %v3897, 1
    %v3899 = vsel %vm3898, 1e+30, %v3801
    %v3900 = vsel %vm3898, 1e+30, %v3803
    %v3901 = vsel %vm3898, 1e+30, %v3805
    %v3902 = vsel %vm3898, 1e+30, %v3807
    %v3903 = vsel %vm3898, 1e+30, %v3809
    %v3904 = vsel %vm3898, 1e+30, %v3811
    %v3905 = vsel %vm3898, 1e+30, %v3813
    %v3906 = vsel %vm3898, 1e+30, %v3815
    %v3907 = vsel %vm3898, 1e+30, %v3817
    %v3908 = vsel %vm3898, 1e+30, %v3819
    %v3909 = vsel %vm3898, 1e+30, %v3821
    %v3910 = vsel %vm3898, 1e+30, %v3823
    %v3911 = vsel %vm3898, 1e+30, %v3825
    %v3912 = vsel %vm3898, 1e+30, %v3827
    %v3913 = vsel %vm3898, 1e+30, %v3829
    %v3914 = vsel %vm3898, 1e+30, %v3831
    %v3915 = vsel %vm3898, 1e+30, %v3833
    %v3916 = vsel %vm3898, 1e+30, %v3835
    %v3917 = vsel %vm3898, 1e+30, %v3837
    %v3918 = vsel %vm3898, 1e+30, %v3839
    %v3919 = vsel %vm3898, 1e+30, %v3841
    %v3920 = vsel %vm3898, 1e+30, %v3843
    %v3921 = vsel %vm3898, 1e+30, %v3845
    %v3922 = vsel %vm3898, 1e+30, %v3847
    %v3923 = vsel %vm3898, 1e+30, %v3849
    %v3924 = vsel %vm3898, 1e+30, %v3851
    %v3925 = vsel %vm3898, 1e+30, %v3853
    %v3926 = vsel %vm3898, 1e+30, %v3855
    %v3927 = vsel %vm3898, 1e+30, %v3857
    %v3928 = vsel %vm3898, 1e+30, %v3859
    %v3929 = vsel %vm3898, 1e+30, %v3861
    %v3930 = vsel %vm3898, 1e+30, %v3863
    %v3931 = vsel %vm3898, 1e+30, %v3865
    %v3932 = vsel %vm3898, 1e+30, %v3867
    %v3933 = vsel %vm3898, 1e+30, %v3869
    %v3934 = vsel %vm3898, 1e+30, %v3871
    %v3935 = vsel %vm3898, 1e+30, %v3873
    %v3936 = vsel %vm3898, 1e+30, %v3875
    %v3937 = vsel %vm3898, 1e+30, %v3877
    %v3938 = vsel %vm3898, 1e+30, %v3879
    %v3939 = vsel %vm3898, 1e+30, %v3881
    %v3940 = vsel %vm3898, 1e+30, %v3883
    %v3941 = vsel %vm3898, 1e+30, %v3885
    %v3942 = vsel %vm3898, 1e+30, %v3887
    %v3943 = vsel %vm3898, 1e+30, %v3889
    %v3944 = vsel %vm3898, 1e+30, %v3891
    %v3945 = vsel %vm3898, 1e+30, %v3893
    %v3946 = vsel %vm3898, 1e+30, %v3895
    %v3947 = vmin.f32 %v3752, %v3899
    %v3948 = vmin.f32 %v3753, %v3900
    %v3949 = vmin.f32 %v3754, %v3901
    %v3950 = vmin.f32 %v3755, %v3902
    %v3951 = vmin.f32 %v3756, %v3903
    %v3952 = vmin.f32 %v3757, %v3904
    %v3953 = vmin.f32 %v3758, %v3905
    %v3954 = vmin.f32 %v3759, %v3906
    %v3955 = vmin.f32 %v3760, %v3907
    %v3956 = vmin.f32 %v3761, %v3908
    %v3957 = vmin.f32 %v3762, %v3909
    %v3958 = vmin.f32 %v3763, %v3910
    %v3959 = vmin.f32 %v3764, %v3911
    %v3960 = vmin.f32 %v3765, %v3912
    %v3961 = vmin.f32 %v3766, %v3913
    %v3962 = vmin.f32 %v3767, %v3914
    %v3963 = vmin.f32 %v3768, %v3915
    %v3964 = vmin.f32 %v3769, %v3916
    %v3965 = vmin.f32 %v3770, %v3917
    %v3966 = vmin.f32 %v3771, %v3918
    %v3967 = vmin.f32 %v3772, %v3919
    %v3968 = vmin.f32 %v3773, %v3920
    %v3969 = vmin.f32 %v3774, %v3921
    %v3970 = vmin.f32 %v3775, %v3922
    %v3971 = vmin.f32 %v3776, %v3923
    %v3972 = vmin.f32 %v3777, %v3924
    %v3973 = vmin.f32 %v3778, %v3925
    %v3974 = vmin.f32 %v3779, %v3926
    %v3975 = vmin.f32 %v3780, %v3927
    %v3976 = vmin.f32 %v3781, %v3928
    %v3977 = vmin.f32 %v3782, %v3929
    %v3978 = vmin.f32 %v3783, %v3930
    %v3979 = vmin.f32 %v3784, %v3931
    %v3980 = vmin.f32 %v3785, %v3932
    %v3981 = vmin.f32 %v3786, %v3933
    %v3982 = vmin.f32 %v3787, %v3934
    %v3983 = vmin.f32 %v3788, %v3935
    %v3984 = vmin.f32 %v3789, %v3936
    %v3985 = vmin.f32 %v3790, %v3937
    %v3986 = vmin.f32 %v3791, %v3938
    %v3987 = vmin.f32 %v3792, %v3939
    %v3988 = vmin.f32 %v3793, %v3940
    %v3989 = vmin.f32 %v3794, %v3941
    %v3990 = vmin.f32 %v3795, %v3942
    %v3991 = vmin.f32 %v3796, %v3943
    %v3992 = vmin.f32 %v3797, %v3944
    %v3993 = vmin.f32 %v3798, %v3945
    %v3994 = vmin.f32 %v3799, %v3946
    %3995 = vrot.lane.b32.xlu0 %v3947, 16
    %v3996 = vpop.permute.xlu0 %3995
    %3997 = vrot.lane.b32.xlu0 %v3948, 16
    %v3998 = vpop.permute.xlu0 %3997
    %3999 = vrot.lane.b32.xlu0 %v3949, 16
    %v4000 = vpop.permute.xlu0 %3999
    %4001 = vrot.lane.b32.xlu0 %v3950, 16
    %v4002 = vpop.permute.xlu0 %4001
    %4003 = vrot.lane.b32.xlu0 %v3951, 16
    %v4004 = vpop.permute.xlu0 %4003
    %4005 = vrot.lane.b32.xlu0 %v3952, 16
    %v4006 = vpop.permute.xlu0 %4005
    %4007 = vrot.lane.b32.xlu0 %v3953, 16
    %v4008 = vpop.permute.xlu0 %4007
    %4009 = vrot.lane.b32.xlu0 %v3954, 16
    %v4010 = vpop.permute.xlu0 %4009
    %4011 = vrot.lane.b32.xlu0 %v3955, 16
    %v4012 = vpop.permute.xlu0 %4011
    %4013 = vrot.lane.b32.xlu0 %v3956, 16
    %v4014 = vpop.permute.xlu0 %4013
    %4015 = vrot.lane.b32.xlu0 %v3957, 16
    %v4016 = vpop.permute.xlu0 %4015
    %4017 = vrot.lane.b32.xlu0 %v3958, 16
    %v4018 = vpop.permute.xlu0 %4017
    %4019 = vrot.lane.b32.xlu0 %v3959, 16
    %v4020 = vpop.permute.xlu0 %4019
    %4021 = vrot.lane.b32.xlu0 %v3960, 16
    %v4022 = vpop.permute.xlu0 %4021
    %4023 = vrot.lane.b32.xlu0 %v3961, 16
    %v4024 = vpop.permute.xlu0 %4023
    %4025 = vrot.lane.b32.xlu0 %v3962, 16
    %v4026 = vpop.permute.xlu0 %4025
    %4027 = vrot.lane.b32.xlu0 %v3963, 16
    %v4028 = vpop.permute.xlu0 %4027
    %4029 = vrot.lane.b32.xlu0 %v3964, 16
    %v4030 = vpop.permute.xlu0 %4029
    %4031 = vrot.lane.b32.xlu0 %v3965, 16
    %v4032 = vpop.permute.xlu0 %4031
    %4033 = vrot.lane.b32.xlu0 %v3966, 16
    %v4034 = vpop.permute.xlu0 %4033
    %4035 = vrot.lane.b32.xlu0 %v3967, 16
    %v4036 = vpop.permute.xlu0 %4035
    %4037 = vrot.lane.b32.xlu0 %v3968, 16
    %v4038 = vpop.permute.xlu0 %4037
    %4039 = vrot.lane.b32.xlu0 %v3969, 16
    %v4040 = vpop.permute.xlu0 %4039
    %4041 = vrot.lane.b32.xlu0 %v3970, 16
    %v4042 = vpop.permute.xlu0 %4041
    %4043 = vrot.lane.b32.xlu0 %v3971, 16
    %v4044 = vpop.permute.xlu0 %4043
    %4045 = vrot.lane.b32.xlu0 %v3972, 16
    %v4046 = vpop.permute.xlu0 %4045
    %4047 = vrot.lane.b32.xlu0 %v3973, 16
    %v4048 = vpop.permute.xlu0 %4047
    %4049 = vrot.lane.b32.xlu0 %v3974, 16
    %v4050 = vpop.permute.xlu0 %4049
    %4051 = vrot.lane.b32.xlu0 %v3975, 16
    %v4052 = vpop.permute.xlu0 %4051
    %4053 = vrot.lane.b32.xlu0 %v3976, 16
    %v4054 = vpop.permute.xlu0 %4053
    %4055 = vrot.lane.b32.xlu0 %v3977, 16
    %v4056 = vpop.permute.xlu0 %4055
    %4057 = vrot.lane.b32.xlu0 %v3978, 16
    %v4058 = vpop.permute.xlu0 %4057
    %4059 = vrot.lane.b32.xlu0 %v3979, 16
    %v4060 = vpop.permute.xlu0 %4059
    %4061 = vrot.lane.b32.xlu0 %v3980, 16
    %v4062 = vpop.permute.xlu0 %4061
    %4063 = vrot.lane.b32.xlu0 %v3981, 16
    %v4064 = vpop.permute.xlu0 %4063
    %4065 = vrot.lane.b32.xlu0 %v3982, 16
    %v4066 = vpop.permute.xlu0 %4065
    %4067 = vrot.lane.b32.xlu0 %v3983, 16
    %v4068 = vpop.permute.xlu0 %4067
    %4069 = vrot.lane.b32.xlu0 %v3984, 16
    %v4070 = vpop.permute.xlu0 %4069
    %4071 = vrot.lane.b32.xlu0 %v3985, 16
    %v4072 = vpop.permute.xlu0 %4071
    %4073 = vrot.lane.b32.xlu0 %v3986, 16
    %v4074 = vpop.permute.xlu0 %4073
    %4075 = vrot.lane.b32.xlu0 %v3987, 16
    %v4076 = vpop.permute.xlu0 %4075
    %4077 = vrot.lane.b32.xlu0 %v3988, 16
    %v4078 = vpop.permute.xlu0 %4077
    %4079 = vrot.lane.b32.xlu0 %v3989, 16
    %v4080 = vpop.permute.xlu0 %4079
    %4081 = vrot.lane.b32.xlu0 %v3990, 16
    %v4082 = vpop.permute.xlu0 %4081
    %4083 = vrot.lane.b32.xlu0 %v3991, 16
    %v4084 = vpop.permute.xlu0 %4083
    %4085 = vrot.lane.b32.xlu0 %v3992, 16
    %v4086 = vpop.permute.xlu0 %4085
    %4087 = vrot.lane.b32.xlu0 %v3993, 16
    %v4088 = vpop.permute.xlu0 %4087
    %4089 = vrot.lane.b32.xlu0 %v3994, 16
    %v4090 = vpop.permute.xlu0 %4089
    %vm4091 = vcmp.lt.s32.totalorder %v138, 16
    %v4092 = vsel %vm4091, 1, 0
    %vm4093 = vcmp.eq.s32.totalorder %v4092, 1
    %v4094 = vsel %vm4093, 1e+30, %v3996
    %v4095 = vsel %vm4093, 1e+30, %v3998
    %v4096 = vsel %vm4093, 1e+30, %v4000
    %v4097 = vsel %vm4093, 1e+30, %v4002
    %v4098 = vsel %vm4093, 1e+30, %v4004
    %v4099 = vsel %vm4093, 1e+30, %v4006
    %v4100 = vsel %vm4093, 1e+30, %v4008
    %v4101 = vsel %vm4093, 1e+30, %v4010
    %v4102 = vsel %vm4093, 1e+30, %v4012
    %v4103 = vsel %vm4093, 1e+30, %v4014
    %v4104 = vsel %vm4093, 1e+30, %v4016
    %v4105 = vsel %vm4093, 1e+30, %v4018
    %v4106 = vsel %vm4093, 1e+30, %v4020
    %v4107 = vsel %vm4093, 1e+30, %v4022
    %v4108 = vsel %vm4093, 1e+30, %v4024
    %v4109 = vsel %vm4093, 1e+30, %v4026
    %v4110 = vsel %vm4093, 1e+30, %v4028
    %v4111 = vsel %vm4093, 1e+30, %v4030
    %v4112 = vsel %vm4093, 1e+30, %v4032
    %v4113 = vsel %vm4093, 1e+30, %v4034
    %v4114 = vsel %vm4093, 1e+30, %v4036
    %v4115 = vsel %vm4093, 1e+30, %v4038
    %v4116 = vsel %vm4093, 1e+30, %v4040
    %v4117 = vsel %vm4093, 1e+30, %v4042
    %v4118 = vsel %vm4093, 1e+30, %v4044
    %v4119 = vsel %vm4093, 1e+30, %v4046
    %v4120 = vsel %vm4093, 1e+30, %v4048
    %v4121 = vsel %vm4093, 1e+30, %v4050
    %v4122 = vsel %vm4093, 1e+30, %v4052
    %v4123 = vsel %vm4093, 1e+30, %v4054
    %v4124 = vsel %vm4093, 1e+30, %v4056
    %v4125 = vsel %vm4093, 1e+30, %v4058
    %v4126 = vsel %vm4093, 1e+30, %v4060
    %v4127 = vsel %vm4093, 1e+30, %v4062
    %v4128 = vsel %vm4093, 1e+30, %v4064
    %v4129 = vsel %vm4093, 1e+30, %v4066
    %v4130 = vsel %vm4093, 1e+30, %v4068
    %v4131 = vsel %vm4093, 1e+30, %v4070
    %v4132 = vsel %vm4093, 1e+30, %v4072
    %v4133 = vsel %vm4093, 1e+30, %v4074
    %v4134 = vsel %vm4093, 1e+30, %v4076
    %v4135 = vsel %vm4093, 1e+30, %v4078
    %v4136 = vsel %vm4093, 1e+30, %v4080
    %v4137 = vsel %vm4093, 1e+30, %v4082
    %v4138 = vsel %vm4093, 1e+30, %v4084
    %v4139 = vsel %vm4093, 1e+30, %v4086
    %v4140 = vsel %vm4093, 1e+30, %v4088
    %v4141 = vsel %vm4093, 1e+30, %v4090
    %v4142 = vmin.f32 %v3947, %v4094
    %v4143 = vmin.f32 %v3948, %v4095
    %v4144 = vmin.f32 %v3949, %v4096
    %v4145 = vmin.f32 %v3950, %v4097
    %v4146 = vmin.f32 %v3951, %v4098
    %v4147 = vmin.f32 %v3952, %v4099
    %v4148 = vmin.f32 %v3953, %v4100
    %v4149 = vmin.f32 %v3954, %v4101
    %v4150 = vmin.f32 %v3955, %v4102
    %v4151 = vmin.f32 %v3956, %v4103
    %v4152 = vmin.f32 %v3957, %v4104
    %v4153 = vmin.f32 %v3958, %v4105
    %v4154 = vmin.f32 %v3959, %v4106
    %v4155 = vmin.f32 %v3960, %v4107
    %v4156 = vmin.f32 %v3961, %v4108
    %v4157 = vmin.f32 %v3962, %v4109
    %v4158 = vmin.f32 %v3963, %v4110
    %v4159 = vmin.f32 %v3964, %v4111
    %v4160 = vmin.f32 %v3965, %v4112
    %v4161 = vmin.f32 %v3966, %v4113
    %v4162 = vmin.f32 %v3967, %v4114
    %v4163 = vmin.f32 %v3968, %v4115
    %v4164 = vmin.f32 %v3969, %v4116
    %v4165 = vmin.f32 %v3970, %v4117
    %v4166 = vmin.f32 %v3971, %v4118
    %v4167 = vmin.f32 %v3972, %v4119
    %v4168 = vmin.f32 %v3973, %v4120
    %v4169 = vmin.f32 %v3974, %v4121
    %v4170 = vmin.f32 %v3975, %v4122
    %v4171 = vmin.f32 %v3976, %v4123
    %v4172 = vmin.f32 %v3977, %v4124
    %v4173 = vmin.f32 %v3978, %v4125
    %v4174 = vmin.f32 %v3979, %v4126
    %v4175 = vmin.f32 %v3980, %v4127
    %v4176 = vmin.f32 %v3981, %v4128
    %v4177 = vmin.f32 %v3982, %v4129
    %v4178 = vmin.f32 %v3983, %v4130
    %v4179 = vmin.f32 %v3984, %v4131
    %v4180 = vmin.f32 %v3985, %v4132
    %v4181 = vmin.f32 %v3986, %v4133
    %v4182 = vmin.f32 %v3987, %v4134
    %v4183 = vmin.f32 %v3988, %v4135
    %v4184 = vmin.f32 %v3989, %v4136
    %v4185 = vmin.f32 %v3990, %v4137
    %v4186 = vmin.f32 %v3991, %v4138
    %v4187 = vmin.f32 %v3992, %v4139
    %v4188 = vmin.f32 %v3993, %v4140
    %v4189 = vmin.f32 %v3994, %v4141
    %4190 = vrot.lane.b32.xlu0 %v4142, 32
    %v4191 = vpop.permute.xlu0 %4190
    %4192 = vrot.lane.b32.xlu0 %v4143, 32
    %v4193 = vpop.permute.xlu0 %4192
    %4194 = vrot.lane.b32.xlu0 %v4144, 32
    %v4195 = vpop.permute.xlu0 %4194
    %4196 = vrot.lane.b32.xlu0 %v4145, 32
    %v4197 = vpop.permute.xlu0 %4196
    %4198 = vrot.lane.b32.xlu0 %v4146, 32
    %v4199 = vpop.permute.xlu0 %4198
    %4200 = vrot.lane.b32.xlu0 %v4147, 32
    %v4201 = vpop.permute.xlu0 %4200
    %4202 = vrot.lane.b32.xlu0 %v4148, 32
    %v4203 = vpop.permute.xlu0 %4202
    %4204 = vrot.lane.b32.xlu0 %v4149, 32
    %v4205 = vpop.permute.xlu0 %4204
    %4206 = vrot.lane.b32.xlu0 %v4150, 32
    %v4207 = vpop.permute.xlu0 %4206
    %4208 = vrot.lane.b32.xlu0 %v4151, 32
    %v4209 = vpop.permute.xlu0 %4208
    %4210 = vrot.lane.b32.xlu0 %v4152, 32
    %v4211 = vpop.permute.xlu0 %4210
    %4212 = vrot.lane.b32.xlu0 %v4153, 32
    %v4213 = vpop.permute.xlu0 %4212
    %4214 = vrot.lane.b32.xlu0 %v4154, 32
    %v4215 = vpop.permute.xlu0 %4214
    %4216 = vrot.lane.b32.xlu0 %v4155, 32
    %v4217 = vpop.permute.xlu0 %4216
    %4218 = vrot.lane.b32.xlu0 %v4156, 32
    %v4219 = vpop.permute.xlu0 %4218
    %4220 = vrot.lane.b32.xlu0 %v4157, 32
    %v4221 = vpop.permute.xlu0 %4220
    %4222 = vrot.lane.b32.xlu0 %v4158, 32
    %v4223 = vpop.permute.xlu0 %4222
    %4224 = vrot.lane.b32.xlu0 %v4159, 32
    %v4225 = vpop.permute.xlu0 %4224
    %4226 = vrot.lane.b32.xlu0 %v4160, 32
    %v4227 = vpop.permute.xlu0 %4226
    %4228 = vrot.lane.b32.xlu0 %v4161, 32
    %v4229 = vpop.permute.xlu0 %4228
    %4230 = vrot.lane.b32.xlu0 %v4162, 32
    %v4231 = vpop.permute.xlu0 %4230
    %4232 = vrot.lane.b32.xlu0 %v4163, 32
    %v4233 = vpop.permute.xlu0 %4232
    %4234 = vrot.lane.b32.xlu0 %v4164, 32
    %v4235 = vpop.permute.xlu0 %4234
    %4236 = vrot.lane.b32.xlu0 %v4165, 32
    %v4237 = vpop.permute.xlu0 %4236
    %4238 = vrot.lane.b32.xlu0 %v4166, 32
    %v4239 = vpop.permute.xlu0 %4238
    %4240 = vrot.lane.b32.xlu0 %v4167, 32
    %v4241 = vpop.permute.xlu0 %4240
    %4242 = vrot.lane.b32.xlu0 %v4168, 32
    %v4243 = vpop.permute.xlu0 %4242
    %4244 = vrot.lane.b32.xlu0 %v4169, 32
    %v4245 = vpop.permute.xlu0 %4244
    %4246 = vrot.lane.b32.xlu0 %v4170, 32
    %v4247 = vpop.permute.xlu0 %4246
    %4248 = vrot.lane.b32.xlu0 %v4171, 32
    %v4249 = vpop.permute.xlu0 %4248
    %4250 = vrot.lane.b32.xlu0 %v4172, 32
    %v4251 = vpop.permute.xlu0 %4250
    %4252 = vrot.lane.b32.xlu0 %v4173, 32
    %v4253 = vpop.permute.xlu0 %4252
    %4254 = vrot.lane.b32.xlu0 %v4174, 32
    %v4255 = vpop.permute.xlu0 %4254
    %4256 = vrot.lane.b32.xlu0 %v4175, 32
    %v4257 = vpop.permute.xlu0 %4256
    %4258 = vrot.lane.b32.xlu0 %v4176, 32
    %v4259 = vpop.permute.xlu0 %4258
    %4260 = vrot.lane.b32.xlu0 %v4177, 32
    %v4261 = vpop.permute.xlu0 %4260
    %4262 = vrot.lane.b32.xlu0 %v4178, 32
    %v4263 = vpop.permute.xlu0 %4262
    %4264 = vrot.lane.b32.xlu0 %v4179, 32
    %v4265 = vpop.permute.xlu0 %4264
    %4266 = vrot.lane.b32.xlu0 %v4180, 32
    %v4267 = vpop.permute.xlu0 %4266
    %4268 = vrot.lane.b32.xlu0 %v4181, 32
    %v4269 = vpop.permute.xlu0 %4268
    %4270 = vrot.lane.b32.xlu0 %v4182, 32
    %v4271 = vpop.permute.xlu0 %4270
    %4272 = vrot.lane.b32.xlu0 %v4183, 32
    %v4273 = vpop.permute.xlu0 %4272
    %4274 = vrot.lane.b32.xlu0 %v4184, 32
    %v4275 = vpop.permute.xlu0 %4274
    %4276 = vrot.lane.b32.xlu0 %v4185, 32
    %v4277 = vpop.permute.xlu0 %4276
    %4278 = vrot.lane.b32.xlu0 %v4186, 32
    %v4279 = vpop.permute.xlu0 %4278
    %4280 = vrot.lane.b32.xlu0 %v4187, 32
    %v4281 = vpop.permute.xlu0 %4280
    %4282 = vrot.lane.b32.xlu0 %v4188, 32
    %v4283 = vpop.permute.xlu0 %4282
    %4284 = vrot.lane.b32.xlu0 %v4189, 32
    %v4285 = vpop.permute.xlu0 %4284
    %vm4286 = vcmp.lt.s32.totalorder %v138, 32
    %v4287 = vsel %vm4286, 1, 0
    %vm4288 = vcmp.eq.s32.totalorder %v4287, 1
    %v4289 = vsel %vm4288, 1e+30, %v4191
    %v4290 = vsel %vm4288, 1e+30, %v4193
    %v4291 = vsel %vm4288, 1e+30, %v4195
    %v4292 = vsel %vm4288, 1e+30, %v4197
    %v4293 = vsel %vm4288, 1e+30, %v4199
    %v4294 = vsel %vm4288, 1e+30, %v4201
    %v4295 = vsel %vm4288, 1e+30, %v4203
    %v4296 = vsel %vm4288, 1e+30, %v4205
    %v4297 = vsel %vm4288, 1e+30, %v4207
    %v4298 = vsel %vm4288, 1e+30, %v4209
    %v4299 = vsel %vm4288, 1e+30, %v4211
    %v4300 = vsel %vm4288, 1e+30, %v4213
    %v4301 = vsel %vm4288, 1e+30, %v4215
    %v4302 = vsel %vm4288, 1e+30, %v4217
    %v4303 = vsel %vm4288, 1e+30, %v4219
    %v4304 = vsel %vm4288, 1e+30, %v4221
    %v4305 = vsel %vm4288, 1e+30, %v4223
    %v4306 = vsel %vm4288, 1e+30, %v4225
    %v4307 = vsel %vm4288, 1e+30, %v4227
    %v4308 = vsel %vm4288, 1e+30, %v4229
    %v4309 = vsel %vm4288, 1e+30, %v4231
    %v4310 = vsel %vm4288, 1e+30, %v4233
    %v4311 = vsel %vm4288, 1e+30, %v4235
    %v4312 = vsel %vm4288, 1e+30, %v4237
    %v4313 = vsel %vm4288, 1e+30, %v4239
    %v4314 = vsel %vm4288, 1e+30, %v4241
    %v4315 = vsel %vm4288, 1e+30, %v4243
    %v4316 = vsel %vm4288, 1e+30, %v4245
    %v4317 = vsel %vm4288, 1e+30, %v4247
    %v4318 = vsel %vm4288, 1e+30, %v4249
    %v4319 = vsel %vm4288, 1e+30, %v4251
    %v4320 = vsel %vm4288, 1e+30, %v4253
    %v4321 = vsel %vm4288, 1e+30, %v4255
    %v4322 = vsel %vm4288, 1e+30, %v4257
    %v4323 = vsel %vm4288, 1e+30, %v4259
    %v4324 = vsel %vm4288, 1e+30, %v4261
    %v4325 = vsel %vm4288, 1e+30, %v4263
    %v4326 = vsel %vm4288, 1e+30, %v4265
    %v4327 = vsel %vm4288, 1e+30, %v4267
    %v4328 = vsel %vm4288, 1e+30, %v4269
    %v4329 = vsel %vm4288, 1e+30, %v4271
    %v4330 = vsel %vm4288, 1e+30, %v4273
    %v4331 = vsel %vm4288, 1e+30, %v4275
    %v4332 = vsel %vm4288, 1e+30, %v4277
    %v4333 = vsel %vm4288, 1e+30, %v4279
    %v4334 = vsel %vm4288, 1e+30, %v4281
    %v4335 = vsel %vm4288, 1e+30, %v4283
    %v4336 = vsel %vm4288, 1e+30, %v4285
    %v4337 = vmin.f32 %v4142, %v4289
    %v4338 = vmin.f32 %v4143, %v4290
    %v4339 = vmin.f32 %v4144, %v4291
    %v4340 = vmin.f32 %v4145, %v4292
    %v4341 = vmin.f32 %v4146, %v4293
    %v4342 = vmin.f32 %v4147, %v4294
    %v4343 = vmin.f32 %v4148, %v4295
    %v4344 = vmin.f32 %v4149, %v4296
    %v4345 = vmin.f32 %v4150, %v4297
    %v4346 = vmin.f32 %v4151, %v4298
    %v4347 = vmin.f32 %v4152, %v4299
    %v4348 = vmin.f32 %v4153, %v4300
    %v4349 = vmin.f32 %v4154, %v4301
    %v4350 = vmin.f32 %v4155, %v4302
    %v4351 = vmin.f32 %v4156, %v4303
    %v4352 = vmin.f32 %v4157, %v4304
    %v4353 = vmin.f32 %v4158, %v4305
    %v4354 = vmin.f32 %v4159, %v4306
    %v4355 = vmin.f32 %v4160, %v4307
    %v4356 = vmin.f32 %v4161, %v4308
    %v4357 = vmin.f32 %v4162, %v4309
    %v4358 = vmin.f32 %v4163, %v4310
    %v4359 = vmin.f32 %v4164, %v4311
    %v4360 = vmin.f32 %v4165, %v4312
    %v4361 = vmin.f32 %v4166, %v4313
    %v4362 = vmin.f32 %v4167, %v4314
    %v4363 = vmin.f32 %v4168, %v4315
    %v4364 = vmin.f32 %v4169, %v4316
    %v4365 = vmin.f32 %v4170, %v4317
    %v4366 = vmin.f32 %v4171, %v4318
    %v4367 = vmin.f32 %v4172, %v4319
    %v4368 = vmin.f32 %v4173, %v4320
    %v4369 = vmin.f32 %v4174, %v4321
    %v4370 = vmin.f32 %v4175, %v4322
    %v4371 = vmin.f32 %v4176, %v4323
    %v4372 = vmin.f32 %v4177, %v4324
    %v4373 = vmin.f32 %v4178, %v4325
    %v4374 = vmin.f32 %v4179, %v4326
    %v4375 = vmin.f32 %v4180, %v4327
    %v4376 = vmin.f32 %v4181, %v4328
    %v4377 = vmin.f32 %v4182, %v4329
    %v4378 = vmin.f32 %v4183, %v4330
    %v4379 = vmin.f32 %v4184, %v4331
    %v4380 = vmin.f32 %v4185, %v4332
    %v4381 = vmin.f32 %v4186, %v4333
    %v4382 = vmin.f32 %v4187, %v4334
    %v4383 = vmin.f32 %v4188, %v4335
    %v4384 = vmin.f32 %v4189, %v4336
    %4385 = vrot.lane.b32.xlu0 %v4337, 64
    %v4386 = vpop.permute.xlu0 %4385
    %4387 = vrot.lane.b32.xlu0 %v4338, 64
    %v4388 = vpop.permute.xlu0 %4387
    %4389 = vrot.lane.b32.xlu0 %v4339, 64
    %v4390 = vpop.permute.xlu0 %4389
    %4391 = vrot.lane.b32.xlu0 %v4340, 64
    %v4392 = vpop.permute.xlu0 %4391
    %4393 = vrot.lane.b32.xlu0 %v4341, 64
    %v4394 = vpop.permute.xlu0 %4393
    %4395 = vrot.lane.b32.xlu0 %v4342, 64
    %v4396 = vpop.permute.xlu0 %4395
    %4397 = vrot.lane.b32.xlu0 %v4343, 64
    %v4398 = vpop.permute.xlu0 %4397
    %4399 = vrot.lane.b32.xlu0 %v4344, 64
    %v4400 = vpop.permute.xlu0 %4399
    %4401 = vrot.lane.b32.xlu0 %v4345, 64
    %v4402 = vpop.permute.xlu0 %4401
    %4403 = vrot.lane.b32.xlu0 %v4346, 64
    %v4404 = vpop.permute.xlu0 %4403
    %4405 = vrot.lane.b32.xlu0 %v4347, 64
    %v4406 = vpop.permute.xlu0 %4405
    %4407 = vrot.lane.b32.xlu0 %v4348, 64
    %v4408 = vpop.permute.xlu0 %4407
    %4409 = vrot.lane.b32.xlu0 %v4349, 64
    %v4410 = vpop.permute.xlu0 %4409
    %4411 = vrot.lane.b32.xlu0 %v4350, 64
    %v4412 = vpop.permute.xlu0 %4411
    %4413 = vrot.lane.b32.xlu0 %v4351, 64
    %v4414 = vpop.permute.xlu0 %4413
    %4415 = vrot.lane.b32.xlu0 %v4352, 64
    %v4416 = vpop.permute.xlu0 %4415
    %4417 = vrot.lane.b32.xlu0 %v4353, 64
    %v4418 = vpop.permute.xlu0 %4417
    %4419 = vrot.lane.b32.xlu0 %v4354, 64
    %v4420 = vpop.permute.xlu0 %4419
    %4421 = vrot.lane.b32.xlu0 %v4355, 64
    %v4422 = vpop.permute.xlu0 %4421
    %4423 = vrot.lane.b32.xlu0 %v4356, 64
    %v4424 = vpop.permute.xlu0 %4423
    %4425 = vrot.lane.b32.xlu0 %v4357, 64
    %v4426 = vpop.permute.xlu0 %4425
    %4427 = vrot.lane.b32.xlu0 %v4358, 64
    %v4428 = vpop.permute.xlu0 %4427
    %4429 = vrot.lane.b32.xlu0 %v4359, 64
    %v4430 = vpop.permute.xlu0 %4429
    %4431 = vrot.lane.b32.xlu0 %v4360, 64
    %v4432 = vpop.permute.xlu0 %4431
    %4433 = vrot.lane.b32.xlu0 %v4361, 64
    %v4434 = vpop.permute.xlu0 %4433
    %4435 = vrot.lane.b32.xlu0 %v4362, 64
    %v4436 = vpop.permute.xlu0 %4435
    %4437 = vrot.lane.b32.xlu0 %v4363, 64
    %v4438 = vpop.permute.xlu0 %4437
    %4439 = vrot.lane.b32.xlu0 %v4364, 64
    %v4440 = vpop.permute.xlu0 %4439
    %4441 = vrot.lane.b32.xlu0 %v4365, 64
    %v4442 = vpop.permute.xlu0 %4441
    %4443 = vrot.lane.b32.xlu0 %v4366, 64
    %v4444 = vpop.permute.xlu0 %4443
    %4445 = vrot.lane.b32.xlu0 %v4367, 64
    %v4446 = vpop.permute.xlu0 %4445
    %4447 = vrot.lane.b32.xlu0 %v4368, 64
    %v4448 = vpop.permute.xlu0 %4447
    %4449 = vrot.lane.b32.xlu0 %v4369, 64
    %v4450 = vpop.permute.xlu0 %4449
    %4451 = vrot.lane.b32.xlu0 %v4370, 64
    %v4452 = vpop.permute.xlu0 %4451
    %4453 = vrot.lane.b32.xlu0 %v4371, 64
    %v4454 = vpop.permute.xlu0 %4453
    %4455 = vrot.lane.b32.xlu0 %v4372, 64
    %v4456 = vpop.permute.xlu0 %4455
    %4457 = vrot.lane.b32.xlu0 %v4373, 64
    %v4458 = vpop.permute.xlu0 %4457
    %4459 = vrot.lane.b32.xlu0 %v4374, 64
    %v4460 = vpop.permute.xlu0 %4459
    %4461 = vrot.lane.b32.xlu0 %v4375, 64
    %v4462 = vpop.permute.xlu0 %4461
    %4463 = vrot.lane.b32.xlu0 %v4376, 64
    %v4464 = vpop.permute.xlu0 %4463
    %4465 = vrot.lane.b32.xlu0 %v4377, 64
    %v4466 = vpop.permute.xlu0 %4465
    %4467 = vrot.lane.b32.xlu0 %v4378, 64
    %v4468 = vpop.permute.xlu0 %4467
    %4469 = vrot.lane.b32.xlu0 %v4379, 64
    %v4470 = vpop.permute.xlu0 %4469
    %4471 = vrot.lane.b32.xlu0 %v4380, 64
    %v4472 = vpop.permute.xlu0 %4471
    %4473 = vrot.lane.b32.xlu0 %v4381, 64
    %v4474 = vpop.permute.xlu0 %4473
    %4475 = vrot.lane.b32.xlu0 %v4382, 64
    %v4476 = vpop.permute.xlu0 %4475
    %4477 = vrot.lane.b32.xlu0 %v4383, 64
    %v4478 = vpop.permute.xlu0 %4477
    %4479 = vrot.lane.b32.xlu0 %v4384, 64
    %v4480 = vpop.permute.xlu0 %4479
    %vm4481 = vcmp.lt.s32.totalorder %v138, 64
    %v4482 = vsel %vm4481, 1, 0
    %vm4483 = vcmp.eq.s32.totalorder %v4482, 1
    %v4484 = vsel %vm4483, 1e+30, %v4386
    %v4485 = vsel %vm4483, 1e+30, %v4388
    %v4486 = vsel %vm4483, 1e+30, %v4390
    %v4487 = vsel %vm4483, 1e+30, %v4392
    %v4488 = vsel %vm4483, 1e+30, %v4394
    %v4489 = vsel %vm4483, 1e+30, %v4396
    %v4490 = vsel %vm4483, 1e+30, %v4398
    %v4491 = vsel %vm4483, 1e+30, %v4400
    %v4492 = vsel %vm4483, 1e+30, %v4402
    %v4493 = vsel %vm4483, 1e+30, %v4404
    %v4494 = vsel %vm4483, 1e+30, %v4406
    %v4495 = vsel %vm4483, 1e+30, %v4408
    %v4496 = vsel %vm4483, 1e+30, %v4410
    %v4497 = vsel %vm4483, 1e+30, %v4412
    %v4498 = vsel %vm4483, 1e+30, %v4414
    %v4499 = vsel %vm4483, 1e+30, %v4416
    %v4500 = vsel %vm4483, 1e+30, %v4418
    %v4501 = vsel %vm4483, 1e+30, %v4420
    %v4502 = vsel %vm4483, 1e+30, %v4422
    %v4503 = vsel %vm4483, 1e+30, %v4424
    %v4504 = vsel %vm4483, 1e+30, %v4426
    %v4505 = vsel %vm4483, 1e+30, %v4428
    %v4506 = vsel %vm4483, 1e+30, %v4430
    %v4507 = vsel %vm4483, 1e+30, %v4432
    %v4508 = vsel %vm4483, 1e+30, %v4434
    %v4509 = vsel %vm4483, 1e+30, %v4436
    %v4510 = vsel %vm4483, 1e+30, %v4438
    %v4511 = vsel %vm4483, 1e+30, %v4440
    %v4512 = vsel %vm4483, 1e+30, %v4442
    %v4513 = vsel %vm4483, 1e+30, %v4444
    %v4514 = vsel %vm4483, 1e+30, %v4446
    %v4515 = vsel %vm4483, 1e+30, %v4448
    %v4516 = vsel %vm4483, 1e+30, %v4450
    %v4517 = vsel %vm4483, 1e+30, %v4452
    %v4518 = vsel %vm4483, 1e+30, %v4454
    %v4519 = vsel %vm4483, 1e+30, %v4456
    %v4520 = vsel %vm4483, 1e+30, %v4458
    %v4521 = vsel %vm4483, 1e+30, %v4460
    %v4522 = vsel %vm4483, 1e+30, %v4462
    %v4523 = vsel %vm4483, 1e+30, %v4464
    %v4524 = vsel %vm4483, 1e+30, %v4466
    %v4525 = vsel %vm4483, 1e+30, %v4468
    %v4526 = vsel %vm4483, 1e+30, %v4470
    %v4527 = vsel %vm4483, 1e+30, %v4472
    %v4528 = vsel %vm4483, 1e+30, %v4474
    %v4529 = vsel %vm4483, 1e+30, %v4476
    %v4530 = vsel %vm4483, 1e+30, %v4478
    %v4531 = vsel %vm4483, 1e+30, %v4480
    %v4532 = vmin.f32 %v4337, %v4484
    %v4533 = vmin.f32 %v4338, %v4485
    %v4534 = vmin.f32 %v4339, %v4486
    %v4535 = vmin.f32 %v4340, %v4487
    %v4536 = vmin.f32 %v4341, %v4488
    %v4537 = vmin.f32 %v4342, %v4489
    %v4538 = vmin.f32 %v4343, %v4490
    %v4539 = vmin.f32 %v4344, %v4491
    %v4540 = vmin.f32 %v4345, %v4492
    %v4541 = vmin.f32 %v4346, %v4493
    %v4542 = vmin.f32 %v4347, %v4494
    %v4543 = vmin.f32 %v4348, %v4495
    %v4544 = vmin.f32 %v4349, %v4496
    %v4545 = vmin.f32 %v4350, %v4497
    %v4546 = vmin.f32 %v4351, %v4498
    %v4547 = vmin.f32 %v4352, %v4499
    %v4548 = vmin.f32 %v4353, %v4500
    %v4549 = vmin.f32 %v4354, %v4501
    %v4550 = vmin.f32 %v4355, %v4502
    %v4551 = vmin.f32 %v4356, %v4503
    %v4552 = vmin.f32 %v4357, %v4504
    %v4553 = vmin.f32 %v4358, %v4505
    %v4554 = vmin.f32 %v4359, %v4506
    %v4555 = vmin.f32 %v4360, %v4507
    %v4556 = vmin.f32 %v4361, %v4508
    %v4557 = vmin.f32 %v4362, %v4509
    %v4558 = vmin.f32 %v4363, %v4510
    %v4559 = vmin.f32 %v4364, %v4511
    %v4560 = vmin.f32 %v4365, %v4512
    %v4561 = vmin.f32 %v4366, %v4513
    %v4562 = vmin.f32 %v4367, %v4514
    %v4563 = vmin.f32 %v4368, %v4515
    %v4564 = vmin.f32 %v4369, %v4516
    %v4565 = vmin.f32 %v4370, %v4517
    %v4566 = vmin.f32 %v4371, %v4518
    %v4567 = vmin.f32 %v4372, %v4519
    %v4568 = vmin.f32 %v4373, %v4520
    %v4569 = vmin.f32 %v4374, %v4521
    %v4570 = vmin.f32 %v4375, %v4522
    %v4571 = vmin.f32 %v4376, %v4523
    %v4572 = vmin.f32 %v4377, %v4524
    %v4573 = vmin.f32 %v4378, %v4525
    %v4574 = vmin.f32 %v4379, %v4526
    %v4575 = vmin.f32 %v4380, %v4527
    %v4576 = vmin.f32 %v4381, %v4528
    %v4577 = vmin.f32 %v4382, %v4529
    %v4578 = vmin.f32 %v4383, %v4530
    %v4579 = vmin.f32 %v4384, %v4531
    %v4580 = vsel %vm3151, %v4532, 0.0
    %v4581 = vsel %vm3152, %v4533, 0.0
    %v4582 = vsel %vm3153, %v4534, 0.0
    %v4583 = vsel %vm3154, %v4535, 0.0
    %v4584 = vsel %vm3155, %v4536, 0.0
    %v4585 = vsel %vm3156, %v4537, 0.0
    %v4586 = vsel %vm3157, %v4538, 0.0
    %v4587 = vsel %vm3158, %v4539, 0.0
    %v4588 = vsel %vm3159, %v4540, 0.0
    %v4589 = vsel %vm3160, %v4541, 0.0
    %v4590 = vsel %vm3161, %v4542, 0.0
    %v4591 = vsel %vm3162, %v4543, 0.0
    %v4592 = vsel %vm3163, %v4544, 0.0
    %v4593 = vsel %vm3164, %v4545, 0.0
    %v4594 = vsel %vm3165, %v4546, 0.0
    %v4595 = vsel %vm3166, %v4547, 0.0
    %v4596 = vsel %vm3151, %v4548, 0.0
    %v4597 = vsel %vm3152, %v4549, 0.0
    %v4598 = vsel %vm3153, %v4550, 0.0
    %v4599 = vsel %vm3154, %v4551, 0.0
    %v4600 = vsel %vm3155, %v4552, 0.0
    %v4601 = vsel %vm3156, %v4553, 0.0
    %v4602 = vsel %vm3157, %v4554, 0.0
    %v4603 = vsel %vm3158, %v4555, 0.0
    %v4604 = vsel %vm3159, %v4556, 0.0
    %v4605 = vsel %vm3160, %v4557, 0.0
    %v4606 = vsel %vm3161, %v4558, 0.0
    %v4607 = vsel %vm3162, %v4559, 0.0
    %v4608 = vsel %vm3163, %v4560, 0.0
    %v4609 = vsel %vm3164, %v4561, 0.0
    %v4610 = vsel %vm3165, %v4562, 0.0
    %v4611 = vsel %vm3166, %v4563, 0.0
    %v4612 = vsel %vm3151, %v4564, 0.0
    %v4613 = vsel %vm3152, %v4565, 0.0
    %v4614 = vsel %vm3153, %v4566, 0.0
    %v4615 = vsel %vm3154, %v4567, 0.0
    %v4616 = vsel %vm3155, %v4568, 0.0
    %v4617 = vsel %vm3156, %v4569, 0.0
    %v4618 = vsel %vm3157, %v4570, 0.0
    %v4619 = vsel %vm3158, %v4571, 0.0
    %v4620 = vsel %vm3159, %v4572, 0.0
    %v4621 = vsel %vm3160, %v4573, 0.0
    %v4622 = vsel %vm3161, %v4574, 0.0
    %v4623 = vsel %vm3162, %v4575, 0.0
    %v4624 = vsel %vm3163, %v4576, 0.0
    %v4625 = vsel %vm3164, %v4577, 0.0
    %v4626 = vsel %vm3165, %v4578, 0.0
    %v4627 = vsel %vm3166, %v4579, 0.0
    %v4628 = vmax.f32 %v4580, %v4582
    %v4629 = vmax.f32 %v4581, %v4583
    %v4630 = vmax.f32 %v4628, %v4584
    %v4631 = vmax.f32 %v4629, %v4585
    %v4632 = vmax.f32 %v4630, %v4586
    %v4633 = vmax.f32 %v4631, %v4587
    %v4634 = vmax.f32 %v4632, %v4588
    %v4635 = vmax.f32 %v4633, %v4589
    %v4636 = vmax.f32 %v4634, %v4590
    %v4637 = vmax.f32 %v4635, %v4591
    %v4638 = vmax.f32 %v4636, %v4592
    %v4639 = vmax.f32 %v4637, %v4593
    %v4640 = vmax.f32 %v4638, %v4594
    %v4641 = vmax.f32 %v4639, %v4595
    %v4642 = vmax.f32 %v4640, %v4641
    %v4643 = vrot.slane %v4642, 4
    %v4644 = vmax.f32 %v4642, %v4643
    %v4645 = vrot.slane %v4644, 2
    %v4646 = vmax.f32 %v4644, %v4645
    %v4647 = vrot.slane %v4646, 1
    %v4648 = vmax.f32 %v4646, %v4647
    %v4649 = vmax.f32 %v4596, %v4598
    %v4650 = vmax.f32 %v4597, %v4599
    %v4651 = vmax.f32 %v4649, %v4600
    %v4652 = vmax.f32 %v4650, %v4601
    %v4653 = vmax.f32 %v4651, %v4602
    %v4654 = vmax.f32 %v4652, %v4603
    %v4655 = vmax.f32 %v4653, %v4604
    %v4656 = vmax.f32 %v4654, %v4605
    %v4657 = vmax.f32 %v4655, %v4606
    %v4658 = vmax.f32 %v4656, %v4607
    %v4659 = vmax.f32 %v4657, %v4608
    %v4660 = vmax.f32 %v4658, %v4609
    %v4661 = vmax.f32 %v4659, %v4610
    %v4662 = vmax.f32 %v4660, %v4611
    %v4663 = vmax.f32 %v4661, %v4662
    %v4664 = vrot.slane %v4663, 4
    %v4665 = vmax.f32 %v4663, %v4664
    %v4666 = vrot.slane %v4665, 2
    %v4667 = vmax.f32 %v4665, %v4666
    %v4668 = vrot.slane %v4667, 1
    %v4669 = vmax.f32 %v4667, %v4668
    %v4670 = vmax.f32 %v4612, %v4614
    %v4671 = vmax.f32 %v4613, %v4615
    %v4672 = vmax.f32 %v4670, %v4616
    %v4673 = vmax.f32 %v4671, %v4617
    %v4674 = vmax.f32 %v4672, %v4618
    %v4675 = vmax.f32 %v4673, %v4619
    %v4676 = vmax.f32 %v4674, %v4620
    %v4677 = vmax.f32 %v4675, %v4621
    %v4678 = vmax.f32 %v4676, %v4622
    %v4679 = vmax.f32 %v4677, %v4623
    %v4680 = vmax.f32 %v4678, %v4624
    %v4681 = vmax.f32 %v4679, %v4625
    %v4682 = vmax.f32 %v4680, %v4626
    %v4683 = vmax.f32 %v4681, %v4627
    %v4684 = vmax.f32 %v4682, %v4683
    %v4685 = vrot.slane %v4684, 4
    %v4686 = vmax.f32 %v4684, %v4685
    %v4687 = vrot.slane %v4686, 2
    %v4688 = vmax.f32 %v4686, %v4687
    %v4689 = vrot.slane %v4688, 1
    %v4690 = vmax.f32 %v4688, %v4689
    %v4691 = vmul.f32 %v1413, %v4648
    %v4692 = vmul.f32 %v1414, %v4648
    %v4693 = vmul.f32 %v1415, %v4648
    %v4694 = vmul.f32 %v1416, %v4648
    %v4695 = vmul.f32 %v1417, %v4648
    %v4696 = vmul.f32 %v1418, %v4648
    %v4697 = vmul.f32 %v1419, %v4648
    %v4698 = vmul.f32 %v1420, %v4648
    %v4699 = vmul.f32 %v1421, %v4648
    %v4700 = vmul.f32 %v1422, %v4648
    %v4701 = vmul.f32 %v1423, %v4648
    %v4702 = vmul.f32 %v1424, %v4648
    %v4703 = vmul.f32 %v1425, %v4648
    %v4704 = vmul.f32 %v1426, %v4648
    %v4705 = vmul.f32 %v1427, %v4648
    %v4706 = vmul.f32 %v1428, %v4648
    %v4707 = vmul.f32 %v1429, %v4669
    %v4708 = vmul.f32 %v1430, %v4669
    %v4709 = vmul.f32 %v1431, %v4669
    %v4710 = vmul.f32 %v1432, %v4669
    %v4711 = vmul.f32 %v1433, %v4669
    %v4712 = vmul.f32 %v1434, %v4669
    %v4713 = vmul.f32 %v1435, %v4669
    %v4714 = vmul.f32 %v1436, %v4669
    %v4715 = vmul.f32 %v1437, %v4669
    %v4716 = vmul.f32 %v1438, %v4669
    %v4717 = vmul.f32 %v1439, %v4669
    %v4718 = vmul.f32 %v1440, %v4669
    %v4719 = vmul.f32 %v1441, %v4669
    %v4720 = vmul.f32 %v1442, %v4669
    %v4721 = vmul.f32 %v1443, %v4669
    %v4722 = vmul.f32 %v1444, %v4669
    %v4723 = vmul.f32 %v1445, %v4690
    %v4724 = vmul.f32 %v1446, %v4690
    %v4725 = vmul.f32 %v1447, %v4690
    %v4726 = vmul.f32 %v1448, %v4690
    %v4727 = vmul.f32 %v1449, %v4690
    %v4728 = vmul.f32 %v1450, %v4690
    %v4729 = vmul.f32 %v1451, %v4690
    %v4730 = vmul.f32 %v1452, %v4690
    %v4731 = vmul.f32 %v1453, %v4690
    %v4732 = vmul.f32 %v1454, %v4690
    %v4733 = vmul.f32 %v1455, %v4690
    %v4734 = vmul.f32 %v1456, %v4690
    %v4735 = vmul.f32 %v1457, %v4690
    %v4736 = vmul.f32 %v1458, %v4690
    %v4737 = vmul.f32 %v1459, %v4690
    %v4738 = vmul.f32 %v1460, %v4690
    %4739 = vadd.xlane.f32.xlu0 %v4691
    %v4740 = vpop.xlane.xlu0 %4739
    %4741 = vadd.xlane.f32.xlu0 %v4692
    %v4742 = vpop.xlane.xlu0 %4741
    %4743 = vadd.xlane.f32.xlu0 %v4693
    %v4744 = vpop.xlane.xlu0 %4743
    %4745 = vadd.xlane.f32.xlu0 %v4694
    %v4746 = vpop.xlane.xlu0 %4745
    %4747 = vadd.xlane.f32.xlu0 %v4695
    %v4748 = vpop.xlane.xlu0 %4747
    %4749 = vadd.xlane.f32.xlu0 %v4696
    %v4750 = vpop.xlane.xlu0 %4749
    %4751 = vadd.xlane.f32.xlu0 %v4697
    %v4752 = vpop.xlane.xlu0 %4751
    %4753 = vadd.xlane.f32.xlu0 %v4698
    %v4754 = vpop.xlane.xlu0 %4753
    %4755 = vadd.xlane.f32.xlu0 %v4699
    %v4756 = vpop.xlane.xlu0 %4755
    %4757 = vadd.xlane.f32.xlu0 %v4700
    %v4758 = vpop.xlane.xlu0 %4757
    %4759 = vadd.xlane.f32.xlu0 %v4701
    %v4760 = vpop.xlane.xlu0 %4759
    %4761 = vadd.xlane.f32.xlu0 %v4702
    %v4762 = vpop.xlane.xlu0 %4761
    %4763 = vadd.xlane.f32.xlu0 %v4703
    %v4764 = vpop.xlane.xlu0 %4763
    %4765 = vadd.xlane.f32.xlu0 %v4704
    %v4766 = vpop.xlane.xlu0 %4765
    %4767 = vadd.xlane.f32.xlu0 %v4705
    %v4768 = vpop.xlane.xlu0 %4767
    %4769 = vadd.xlane.f32.xlu0 %v4706
    %v4770 = vpop.xlane.xlu0 %4769
    %4771 = vadd.xlane.f32.xlu0 %v4707
    %v4772 = vpop.xlane.xlu0 %4771
    %4773 = vadd.xlane.f32.xlu0 %v4708
    %v4774 = vpop.xlane.xlu0 %4773
    %4775 = vadd.xlane.f32.xlu0 %v4709
    %v4776 = vpop.xlane.xlu0 %4775
    %4777 = vadd.xlane.f32.xlu0 %v4710
    %v4778 = vpop.xlane.xlu0 %4777
    %4779 = vadd.xlane.f32.xlu0 %v4711
    %v4780 = vpop.xlane.xlu0 %4779
    %4781 = vadd.xlane.f32.xlu0 %v4712
    %v4782 = vpop.xlane.xlu0 %4781
    %4783 = vadd.xlane.f32.xlu0 %v4713
    %v4784 = vpop.xlane.xlu0 %4783
    %4785 = vadd.xlane.f32.xlu0 %v4714
    %v4786 = vpop.xlane.xlu0 %4785
    %4787 = vadd.xlane.f32.xlu0 %v4715
    %v4788 = vpop.xlane.xlu0 %4787
    %4789 = vadd.xlane.f32.xlu0 %v4716
    %v4790 = vpop.xlane.xlu0 %4789
    %4791 = vadd.xlane.f32.xlu0 %v4717
    %v4792 = vpop.xlane.xlu0 %4791
    %4793 = vadd.xlane.f32.xlu0 %v4718
    %v4794 = vpop.xlane.xlu0 %4793
    %4795 = vadd.xlane.f32.xlu0 %v4719
    %v4796 = vpop.xlane.xlu0 %4795
    %4797 = vadd.xlane.f32.xlu0 %v4720
    %v4798 = vpop.xlane.xlu0 %4797
    %4799 = vadd.xlane.f32.xlu0 %v4721
    %v4800 = vpop.xlane.xlu0 %4799
    %4801 = vadd.xlane.f32.xlu0 %v4722
    %v4802 = vpop.xlane.xlu0 %4801
    %4803 = vadd.xlane.f32.xlu0 %v4723
    %v4804 = vpop.xlane.xlu0 %4803
    %4805 = vadd.xlane.f32.xlu0 %v4724
    %v4806 = vpop.xlane.xlu0 %4805
    %4807 = vadd.xlane.f32.xlu0 %v4725
    %v4808 = vpop.xlane.xlu0 %4807
    %4809 = vadd.xlane.f32.xlu0 %v4726
    %v4810 = vpop.xlane.xlu0 %4809
    %4811 = vadd.xlane.f32.xlu0 %v4727
    %v4812 = vpop.xlane.xlu0 %4811
    %4813 = vadd.xlane.f32.xlu0 %v4728
    %v4814 = vpop.xlane.xlu0 %4813
    %4815 = vadd.xlane.f32.xlu0 %v4729
    %v4816 = vpop.xlane.xlu0 %4815
    %4817 = vadd.xlane.f32.xlu0 %v4730
    %v4818 = vpop.xlane.xlu0 %4817
    %4819 = vadd.xlane.f32.xlu0 %v4731
    %v4820 = vpop.xlane.xlu0 %4819
    %4821 = vadd.xlane.f32.xlu0 %v4732
    %v4822 = vpop.xlane.xlu0 %4821
    %4823 = vadd.xlane.f32.xlu0 %v4733
    %v4824 = vpop.xlane.xlu0 %4823
    %4825 = vadd.xlane.f32.xlu0 %v4734
    %v4826 = vpop.xlane.xlu0 %4825
    %4827 = vadd.xlane.f32.xlu0 %v4735
    %v4828 = vpop.xlane.xlu0 %4827
    %4829 = vadd.xlane.f32.xlu0 %v4736
    %v4830 = vpop.xlane.xlu0 %4829
    %4831 = vadd.xlane.f32.xlu0 %v4737
    %v4832 = vpop.xlane.xlu0 %4831
    %4833 = vadd.xlane.f32.xlu0 %v4738
    %v4834 = vpop.xlane.xlu0 %4833
    %v4835 = vmax.f32 %v4740, 1e-37
    %v4836 = vmax.f32 %v4742, 1e-37
    %v4837 = vmax.f32 %v4744, 1e-37
    %v4838 = vmax.f32 %v4746, 1e-37
    %v4839 = vmax.f32 %v4748, 1e-37
    %v4840 = vmax.f32 %v4750, 1e-37
    %v4841 = vmax.f32 %v4752, 1e-37
    %v4842 = vmax.f32 %v4754, 1e-37
    %v4843 = vmax.f32 %v4756, 1e-37
    %v4844 = vmax.f32 %v4758, 1e-37
    %v4845 = vmax.f32 %v4760, 1e-37
    %v4846 = vmax.f32 %v4762, 1e-37
    %v4847 = vmax.f32 %v4764, 1e-37
    %v4848 = vmax.f32 %v4766, 1e-37
    %v4849 = vmax.f32 %v4768, 1e-37
    %v4850 = vmax.f32 %v4770, 1e-37
    %v4851 = vmax.f32 %v4772, 1e-37
    %v4852 = vmax.f32 %v4774, 1e-37
    %v4853 = vmax.f32 %v4776, 1e-37
    %v4854 = vmax.f32 %v4778, 1e-37
    %v4855 = vmax.f32 %v4780, 1e-37
    %v4856 = vmax.f32 %v4782, 1e-37
    %v4857 = vmax.f32 %v4784, 1e-37
    %v4858 = vmax.f32 %v4786, 1e-37
    %v4859 = vmax.f32 %v4788, 1e-37
    %v4860 = vmax.f32 %v4790, 1e-37
    %v4861 = vmax.f32 %v4792, 1e-37
    %v4862 = vmax.f32 %v4794, 1e-37
    %v4863 = vmax.f32 %v4796, 1e-37
    %v4864 = vmax.f32 %v4798, 1e-37
    %v4865 = vmax.f32 %v4800, 1e-37
    %v4866 = vmax.f32 %v4802, 1e-37
    %v4867 = vmax.f32 %v4804, 1e-37
    %v4868 = vmax.f32 %v4806, 1e-37
    %v4869 = vmax.f32 %v4808, 1e-37
    %v4870 = vmax.f32 %v4810, 1e-37
    %v4871 = vmax.f32 %v4812, 1e-37
    %v4872 = vmax.f32 %v4814, 1e-37
    %v4873 = vmax.f32 %v4816, 1e-37
    %v4874 = vmax.f32 %v4818, 1e-37
    %v4875 = vmax.f32 %v4820, 1e-37
    %v4876 = vmax.f32 %v4822, 1e-37
    %v4877 = vmax.f32 %v4824, 1e-37
    %v4878 = vmax.f32 %v4826, 1e-37
    %v4879 = vmax.f32 %v4828, 1e-37
    %v4880 = vmax.f32 %v4830, 1e-37
    %v4881 = vmax.f32 %v4832, 1e-37
    %v4882 = vmax.f32 %v4834, 1e-37
    %v4883 = vperm.slane %v1575, 0
    %v4884 = vperm.slane %v1578, 0
    %v4885 = vperm.slane %v1581, 0
    %v4886 = vsub.f32 %v594, %v4883
    %v4887 = vsub.f32 %v595, %v4883
    %v4888 = vsub.f32 %v596, %v4883
    %v4889 = vsub.f32 %v597, %v4883
    %v4890 = vsub.f32 %v598, %v4883
    %v4891 = vsub.f32 %v599, %v4883
    %v4892 = vsub.f32 %v600, %v4883
    %v4893 = vsub.f32 %v601, %v4883
    %v4894 = vsub.f32 %v602, %v4883
    %v4895 = vsub.f32 %v603, %v4883
    %v4896 = vsub.f32 %v604, %v4883
    %v4897 = vsub.f32 %v605, %v4883
    %v4898 = vsub.f32 %v606, %v4883
    %v4899 = vsub.f32 %v607, %v4883
    %v4900 = vsub.f32 %v608, %v4883
    %v4901 = vsub.f32 %v609, %v4883
    %v4902 = vsub.f32 %v610, %v4884
    %v4903 = vsub.f32 %v611, %v4884
    %v4904 = vsub.f32 %v612, %v4884
    %v4905 = vsub.f32 %v613, %v4884
    %v4906 = vsub.f32 %v614, %v4884
    %v4907 = vsub.f32 %v615, %v4884
    %v4908 = vsub.f32 %v616, %v4884
    %v4909 = vsub.f32 %v617, %v4884
    %v4910 = vsub.f32 %v618, %v4884
    %v4911 = vsub.f32 %v619, %v4884
    %v4912 = vsub.f32 %v620, %v4884
    %v4913 = vsub.f32 %v621, %v4884
    %v4914 = vsub.f32 %v622, %v4884
    %v4915 = vsub.f32 %v623, %v4884
    %v4916 = vsub.f32 %v624, %v4884
    %v4917 = vsub.f32 %v625, %v4884
    %v4918 = vsub.f32 %v626, %v4885
    %v4919 = vsub.f32 %v627, %v4885
    %v4920 = vsub.f32 %v628, %v4885
    %v4921 = vsub.f32 %v629, %v4885
    %v4922 = vsub.f32 %v630, %v4885
    %v4923 = vsub.f32 %v631, %v4885
    %v4924 = vsub.f32 %v632, %v4885
    %v4925 = vsub.f32 %v633, %v4885
    %v4926 = vsub.f32 %v634, %v4885
    %v4927 = vsub.f32 %v635, %v4885
    %v4928 = vsub.f32 %v636, %v4885
    %v4929 = vsub.f32 %v637, %v4885
    %v4930 = vsub.f32 %v638, %v4885
    %v4931 = vsub.f32 %v639, %v4885
    %v4932 = vsub.f32 %v640, %v4885
    %v4933 = vsub.f32 %v641, %v4885
    %v4934 = vmul.f32 %v4886, 1.442695
    %v4935 = vpow.pop %v4934
    %v4936 = vmul.f32 %v4887, 1.442695
    %v4937 = vpow.pop %v4936
    %v4938 = vmul.f32 %v4888, 1.442695
    %v4939 = vpow.pop %v4938
    %v4940 = vmul.f32 %v4889, 1.442695
    %v4941 = vpow.pop %v4940
    %v4942 = vmul.f32 %v4890, 1.442695
    %v4943 = vpow.pop %v4942
    %v4944 = vmul.f32 %v4891, 1.442695
    %v4945 = vpow.pop %v4944
    %v4946 = vmul.f32 %v4892, 1.442695
    %v4947 = vpow.pop %v4946
    %v4948 = vmul.f32 %v4893, 1.442695
    %v4949 = vpow.pop %v4948
    %v4950 = vmul.f32 %v4894, 1.442695
    %v4951 = vpow.pop %v4950
    %v4952 = vmul.f32 %v4895, 1.442695
    %v4953 = vpow.pop %v4952
    %v4954 = vmul.f32 %v4896, 1.442695
    %v4955 = vpow.pop %v4954
    %v4956 = vmul.f32 %v4897, 1.442695
    %v4957 = vpow.pop %v4956
    %v4958 = vmul.f32 %v4898, 1.442695
    %v4959 = vpow.pop %v4958
    %v4960 = vmul.f32 %v4899, 1.442695
    %v4961 = vpow.pop %v4960
    %v4962 = vmul.f32 %v4900, 1.442695
    %v4963 = vpow.pop %v4962
    %v4964 = vmul.f32 %v4901, 1.442695
    %v4965 = vpow.pop %v4964
    %v4966 = vmul.f32 %v4902, 1.442695
    %v4967 = vpow.pop %v4966
    %v4968 = vmul.f32 %v4903, 1.442695
    %v4969 = vpow.pop %v4968
    %v4970 = vmul.f32 %v4904, 1.442695
    %v4971 = vpow.pop %v4970
    %v4972 = vmul.f32 %v4905, 1.442695
    %v4973 = vpow.pop %v4972
    %v4974 = vmul.f32 %v4906, 1.442695
    %v4975 = vpow.pop %v4974
    %v4976 = vmul.f32 %v4907, 1.442695
    %v4977 = vpow.pop %v4976
    %v4978 = vmul.f32 %v4908, 1.442695
    %v4979 = vpow.pop %v4978
    %v4980 = vmul.f32 %v4909, 1.442695
    %v4981 = vpow.pop %v4980
    %v4982 = vmul.f32 %v4910, 1.442695
    %v4983 = vpow.pop %v4982
    %v4984 = vmul.f32 %v4911, 1.442695
    %v4985 = vpow.pop %v4984
    %v4986 = vmul.f32 %v4912, 1.442695
    %v4987 = vpow.pop %v4986
    %v4988 = vmul.f32 %v4913, 1.442695
    %v4989 = vpow.pop %v4988
    %v4990 = vmul.f32 %v4914, 1.442695
    %v4991 = vpow.pop %v4990
    %v4992 = vmul.f32 %v4915, 1.442695
    %v4993 = vpow.pop %v4992
    %v4994 = vmul.f32 %v4916, 1.442695
    %v4995 = vpow.pop %v4994
    %v4996 = vmul.f32 %v4917, 1.442695
    %v4997 = vpow.pop %v4996
    %v4998 = vmul.f32 %v4918, 1.442695
    %v4999 = vpow.pop %v4998
    %v5000 = vmul.f32 %v4919, 1.442695
    %v5001 = vpow.pop %v5000
    %v5002 = vmul.f32 %v4920, 1.442695
    %v5003 = vpow.pop %v5002
    %v5004 = vmul.f32 %v4921, 1.442695
    %v5005 = vpow.pop %v5004
    %v5006 = vmul.f32 %v4922, 1.442695
    %v5007 = vpow.pop %v5006
    %v5008 = vmul.f32 %v4923, 1.442695
    %v5009 = vpow.pop %v5008
    %v5010 = vmul.f32 %v4924, 1.442695
    %v5011 = vpow.pop %v5010
    %v5012 = vmul.f32 %v4925, 1.442695
    %v5013 = vpow.pop %v5012
    %v5014 = vmul.f32 %v4926, 1.442695
    %v5015 = vpow.pop %v5014
    %v5016 = vmul.f32 %v4927, 1.442695
    %v5017 = vpow.pop %v5016
    %v5018 = vmul.f32 %v4928, 1.442695
    %v5019 = vpow.pop %v5018
    %v5020 = vmul.f32 %v4929, 1.442695
    %v5021 = vpow.pop %v5020
    %v5022 = vmul.f32 %v4930, 1.442695
    %v5023 = vpow.pop %v5022
    %v5024 = vmul.f32 %v4931, 1.442695
    %v5025 = vpow.pop %v5024
    %v5026 = vmul.f32 %v4932, 1.442695
    %v5027 = vpow.pop %v5026
    %v5028 = vmul.f32 %v4933, 1.442695
    %v5029 = vpow.pop %v5028
    %v5030 = vrcp.pop %v4835
    %v5031 = vmul.f32 %v4835, %v5030
    %v5032 = vsub.f32 1.0, %v5031
    %v5033 = vmul.f32 %v5030, %v5032
    %v5034 = vadd.f32 %v5030, %v5033
    %vm5035 = vweird.f32 %v4835
    %vm5036 = vweird.f32 %v5030
    %vm5037 = vmor %vm5035, %vm5036
    %v5038 = vsel %vm5037, %v5030, %v5034
    %v5039 = vand.u32 2147483647, %v4835
    %vm5040 = vcmp.eq.f32.partialorder %v5039, 8.507059e+37
    %v5041 = vand.u32 %v4835, 2147483648
    %v5042 = vor.u32 1.1754944e-38, %v5041
    %v5043 = vsel %vm5040, %v5042, %v5038
    %v5044 = vmul.f32 %v4935, %v5043
    %v5045 = vrcp.pop %v4836
    %v5046 = vmul.f32 %v4836, %v5045
    %v5047 = vsub.f32 1.0, %v5046
    %v5048 = vmul.f32 %v5045, %v5047
    %v5049 = vadd.f32 %v5045, %v5048
    %vm5050 = vweird.f32 %v4836
    %vm5051 = vweird.f32 %v5045
    %vm5052 = vmor %vm5050, %vm5051
    %v5053 = vsel %vm5052, %v5045, %v5049
    %v5054 = vand.u32 2147483647, %v4836
    %vm5055 = vcmp.eq.f32.partialorder %v5054, 8.507059e+37
    %v5056 = vand.u32 %v4836, 2147483648
    %v5057 = vor.u32 1.1754944e-38, %v5056
    %v5058 = vsel %vm5055, %v5057, %v5053
    %v5059 = vmul.f32 %v4937, %v5058
    %v5060 = vrcp.pop %v4837
    %v5061 = vmul.f32 %v4837, %v5060
    %v5062 = vsub.f32 1.0, %v5061
    %v5063 = vmul.f32 %v5060, %v5062
    %v5064 = vadd.f32 %v5060, %v5063
    %vm5065 = vweird.f32 %v4837
    %vm5066 = vweird.f32 %v5060
    %vm5067 = vmor %vm5065, %vm5066
    %v5068 = vsel %vm5067, %v5060, %v5064
    %v5069 = vand.u32 2147483647, %v4837
    %vm5070 = vcmp.eq.f32.partialorder %v5069, 8.507059e+37
    %v5071 = vand.u32 %v4837, 2147483648
    %v5072 = vor.u32 1.1754944e-38, %v5071
    %v5073 = vsel %vm5070, %v5072, %v5068
    %v5074 = vmul.f32 %v4939, %v5073
    %v5075 = vrcp.pop %v4838
    %v5076 = vmul.f32 %v4838, %v5075
    %v5077 = vsub.f32 1.0, %v5076
    %v5078 = vmul.f32 %v5075, %v5077
    %v5079 = vadd.f32 %v5075, %v5078
    %vm5080 = vweird.f32 %v4838
    %vm5081 = vweird.f32 %v5075
    %vm5082 = vmor %vm5080, %vm5081
    %v5083 = vsel %vm5082, %v5075, %v5079
    %v5084 = vand.u32 2147483647, %v4838
    %vm5085 = vcmp.eq.f32.partialorder %v5084, 8.507059e+37
    %v5086 = vand.u32 %v4838, 2147483648
    %v5087 = vor.u32 1.1754944e-38, %v5086
    %v5088 = vsel %vm5085, %v5087, %v5083
    %v5089 = vmul.f32 %v4941, %v5088
    %v5090 = vrcp.pop %v4839
    %v5091 = vmul.f32 %v4839, %v5090
    %v5092 = vsub.f32 1.0, %v5091
    %v5093 = vmul.f32 %v5090, %v5092
    %v5094 = vadd.f32 %v5090, %v5093
    %vm5095 = vweird.f32 %v4839
    %vm5096 = vweird.f32 %v5090
    %vm5097 = vmor %vm5095, %vm5096
    %v5098 = vsel %vm5097, %v5090, %v5094
    %v5099 = vand.u32 2147483647, %v4839
    %vm5100 = vcmp.eq.f32.partialorder %v5099, 8.507059e+37
    %v5101 = vand.u32 %v4839, 2147483648
    %v5102 = vor.u32 1.1754944e-38, %v5101
    %v5103 = vsel %vm5100, %v5102, %v5098
    %v5104 = vmul.f32 %v4943, %v5103
    %v5105 = vrcp.pop %v4840
    %v5106 = vmul.f32 %v4840, %v5105
    %v5107 = vsub.f32 1.0, %v5106
    %v5108 = vmul.f32 %v5105, %v5107
    %v5109 = vadd.f32 %v5105, %v5108
    %vm5110 = vweird.f32 %v4840
    %vm5111 = vweird.f32 %v5105
    %vm5112 = vmor %vm5110, %vm5111
    %v5113 = vsel %vm5112, %v5105, %v5109
    %v5114 = vand.u32 2147483647, %v4840
    %vm5115 = vcmp.eq.f32.partialorder %v5114, 8.507059e+37
    %v5116 = vand.u32 %v4840, 2147483648
    %v5117 = vor.u32 1.1754944e-38, %v5116
    %v5118 = vsel %vm5115, %v5117, %v5113
    %v5119 = vmul.f32 %v4945, %v5118
    %v5120 = vrcp.pop %v4841
    %v5121 = vmul.f32 %v4841, %v5120
    %v5122 = vsub.f32 1.0, %v5121
    %v5123 = vmul.f32 %v5120, %v5122
    %v5124 = vadd.f32 %v5120, %v5123
    %vm5125 = vweird.f32 %v4841
    %vm5126 = vweird.f32 %v5120
    %vm5127 = vmor %vm5125, %vm5126
    %v5128 = vsel %vm5127, %v5120, %v5124
    %v5129 = vand.u32 2147483647, %v4841
    %vm5130 = vcmp.eq.f32.partialorder %v5129, 8.507059e+37
    %v5131 = vand.u32 %v4841, 2147483648
    %v5132 = vor.u32 1.1754944e-38, %v5131
    %v5133 = vsel %vm5130, %v5132, %v5128
    %v5134 = vmul.f32 %v4947, %v5133
    %v5135 = vrcp.pop %v4842
    %v5136 = vmul.f32 %v4842, %v5135
    %v5137 = vsub.f32 1.0, %v5136
    %v5138 = vmul.f32 %v5135, %v5137
    %v5139 = vadd.f32 %v5135, %v5138
    %vm5140 = vweird.f32 %v4842
    %vm5141 = vweird.f32 %v5135
    %vm5142 = vmor %vm5140, %vm5141
    %v5143 = vsel %vm5142, %v5135, %v5139
    %v5144 = vand.u32 2147483647, %v4842
    %vm5145 = vcmp.eq.f32.partialorder %v5144, 8.507059e+37
    %v5146 = vand.u32 %v4842, 2147483648
    %v5147 = vor.u32 1.1754944e-38, %v5146
    %v5148 = vsel %vm5145, %v5147, %v5143
    %v5149 = vmul.f32 %v4949, %v5148
    %v5150 = vrcp.pop %v4843
    %v5151 = vmul.f32 %v4843, %v5150
    %v5152 = vsub.f32 1.0, %v5151
    %v5153 = vmul.f32 %v5150, %v5152
    %v5154 = vadd.f32 %v5150, %v5153
    %vm5155 = vweird.f32 %v4843
    %vm5156 = vweird.f32 %v5150
    %vm5157 = vmor %vm5155, %vm5156
    %v5158 = vsel %vm5157, %v5150, %v5154
    %v5159 = vand.u32 2147483647, %v4843
    %vm5160 = vcmp.eq.f32.partialorder %v5159, 8.507059e+37
    %v5161 = vand.u32 %v4843, 2147483648
    %v5162 = vor.u32 1.1754944e-38, %v5161
    %v5163 = vsel %vm5160, %v5162, %v5158
    %v5164 = vmul.f32 %v4951, %v5163
    %v5165 = vrcp.pop %v4844
    %v5166 = vmul.f32 %v4844, %v5165
    %v5167 = vsub.f32 1.0, %v5166
    %v5168 = vmul.f32 %v5165, %v5167
    %v5169 = vadd.f32 %v5165, %v5168
    %vm5170 = vweird.f32 %v4844
    %vm5171 = vweird.f32 %v5165
    %vm5172 = vmor %vm5170, %vm5171
    %v5173 = vsel %vm5172, %v5165, %v5169
    %v5174 = vand.u32 2147483647, %v4844
    %vm5175 = vcmp.eq.f32.partialorder %v5174, 8.507059e+37
    %v5176 = vand.u32 %v4844, 2147483648
    %v5177 = vor.u32 1.1754944e-38, %v5176
    %v5178 = vsel %vm5175, %v5177, %v5173
    %v5179 = vmul.f32 %v4953, %v5178
    %v5180 = vrcp.pop %v4845
    %v5181 = vmul.f32 %v4845, %v5180
    %v5182 = vsub.f32 1.0, %v5181
    %v5183 = vmul.f32 %v5180, %v5182
    %v5184 = vadd.f32 %v5180, %v5183
    %vm5185 = vweird.f32 %v4845
    %vm5186 = vweird.f32 %v5180
    %vm5187 = vmor %vm5185, %vm5186
    %v5188 = vsel %vm5187, %v5180, %v5184
    %v5189 = vand.u32 2147483647, %v4845
    %vm5190 = vcmp.eq.f32.partialorder %v5189, 8.507059e+37
    %v5191 = vand.u32 %v4845, 2147483648
    %v5192 = vor.u32 1.1754944e-38, %v5191
    %v5193 = vsel %vm5190, %v5192, %v5188
    %v5194 = vmul.f32 %v4955, %v5193
    %v5195 = vrcp.pop %v4846
    %v5196 = vmul.f32 %v4846, %v5195
    %v5197 = vsub.f32 1.0, %v5196
    %v5198 = vmul.f32 %v5195, %v5197
    %v5199 = vadd.f32 %v5195, %v5198
    %vm5200 = vweird.f32 %v4846
    %vm5201 = vweird.f32 %v5195
    %vm5202 = vmor %vm5200, %vm5201
    %v5203 = vsel %vm5202, %v5195, %v5199
    %v5204 = vand.u32 2147483647, %v4846
    %vm5205 = vcmp.eq.f32.partialorder %v5204, 8.507059e+37
    %v5206 = vand.u32 %v4846, 2147483648
    %v5207 = vor.u32 1.1754944e-38, %v5206
    %v5208 = vsel %vm5205, %v5207, %v5203
    %v5209 = vmul.f32 %v4957, %v5208
    %v5210 = vrcp.pop %v4847
    %v5211 = vmul.f32 %v4847, %v5210
    %v5212 = vsub.f32 1.0, %v5211
    %v5213 = vmul.f32 %v5210, %v5212
    %v5214 = vadd.f32 %v5210, %v5213
    %vm5215 = vweird.f32 %v4847
    %vm5216 = vweird.f32 %v5210
    %vm5217 = vmor %vm5215, %vm5216
    %v5218 = vsel %vm5217, %v5210, %v5214
    %v5219 = vand.u32 2147483647, %v4847
    %vm5220 = vcmp.eq.f32.partialorder %v5219, 8.507059e+37
    %v5221 = vand.u32 %v4847, 2147483648
    %v5222 = vor.u32 1.1754944e-38, %v5221
    %v5223 = vsel %vm5220, %v5222, %v5218
    %v5224 = vmul.f32 %v4959, %v5223
    %v5225 = vrcp.pop %v4848
    %v5226 = vmul.f32 %v4848, %v5225
    %v5227 = vsub.f32 1.0, %v5226
    %v5228 = vmul.f32 %v5225, %v5227
    %v5229 = vadd.f32 %v5225, %v5228
    %vm5230 = vweird.f32 %v4848
    %vm5231 = vweird.f32 %v5225
    %vm5232 = vmor %vm5230, %vm5231
    %v5233 = vsel %vm5232, %v5225, %v5229
    %v5234 = vand.u32 2147483647, %v4848
    %vm5235 = vcmp.eq.f32.partialorder %v5234, 8.507059e+37
    %v5236 = vand.u32 %v4848, 2147483648
    %v5237 = vor.u32 1.1754944e-38, %v5236
    %v5238 = vsel %vm5235, %v5237, %v5233
    %v5239 = vmul.f32 %v4961, %v5238
    %v5240 = vrcp.pop %v4849
    %v5241 = vmul.f32 %v4849, %v5240
    %v5242 = vsub.f32 1.0, %v5241
    %v5243 = vmul.f32 %v5240, %v5242
    %v5244 = vadd.f32 %v5240, %v5243
    %vm5245 = vweird.f32 %v4849
    %vm5246 = vweird.f32 %v5240
    %vm5247 = vmor %vm5245, %vm5246
    %v5248 = vsel %vm5247, %v5240, %v5244
    %v5249 = vand.u32 2147483647, %v4849
    %vm5250 = vcmp.eq.f32.partialorder %v5249, 8.507059e+37
    %v5251 = vand.u32 %v4849, 2147483648
    %v5252 = vor.u32 1.1754944e-38, %v5251
    %v5253 = vsel %vm5250, %v5252, %v5248
    %v5254 = vmul.f32 %v4963, %v5253
    %v5255 = vrcp.pop %v4850
    %v5256 = vmul.f32 %v4850, %v5255
    %v5257 = vsub.f32 1.0, %v5256
    %v5258 = vmul.f32 %v5255, %v5257
    %v5259 = vadd.f32 %v5255, %v5258
    %vm5260 = vweird.f32 %v4850
    %vm5261 = vweird.f32 %v5255
    %vm5262 = vmor %vm5260, %vm5261
    %v5263 = vsel %vm5262, %v5255, %v5259
    %v5264 = vand.u32 2147483647, %v4850
    %vm5265 = vcmp.eq.f32.partialorder %v5264, 8.507059e+37
    %v5266 = vand.u32 %v4850, 2147483648
    %v5267 = vor.u32 1.1754944e-38, %v5266
    %v5268 = vsel %vm5265, %v5267, %v5263
    %v5269 = vmul.f32 %v4965, %v5268
    %v5270 = vrcp.pop %v4851
    %v5271 = vmul.f32 %v4851, %v5270
    %v5272 = vsub.f32 1.0, %v5271
    %v5273 = vmul.f32 %v5270, %v5272
    %v5274 = vadd.f32 %v5270, %v5273
    %vm5275 = vweird.f32 %v4851
    %vm5276 = vweird.f32 %v5270
    %vm5277 = vmor %vm5275, %vm5276
    %v5278 = vsel %vm5277, %v5270, %v5274
    %v5279 = vand.u32 2147483647, %v4851
    %vm5280 = vcmp.eq.f32.partialorder %v5279, 8.507059e+37
    %v5281 = vand.u32 %v4851, 2147483648
    %v5282 = vor.u32 1.1754944e-38, %v5281
    %v5283 = vsel %vm5280, %v5282, %v5278
    %v5284 = vmul.f32 %v4967, %v5283
    %v5285 = vrcp.pop %v4852
    %v5286 = vmul.f32 %v4852, %v5285
    %v5287 = vsub.f32 1.0, %v5286
    %v5288 = vmul.f32 %v5285, %v5287
    %v5289 = vadd.f32 %v5285, %v5288
    %vm5290 = vweird.f32 %v4852
    %vm5291 = vweird.f32 %v5285
    %vm5292 = vmor %vm5290, %vm5291
    %v5293 = vsel %vm5292, %v5285, %v5289
    %v5294 = vand.u32 2147483647, %v4852
    %vm5295 = vcmp.eq.f32.partialorder %v5294, 8.507059e+37
    %v5296 = vand.u32 %v4852, 2147483648
    %v5297 = vor.u32 1.1754944e-38, %v5296
    %v5298 = vsel %vm5295, %v5297, %v5293
    %v5299 = vmul.f32 %v4969, %v5298
    %v5300 = vrcp.pop %v4853
    %v5301 = vmul.f32 %v4853, %v5300
    %v5302 = vsub.f32 1.0, %v5301
    %v5303 = vmul.f32 %v5300, %v5302
    %v5304 = vadd.f32 %v5300, %v5303
    %vm5305 = vweird.f32 %v4853
    %vm5306 = vweird.f32 %v5300
    %vm5307 = vmor %vm5305, %vm5306
    %v5308 = vsel %vm5307, %v5300, %v5304
    %v5309 = vand.u32 2147483647, %v4853
    %vm5310 = vcmp.eq.f32.partialorder %v5309, 8.507059e+37
    %v5311 = vand.u32 %v4853, 2147483648
    %v5312 = vor.u32 1.1754944e-38, %v5311
    %v5313 = vsel %vm5310, %v5312, %v5308
    %v5314 = vmul.f32 %v4971, %v5313
    %v5315 = vrcp.pop %v4854
    %v5316 = vmul.f32 %v4854, %v5315
    %v5317 = vsub.f32 1.0, %v5316
    %v5318 = vmul.f32 %v5315, %v5317
    %v5319 = vadd.f32 %v5315, %v5318
    %vm5320 = vweird.f32 %v4854
    %vm5321 = vweird.f32 %v5315
    %vm5322 = vmor %vm5320, %vm5321
    %v5323 = vsel %vm5322, %v5315, %v5319
    %v5324 = vand.u32 2147483647, %v4854
    %vm5325 = vcmp.eq.f32.partialorder %v5324, 8.507059e+37
    %v5326 = vand.u32 %v4854, 2147483648
    %v5327 = vor.u32 1.1754944e-38, %v5326
    %v5328 = vsel %vm5325, %v5327, %v5323
    %v5329 = vmul.f32 %v4973, %v5328
    %v5330 = vrcp.pop %v4855
    %v5331 = vmul.f32 %v4855, %v5330
    %v5332 = vsub.f32 1.0, %v5331
    %v5333 = vmul.f32 %v5330, %v5332
    %v5334 = vadd.f32 %v5330, %v5333
    %vm5335 = vweird.f32 %v4855
    %vm5336 = vweird.f32 %v5330
    %vm5337 = vmor %vm5335, %vm5336
    %v5338 = vsel %vm5337, %v5330, %v5334
    %v5339 = vand.u32 2147483647, %v4855
    %vm5340 = vcmp.eq.f32.partialorder %v5339, 8.507059e+37
    %v5341 = vand.u32 %v4855, 2147483648
    %v5342 = vor.u32 1.1754944e-38, %v5341
    %v5343 = vsel %vm5340, %v5342, %v5338
    %v5344 = vmul.f32 %v4975, %v5343
    %v5345 = vrcp.pop %v4856
    %v5346 = vmul.f32 %v4856, %v5345
    %v5347 = vsub.f32 1.0, %v5346
    %v5348 = vmul.f32 %v5345, %v5347
    %v5349 = vadd.f32 %v5345, %v5348
    %vm5350 = vweird.f32 %v4856
    %vm5351 = vweird.f32 %v5345
    %vm5352 = vmor %vm5350, %vm5351
    %v5353 = vsel %vm5352, %v5345, %v5349
    %v5354 = vand.u32 2147483647, %v4856
    %vm5355 = vcmp.eq.f32.partialorder %v5354, 8.507059e+37
    %v5356 = vand.u32 %v4856, 2147483648
    %v5357 = vor.u32 1.1754944e-38, %v5356
    %v5358 = vsel %vm5355, %v5357, %v5353
    %v5359 = vmul.f32 %v4977, %v5358
    %v5360 = vrcp.pop %v4857
    %v5361 = vmul.f32 %v4857, %v5360
    %v5362 = vsub.f32 1.0, %v5361
    %v5363 = vmul.f32 %v5360, %v5362
    %v5364 = vadd.f32 %v5360, %v5363
    %vm5365 = vweird.f32 %v4857
    %vm5366 = vweird.f32 %v5360
    %vm5367 = vmor %vm5365, %vm5366
    %v5368 = vsel %vm5367, %v5360, %v5364
    %v5369 = vand.u32 2147483647, %v4857
    %vm5370 = vcmp.eq.f32.partialorder %v5369, 8.507059e+37
    %v5371 = vand.u32 %v4857, 2147483648
    %v5372 = vor.u32 1.1754944e-38, %v5371
    %v5373 = vsel %vm5370, %v5372, %v5368
    %v5374 = vmul.f32 %v4979, %v5373
    %v5375 = vrcp.pop %v4858
    %v5376 = vmul.f32 %v4858, %v5375
    %v5377 = vsub.f32 1.0, %v5376
    %v5378 = vmul.f32 %v5375, %v5377
    %v5379 = vadd.f32 %v5375, %v5378
    %vm5380 = vweird.f32 %v4858
    %vm5381 = vweird.f32 %v5375
    %vm5382 = vmor %vm5380, %vm5381
    %v5383 = vsel %vm5382, %v5375, %v5379
    %v5384 = vand.u32 2147483647, %v4858
    %vm5385 = vcmp.eq.f32.partialorder %v5384, 8.507059e+37
    %v5386 = vand.u32 %v4858, 2147483648
    %v5387 = vor.u32 1.1754944e-38, %v5386
    %v5388 = vsel %vm5385, %v5387, %v5383
    %v5389 = vmul.f32 %v4981, %v5388
    %v5390 = vrcp.pop %v4859
    %v5391 = vmul.f32 %v4859, %v5390
    %v5392 = vsub.f32 1.0, %v5391
    %v5393 = vmul.f32 %v5390, %v5392
    %v5394 = vadd.f32 %v5390, %v5393
    %vm5395 = vweird.f32 %v4859
    %vm5396 = vweird.f32 %v5390
    %vm5397 = vmor %vm5395, %vm5396
    %v5398 = vsel %vm5397, %v5390, %v5394
    %v5399 = vand.u32 2147483647, %v4859
    %vm5400 = vcmp.eq.f32.partialorder %v5399, 8.507059e+37
    %v5401 = vand.u32 %v4859, 2147483648
    %v5402 = vor.u32 1.1754944e-38, %v5401
    %v5403 = vsel %vm5400, %v5402, %v5398
    %v5404 = vmul.f32 %v4983, %v5403
    %v5405 = vrcp.pop %v4860
    %v5406 = vmul.f32 %v4860, %v5405
    %v5407 = vsub.f32 1.0, %v5406
    %v5408 = vmul.f32 %v5405, %v5407
    %v5409 = vadd.f32 %v5405, %v5408
    %vm5410 = vweird.f32 %v4860
    %vm5411 = vweird.f32 %v5405
    %vm5412 = vmor %vm5410, %vm5411
    %v5413 = vsel %vm5412, %v5405, %v5409
    %v5414 = vand.u32 2147483647, %v4860
    %vm5415 = vcmp.eq.f32.partialorder %v5414, 8.507059e+37
    %v5416 = vand.u32 %v4860, 2147483648
    %v5417 = vor.u32 1.1754944e-38, %v5416
    %v5418 = vsel %vm5415, %v5417, %v5413
    %v5419 = vmul.f32 %v4985, %v5418
    %v5420 = vrcp.pop %v4861
    %v5421 = vmul.f32 %v4861, %v5420
    %v5422 = vsub.f32 1.0, %v5421
    %v5423 = vmul.f32 %v5420, %v5422
    %v5424 = vadd.f32 %v5420, %v5423
    %vm5425 = vweird.f32 %v4861
    %vm5426 = vweird.f32 %v5420
    %vm5427 = vmor %vm5425, %vm5426
    %v5428 = vsel %vm5427, %v5420, %v5424
    %v5429 = vand.u32 2147483647, %v4861
    %vm5430 = vcmp.eq.f32.partialorder %v5429, 8.507059e+37
    %v5431 = vand.u32 %v4861, 2147483648
    %v5432 = vor.u32 1.1754944e-38, %v5431
    %v5433 = vsel %vm5430, %v5432, %v5428
    %v5434 = vmul.f32 %v4987, %v5433
    %v5435 = vrcp.pop %v4862
    %v5436 = vmul.f32 %v4862, %v5435
    %v5437 = vsub.f32 1.0, %v5436
    %v5438 = vmul.f32 %v5435, %v5437
    %v5439 = vadd.f32 %v5435, %v5438
    %vm5440 = vweird.f32 %v4862
    %vm5441 = vweird.f32 %v5435
    %vm5442 = vmor %vm5440, %vm5441
    %v5443 = vsel %vm5442, %v5435, %v5439
    %v5444 = vand.u32 2147483647, %v4862
    %vm5445 = vcmp.eq.f32.partialorder %v5444, 8.507059e+37
    %v5446 = vand.u32 %v4862, 2147483648
    %v5447 = vor.u32 1.1754944e-38, %v5446
    %v5448 = vsel %vm5445, %v5447, %v5443
    %v5449 = vmul.f32 %v4989, %v5448
    %v5450 = vrcp.pop %v4863
    %v5451 = vmul.f32 %v4863, %v5450
    %v5452 = vsub.f32 1.0, %v5451
    %v5453 = vmul.f32 %v5450, %v5452
    %v5454 = vadd.f32 %v5450, %v5453
    %vm5455 = vweird.f32 %v4863
    %vm5456 = vweird.f32 %v5450
    %vm5457 = vmor %vm5455, %vm5456
    %v5458 = vsel %vm5457, %v5450, %v5454
    %v5459 = vand.u32 2147483647, %v4863
    %vm5460 = vcmp.eq.f32.partialorder %v5459, 8.507059e+37
    %v5461 = vand.u32 %v4863, 2147483648
    %v5462 = vor.u32 1.1754944e-38, %v5461
    %v5463 = vsel %vm5460, %v5462, %v5458
    %v5464 = vmul.f32 %v4991, %v5463
    %v5465 = vrcp.pop %v4864
    %v5466 = vmul.f32 %v4864, %v5465
    %v5467 = vsub.f32 1.0, %v5466
    %v5468 = vmul.f32 %v5465, %v5467
    %v5469 = vadd.f32 %v5465, %v5468
    %vm5470 = vweird.f32 %v4864
    %vm5471 = vweird.f32 %v5465
    %vm5472 = vmor %vm5470, %vm5471
    %v5473 = vsel %vm5472, %v5465, %v5469
    %v5474 = vand.u32 2147483647, %v4864
    %vm5475 = vcmp.eq.f32.partialorder %v5474, 8.507059e+37
    %v5476 = vand.u32 %v4864, 2147483648
    %v5477 = vor.u32 1.1754944e-38, %v5476
    %v5478 = vsel %vm5475, %v5477, %v5473
    %v5479 = vmul.f32 %v4993, %v5478
    %v5480 = vrcp.pop %v4865
    %v5481 = vmul.f32 %v4865, %v5480
    %v5482 = vsub.f32 1.0, %v5481
    %v5483 = vmul.f32 %v5480, %v5482
    %v5484 = vadd.f32 %v5480, %v5483
    %vm5485 = vweird.f32 %v4865
    %vm5486 = vweird.f32 %v5480
    %vm5487 = vmor %vm5485, %vm5486
    %v5488 = vsel %vm5487, %v5480, %v5484
    %v5489 = vand.u32 2147483647, %v4865
    %vm5490 = vcmp.eq.f32.partialorder %v5489, 8.507059e+37
    %v5491 = vand.u32 %v4865, 2147483648
    %v5492 = vor.u32 1.1754944e-38, %v5491
    %v5493 = vsel %vm5490, %v5492, %v5488
    %v5494 = vmul.f32 %v4995, %v5493
    %v5495 = vrcp.pop %v4866
    %v5496 = vmul.f32 %v4866, %v5495
    %v5497 = vsub.f32 1.0, %v5496
    %v5498 = vmul.f32 %v5495, %v5497
    %v5499 = vadd.f32 %v5495, %v5498
    %vm5500 = vweird.f32 %v4866
    %vm5501 = vweird.f32 %v5495
    %vm5502 = vmor %vm5500, %vm5501
    %v5503 = vsel %vm5502, %v5495, %v5499
    %v5504 = vand.u32 2147483647, %v4866
    %vm5505 = vcmp.eq.f32.partialorder %v5504, 8.507059e+37
    %v5506 = vand.u32 %v4866, 2147483648
    %v5507 = vor.u32 1.1754944e-38, %v5506
    %v5508 = vsel %vm5505, %v5507, %v5503
    %v5509 = vmul.f32 %v4997, %v5508
    %v5510 = vrcp.pop %v4867
    %v5511 = vmul.f32 %v4867, %v5510
    %v5512 = vsub.f32 1.0, %v5511
    %v5513 = vmul.f32 %v5510, %v5512
    %v5514 = vadd.f32 %v5510, %v5513
    %vm5515 = vweird.f32 %v4867
    %vm5516 = vweird.f32 %v5510
    %vm5517 = vmor %vm5515, %vm5516
    %v5518 = vsel %vm5517, %v5510, %v5514
    %v5519 = vand.u32 2147483647, %v4867
    %vm5520 = vcmp.eq.f32.partialorder %v5519, 8.507059e+37
    %v5521 = vand.u32 %v4867, 2147483648
    %v5522 = vor.u32 1.1754944e-38, %v5521
    %v5523 = vsel %vm5520, %v5522, %v5518
    %v5524 = vmul.f32 %v4999, %v5523
    %v5525 = vrcp.pop %v4868
    %v5526 = vmul.f32 %v4868, %v5525
    %v5527 = vsub.f32 1.0, %v5526
    %v5528 = vmul.f32 %v5525, %v5527
    %v5529 = vadd.f32 %v5525, %v5528
    %vm5530 = vweird.f32 %v4868
    %vm5531 = vweird.f32 %v5525
    %vm5532 = vmor %vm5530, %vm5531
    %v5533 = vsel %vm5532, %v5525, %v5529
    %v5534 = vand.u32 2147483647, %v4868
    %vm5535 = vcmp.eq.f32.partialorder %v5534, 8.507059e+37
    %v5536 = vand.u32 %v4868, 2147483648
    %v5537 = vor.u32 1.1754944e-38, %v5536
    %v5538 = vsel %vm5535, %v5537, %v5533
    %v5539 = vmul.f32 %v5001, %v5538
    %v5540 = vrcp.pop %v4869
    %v5541 = vmul.f32 %v4869, %v5540
    %v5542 = vsub.f32 1.0, %v5541
    %v5543 = vmul.f32 %v5540, %v5542
    %v5544 = vadd.f32 %v5540, %v5543
    %vm5545 = vweird.f32 %v4869
    %vm5546 = vweird.f32 %v5540
    %vm5547 = vmor %vm5545, %vm5546
    %v5548 = vsel %vm5547, %v5540, %v5544
    %v5549 = vand.u32 2147483647, %v4869
    %vm5550 = vcmp.eq.f32.partialorder %v5549, 8.507059e+37
    %v5551 = vand.u32 %v4869, 2147483648
    %v5552 = vor.u32 1.1754944e-38, %v5551
    %v5553 = vsel %vm5550, %v5552, %v5548
    %v5554 = vmul.f32 %v5003, %v5553
    %v5555 = vrcp.pop %v4870
    %v5556 = vmul.f32 %v4870, %v5555
    %v5557 = vsub.f32 1.0, %v5556
    %v5558 = vmul.f32 %v5555, %v5557
    %v5559 = vadd.f32 %v5555, %v5558
    %vm5560 = vweird.f32 %v4870
    %vm5561 = vweird.f32 %v5555
    %vm5562 = vmor %vm5560, %vm5561
    %v5563 = vsel %vm5562, %v5555, %v5559
    %v5564 = vand.u32 2147483647, %v4870
    %vm5565 = vcmp.eq.f32.partialorder %v5564, 8.507059e+37
    %v5566 = vand.u32 %v4870, 2147483648
    %v5567 = vor.u32 1.1754944e-38, %v5566
    %v5568 = vsel %vm5565, %v5567, %v5563
    %v5569 = vmul.f32 %v5005, %v5568
    %v5570 = vrcp.pop %v4871
    %v5571 = vmul.f32 %v4871, %v5570
    %v5572 = vsub.f32 1.0, %v5571
    %v5573 = vmul.f32 %v5570, %v5572
    %v5574 = vadd.f32 %v5570, %v5573
    %vm5575 = vweird.f32 %v4871
    %vm5576 = vweird.f32 %v5570
    %vm5577 = vmor %vm5575, %vm5576
    %v5578 = vsel %vm5577, %v5570, %v5574
    %v5579 = vand.u32 2147483647, %v4871
    %vm5580 = vcmp.eq.f32.partialorder %v5579, 8.507059e+37
    %v5581 = vand.u32 %v4871, 2147483648
    %v5582 = vor.u32 1.1754944e-38, %v5581
    %v5583 = vsel %vm5580, %v5582, %v5578
    %v5584 = vmul.f32 %v5007, %v5583
    %v5585 = vrcp.pop %v4872
    %v5586 = vmul.f32 %v4872, %v5585
    %v5587 = vsub.f32 1.0, %v5586
    %v5588 = vmul.f32 %v5585, %v5587
    %v5589 = vadd.f32 %v5585, %v5588
    %vm5590 = vweird.f32 %v4872
    %vm5591 = vweird.f32 %v5585
    %vm5592 = vmor %vm5590, %vm5591
    %v5593 = vsel %vm5592, %v5585, %v5589
    %v5594 = vand.u32 2147483647, %v4872
    %vm5595 = vcmp.eq.f32.partialorder %v5594, 8.507059e+37
    %v5596 = vand.u32 %v4872, 2147483648
    %v5597 = vor.u32 1.1754944e-38, %v5596
    %v5598 = vsel %vm5595, %v5597, %v5593
    %v5599 = vmul.f32 %v5009, %v5598
    %v5600 = vrcp.pop %v4873
    %v5601 = vmul.f32 %v4873, %v5600
    %v5602 = vsub.f32 1.0, %v5601
    %v5603 = vmul.f32 %v5600, %v5602
    %v5604 = vadd.f32 %v5600, %v5603
    %vm5605 = vweird.f32 %v4873
    %vm5606 = vweird.f32 %v5600
    %vm5607 = vmor %vm5605, %vm5606
    %v5608 = vsel %vm5607, %v5600, %v5604
    %v5609 = vand.u32 2147483647, %v4873
    %vm5610 = vcmp.eq.f32.partialorder %v5609, 8.507059e+37
    %v5611 = vand.u32 %v4873, 2147483648
    %v5612 = vor.u32 1.1754944e-38, %v5611
    %v5613 = vsel %vm5610, %v5612, %v5608
    %v5614 = vmul.f32 %v5011, %v5613
    %v5615 = vrcp.pop %v4874
    %v5616 = vmul.f32 %v4874, %v5615
    %v5617 = vsub.f32 1.0, %v5616
    %v5618 = vmul.f32 %v5615, %v5617
    %v5619 = vadd.f32 %v5615, %v5618
    %vm5620 = vweird.f32 %v4874
    %vm5621 = vweird.f32 %v5615
    %vm5622 = vmor %vm5620, %vm5621
    %v5623 = vsel %vm5622, %v5615, %v5619
    %v5624 = vand.u32 2147483647, %v4874
    %vm5625 = vcmp.eq.f32.partialorder %v5624, 8.507059e+37
    %v5626 = vand.u32 %v4874, 2147483648
    %v5627 = vor.u32 1.1754944e-38, %v5626
    %v5628 = vsel %vm5625, %v5627, %v5623
    %v5629 = vmul.f32 %v5013, %v5628
    %v5630 = vrcp.pop %v4875
    %v5631 = vmul.f32 %v4875, %v5630
    %v5632 = vsub.f32 1.0, %v5631
    %v5633 = vmul.f32 %v5630, %v5632
    %v5634 = vadd.f32 %v5630, %v5633
    %vm5635 = vweird.f32 %v4875
    %vm5636 = vweird.f32 %v5630
    %vm5637 = vmor %vm5635, %vm5636
    %v5638 = vsel %vm5637, %v5630, %v5634
    %v5639 = vand.u32 2147483647, %v4875
    %vm5640 = vcmp.eq.f32.partialorder %v5639, 8.507059e+37
    %v5641 = vand.u32 %v4875, 2147483648
    %v5642 = vor.u32 1.1754944e-38, %v5641
    %v5643 = vsel %vm5640, %v5642, %v5638
    %v5644 = vmul.f32 %v5015, %v5643
    %v5645 = vrcp.pop %v4876
    %v5646 = vmul.f32 %v4876, %v5645
    %v5647 = vsub.f32 1.0, %v5646
    %v5648 = vmul.f32 %v5645, %v5647
    %v5649 = vadd.f32 %v5645, %v5648
    %vm5650 = vweird.f32 %v4876
    %vm5651 = vweird.f32 %v5645
    %vm5652 = vmor %vm5650, %vm5651
    %v5653 = vsel %vm5652, %v5645, %v5649
    %v5654 = vand.u32 2147483647, %v4876
    %vm5655 = vcmp.eq.f32.partialorder %v5654, 8.507059e+37
    %v5656 = vand.u32 %v4876, 2147483648
    %v5657 = vor.u32 1.1754944e-38, %v5656
    %v5658 = vsel %vm5655, %v5657, %v5653
    %v5659 = vmul.f32 %v5017, %v5658
    %v5660 = vrcp.pop %v4877
    %v5661 = vmul.f32 %v4877, %v5660
    %v5662 = vsub.f32 1.0, %v5661
    %v5663 = vmul.f32 %v5660, %v5662
    %v5664 = vadd.f32 %v5660, %v5663
    %vm5665 = vweird.f32 %v4877
    %vm5666 = vweird.f32 %v5660
    %vm5667 = vmor %vm5665, %vm5666
    %v5668 = vsel %vm5667, %v5660, %v5664
    %v5669 = vand.u32 2147483647, %v4877
    %vm5670 = vcmp.eq.f32.partialorder %v5669, 8.507059e+37
    %v5671 = vand.u32 %v4877, 2147483648
    %v5672 = vor.u32 1.1754944e-38, %v5671
    %v5673 = vsel %vm5670, %v5672, %v5668
    %v5674 = vmul.f32 %v5019, %v5673
    %v5675 = vrcp.pop %v4878
    %v5676 = vmul.f32 %v4878, %v5675
    %v5677 = vsub.f32 1.0, %v5676
    %v5678 = vmul.f32 %v5675, %v5677
    %v5679 = vadd.f32 %v5675, %v5678
    %vm5680 = vweird.f32 %v4878
    %vm5681 = vweird.f32 %v5675
    %vm5682 = vmor %vm5680, %vm5681
    %v5683 = vsel %vm5682, %v5675, %v5679
    %v5684 = vand.u32 2147483647, %v4878
    %vm5685 = vcmp.eq.f32.partialorder %v5684, 8.507059e+37
    %v5686 = vand.u32 %v4878, 2147483648
    %v5687 = vor.u32 1.1754944e-38, %v5686
    %v5688 = vsel %vm5685, %v5687, %v5683
    %v5689 = vmul.f32 %v5021, %v5688
    %v5690 = vrcp.pop %v4879
    %v5691 = vmul.f32 %v4879, %v5690
    %v5692 = vsub.f32 1.0, %v5691
    %v5693 = vmul.f32 %v5690, %v5692
    %v5694 = vadd.f32 %v5690, %v5693
    %vm5695 = vweird.f32 %v4879
    %vm5696 = vweird.f32 %v5690
    %vm5697 = vmor %vm5695, %vm5696
    %v5698 = vsel %vm5697, %v5690, %v5694
    %v5699 = vand.u32 2147483647, %v4879
    %vm5700 = vcmp.eq.f32.partialorder %v5699, 8.507059e+37
    %v5701 = vand.u32 %v4879, 2147483648
    %v5702 = vor.u32 1.1754944e-38, %v5701
    %v5703 = vsel %vm5700, %v5702, %v5698
    %v5704 = vmul.f32 %v5023, %v5703
    %v5705 = vrcp.pop %v4880
    %v5706 = vmul.f32 %v4880, %v5705
    %v5707 = vsub.f32 1.0, %v5706
    %v5708 = vmul.f32 %v5705, %v5707
    %v5709 = vadd.f32 %v5705, %v5708
    %vm5710 = vweird.f32 %v4880
    %vm5711 = vweird.f32 %v5705
    %vm5712 = vmor %vm5710, %vm5711
    %v5713 = vsel %vm5712, %v5705, %v5709
    %v5714 = vand.u32 2147483647, %v4880
    %vm5715 = vcmp.eq.f32.partialorder %v5714, 8.507059e+37
    %v5716 = vand.u32 %v4880, 2147483648
    %v5717 = vor.u32 1.1754944e-38, %v5716
    %v5718 = vsel %vm5715, %v5717, %v5713
    %v5719 = vmul.f32 %v5025, %v5718
    %v5720 = vrcp.pop %v4881
    %v5721 = vmul.f32 %v4881, %v5720
    %v5722 = vsub.f32 1.0, %v5721
    %v5723 = vmul.f32 %v5720, %v5722
    %v5724 = vadd.f32 %v5720, %v5723
    %vm5725 = vweird.f32 %v4881
    %vm5726 = vweird.f32 %v5720
    %vm5727 = vmor %vm5725, %vm5726
    %v5728 = vsel %vm5727, %v5720, %v5724
    %v5729 = vand.u32 2147483647, %v4881
    %vm5730 = vcmp.eq.f32.partialorder %v5729, 8.507059e+37
    %v5731 = vand.u32 %v4881, 2147483648
    %v5732 = vor.u32 1.1754944e-38, %v5731
    %v5733 = vsel %vm5730, %v5732, %v5728
    %v5734 = vmul.f32 %v5027, %v5733
    %v5735 = vrcp.pop %v4882
    %v5736 = vmul.f32 %v4882, %v5735
    %v5737 = vsub.f32 1.0, %v5736
    %v5738 = vmul.f32 %v5735, %v5737
    %v5739 = vadd.f32 %v5735, %v5738
    %vm5740 = vweird.f32 %v4882
    %vm5741 = vweird.f32 %v5735
    %vm5742 = vmor %vm5740, %vm5741
    %v5743 = vsel %vm5742, %v5735, %v5739
    %v5744 = vand.u32 2147483647, %v4882
    %vm5745 = vcmp.eq.f32.partialorder %v5744, 8.507059e+37
    %v5746 = vand.u32 %v4882, 2147483648
    %v5747 = vor.u32 1.1754944e-38, %v5746
    %v5748 = vsel %vm5745, %v5747, %v5743
    %v5749 = vmul.f32 %v5029, %v5748
    %v5750 = vmul.f32 %v5044, 0.0078125
    %v5751 = vmul.f32 %v5059, 0.0078125
    %v5752 = vmul.f32 %v5074, 0.0078125
    %v5753 = vmul.f32 %v5089, 0.0078125
    %v5754 = vmul.f32 %v5104, 0.0078125
    %v5755 = vmul.f32 %v5119, 0.0078125
    %v5756 = vmul.f32 %v5134, 0.0078125
    %v5757 = vmul.f32 %v5149, 0.0078125
    %v5758 = vmul.f32 %v5164, 0.0078125
    %v5759 = vmul.f32 %v5179, 0.0078125
    %v5760 = vmul.f32 %v5194, 0.0078125
    %v5761 = vmul.f32 %v5209, 0.0078125
    %v5762 = vmul.f32 %v5224, 0.0078125
    %v5763 = vmul.f32 %v5239, 0.0078125
    %v5764 = vmul.f32 %v5254, 0.0078125
    %v5765 = vmul.f32 %v5269, 0.0078125
    %v5766 = vmul.f32 %v5284, 0.0078125
    %v5767 = vmul.f32 %v5299, 0.0078125
    %v5768 = vmul.f32 %v5314, 0.0078125
    %v5769 = vmul.f32 %v5329, 0.0078125
    %v5770 = vmul.f32 %v5344, 0.0078125
    %v5771 = vmul.f32 %v5359, 0.0078125
    %v5772 = vmul.f32 %v5374, 0.0078125
    %v5773 = vmul.f32 %v5389, 0.0078125
    %v5774 = vmul.f32 %v5404, 0.0078125
    %v5775 = vmul.f32 %v5419, 0.0078125
    %v5776 = vmul.f32 %v5434, 0.0078125
    %v5777 = vmul.f32 %v5449, 0.0078125
    %v5778 = vmul.f32 %v5464, 0.0078125
    %v5779 = vmul.f32 %v5479, 0.0078125
    %v5780 = vmul.f32 %v5494, 0.0078125
    %v5781 = vmul.f32 %v5509, 0.0078125
    %v5782 = vmul.f32 %v5524, 0.0078125
    %v5783 = vmul.f32 %v5539, 0.0078125
    %v5784 = vmul.f32 %v5554, 0.0078125
    %v5785 = vmul.f32 %v5569, 0.0078125
    %v5786 = vmul.f32 %v5584, 0.0078125
    %v5787 = vmul.f32 %v5599, 0.0078125
    %v5788 = vmul.f32 %v5614, 0.0078125
    %v5789 = vmul.f32 %v5629, 0.0078125
    %v5790 = vmul.f32 %v5644, 0.0078125
    %v5791 = vmul.f32 %v5659, 0.0078125
    %v5792 = vmul.f32 %v5674, 0.0078125
    %v5793 = vmul.f32 %v5689, 0.0078125
    %v5794 = vmul.f32 %v5704, 0.0078125
    %v5795 = vmul.f32 %v5719, 0.0078125
    %v5796 = vmul.f32 %v5734, 0.0078125
    %v5797 = vmul.f32 %v5749, 0.0078125
    %vm5798 = vcmask 7168
    %v5799 = vsel %vm5798, %v5750, 0.0
    %v5800 = vsel %vm5798, %v5751, 0.0
    %v5801 = vadd.f32 %v5799, %v5800
    %v5802 = vsel %vm5798, %v5752, 0.0
    %v5803 = vadd.f32 %v5801, %v5802
    %v5804 = vsel %vm5798, %v5753, 0.0
    %v5805 = vadd.f32 %v5803, %v5804
    %v5806 = vsel %vm5798, %v5754, 0.0
    %v5807 = vadd.f32 %v5805, %v5806
    %v5808 = vsel %vm5798, %v5755, 0.0
    %v5809 = vadd.f32 %v5807, %v5808
    %v5810 = vsel %vm5798, %v5756, 0.0
    %v5811 = vadd.f32 %v5809, %v5810
    %v5812 = vsel %vm5798, %v5757, 0.0
    %v5813 = vadd.f32 %v5811, %v5812
    %v5814 = vsel %vm5798, %v5758, 0.0
    %v5815 = vadd.f32 %v5813, %v5814
    %v5816 = vsel %vm5798, %v5759, 0.0
    %v5817 = vadd.f32 %v5815, %v5816
    %v5818 = vsel %vm5798, %v5760, 0.0
    %v5819 = vadd.f32 %v5817, %v5818
    %v5820 = vsel %vm5798, %v5761, 0.0
    %v5821 = vadd.f32 %v5819, %v5820
    %v5822 = vsel %vm5798, %v5762, 0.0
    %v5823 = vadd.f32 %v5821, %v5822
    %v5824 = vsel %vm5798, %v5763, 0.0
    %v5825 = vadd.f32 %v5823, %v5824
    %v5826 = vsel %vm5798, %v5764, 0.0
    %v5827 = vadd.f32 %v5825, %v5826
    %v5828 = vsel %vm5798, %v5765, 0.0
    %v5829 = vadd.f32 %v5827, %v5828
    %v5830 = vrot.slane %v5829, 4
    %v5831 = vadd.f32 %v5829, %v5830
    %v5832 = vrot.slane %v5831, 2
    %v5833 = vadd.f32 %v5831, %v5832
    %v5834 = vrot.slane %v5833, 1
    %v5835 = vadd.f32 %v5833, %v5834
    %v5836 = vsel %vm5798, %v5766, 0.0
    %v5837 = vsel %vm5798, %v5767, 0.0
    %v5838 = vadd.f32 %v5836, %v5837
    %v5839 = vsel %vm5798, %v5768, 0.0
    %v5840 = vadd.f32 %v5838, %v5839
    %v5841 = vsel %vm5798, %v5769, 0.0
    %v5842 = vadd.f32 %v5840, %v5841
    %v5843 = vsel %vm5798, %v5770, 0.0
    %v5844 = vadd.f32 %v5842, %v5843
    %v5845 = vsel %vm5798, %v5771, 0.0
    %v5846 = vadd.f32 %v5844, %v5845
    %v5847 = vsel %vm5798, %v5772, 0.0
    %v5848 = vadd.f32 %v5846, %v5847
    %v5849 = vsel %vm5798, %v5773, 0.0
    %v5850 = vadd.f32 %v5848, %v5849
    %v5851 = vsel %vm5798, %v5774, 0.0
    %v5852 = vadd.f32 %v5850, %v5851
    %v5853 = vsel %vm5798, %v5775, 0.0
    %v5854 = vadd.f32 %v5852, %v5853
    %v5855 = vsel %vm5798, %v5776, 0.0
    %v5856 = vadd.f32 %v5854, %v5855
    %v5857 = vsel %vm5798, %v5777, 0.0
    %v5858 = vadd.f32 %v5856, %v5857
    %v5859 = vsel %vm5798, %v5778, 0.0
    %v5860 = vadd.f32 %v5858, %v5859
    %v5861 = vsel %vm5798, %v5779, 0.0
    %v5862 = vadd.f32 %v5860, %v5861
    %v5863 = vsel %vm5798, %v5780, 0.0
    %v5864 = vadd.f32 %v5862, %v5863
    %v5865 = vsel %vm5798, %v5781, 0.0
    %v5866 = vadd.f32 %v5864, %v5865
    %v5867 = vrot.slane %v5866, 4
    %v5868 = vadd.f32 %v5866, %v5867
    %v5869 = vrot.slane %v5868, 2
    %v5870 = vadd.f32 %v5868, %v5869
    %v5871 = vrot.slane %v5870, 1
    %v5872 = vadd.f32 %v5870, %v5871
    %v5873 = vsel %vm5798, %v5782, 0.0
    %v5874 = vsel %vm5798, %v5783, 0.0
    %v5875 = vadd.f32 %v5873, %v5874
    %v5876 = vsel %vm5798, %v5784, 0.0
    %v5877 = vadd.f32 %v5875, %v5876
    %v5878 = vsel %vm5798, %v5785, 0.0
    %v5879 = vadd.f32 %v5877, %v5878
    %v5880 = vsel %vm5798, %v5786, 0.0
    %v5881 = vadd.f32 %v5879, %v5880
    %v5882 = vsel %vm5798, %v5787, 0.0
    %v5883 = vadd.f32 %v5881, %v5882
    %v5884 = vsel %vm5798, %v5788, 0.0
    %v5885 = vadd.f32 %v5883, %v5884
    %v5886 = vsel %vm5798, %v5789, 0.0
    %v5887 = vadd.f32 %v5885, %v5886
    %v5888 = vsel %vm5798, %v5790, 0.0
    %v5889 = vadd.f32 %v5887, %v5888
    %v5890 = vsel %vm5798, %v5791, 0.0
    %v5891 = vadd.f32 %v5889, %v5890
    %v5892 = vsel %vm5798, %v5792, 0.0
    %v5893 = vadd.f32 %v5891, %v5892
    %v5894 = vsel %vm5798, %v5793, 0.0
    %v5895 = vadd.f32 %v5893, %v5894
    %v5896 = vsel %vm5798, %v5794, 0.0
    %v5897 = vadd.f32 %v5895, %v5896
    %v5898 = vsel %vm5798, %v5795, 0.0
    %v5899 = vadd.f32 %v5897, %v5898
    %v5900 = vsel %vm5798, %v5796, 0.0
    %v5901 = vadd.f32 %v5899, %v5900
    %v5902 = vsel %vm5798, %v5797, 0.0
    %v5903 = vadd.f32 %v5901, %v5902
    %v5904 = vrot.slane %v5903, 4
    %v5905 = vadd.f32 %v5903, %v5904
    %v5906 = vrot.slane %v5905, 2
    %v5907 = vadd.f32 %v5905, %v5906
    %v5908 = vrot.slane %v5907, 1
    %v5909 = vadd.f32 %v5907, %v5908
    %v5910 = vmul.f32 %v5835, 0.0078125
    %v5911 = vmul.f32 %v5872, 0.0078125
    %v5912 = vmul.f32 %v5909, 0.0078125
    %v5913 = vsub.f32 %v5750, %v5910
    %v5914 = vsub.f32 %v5751, %v5910
    %v5915 = vsub.f32 %v5752, %v5910
    %v5916 = vsub.f32 %v5753, %v5910
    %v5917 = vsub.f32 %v5754, %v5910
    %v5918 = vsub.f32 %v5755, %v5910
    %v5919 = vsub.f32 %v5756, %v5910
    %v5920 = vsub.f32 %v5757, %v5910
    %v5921 = vsub.f32 %v5758, %v5910
    %v5922 = vsub.f32 %v5759, %v5910
    %v5923 = vsub.f32 %v5760, %v5910
    %v5924 = vsub.f32 %v5761, %v5910
    %v5925 = vsub.f32 %v5762, %v5910
    %v5926 = vsub.f32 %v5763, %v5910
    %v5927 = vsub.f32 %v5764, %v5910
    %v5928 = vsub.f32 %v5765, %v5910
    %v5929 = vsub.f32 %v5766, %v5911
    %v5930 = vsub.f32 %v5767, %v5911
    %v5931 = vsub.f32 %v5768, %v5911
    %v5932 = vsub.f32 %v5769, %v5911
    %v5933 = vsub.f32 %v5770, %v5911
    %v5934 = vsub.f32 %v5771, %v5911
    %v5935 = vsub.f32 %v5772, %v5911
    %v5936 = vsub.f32 %v5773, %v5911
    %v5937 = vsub.f32 %v5774, %v5911
    %v5938 = vsub.f32 %v5775, %v5911
    %v5939 = vsub.f32 %v5776, %v5911
    %v5940 = vsub.f32 %v5777, %v5911
    %v5941 = vsub.f32 %v5778, %v5911
    %v5942 = vsub.f32 %v5779, %v5911
    %v5943 = vsub.f32 %v5780, %v5911
    %v5944 = vsub.f32 %v5781, %v5911
    %v5945 = vsub.f32 %v5782, %v5912
    %v5946 = vsub.f32 %v5783, %v5912
    %v5947 = vsub.f32 %v5784, %v5912
    %v5948 = vsub.f32 %v5785, %v5912
    %v5949 = vsub.f32 %v5786, %v5912
    %v5950 = vsub.f32 %v5787, %v5912
    %v5951 = vsub.f32 %v5788, %v5912
    %v5952 = vsub.f32 %v5789, %v5912
    %v5953 = vsub.f32 %v5790, %v5912
    %v5954 = vsub.f32 %v5791, %v5912
    %v5955 = vsub.f32 %v5792, %v5912
    %v5956 = vsub.f32 %v5793, %v5912
    %v5957 = vsub.f32 %v5794, %v5912
    %v5958 = vsub.f32 %v5795, %v5912
    %v5959 = vsub.f32 %v5796, %v5912
    %v5960 = vsub.f32 %v5797, %v5912
    %v5961 = vsel %vm578, %v5913, 0.0
    %v5962 = vsel %vm579, %v5914, 0.0
    %v5963 = vsel %vm580, %v5915, 0.0
    %v5964 = vsel %vm581, %v5916, 0.0
    %v5965 = vsel %vm582, %v5917, 0.0
    %v5966 = vsel %vm583, %v5918, 0.0
    %v5967 = vsel %vm584, %v5919, 0.0
    %v5968 = vsel %vm585, %v5920, 0.0
    %v5969 = vsel %vm586, %v5921, 0.0
    %v5970 = vsel %vm587, %v5922, 0.0
    %v5971 = vsel %vm588, %v5923, 0.0
    %v5972 = vsel %vm589, %v5924, 0.0
    %v5973 = vsel %vm590, %v5925, 0.0
    %v5974 = vsel %vm591, %v5926, 0.0
    %v5975 = vsel %vm592, %v5927, 0.0
    %v5976 = vsel %vm593, %v5928, 0.0
    %v5977 = vsel %vm578, %v5929, 0.0
    %v5978 = vsel %vm579, %v5930, 0.0
    %v5979 = vsel %vm580, %v5931, 0.0
    %v5980 = vsel %vm581, %v5932, 0.0
    %v5981 = vsel %vm582, %v5933, 0.0
    %v5982 = vsel %vm583, %v5934, 0.0
    %v5983 = vsel %vm584, %v5935, 0.0
    %v5984 = vsel %vm585, %v5936, 0.0
    %v5985 = vsel %vm586, %v5937, 0.0
    %v5986 = vsel %vm587, %v5938, 0.0
    %v5987 = vsel %vm588, %v5939, 0.0
    %v5988 = vsel %vm589, %v5940, 0.0
    %v5989 = vsel %vm590, %v5941, 0.0
    %v5990 = vsel %vm591, %v5942, 0.0
    %v5991 = vsel %vm592, %v5943, 0.0
    %v5992 = vsel %vm593, %v5944, 0.0
    %v5993 = vsel %vm578, %v5945, 0.0
    %v5994 = vsel %vm579, %v5946, 0.0
    %v5995 = vsel %vm580, %v5947, 0.0
    %v5996 = vsel %vm581, %v5948, 0.0
    %v5997 = vsel %vm582, %v5949, 0.0
    %v5998 = vsel %vm583, %v5950, 0.0
    %v5999 = vsel %vm584, %v5951, 0.0
    %v6000 = vsel %vm585, %v5952, 0.0
    %v6001 = vsel %vm586, %v5953, 0.0
    %v6002 = vsel %vm587, %v5954, 0.0
    %v6003 = vsel %vm588, %v5955, 0.0
    %v6004 = vsel %vm589, %v5956, 0.0
    %v6005 = vsel %vm590, %v5957, 0.0
    %v6006 = vsel %vm591, %v5958, 0.0
    %v6007 = vsel %vm592, %v5959, 0.0
    %v6008 = vsel %vm593, %v5960, 0.0
    %v6009 = vsel %vm5798, %v72, 0.0
    %v6010 = vsel %vm5798, %v73, 0.0
    %v6011 = vadd.f32 %v6009, %v6010
    %v6012 = vsel %vm5798, %v74, 0.0
    %v6013 = vadd.f32 %v6011, %v6012
    %v6014 = vsel %vm5798, %v75, 0.0
    %v6015 = vadd.f32 %v6013, %v6014
    %v6016 = vsel %vm5798, %v76, 0.0
    %v6017 = vadd.f32 %v6015, %v6016
    %v6018 = vsel %vm5798, %v77, 0.0
    %v6019 = vadd.f32 %v6017, %v6018
    %v6020 = vsel %vm5798, %v78, 0.0
    %v6021 = vadd.f32 %v6019, %v6020
    %v6022 = vsel %vm5798, %v79, 0.0
    %v6023 = vadd.f32 %v6021, %v6022
    %v6024 = vsel %vm5798, %v80, 0.0
    %v6025 = vadd.f32 %v6023, %v6024
    %v6026 = vsel %vm5798, %v81, 0.0
    %v6027 = vadd.f32 %v6025, %v6026
    %v6028 = vsel %vm5798, %v82, 0.0
    %v6029 = vadd.f32 %v6027, %v6028
    %v6030 = vsel %vm5798, %v83, 0.0
    %v6031 = vadd.f32 %v6029, %v6030
    %v6032 = vsel %vm5798, %v84, 0.0
    %v6033 = vadd.f32 %v6031, %v6032
    %v6034 = vsel %vm5798, %v85, 0.0
    %v6035 = vadd.f32 %v6033, %v6034
    %v6036 = vsel %vm5798, %v86, 0.0
    %v6037 = vadd.f32 %v6035, %v6036
    %v6038 = vsel %vm5798, %v87, 0.0
    %v6039 = vadd.f32 %v6037, %v6038
    %v6040 = vrot.slane %v6039, 4
    %v6041 = vadd.f32 %v6039, %v6040
    %v6042 = vrot.slane %v6041, 2
    %v6043 = vadd.f32 %v6041, %v6042
    %v6044 = vrot.slane %v6043, 1
    %v6045 = vadd.f32 %v6043, %v6044
    %v6046 = vsel %vm5798, %v88, 0.0
    %v6047 = vsel %vm5798, %v89, 0.0
    %v6048 = vadd.f32 %v6046, %v6047
    %v6049 = vsel %vm5798, %v90, 0.0
    %v6050 = vadd.f32 %v6048, %v6049
    %v6051 = vsel %vm5798, %v91, 0.0
    %v6052 = vadd.f32 %v6050, %v6051
    %v6053 = vsel %vm5798, %v92, 0.0
    %v6054 = vadd.f32 %v6052, %v6053
    %v6055 = vsel %vm5798, %v93, 0.0
    %v6056 = vadd.f32 %v6054, %v6055
    %v6057 = vsel %vm5798, %v94, 0.0
    %v6058 = vadd.f32 %v6056, %v6057
    %v6059 = vsel %vm5798, %v95, 0.0
    %v6060 = vadd.f32 %v6058, %v6059
    %v6061 = vsel %vm5798, %v96, 0.0
    %v6062 = vadd.f32 %v6060, %v6061
    %v6063 = vsel %vm5798, %v97, 0.0
    %v6064 = vadd.f32 %v6062, %v6063
    %v6065 = vsel %vm5798, %v98, 0.0
    %v6066 = vadd.f32 %v6064, %v6065
    %v6067 = vsel %vm5798, %v99, 0.0
    %v6068 = vadd.f32 %v6066, %v6067
    %v6069 = vsel %vm5798, %v100, 0.0
    %v6070 = vadd.f32 %v6068, %v6069
    %v6071 = vsel %vm5798, %v101, 0.0
    %v6072 = vadd.f32 %v6070, %v6071
    %v6073 = vsel %vm5798, %v102, 0.0
    %v6074 = vadd.f32 %v6072, %v6073
    %v6075 = vsel %vm5798, %v103, 0.0
    %v6076 = vadd.f32 %v6074, %v6075
    %v6077 = vrot.slane %v6076, 4
    %v6078 = vadd.f32 %v6076, %v6077
    %v6079 = vrot.slane %v6078, 2
    %v6080 = vadd.f32 %v6078, %v6079
    %v6081 = vrot.slane %v6080, 1
    %v6082 = vadd.f32 %v6080, %v6081
    %v6083 = vsel %vm5798, %v104, 0.0
    %v6084 = vsel %vm5798, %v105, 0.0
    %v6085 = vadd.f32 %v6083, %v6084
    %v6086 = vsel %vm5798, %v106, 0.0
    %v6087 = vadd.f32 %v6085, %v6086
    %v6088 = vsel %vm5798, %v107, 0.0
    %v6089 = vadd.f32 %v6087, %v6088
    %v6090 = vsel %vm5798, %v108, 0.0
    %v6091 = vadd.f32 %v6089, %v6090
    %v6092 = vsel %vm5798, %v109, 0.0
    %v6093 = vadd.f32 %v6091, %v6092
    %v6094 = vsel %vm5798, %v110, 0.0
    %v6095 = vadd.f32 %v6093, %v6094
    %v6096 = vsel %vm5798, %v111, 0.0
    %v6097 = vadd.f32 %v6095, %v6096
    %v6098 = vsel %vm5798, %v112, 0.0
    %v6099 = vadd.f32 %v6097, %v6098
    %v6100 = vsel %vm5798, %v113, 0.0
    %v6101 = vadd.f32 %v6099, %v6100
    %v6102 = vsel %vm5798, %v114, 0.0
    %v6103 = vadd.f32 %v6101, %v6102
    %v6104 = vsel %vm5798, %v115, 0.0
    %v6105 = vadd.f32 %v6103, %v6104
    %v6106 = vsel %vm5798, %v116, 0.0
    %v6107 = vadd.f32 %v6105, %v6106
    %v6108 = vsel %vm5798, %v117, 0.0
    %v6109 = vadd.f32 %v6107, %v6108
    %v6110 = vsel %vm5798, %v118, 0.0
    %v6111 = vadd.f32 %v6109, %v6110
    %v6112 = vsel %vm5798, %v119, 0.0
    %v6113 = vadd.f32 %v6111, %v6112
    %v6114 = vrot.slane %v6113, 4
    %v6115 = vadd.f32 %v6113, %v6114
    %v6116 = vrot.slane %v6115, 2
    %v6117 = vadd.f32 %v6115, %v6116
    %v6118 = vrot.slane %v6117, 1
    %v6119 = vadd.f32 %v6117, %v6118
    %v6120 = vmul.f32 %v6045, 0.0078125
    %v6121 = vmul.f32 %v6082, 0.0078125
    %v6122 = vmul.f32 %v6119, 0.0078125
    %v6123 = vsub.f32 %v72, %v6120
    %v6124 = vsub.f32 %v73, %v6120
    %v6125 = vsub.f32 %v74, %v6120
    %v6126 = vsub.f32 %v75, %v6120
    %v6127 = vsub.f32 %v76, %v6120
    %v6128 = vsub.f32 %v77, %v6120
    %v6129 = vsub.f32 %v78, %v6120
    %v6130 = vsub.f32 %v79, %v6120
    %v6131 = vsub.f32 %v80, %v6120
    %v6132 = vsub.f32 %v81, %v6120
    %v6133 = vsub.f32 %v82, %v6120
    %v6134 = vsub.f32 %v83, %v6120
    %v6135 = vsub.f32 %v84, %v6120
    %v6136 = vsub.f32 %v85, %v6120
    %v6137 = vsub.f32 %v86, %v6120
    %v6138 = vsub.f32 %v87, %v6120
    %v6139 = vsub.f32 %v88, %v6121
    %v6140 = vsub.f32 %v89, %v6121
    %v6141 = vsub.f32 %v90, %v6121
    %v6142 = vsub.f32 %v91, %v6121
    %v6143 = vsub.f32 %v92, %v6121
    %v6144 = vsub.f32 %v93, %v6121
    %v6145 = vsub.f32 %v94, %v6121
    %v6146 = vsub.f32 %v95, %v6121
    %v6147 = vsub.f32 %v96, %v6121
    %v6148 = vsub.f32 %v97, %v6121
    %v6149 = vsub.f32 %v98, %v6121
    %v6150 = vsub.f32 %v99, %v6121
    %v6151 = vsub.f32 %v100, %v6121
    %v6152 = vsub.f32 %v101, %v6121
    %v6153 = vsub.f32 %v102, %v6121
    %v6154 = vsub.f32 %v103, %v6121
    %v6155 = vsub.f32 %v104, %v6122
    %v6156 = vsub.f32 %v105, %v6122
    %v6157 = vsub.f32 %v106, %v6122
    %v6158 = vsub.f32 %v107, %v6122
    %v6159 = vsub.f32 %v108, %v6122
    %v6160 = vsub.f32 %v109, %v6122
    %v6161 = vsub.f32 %v110, %v6122
    %v6162 = vsub.f32 %v111, %v6122
    %v6163 = vsub.f32 %v112, %v6122
    %v6164 = vsub.f32 %v113, %v6122
    %v6165 = vsub.f32 %v114, %v6122
    %v6166 = vsub.f32 %v115, %v6122
    %v6167 = vsub.f32 %v116, %v6122
    %v6168 = vsub.f32 %v117, %v6122
    %v6169 = vsub.f32 %v118, %v6122
    %v6170 = vsub.f32 %v119, %v6122
    %v6171 = vsel %vm578, %v6123, 0.0
    %v6172 = vsel %vm579, %v6124, 0.0
    %v6173 = vsel %vm580, %v6125, 0.0
    %v6174 = vsel %vm581, %v6126, 0.0
    %v6175 = vsel %vm582, %v6127, 0.0
    %v6176 = vsel %vm583, %v6128, 0.0
    %v6177 = vsel %vm584, %v6129, 0.0
    %v6178 = vsel %vm585, %v6130, 0.0
    %v6179 = vsel %vm586, %v6131, 0.0
    %v6180 = vsel %vm587, %v6132, 0.0
    %v6181 = vsel %vm588, %v6133, 0.0
    %v6182 = vsel %vm589, %v6134, 0.0
    %v6183 = vsel %vm590, %v6135, 0.0
    %v6184 = vsel %vm591, %v6136, 0.0
    %v6185 = vsel %vm592, %v6137, 0.0
    %v6186 = vsel %vm593, %v6138, 0.0
    %v6187 = vsel %vm578, %v6139, 0.0
    %v6188 = vsel %vm579, %v6140, 0.0
    %v6189 = vsel %vm580, %v6141, 0.0
    %v6190 = vsel %vm581, %v6142, 0.0
    %v6191 = vsel %vm582, %v6143, 0.0
    %v6192 = vsel %vm583, %v6144, 0.0
    %v6193 = vsel %vm584, %v6145, 0.0
    %v6194 = vsel %vm585, %v6146, 0.0
    %v6195 = vsel %vm586, %v6147, 0.0
    %v6196 = vsel %vm587, %v6148, 0.0
    %v6197 = vsel %vm588, %v6149, 0.0
    %v6198 = vsel %vm589, %v6150, 0.0
    %v6199 = vsel %vm590, %v6151, 0.0
    %v6200 = vsel %vm591, %v6152, 0.0
    %v6201 = vsel %vm592, %v6153, 0.0
    %v6202 = vsel %vm593, %v6154, 0.0
    %v6203 = vsel %vm578, %v6155, 0.0
    %v6204 = vsel %vm579, %v6156, 0.0
    %v6205 = vsel %vm580, %v6157, 0.0
    %v6206 = vsel %vm581, %v6158, 0.0
    %v6207 = vsel %vm582, %v6159, 0.0
    %v6208 = vsel %vm583, %v6160, 0.0
    %v6209 = vsel %vm584, %v6161, 0.0
    %v6210 = vsel %vm585, %v6162, 0.0
    %v6211 = vsel %vm586, %v6163, 0.0
    %v6212 = vsel %vm587, %v6164, 0.0
    %v6213 = vsel %vm588, %v6165, 0.0
    %v6214 = vsel %vm589, %v6166, 0.0
    %v6215 = vsel %vm590, %v6167, 0.0
    %v6216 = vsel %vm591, %v6168, 0.0
    %v6217 = vsel %vm592, %v6169, 0.0
    %v6218 = vsel %vm593, %v6170, 0.0
    %v6219 = vmul.f32 %v5961, %v6171
    %v6220 = vmul.f32 %v5962, %v6172
    %v6221 = vmul.f32 %v5963, %v6173
    %v6222 = vmul.f32 %v5964, %v6174
    %v6223 = vmul.f32 %v5965, %v6175
    %v6224 = vmul.f32 %v5966, %v6176
    %v6225 = vmul.f32 %v5967, %v6177
    %v6226 = vmul.f32 %v5968, %v6178
    %v6227 = vmul.f32 %v5969, %v6179
    %v6228 = vmul.f32 %v5970, %v6180
    %v6229 = vmul.f32 %v5971, %v6181
    %v6230 = vmul.f32 %v5972, %v6182
    %v6231 = vmul.f32 %v5973, %v6183
    %v6232 = vmul.f32 %v5974, %v6184
    %v6233 = vmul.f32 %v5975, %v6185
    %v6234 = vmul.f32 %v5976, %v6186
    %v6235 = vmul.f32 %v5977, %v6187
    %v6236 = vmul.f32 %v5978, %v6188
    %v6237 = vmul.f32 %v5979, %v6189
    %v6238 = vmul.f32 %v5980, %v6190
    %v6239 = vmul.f32 %v5981, %v6191
    %v6240 = vmul.f32 %v5982, %v6192
    %v6241 = vmul.f32 %v5983, %v6193
    %v6242 = vmul.f32 %v5984, %v6194
    %v6243 = vmul.f32 %v5985, %v6195
    %v6244 = vmul.f32 %v5986, %v6196
    %v6245 = vmul.f32 %v5987, %v6197
    %v6246 = vmul.f32 %v5988, %v6198
    %v6247 = vmul.f32 %v5989, %v6199
    %v6248 = vmul.f32 %v5990, %v6200
    %v6249 = vmul.f32 %v5991, %v6201
    %v6250 = vmul.f32 %v5992, %v6202
    %v6251 = vmul.f32 %v5993, %v6203
    %v6252 = vmul.f32 %v5994, %v6204
    %v6253 = vmul.f32 %v5995, %v6205
    %v6254 = vmul.f32 %v5996, %v6206
    %v6255 = vmul.f32 %v5997, %v6207
    %v6256 = vmul.f32 %v5998, %v6208
    %v6257 = vmul.f32 %v5999, %v6209
    %v6258 = vmul.f32 %v6000, %v6210
    %v6259 = vmul.f32 %v6001, %v6211
    %v6260 = vmul.f32 %v6002, %v6212
    %v6261 = vmul.f32 %v6003, %v6213
    %v6262 = vmul.f32 %v6004, %v6214
    %v6263 = vmul.f32 %v6005, %v6215
    %v6264 = vmul.f32 %v6006, %v6216
    %v6265 = vmul.f32 %v6007, %v6217
    %v6266 = vmul.f32 %v6008, %v6218
    %v6267 = vsel %vm5798, %v6219, 0.0
    %v6268 = vsel %vm5798, %v6220, 0.0
    %v6269 = vadd.f32 %v6267, %v6268
    %v6270 = vsel %vm5798, %v6221, 0.0
    %v6271 = vadd.f32 %v6269, %v6270
    %v6272 = vsel %vm5798, %v6222, 0.0
    %v6273 = vadd.f32 %v6271, %v6272
    %v6274 = vsel %vm5798, %v6223, 0.0
    %v6275 = vadd.f32 %v6273, %v6274
    %v6276 = vsel %vm5798, %v6224, 0.0
    %v6277 = vadd.f32 %v6275, %v6276
    %v6278 = vsel %vm5798, %v6225, 0.0
    %v6279 = vadd.f32 %v6277, %v6278
    %v6280 = vsel %vm5798, %v6226, 0.0
    %v6281 = vadd.f32 %v6279, %v6280
    %v6282 = vsel %vm5798, %v6227, 0.0
    %v6283 = vadd.f32 %v6281, %v6282
    %v6284 = vsel %vm5798, %v6228, 0.0
    %v6285 = vadd.f32 %v6283, %v6284
    %v6286 = vsel %vm5798, %v6229, 0.0
    %v6287 = vadd.f32 %v6285, %v6286
    %v6288 = vsel %vm5798, %v6230, 0.0
    %v6289 = vadd.f32 %v6287, %v6288
    %v6290 = vsel %vm5798, %v6231, 0.0
    %v6291 = vadd.f32 %v6289, %v6290
    %v6292 = vsel %vm5798, %v6232, 0.0
    %v6293 = vadd.f32 %v6291, %v6292
    %v6294 = vsel %vm5798, %v6233, 0.0
    %v6295 = vadd.f32 %v6293, %v6294
    %v6296 = vsel %vm5798, %v6234, 0.0
    %v6297 = vadd.f32 %v6295, %v6296
    %v6298 = vrot.slane %v6297, 4
    %v6299 = vadd.f32 %v6297, %v6298
    %v6300 = vrot.slane %v6299, 2
    %v6301 = vadd.f32 %v6299, %v6300
    %v6302 = vrot.slane %v6301, 1
    %v6303 = vadd.f32 %v6301, %v6302
    %v6304 = vsel %vm5798, %v6235, 0.0
    %v6305 = vsel %vm5798, %v6236, 0.0
    %v6306 = vadd.f32 %v6304, %v6305
    %v6307 = vsel %vm5798, %v6237, 0.0
    %v6308 = vadd.f32 %v6306, %v6307
    %v6309 = vsel %vm5798, %v6238, 0.0
    %v6310 = vadd.f32 %v6308, %v6309
    %v6311 = vsel %vm5798, %v6239, 0.0
    %v6312 = vadd.f32 %v6310, %v6311
    %v6313 = vsel %vm5798, %v6240, 0.0
    %v6314 = vadd.f32 %v6312, %v6313
    %v6315 = vsel %vm5798, %v6241, 0.0
    %v6316 = vadd.f32 %v6314, %v6315
    %v6317 = vsel %vm5798, %v6242, 0.0
    %v6318 = vadd.f32 %v6316, %v6317
    %v6319 = vsel %vm5798, %v6243, 0.0
    %v6320 = vadd.f32 %v6318, %v6319
    %v6321 = vsel %vm5798, %v6244, 0.0
    %v6322 = vadd.f32 %v6320, %v6321
    %v6323 = vsel %vm5798, %v6245, 0.0
    %v6324 = vadd.f32 %v6322, %v6323
    %v6325 = vsel %vm5798, %v6246, 0.0
    %v6326 = vadd.f32 %v6324, %v6325
    %v6327 = vsel %vm5798, %v6247, 0.0
    %v6328 = vadd.f32 %v6326, %v6327
    %v6329 = vsel %vm5798, %v6248, 0.0
    %v6330 = vadd.f32 %v6328, %v6329
    %v6331 = vsel %vm5798, %v6249, 0.0
    %v6332 = vadd.f32 %v6330, %v6331
    %v6333 = vsel %vm5798, %v6250, 0.0
    %v6334 = vadd.f32 %v6332, %v6333
    %v6335 = vrot.slane %v6334, 4
    %v6336 = vadd.f32 %v6334, %v6335
    %v6337 = vrot.slane %v6336, 2
    %v6338 = vadd.f32 %v6336, %v6337
    %v6339 = vrot.slane %v6338, 1
    %v6340 = vadd.f32 %v6338, %v6339
    %v6341 = vsel %vm5798, %v6251, 0.0
    %v6342 = vsel %vm5798, %v6252, 0.0
    %v6343 = vadd.f32 %v6341, %v6342
    %v6344 = vsel %vm5798, %v6253, 0.0
    %v6345 = vadd.f32 %v6343, %v6344
    %v6346 = vsel %vm5798, %v6254, 0.0
    %v6347 = vadd.f32 %v6345, %v6346
    %v6348 = vsel %vm5798, %v6255, 0.0
    %v6349 = vadd.f32 %v6347, %v6348
    %v6350 = vsel %vm5798, %v6256, 0.0
    %v6351 = vadd.f32 %v6349, %v6350
    %v6352 = vsel %vm5798, %v6257, 0.0
    %v6353 = vadd.f32 %v6351, %v6352
    %v6354 = vsel %vm5798, %v6258, 0.0
    %v6355 = vadd.f32 %v6353, %v6354
    %v6356 = vsel %vm5798, %v6259, 0.0
    %v6357 = vadd.f32 %v6355, %v6356
    %v6358 = vsel %vm5798, %v6260, 0.0
    %v6359 = vadd.f32 %v6357, %v6358
    %v6360 = vsel %vm5798, %v6261, 0.0
    %v6361 = vadd.f32 %v6359, %v6360
    %v6362 = vsel %vm5798, %v6262, 0.0
    %v6363 = vadd.f32 %v6361, %v6362
    %v6364 = vsel %vm5798, %v6263, 0.0
    %v6365 = vadd.f32 %v6363, %v6364
    %v6366 = vsel %vm5798, %v6264, 0.0
    %v6367 = vadd.f32 %v6365, %v6366
    %v6368 = vsel %vm5798, %v6265, 0.0
    %v6369 = vadd.f32 %v6367, %v6368
    %v6370 = vsel %vm5798, %v6266, 0.0
    %v6371 = vadd.f32 %v6369, %v6370
    %v6372 = vrot.slane %v6371, 4
    %v6373 = vadd.f32 %v6371, %v6372
    %v6374 = vrot.slane %v6373, 2
    %v6375 = vadd.f32 %v6373, %v6374
    %v6376 = vrot.slane %v6375, 1
    %v6377 = vadd.f32 %v6375, %v6376
    %v6378 = vmul.f32 %v5961, %v5961
    %v6379 = vmul.f32 %v5962, %v5962
    %v6380 = vmul.f32 %v5963, %v5963
    %v6381 = vmul.f32 %v5964, %v5964
    %v6382 = vmul.f32 %v5965, %v5965
    %v6383 = vmul.f32 %v5966, %v5966
    %v6384 = vmul.f32 %v5967, %v5967
    %v6385 = vmul.f32 %v5968, %v5968
    %v6386 = vmul.f32 %v5969, %v5969
    %v6387 = vmul.f32 %v5970, %v5970
    %v6388 = vmul.f32 %v5971, %v5971
    %v6389 = vmul.f32 %v5972, %v5972
    %v6390 = vmul.f32 %v5973, %v5973
    %v6391 = vmul.f32 %v5974, %v5974
    %v6392 = vmul.f32 %v5975, %v5975
    %v6393 = vmul.f32 %v5976, %v5976
    %v6394 = vmul.f32 %v5977, %v5977
    %v6395 = vmul.f32 %v5978, %v5978
    %v6396 = vmul.f32 %v5979, %v5979
    %v6397 = vmul.f32 %v5980, %v5980
    %v6398 = vmul.f32 %v5981, %v5981
    %v6399 = vmul.f32 %v5982, %v5982
    %v6400 = vmul.f32 %v5983, %v5983
    %v6401 = vmul.f32 %v5984, %v5984
    %v6402 = vmul.f32 %v5985, %v5985
    %v6403 = vmul.f32 %v5986, %v5986
    %v6404 = vmul.f32 %v5987, %v5987
    %v6405 = vmul.f32 %v5988, %v5988
    %v6406 = vmul.f32 %v5989, %v5989
    %v6407 = vmul.f32 %v5990, %v5990
    %v6408 = vmul.f32 %v5991, %v5991
    %v6409 = vmul.f32 %v5992, %v5992
    %v6410 = vmul.f32 %v5993, %v5993
    %v6411 = vmul.f32 %v5994, %v5994
    %v6412 = vmul.f32 %v5995, %v5995
    %v6413 = vmul.f32 %v5996, %v5996
    %v6414 = vmul.f32 %v5997, %v5997
    %v6415 = vmul.f32 %v5998, %v5998
    %v6416 = vmul.f32 %v5999, %v5999
    %v6417 = vmul.f32 %v6000, %v6000
    %v6418 = vmul.f32 %v6001, %v6001
    %v6419 = vmul.f32 %v6002, %v6002
    %v6420 = vmul.f32 %v6003, %v6003
    %v6421 = vmul.f32 %v6004, %v6004
    %v6422 = vmul.f32 %v6005, %v6005
    %v6423 = vmul.f32 %v6006, %v6006
    %v6424 = vmul.f32 %v6007, %v6007
    %v6425 = vmul.f32 %v6008, %v6008
    %v6426 = vsel %vm5798, %v6378, 0.0
    %v6427 = vsel %vm5798, %v6379, 0.0
    %v6428 = vadd.f32 %v6426, %v6427
    %v6429 = vsel %vm5798, %v6380, 0.0
    %v6430 = vadd.f32 %v6428, %v6429
    %v6431 = vsel %vm5798, %v6381, 0.0
    %v6432 = vadd.f32 %v6430, %v6431
    %v6433 = vsel %vm5798, %v6382, 0.0
    %v6434 = vadd.f32 %v6432, %v6433
    %v6435 = vsel %vm5798, %v6383, 0.0
    %v6436 = vadd.f32 %v6434, %v6435
    %v6437 = vsel %vm5798, %v6384, 0.0
    %v6438 = vadd.f32 %v6436, %v6437
    %v6439 = vsel %vm5798, %v6385, 0.0
    %v6440 = vadd.f32 %v6438, %v6439
    %v6441 = vsel %vm5798, %v6386, 0.0
    %v6442 = vadd.f32 %v6440, %v6441
    %v6443 = vsel %vm5798, %v6387, 0.0
    %v6444 = vadd.f32 %v6442, %v6443
    %v6445 = vsel %vm5798, %v6388, 0.0
    %v6446 = vadd.f32 %v6444, %v6445
    %v6447 = vsel %vm5798, %v6389, 0.0
    %v6448 = vadd.f32 %v6446, %v6447
    %v6449 = vsel %vm5798, %v6390, 0.0
    %v6450 = vadd.f32 %v6448, %v6449
    %v6451 = vsel %vm5798, %v6391, 0.0
    %v6452 = vadd.f32 %v6450, %v6451
    %v6453 = vsel %vm5798, %v6392, 0.0
    %v6454 = vadd.f32 %v6452, %v6453
    %v6455 = vsel %vm5798, %v6393, 0.0
    %v6456 = vadd.f32 %v6454, %v6455
    %v6457 = vrot.slane %v6456, 4
    %v6458 = vadd.f32 %v6456, %v6457
    %v6459 = vrot.slane %v6458, 2
    %v6460 = vadd.f32 %v6458, %v6459
    %v6461 = vrot.slane %v6460, 1
    %v6462 = vadd.f32 %v6460, %v6461
    %v6463 = vsel %vm5798, %v6394, 0.0
    %v6464 = vsel %vm5798, %v6395, 0.0
    %v6465 = vadd.f32 %v6463, %v6464
    %v6466 = vsel %vm5798, %v6396, 0.0
    %v6467 = vadd.f32 %v6465, %v6466
    %v6468 = vsel %vm5798, %v6397, 0.0
    %v6469 = vadd.f32 %v6467, %v6468
    %v6470 = vsel %vm5798, %v6398, 0.0
    %v6471 = vadd.f32 %v6469, %v6470
    %v6472 = vsel %vm5798, %v6399, 0.0
    %v6473 = vadd.f32 %v6471, %v6472
    %v6474 = vsel %vm5798, %v6400, 0.0
    %v6475 = vadd.f32 %v6473, %v6474
    %v6476 = vsel %vm5798, %v6401, 0.0
    %v6477 = vadd.f32 %v6475, %v6476
    %v6478 = vsel %vm5798, %v6402, 0.0
    %v6479 = vadd.f32 %v6477, %v6478
    %v6480 = vsel %vm5798, %v6403, 0.0
    %v6481 = vadd.f32 %v6479, %v6480
    %v6482 = vsel %vm5798, %v6404, 0.0
    %v6483 = vadd.f32 %v6481, %v6482
    %v6484 = vsel %vm5798, %v6405, 0.0
    %v6485 = vadd.f32 %v6483, %v6484
    %v6486 = vsel %vm5798, %v6406, 0.0
    %v6487 = vadd.f32 %v6485, %v6486
    %v6488 = vsel %vm5798, %v6407, 0.0
    %v6489 = vadd.f32 %v6487, %v6488
    %v6490 = vsel %vm5798, %v6408, 0.0
    %v6491 = vadd.f32 %v6489, %v6490
    %v6492 = vsel %vm5798, %v6409, 0.0
    %v6493 = vadd.f32 %v6491, %v6492
    %v6494 = vrot.slane %v6493, 4
    %v6495 = vadd.f32 %v6493, %v6494
    %v6496 = vrot.slane %v6495, 2
    %v6497 = vadd.f32 %v6495, %v6496
    %v6498 = vrot.slane %v6497, 1
    %v6499 = vadd.f32 %v6497, %v6498
    %v6500 = vsel %vm5798, %v6410, 0.0
    %v6501 = vsel %vm5798, %v6411, 0.0
    %v6502 = vadd.f32 %v6500, %v6501
    %v6503 = vsel %vm5798, %v6412, 0.0
    %v6504 = vadd.f32 %v6502, %v6503
    %v6505 = vsel %vm5798, %v6413, 0.0
    %v6506 = vadd.f32 %v6504, %v6505
    %v6507 = vsel %vm5798, %v6414, 0.0
    %v6508 = vadd.f32 %v6506, %v6507
    %v6509 = vsel %vm5798, %v6415, 0.0
    %v6510 = vadd.f32 %v6508, %v6509
    %v6511 = vsel %vm5798, %v6416, 0.0
    %v6512 = vadd.f32 %v6510, %v6511
    %v6513 = vsel %vm5798, %v6417, 0.0
    %v6514 = vadd.f32 %v6512, %v6513
    %v6515 = vsel %vm5798, %v6418, 0.0
    %v6516 = vadd.f32 %v6514, %v6515
    %v6517 = vsel %vm5798, %v6419, 0.0
    %v6518 = vadd.f32 %v6516, %v6517
    %v6519 = vsel %vm5798, %v6420, 0.0
    %v6520 = vadd.f32 %v6518, %v6519
    %v6521 = vsel %vm5798, %v6421, 0.0
    %v6522 = vadd.f32 %v6520, %v6521
    %v6523 = vsel %vm5798, %v6422, 0.0
    %v6524 = vadd.f32 %v6522, %v6523
    %v6525 = vsel %vm5798, %v6423, 0.0
    %v6526 = vadd.f32 %v6524, %v6525
    %v6527 = vsel %vm5798, %v6424, 0.0
    %v6528 = vadd.f32 %v6526, %v6527
    %v6529 = vsel %vm5798, %v6425, 0.0
    %v6530 = vadd.f32 %v6528, %v6529
    %v6531 = vrot.slane %v6530, 4
    %v6532 = vadd.f32 %v6530, %v6531
    %v6533 = vrot.slane %v6532, 2
    %v6534 = vadd.f32 %v6532, %v6533
    %v6535 = vrot.slane %v6534, 1
    %v6536 = vadd.f32 %v6534, %v6535
    %v6537 = vmul.f32 %v6171, %v6171
    %v6538 = vmul.f32 %v6172, %v6172
    %v6539 = vmul.f32 %v6173, %v6173
    %v6540 = vmul.f32 %v6174, %v6174
    %v6541 = vmul.f32 %v6175, %v6175
    %v6542 = vmul.f32 %v6176, %v6176
    %v6543 = vmul.f32 %v6177, %v6177
    %v6544 = vmul.f32 %v6178, %v6178
    %v6545 = vmul.f32 %v6179, %v6179
    %v6546 = vmul.f32 %v6180, %v6180
    %v6547 = vmul.f32 %v6181, %v6181
    %v6548 = vmul.f32 %v6182, %v6182
    %v6549 = vmul.f32 %v6183, %v6183
    %v6550 = vmul.f32 %v6184, %v6184
    %v6551 = vmul.f32 %v6185, %v6185
    %v6552 = vmul.f32 %v6186, %v6186
    %v6553 = vmul.f32 %v6187, %v6187
    %v6554 = vmul.f32 %v6188, %v6188
    %v6555 = vmul.f32 %v6189, %v6189
    %v6556 = vmul.f32 %v6190, %v6190
    %v6557 = vmul.f32 %v6191, %v6191
    %v6558 = vmul.f32 %v6192, %v6192
    %v6559 = vmul.f32 %v6193, %v6193
    %v6560 = vmul.f32 %v6194, %v6194
    %v6561 = vmul.f32 %v6195, %v6195
    %v6562 = vmul.f32 %v6196, %v6196
    %v6563 = vmul.f32 %v6197, %v6197
    %v6564 = vmul.f32 %v6198, %v6198
    %v6565 = vmul.f32 %v6199, %v6199
    %v6566 = vmul.f32 %v6200, %v6200
    %v6567 = vmul.f32 %v6201, %v6201
    %v6568 = vmul.f32 %v6202, %v6202
    %v6569 = vmul.f32 %v6203, %v6203
    %v6570 = vmul.f32 %v6204, %v6204
    %v6571 = vmul.f32 %v6205, %v6205
    %v6572 = vmul.f32 %v6206, %v6206
    %v6573 = vmul.f32 %v6207, %v6207
    %v6574 = vmul.f32 %v6208, %v6208
    %v6575 = vmul.f32 %v6209, %v6209
    %v6576 = vmul.f32 %v6210, %v6210
    %v6577 = vmul.f32 %v6211, %v6211
    %v6578 = vmul.f32 %v6212, %v6212
    %v6579 = vmul.f32 %v6213, %v6213
    %v6580 = vmul.f32 %v6214, %v6214
    %v6581 = vmul.f32 %v6215, %v6215
    %v6582 = vmul.f32 %v6216, %v6216
    %v6583 = vmul.f32 %v6217, %v6217
    %v6584 = vmul.f32 %v6218, %v6218
    %v6585 = vsel %vm5798, %v6537, 0.0
    %v6586 = vsel %vm5798, %v6538, 0.0
    %v6587 = vadd.f32 %v6585, %v6586
    %v6588 = vsel %vm5798, %v6539, 0.0
    %v6589 = vadd.f32 %v6587, %v6588
    %v6590 = vsel %vm5798, %v6540, 0.0
    %v6591 = vadd.f32 %v6589, %v6590
    %v6592 = vsel %vm5798, %v6541, 0.0
    %v6593 = vadd.f32 %v6591, %v6592
    %v6594 = vsel %vm5798, %v6542, 0.0
    %v6595 = vadd.f32 %v6593, %v6594
    %v6596 = vsel %vm5798, %v6543, 0.0
    %v6597 = vadd.f32 %v6595, %v6596
    %v6598 = vsel %vm5798, %v6544, 0.0
    %v6599 = vadd.f32 %v6597, %v6598
    %v6600 = vsel %vm5798, %v6545, 0.0
    %v6601 = vadd.f32 %v6599, %v6600
    %v6602 = vsel %vm5798, %v6546, 0.0
    %v6603 = vadd.f32 %v6601, %v6602
    %v6604 = vsel %vm5798, %v6547, 0.0
    %v6605 = vadd.f32 %v6603, %v6604
    %v6606 = vsel %vm5798, %v6548, 0.0
    %v6607 = vadd.f32 %v6605, %v6606
    %v6608 = vsel %vm5798, %v6549, 0.0
    %v6609 = vadd.f32 %v6607, %v6608
    %v6610 = vsel %vm5798, %v6550, 0.0
    %v6611 = vadd.f32 %v6609, %v6610
    %v6612 = vsel %vm5798, %v6551, 0.0
    %v6613 = vadd.f32 %v6611, %v6612
    %v6614 = vsel %vm5798, %v6552, 0.0
    %v6615 = vadd.f32 %v6613, %v6614
    %v6616 = vrot.slane %v6615, 4
    %v6617 = vadd.f32 %v6615, %v6616
    %v6618 = vrot.slane %v6617, 2
    %v6619 = vadd.f32 %v6617, %v6618
    %v6620 = vrot.slane %v6619, 1
    %v6621 = vadd.f32 %v6619, %v6620
    %v6622 = vsel %vm5798, %v6553, 0.0
    %v6623 = vsel %vm5798, %v6554, 0.0
    %v6624 = vadd.f32 %v6622, %v6623
    %v6625 = vsel %vm5798, %v6555, 0.0
    %v6626 = vadd.f32 %v6624, %v6625
    %v6627 = vsel %vm5798, %v6556, 0.0
    %v6628 = vadd.f32 %v6626, %v6627
    %v6629 = vsel %vm5798, %v6557, 0.0
    %v6630 = vadd.f32 %v6628, %v6629
    %v6631 = vsel %vm5798, %v6558, 0.0
    %v6632 = vadd.f32 %v6630, %v6631
    %v6633 = vsel %vm5798, %v6559, 0.0
    %v6634 = vadd.f32 %v6632, %v6633
    %v6635 = vsel %vm5798, %v6560, 0.0
    %v6636 = vadd.f32 %v6634, %v6635
    %v6637 = vsel %vm5798, %v6561, 0.0
    %v6638 = vadd.f32 %v6636, %v6637
    %v6639 = vsel %vm5798, %v6562, 0.0
    %v6640 = vadd.f32 %v6638, %v6639
    %v6641 = vsel %vm5798, %v6563, 0.0
    %v6642 = vadd.f32 %v6640, %v6641
    %v6643 = vsel %vm5798, %v6564, 0.0
    %v6644 = vadd.f32 %v6642, %v6643
    %v6645 = vsel %vm5798, %v6565, 0.0
    %v6646 = vadd.f32 %v6644, %v6645
    %v6647 = vsel %vm5798, %v6566, 0.0
    %v6648 = vadd.f32 %v6646, %v6647
    %v6649 = vsel %vm5798, %v6567, 0.0
    %v6650 = vadd.f32 %v6648, %v6649
    %v6651 = vsel %vm5798, %v6568, 0.0
    %v6652 = vadd.f32 %v6650, %v6651
    %v6653 = vrot.slane %v6652, 4
    %v6654 = vadd.f32 %v6652, %v6653
    %v6655 = vrot.slane %v6654, 2
    %v6656 = vadd.f32 %v6654, %v6655
    %v6657 = vrot.slane %v6656, 1
    %v6658 = vadd.f32 %v6656, %v6657
    %v6659 = vsel %vm5798, %v6569, 0.0
    %v6660 = vsel %vm5798, %v6570, 0.0
    %v6661 = vadd.f32 %v6659, %v6660
    %v6662 = vsel %vm5798, %v6571, 0.0
    %v6663 = vadd.f32 %v6661, %v6662
    %v6664 = vsel %vm5798, %v6572, 0.0
    %v6665 = vadd.f32 %v6663, %v6664
    %v6666 = vsel %vm5798, %v6573, 0.0
    %v6667 = vadd.f32 %v6665, %v6666
    %v6668 = vsel %vm5798, %v6574, 0.0
    %v6669 = vadd.f32 %v6667, %v6668
    %v6670 = vsel %vm5798, %v6575, 0.0
    %v6671 = vadd.f32 %v6669, %v6670
    %v6672 = vsel %vm5798, %v6576, 0.0
    %v6673 = vadd.f32 %v6671, %v6672
    %v6674 = vsel %vm5798, %v6577, 0.0
    %v6675 = vadd.f32 %v6673, %v6674
    %v6676 = vsel %vm5798, %v6578, 0.0
    %v6677 = vadd.f32 %v6675, %v6676
    %v6678 = vsel %vm5798, %v6579, 0.0
    %v6679 = vadd.f32 %v6677, %v6678
    %v6680 = vsel %vm5798, %v6580, 0.0
    %v6681 = vadd.f32 %v6679, %v6680
    %v6682 = vsel %vm5798, %v6581, 0.0
    %v6683 = vadd.f32 %v6681, %v6682
    %v6684 = vsel %vm5798, %v6582, 0.0
    %v6685 = vadd.f32 %v6683, %v6684
    %v6686 = vsel %vm5798, %v6583, 0.0
    %v6687 = vadd.f32 %v6685, %v6686
    %v6688 = vsel %vm5798, %v6584, 0.0
    %v6689 = vadd.f32 %v6687, %v6688
    %v6690 = vrot.slane %v6689, 4
    %v6691 = vadd.f32 %v6689, %v6690
    %v6692 = vrot.slane %v6691, 2
    %v6693 = vadd.f32 %v6691, %v6692
    %v6694 = vrot.slane %v6693, 1
    %v6695 = vadd.f32 %v6693, %v6694
    %v6696 = vmax.f32 %v6462, 1e-37
    %v6697 = vmax.f32 %v6499, 1e-37
    %v6698 = vmax.f32 %v6536, 1e-37
    %v6699 = vrsqrt.pop %v6696
    %v6700 = vmul.f32 %v6699, %v6696
    %v6701 = vmul.f32 %v6700, %v6699
    %v6702 = vmul.f32 0.5, %v6701
    %v6703 = vsub.f32 1.5, %v6702
    %v6704 = vmul.f32 %v6699, %v6703
    %vm6705 = vweird.f32 %v6696
    %vm6706 = vweird.f32 %v6699
    %vm6707 = vmor %vm6705, %vm6706
    %v6708 = vsel %vm6707, %v6699, %v6704
    %v6709 = vrsqrt.pop %v6697
    %v6710 = vmul.f32 %v6709, %v6697
    %v6711 = vmul.f32 %v6710, %v6709
    %v6712 = vmul.f32 0.5, %v6711
    %v6713 = vsub.f32 1.5, %v6712
    %v6714 = vmul.f32 %v6709, %v6713
    %vm6715 = vweird.f32 %v6697
    %vm6716 = vweird.f32 %v6709
    %vm6717 = vmor %vm6715, %vm6716
    %v6718 = vsel %vm6717, %v6709, %v6714
    %v6719 = vrsqrt.pop %v6698
    %v6720 = vmul.f32 %v6719, %v6698
    %v6721 = vmul.f32 %v6720, %v6719
    %v6722 = vmul.f32 0.5, %v6721
    %v6723 = vsub.f32 1.5, %v6722
    %v6724 = vmul.f32 %v6719, %v6723
    %vm6725 = vweird.f32 %v6698
    %vm6726 = vweird.f32 %v6719
    %vm6727 = vmor %vm6725, %vm6726
    %v6728 = vsel %vm6727, %v6719, %v6724
    %v6729 = vmul.f32 %v6303, %v6708
    %v6730 = vmul.f32 %v6340, %v6718
    %v6731 = vmul.f32 %v6377, %v6728
    %v6732 = vmax.f32 %v6621, 1e-37
    %v6733 = vmax.f32 %v6658, 1e-37
    %v6734 = vmax.f32 %v6695, 1e-37
    %v6735 = vrsqrt.pop %v6732
    %v6736 = vmul.f32 %v6735, %v6732
    %v6737 = vmul.f32 %v6736, %v6735
    %v6738 = vmul.f32 0.5, %v6737
    %v6739 = vsub.f32 1.5, %v6738
    %v6740 = vmul.f32 %v6735, %v6739
    %vm6741 = vweird.f32 %v6732
    %vm6742 = vweird.f32 %v6735
    %vm6743 = vmor %vm6741, %vm6742
    %v6744 = vsel %vm6743, %v6735, %v6740
    %v6745 = vrsqrt.pop %v6733
    %v6746 = vmul.f32 %v6745, %v6733
    %v6747 = vmul.f32 %v6746, %v6745
    %v6748 = vmul.f32 0.5, %v6747
    %v6749 = vsub.f32 1.5, %v6748
    %v6750 = vmul.f32 %v6745, %v6749
    %vm6751 = vweird.f32 %v6733
    %vm6752 = vweird.f32 %v6745
    %vm6753 = vmor %vm6751, %vm6752
    %v6754 = vsel %vm6753, %v6745, %v6750
    %v6755 = vrsqrt.pop %v6734
    %v6756 = vmul.f32 %v6755, %v6734
    %v6757 = vmul.f32 %v6756, %v6755
    %v6758 = vmul.f32 0.5, %v6757
    %v6759 = vsub.f32 1.5, %v6758
    %v6760 = vmul.f32 %v6755, %v6759
    %vm6761 = vweird.f32 %v6734
    %vm6762 = vweird.f32 %v6755
    %vm6763 = vmor %vm6761, %vm6762
    %v6764 = vsel %vm6763, %v6755, %v6760
    %v6765 = vmul.f32 %v6729, %v6744
    %v6766 = vmul.f32 %v6730, %v6754
    %v6767 = vmul.f32 %v6731, %v6764
    %v6768 = vmul.f32 %v6765, 0.2
    %v6769 = vmul.f32 %v6766, 0.3
    %v6770 = vadd.f32 %v6768, %v6769
    %v6771 = vmul.f32 %v6767, 0.5
    %v6772 = vadd.f32 %v6770, %v6771
    %v6773 = vsub.f32 1.0, %v6772
    %v6774 = vsub.f32 %v18, %v69
    %v6775 = vsub.f32 %v19, %v70
    %v6776 = vsub.f32 %v20, %v71
    %v6777 = vand.u32 2147483647, %v6774
    %v6778 = vand.u32 2147483647, %v6775
    %v6779 = vand.u32 2147483647, %v6776
    %vm6780 = vcmp.lt.f32.partialorder %v6777, 1.0
    %vm6781 = vcmp.lt.f32.partialorder %v6778, 1.0
    %vm6782 = vcmp.lt.f32.partialorder %v6779, 1.0
    %v6783 = vmul.f32 %v6774, 0.5
    %v6784 = vmul.f32 %v6775, 0.5
    %v6785 = vmul.f32 %v6776, 0.5
    %v6786 = vmul.f32 %v6783, %v6774
    %v6787 = vmul.f32 %v6784, %v6775
    %v6788 = vmul.f32 %v6785, %v6776
    %v6789 = vsub.f32 %v6777, 0.5
    %v6790 = vsub.f32 %v6778, 0.5
    %v6791 = vsub.f32 %v6779, 0.5
    %v6792 = vsel %vm6780, %v6786, %v6789
    %v6793 = vsel %vm6781, %v6787, %v6790
    %v6794 = vsel %vm6782, %v6788, %v6791
    %v6795 = vsel %vm1572, %v6792, 0.0
    %6796 = vadd.xlane.f32.xlu0 %v6795
    %v6797 = vpop.xlane.xlu0 %6796
    %v6798 = vsel %vm1572, %v6793, 0.0
    %6799 = vadd.xlane.f32.xlu0 %v6798
    %v6800 = vpop.xlane.xlu0 %6799
    %v6801 = vsel %vm1572, %v6794, 0.0
    %6802 = vadd.xlane.f32.xlu0 %v6801
    %v6803 = vpop.xlane.xlu0 %6802
    %v6804 = vadd.f32 %v6797, %v6800
    %v6805 = vadd.f32 %v6804, %v6803
    %v6806 = vmul.f32 %v6805, 0.0026041667
    %v6807 = vmul.f32 %v6773, 1000000.0
    %v6808 = vmul.f32 %v6807, %v6806
    %vm6809 = vcmask 0
    %6810 = vst.msk [vmem:[#allocation2] sm:$0x1] %vm6809, %v6808
    // Predicated region
    $region18: #{_my_loss.1} parent=1 // pred_check
      _
    $region19: #{_my_loss.1} parent=1 // pred_check_branch
      %6812 = sbr.rel (0) target = $region21
    $region20: #{_my_loss.1} parent=1 // pred_region
      %6814 = vsyncadd [#allocation3], 0
      %s6816 = sshll.u32 [#allocation2], 4
      %s6817 = int_to_ptr.vmem [resolvable:$true] %s6816
      %s6818 = sshll.u32 %s4, 4
      %s6819 = int_to_ptr.hbm [resolvable:$true] %s6818
      %6821 = dma.vmem_to_hbm [thread:$0]  %s6817, 16, %s6819, [#allocation3]
    $region21: #{_my_loss.1} parent=1 // pred_fallthru
      _
    // Predicated region
    $region22: #{_my_loss.1} parent=1 // pred_check
      _
    $region23: #{_my_loss.1} parent=1 // pred_check_branch
      %6823 = sbr.rel (0) target = $region25
    $region24: #{_my_loss.1} parent=1 // pred_region
      %6825 = dma.done [#allocation3], 16
    $region25: #{_my_loss.1} parent=1 // pred_fallthru
      _
    %6826 = vsyncpa [#allocation3], 1

</llo_original>
